<compile_context>
chip_gen: v7x
topology: tpu7x:2x2x1
jax: 0.10.0
libtpu: 0.0.40
codegen_flags: <defaults>
</compile_context>

<pallas_src>
import jax
import jax.numpy as jnp
from jax.experimental import pallas as pl
from jax.experimental.pallas import tpu as pltpu


_LANE = 128   # lane-dense padded channel count used by every layer's im2col
_WPAD = 8     # left spatial pad in W; 8 keeps all slab stores sublane-aligned

# (in_channels, out_channels) of the five Conv2d(kernel=3, stride=1, pad=1)
_LAYER_CHANNELS = [(7, 7), (7, 7), (7, 60), (60, 100), (100, 175)]


def _round_up(x, m):
    return ((x + m - 1) // m) * m


# ---------------------------------------------------------------------------
# Fused kernel
# ---------------------------------------------------------------------------
def _fused_cnn_kernel(*refs):
    """Whole Koundinya2D_CNN forward in one kernel invocation.

    refs = (x, w1, b1, ..., w5, b5, out, act_slab, patch_scratch)
    x is NHWC with channels already zero-padded to _LANE (done in wrapper).
    """
    x_ref, o_ref, act_ref, patch_ref = refs[0], refs[-3], refs[-2], refs[-1]
    wb_refs = refs[1:-3]
    n_layers = len(wb_refs) // 2

    n, h, w, cpad = x_ref.shape       # cpad == _LANE (lane-dense)
    hw = h * w
    m = n * hw                        # 128 rows -> exactly fills the MXU

    # One-time zero fill: provides both the conv "same" zero border and the
    # zero channel padding for every layer (replaces per-layer jnp.pad ops
    # and their HBM round-trips).
    act_ref[...] = jnp.zeros_like(act_ref)
    # Interior lives at [1:1+h, _WPAD:_WPAD+w, :]; full-lane, tile-aligned
    # store (input was channel-padded to 128 in the wrapper).
    act_ref[:, 1:1 + h, _WPAD:_WPAD + w, :] = x_ref[...]

    y = None
    for li in range(n_layers):
        w_ref, b_ref = wb_refs[2 * li], wb_refs[2 * li + 1]
        cout_pad = w_ref.shape[-1]    # multiple of 128 (zero-padded columns)

        # im2col into a lane-aligned VMEM scratch: 9 shifted windows of the
        # padded activation slab -> (m, 9*cpad) bf16 patch matrix.  Each
        # destination column block is a full 128-lane aligned store.
        for t in range(9):
            dy, dx = t // 3, t % 3
            win = act_ref[:, dy:dy + h, _WPAD - 1 + dx:_WPAD - 1 + dx + w, :]
            patch_ref[:, t * cpad:(t + 1) * cpad] = (
                win.reshape(m, cpad).astype(patch_ref.dtype))

        # One MXU matmul per conv layer: (128, 9*128) x (9*128, cout_pad) in
        # bf16 with f32 accumulation, then bias + fused ReLU on the f32 result.
        y = jnp.dot(patch_ref[...], w_ref[...],
                    preferred_element_type=jnp.float32)
        y = y + b_ref[...]
        if li < n_layers - 1:
            # Intermediate layers are padded to exactly _LANE output channels,
            # so this writeback is a full, unmasked lane-dense store; padded
            # lanes carry ReLU(0 + 0) = 0, matching the next layer's zero
            # weight rows.
            assert cout_pad == cpad
            y = jnp.maximum(y, 0.0)
            act_ref[:, 1:1 + h, _WPAD:_WPAD + w, :] = y.reshape(n, h, w, cpad)

    # Final layer (no ReLU): emit (n, h*w, cout_pad) — lane-dense, unmasked.
    # The wrapper slices the true channels and folds to PyTorch's NCHW
    # .view(N, -1) ordering with one tiny permute.
    o_ref[...] = y.reshape(n, hw, o_ref.shape[-1])


# ---------------------------------------------------------------------------
# Parameters
# ---------------------------------------------------------------------------
def init_params(key):
    """PyTorch-layout params: list of (weight OIHW (Cout,Cin,3,3), bias (Cout,))."""
    params = []
    for cin, cout in _LAYER_CHANNELS:
        key, kw, kb = jax.random.split(key, 3)
        bound = 1.0 / jnp.sqrt(cin * 3 * 3)
        w = jax.random.uniform(kw, (cout, cin, 3, 3), jnp.float32, -bound, bound)
        b = jax.random.uniform(kb, (cout,), jnp.float32, -bound, bound)
        params.append((w, b))
    return params


def prepare_params(params):
    """PyTorch (OIHW weight, bias) -> kernel-format im2col matrices (done once).

    Weight becomes a (9*_LANE, Cout_pad) bf16 matrix:
      * rows for padded input channels are zero (so padded/stale slab lanes
        never contribute to the contraction),
      * columns for padded output channels are zero (so every matmul result,
        writeback store and the final output are lane-dense and unmasked).
    Bias becomes a (1, Cout_pad) f32 row (zero in the padded columns).
    """
    kparams = []
    for w_oihw, b in params:
        cout, cin = int(w_oihw.shape[0]), int(w_oihw.shape[1])
        cout_pad = _round_up(cout, _LANE)
        w_hwio = jnp.transpose(w_oihw, (2, 3, 1, 0))              # (3,3,Cin,Cout)
        w_pad = jnp.zeros((3, 3, _LANE, cout_pad), jnp.float32)
        w_pad = w_pad.at[:, :, :cin, :cout].set(w_hwio)
        b_pad = jnp.zeros((1, cout_pad), jnp.float32).at[0, :cout].set(b)
        kparams.append((w_pad.reshape(9 * _LANE, cout_pad).astype(jnp.bfloat16),
                        b_pad))
    return kparams


# ---------------------------------------------------------------------------
# Forward wrapper
# ---------------------------------------------------------------------------
def koundinya2d_forward(x_nchw, kparams):
    """Forward pass matching Koundinya2D_CNN.forward: NCHW in, (N, C*H*W) out."""
    n, cin, h, w = x_nchw.shape
    hw = h * w
    c_pad_last = kparams[-1][0].shape[-1]          # 256 (lane-dense)
    c_out = _LAYER_CHANNELS[-1][1]                 # 175 (true channels)

    # NCHW -> NHWC and zero-pad channels to the lane-dense 128 once here, so
    # every store inside the kernel is a full, unmasked lane store.
    x_nhwc = jnp.transpose(x_nchw, (0, 2, 3, 1))   # tiny (3.5 KB) layout op
    x_nhwc = jnp.pad(x_nhwc, ((0, 0), (0, 0), (0, 0), (0, _LANE - cin)))

    flat = [a for pair in kparams for a in pair]   # w1, b1, ..., w5, b5

    map2 = lambda i: (0, 0)
    map3 = lambda i: (0, 0, 0)
    map4 = lambda i: (0, 0, 0, 0)

    in_specs = [pl.BlockSpec(x_nhwc.shape, map4)]
    in_specs += [pl.BlockSpec(a.shape, map2) for a in flat]

    out = pl.pallas_call(
        _fused_cnn_kernel,
        out_shape=jax.ShapeDtypeStruct((n, hw, c_pad_last), jnp.float32),
        grid=(1,),                        # single step: batch folded into M=128
        in_specs=in_specs,
        out_specs=pl.BlockSpec((n, hw, c_pad_last), map3),
        scratch_shapes=[
            # zero-bordered activation slab (interior at [1:1+h, 8:8+w, :])
            pltpu.VMEM((n, h + 2, 2 * _WPAD + w, _LANE), jnp.float32),
            # im2col patch matrix, bf16 for the MXU
            pltpu.VMEM((n * hw, 9 * _LANE), jnp.bfloat16),
        ],
        compiler_params=pltpu.CompilerParams(
            dimension_semantics=("arbitrary",),
            vmem_limit_bytes=32 * 1024 * 1024),
    )(x_nhwc, *flat)

    # (n, hw, 256) -> true channels -> (n, c, hw) -> (n, c*h*w): PyTorch NCHW
    # .view(N, -1) order.  This last ~90 KB slice+permute stays in XLA (not
    # worth in-kernel transpose risk).
    out = out[:, :, :c_out]
    return jnp.transpose(out, (0, 2, 1)).reshape(n, -1)


# ---------------------------------------------------------------------------
# Pure-JAX reference (f32 lax.conv) for the correctness check
# ---------------------------------------------------------------------------
def _reference_forward(x_nchw, params):
    x = x_nchw
    for i, (w_oihw, b) in enumerate(params):
        x = jax.lax.conv_general_dilated(
            x, w_oihw, window_strides=(1, 1), padding=((1, 1), (1, 1)),
            dimension_numbers=("NCHW", "OIHW", "NCHW"))
        x = x + b[None, :, None, None]
        if i < len(params) - 1:
            x = jnp.maximum(x, 0.0)
    return x.reshape(x.shape[0], -1)


if __name__ == "__main__":
    key = jax.random.PRNGKey(0)
    key, kx = jax.random.split(key)

    # Small input consistent with the module: NCHW with 7 input channels.
    x = jax.random.normal(kx, (2, 7, 8, 8), jnp.float32)

    params = init_params(key)            # PyTorch-layout params (for reference)
    kparams = prepare_params(params)     # kernel-format params (prep done once)

    fwd = jax.jit(koundinya2d_forward)
    out = jax.block_until_ready(fwd(x, kparams))

    ref = jax.block_until_ready(_reference_forward(x, params))
    assert out.shape == (2, 175 * 8 * 8), out.shape
    max_err = float(jnp.max(jnp.abs(out - ref)))
    # bf16 MXU inputs (f32 accumulation) -> slightly looser tolerance vs the
    # f32 reference.
    assert jnp.allclose(out, ref, rtol=5e-2, atol=1e-2), max_err

    print("KERNEL_OK")
</pallas_src>

<mosaic_0001>
module attributes {stable_mosaic.version = 11 : i64} {
  func.func @_fused_cnn_kernel(%arg0: i32, %arg1: memref<2x8x8x128xf32, #tpu.memory_space<vmem>>, %arg2: memref<1152x128xbf16, #tpu.memory_space<vmem>>, %arg3: memref<1x128xf32, #tpu.memory_space<vmem>>, %arg4: memref<1152x128xbf16, #tpu.memory_space<vmem>>, %arg5: memref<1x128xf32, #tpu.memory_space<vmem>>, %arg6: memref<1152x128xbf16, #tpu.memory_space<vmem>>, %arg7: memref<1x128xf32, #tpu.memory_space<vmem>>, %arg8: memref<1152x128xbf16, #tpu.memory_space<vmem>>, %arg9: memref<1x128xf32, #tpu.memory_space<vmem>>, %arg10: memref<1152x256xbf16, #tpu.memory_space<vmem>>, %arg11: memref<1x256xf32, #tpu.memory_space<vmem>>, %arg12: memref<2x64x256xf32, #tpu.memory_space<vmem>>, %arg13: memref<2x10x24x128xf32, #tpu.memory_space<vmem>>, %arg14: memref<128x1152xbf16, #tpu.memory_space<vmem>>) attributes {dimension_semantics = [#tpu.dimension_semantics<arbitrary>], iteration_bounds = array<i64: 1>, scalar_prefetch = 0 : i64, scratch_operands = 2 : i64, tpu.core_type = #tpu.core_type<tc>, window_params = [{pipeline_mode = #tpu.pipeline_mode<synchronous>, transform_indices = @transform_0, window_bounds = array<i64: 2, 8, 8, 128>}, {pipeline_mode = #tpu.pipeline_mode<synchronous>, transform_indices = @transform_1, window_bounds = array<i64: 1152, 128>}, {pipeline_mode = #tpu.pipeline_mode<synchronous>, transform_indices = @transform_2, window_bounds = array<i64: 1, 128>}, {pipeline_mode = #tpu.pipeline_mode<synchronous>, transform_indices = @transform_3, window_bounds = array<i64: 1152, 128>}, {pipeline_mode = #tpu.pipeline_mode<synchronous>, transform_indices = @transform_4, window_bounds = array<i64: 1, 128>}, {pipeline_mode = #tpu.pipeline_mode<synchronous>, transform_indices = @transform_5, window_bounds = array<i64: 1152, 128>}, {pipeline_mode = #tpu.pipeline_mode<synchronous>, transform_indices = @transform_6, window_bounds = array<i64: 1, 128>}, {pipeline_mode = #tpu.pipeline_mode<synchronous>, transform_indices = @transform_7, window_bounds = array<i64: 1152, 128>}, {pipeline_mode = #tpu.pipeline_mode<synchronous>, transform_indices = @transform_8, window_bounds = array<i64: 1, 128>}, {pipeline_mode = #tpu.pipeline_mode<synchronous>, transform_indices = @transform_9, window_bounds = array<i64: 1152, 256>}, {pipeline_mode = #tpu.pipeline_mode<synchronous>, transform_indices = @transform_10, window_bounds = array<i64: 1, 256>}, {pipeline_mode = #tpu.pipeline_mode<synchronous>, transform_indices = @transform_11, window_bounds = array<i64: 2, 64, 256>}]} {
    %cst = arith.constant 0.000000e+00 : f32
    %0 = vector.broadcast %cst : f32 to vector<2x10x24x128xf32>
    %c0 = arith.constant 0 : index
    %c0_0 = arith.constant 0 : index
    %c0_1 = arith.constant 0 : index
    %c0_2 = arith.constant 0 : index
    %1 = vector.load %arg13[%c0, %c0_0, %c0_1, %c0_2] : memref<2x10x24x128xf32, #tpu.memory_space<vmem>>, vector<2x10x24x128xf32>
    tpu.vector_store %arg13[%c0, %c0_0, %c0_1, %c0_2], %0 {strides = array<i32>} : memref<2x10x24x128xf32, #tpu.memory_space<vmem>>, vector<2x10x24x128xf32>,
    %c0_3 = arith.constant 0 : index
    %c0_4 = arith.constant 0 : index
    %c0_5 = arith.constant 0 : index
    %c0_6 = arith.constant 0 : index
    %2 = vector.load %arg1[%c0_3, %c0_4, %c0_5, %c0_6] : memref<2x8x8x128xf32, #tpu.memory_space<vmem>>, vector<2x8x8x128xf32>
    %c0_7 = arith.constant 0 : index
    %c1 = arith.constant 1 : index
    %c8 = arith.constant 8 : index
    %c0_8 = arith.constant 0 : index
    %3 = vector.load %arg13[%c0_7, %c1, %c8, %c0_8] : memref<2x10x24x128xf32, #tpu.memory_space<vmem>>, vector<2x8x8x128xf32>
    tpu.vector_store %arg13[%c0_7, %c1, %c8, %c0_8], %2 {strides = array<i32>} : memref<2x10x24x128xf32, #tpu.memory_space<vmem>>, vector<2x8x8x128xf32>,
    %c0_9 = arith.constant 0 : index
    %c0_10 = arith.constant 0 : index
    %c7 = arith.constant 7 : index
    %c0_11 = arith.constant 0 : index
    %4 = vector.load %arg13[%c0_9, %c0_10, %c7, %c0_11] : memref<2x10x24x128xf32, #tpu.memory_space<vmem>>, vector<2x8x8x128xf32>
    %5 = vector.shape_cast %4 : vector<2x8x8x128xf32> to vector<128x128xf32>
    %6 = arith.truncf %5 : vector<128x128xf32> to vector<128x128xbf16>
    %c0_12 = arith.constant 0 : index
    %c0_13 = arith.constant 0 : index
    %7 = vector.load %arg14[%c0_12, %c0_13] : memref<128x1152xbf16, #tpu.memory_space<vmem>>, vector<128x128xbf16>
    tpu.vector_store %arg14[%c0_12, %c0_13], %6 {strides = array<i32>} : memref<128x1152xbf16, #tpu.memory_space<vmem>>, vector<128x128xbf16>,
    %c0_14 = arith.constant 0 : index
    %c0_15 = arith.constant 0 : index
    %c8_16 = arith.constant 8 : index
    %c0_17 = arith.constant 0 : index
    %8 = vector.load %arg13[%c0_14, %c0_15, %c8_16, %c0_17] : memref<2x10x24x128xf32, #tpu.memory_space<vmem>>, vector<2x8x8x128xf32>
    %9 = vector.shape_cast %8 : vector<2x8x8x128xf32> to vector<128x128xf32>
    %10 = arith.truncf %9 : vector<128x128xf32> to vector<128x128xbf16>
    %c0_18 = arith.constant 0 : index
    %c128 = arith.constant 128 : index
    %11 = vector.load %arg14[%c0_18, %c128] : memref<128x1152xbf16, #tpu.memory_space<vmem>>, vector<128x128xbf16>
    tpu.vector_store %arg14[%c0_18, %c128], %10 {strides = array<i32>} : memref<128x1152xbf16, #tpu.memory_space<vmem>>, vector<128x128xbf16>,
    %c0_19 = arith.constant 0 : index
    %c0_20 = arith.constant 0 : index
    %c9 = arith.constant 9 : index
    %c0_21 = arith.constant 0 : index
    %12 = vector.load %arg13[%c0_19, %c0_20, %c9, %c0_21] : memref<2x10x24x128xf32, #tpu.memory_space<vmem>>, vector<2x8x8x128xf32>
    %13 = vector.shape_cast %12 : vector<2x8x8x128xf32> to vector<128x128xf32>
    %14 = arith.truncf %13 : vector<128x128xf32> to vector<128x128xbf16>
    %c0_22 = arith.constant 0 : index
    %c256 = arith.constant 256 : index
    %15 = vector.load %arg14[%c0_22, %c256] : memref<128x1152xbf16, #tpu.memory_space<vmem>>, vector<128x128xbf16>
    tpu.vector_store %arg14[%c0_22, %c256], %14 {strides = array<i32>} : memref<128x1152xbf16, #tpu.memory_space<vmem>>, vector<128x128xbf16>,
    %c0_23 = arith.constant 0 : index
    %c1_24 = arith.constant 1 : index
    %c7_25 = arith.constant 7 : index
    %c0_26 = arith.constant 0 : index
    %16 = vector.load %arg13[%c0_23, %c1_24, %c7_25, %c0_26] : memref<2x10x24x128xf32, #tpu.memory_space<vmem>>, vector<2x8x8x128xf32>
    %17 = vector.shape_cast %16 : vector<2x8x8x128xf32> to vector<128x128xf32>
    %18 = arith.truncf %17 : vector<128x128xf32> to vector<128x128xbf16>
    %c0_27 = arith.constant 0 : index
    %c384 = arith.constant 384 : index
    %19 = vector.load %arg14[%c0_27, %c384] : memref<128x1152xbf16, #tpu.memory_space<vmem>>, vector<128x128xbf16>
    tpu.vector_store %arg14[%c0_27, %c384], %18 {strides = array<i32>} : memref<128x1152xbf16, #tpu.memory_space<vmem>>, vector<128x128xbf16>,
    %c0_28 = arith.constant 0 : index
    %c1_29 = arith.constant 1 : index
    %c8_30 = arith.constant 8 : index
    %c0_31 = arith.constant 0 : index
    %20 = vector.load %arg13[%c0_28, %c1_29, %c8_30, %c0_31] : memref<2x10x24x128xf32, #tpu.memory_space<vmem>>, vector<2x8x8x128xf32>
    %21 = vector.shape_cast %20 : vector<2x8x8x128xf32> to vector<128x128xf32>
    %22 = arith.truncf %21 : vector<128x128xf32> to vector<128x128xbf16>
    %c0_32 = arith.constant 0 : index
    %c512 = arith.constant 512 : index
    %23 = vector.load %arg14[%c0_32, %c512] : memref<128x1152xbf16, #tpu.memory_space<vmem>>, vector<128x128xbf16>
    tpu.vector_store %arg14[%c0_32, %c512], %22 {strides = array<i32>} : memref<128x1152xbf16, #tpu.memory_space<vmem>>, vector<128x128xbf16>,
    %c0_33 = arith.constant 0 : index
    %c1_34 = arith.constant 1 : index
    %c9_35 = arith.constant 9 : index
    %c0_36 = arith.constant 0 : index
    %24 = vector.load %arg13[%c0_33, %c1_34, %c9_35, %c0_36] : memref<2x10x24x128xf32, #tpu.memory_space<vmem>>, vector<2x8x8x128xf32>
    %25 = vector.shape_cast %24 : vector<2x8x8x128xf32> to vector<128x128xf32>
    %26 = arith.truncf %25 : vector<128x128xf32> to vector<128x128xbf16>
    %c0_37 = arith.constant 0 : index
    %c640 = arith.constant 640 : index
    %27 = vector.load %arg14[%c0_37, %c640] : memref<128x1152xbf16, #tpu.memory_space<vmem>>, vector<128x128xbf16>
    tpu.vector_store %arg14[%c0_37, %c640], %26 {strides = array<i32>} : memref<128x1152xbf16, #tpu.memory_space<vmem>>, vector<128x128xbf16>,
    %c0_38 = arith.constant 0 : index
    %c2 = arith.constant 2 : index
    %c7_39 = arith.constant 7 : index
    %c0_40 = arith.constant 0 : index
    %28 = vector.load %arg13[%c0_38, %c2, %c7_39, %c0_40] : memref<2x10x24x128xf32, #tpu.memory_space<vmem>>, vector<2x8x8x128xf32>
    %29 = vector.shape_cast %28 : vector<2x8x8x128xf32> to vector<128x128xf32>
    %30 = arith.truncf %29 : vector<128x128xf32> to vector<128x128xbf16>
    %c0_41 = arith.constant 0 : index
    %c768 = arith.constant 768 : index
    %31 = vector.load %arg14[%c0_41, %c768] : memref<128x1152xbf16, #tpu.memory_space<vmem>>, vector<128x128xbf16>
    tpu.vector_store %arg14[%c0_41, %c768], %30 {strides = array<i32>} : memref<128x1152xbf16, #tpu.memory_space<vmem>>, vector<128x128xbf16>,
    %c0_42 = arith.constant 0 : index
    %c2_43 = arith.constant 2 : index
    %c8_44 = arith.constant 8 : index
    %c0_45 = arith.constant 0 : index
    %32 = vector.load %arg13[%c0_42, %c2_43, %c8_44, %c0_45] : memref<2x10x24x128xf32, #tpu.memory_space<vmem>>, vector<2x8x8x128xf32>
    %33 = vector.shape_cast %32 : vector<2x8x8x128xf32> to vector<128x128xf32>
    %34 = arith.truncf %33 : vector<128x128xf32> to vector<128x128xbf16>
    %c0_46 = arith.constant 0 : index
    %c896 = arith.constant 896 : index
    %35 = vector.load %arg14[%c0_46, %c896] : memref<128x1152xbf16, #tpu.memory_space<vmem>>, vector<128x128xbf16>
    tpu.vector_store %arg14[%c0_46, %c896], %34 {strides = array<i32>} : memref<128x1152xbf16, #tpu.memory_space<vmem>>, vector<128x128xbf16>,
    %c0_47 = arith.constant 0 : index
    %c2_48 = arith.constant 2 : index
    %c9_49 = arith.constant 9 : index
    %c0_50 = arith.constant 0 : index
    %36 = vector.load %arg13[%c0_47, %c2_48, %c9_49, %c0_50] : memref<2x10x24x128xf32, #tpu.memory_space<vmem>>, vector<2x8x8x128xf32>
    %37 = vector.shape_cast %36 : vector<2x8x8x128xf32> to vector<128x128xf32>
    %38 = arith.truncf %37 : vector<128x128xf32> to vector<128x128xbf16>
    %c0_51 = arith.constant 0 : index
    %c1024 = arith.constant 1024 : index
    %39 = vector.load %arg14[%c0_51, %c1024] : memref<128x1152xbf16, #tpu.memory_space<vmem>>, vector<128x128xbf16>
    tpu.vector_store %arg14[%c0_51, %c1024], %38 {strides = array<i32>} : memref<128x1152xbf16, #tpu.memory_space<vmem>>, vector<128x128xbf16>,
    %c0_52 = arith.constant 0 : index
    %c0_53 = arith.constant 0 : index
    %40 = vector.load %arg14[%c0_52, %c0_53] : memref<128x1152xbf16, #tpu.memory_space<vmem>>, vector<128x1152xbf16>
    %c0_54 = arith.constant 0 : index
    %c0_55 = arith.constant 0 : index
    %41 = vector.load %arg2[%c0_54, %c0_55] : memref<1152x128xbf16, #tpu.memory_space<vmem>>, vector<1152x128xbf16>
    %cst_56 = arith.constant dense<0.000000e+00> : vector<128x128xf32>
    %42 = tpu.matmul %40, %41, %cst_56 {dimension_numbers = #tpu.dot_dimension_numbers<[1], [0], [0], [1], [0, 0, 1, 1], [], []>} : vector<128x1152xbf16>, vector<1152x128xbf16>, vector<128x128xf32> -> vector<128x128xf32>
    %c0_57 = arith.constant 0 : index
    %c0_58 = arith.constant 0 : index
    %43 = vector.load %arg3[%c0_57, %c0_58] : memref<1x128xf32, #tpu.memory_space<vmem>>, vector<1x128xf32>
    %44 = vector.broadcast %43 : vector<1x128xf32> to vector<128x128xf32>
    %45 = arith.addf %42, %44 : vector<128x128xf32>
    %cst_59 = arith.constant 0.000000e+00 : f32
    %46 = vector.broadcast %cst_59 : f32 to vector<128x128xf32>
    %47 = arith.maximumf %45, %46 : vector<128x128xf32>
    %48 = vector.shape_cast %47 : vector<128x128xf32> to vector<2x8x8x128xf32>
    %c0_60 = arith.constant 0 : index
    %c1_61 = arith.constant 1 : index
    %c8_62 = arith.constant 8 : index
    %c0_63 = arith.constant 0 : index
    %49 = vector.load %arg13[%c0_60, %c1_61, %c8_62, %c0_63] : memref<2x10x24x128xf32, #tpu.memory_space<vmem>>, vector<2x8x8x128xf32>
    tpu.vector_store %arg13[%c0_60, %c1_61, %c8_62, %c0_63], %48 {strides = array<i32>} : memref<2x10x24x128xf32, #tpu.memory_space<vmem>>, vector<2x8x8x128xf32>,
    %c0_64 = arith.constant 0 : index
    %c0_65 = arith.constant 0 : index
    %c7_66 = arith.constant 7 : index
    %c0_67 = arith.constant 0 : index
    %50 = vector.load %arg13[%c0_64, %c0_65, %c7_66, %c0_67] : memref<2x10x24x128xf32, #tpu.memory_space<vmem>>, vector<2x8x8x128xf32>
    %51 = vector.shape_cast %50 : vector<2x8x8x128xf32> to vector<128x128xf32>
    %52 = arith.truncf %51 : vector<128x128xf32> to vector<128x128xbf16>
    %c0_68 = arith.constant 0 : index
    %c0_69 = arith.constant 0 : index
    %53 = vector.load %arg14[%c0_68, %c0_69] : memref<128x1152xbf16, #tpu.memory_space<vmem>>, vector<128x128xbf16>
    tpu.vector_store %arg14[%c0_68, %c0_69], %52 {strides = array<i32>} : memref<128x1152xbf16, #tpu.memory_space<vmem>>, vector<128x128xbf16>,
    %c0_70 = arith.constant 0 : index
    %c0_71 = arith.constant 0 : index
    %c8_72 = arith.constant 8 : index
    %c0_73 = arith.constant 0 : index
    %54 = vector.load %arg13[%c0_70, %c0_71, %c8_72, %c0_73] : memref<2x10x24x128xf32, #tpu.memory_space<vmem>>, vector<2x8x8x128xf32>
    %55 = vector.shape_cast %54 : vector<2x8x8x128xf32> to vector<128x128xf32>
    %56 = arith.truncf %55 : vector<128x128xf32> to vector<128x128xbf16>
    %c0_74 = arith.constant 0 : index
    %c128_75 = arith.constant 128 : index
    %57 = vector.load %arg14[%c0_74, %c128_75] : memref<128x1152xbf16, #tpu.memory_space<vmem>>, vector<128x128xbf16>
    tpu.vector_store %arg14[%c0_74, %c128_75], %56 {strides = array<i32>} : memref<128x1152xbf16, #tpu.memory_space<vmem>>, vector<128x128xbf16>,
    %c0_76 = arith.constant 0 : index
    %c0_77 = arith.constant 0 : index
    %c9_78 = arith.constant 9 : index
    %c0_79 = arith.constant 0 : index
    %58 = vector.load %arg13[%c0_76, %c0_77, %c9_78, %c0_79] : memref<2x10x24x128xf32, #tpu.memory_space<vmem>>, vector<2x8x8x128xf32>
    %59 = vector.shape_cast %58 : vector<2x8x8x128xf32> to vector<128x128xf32>
    %60 = arith.truncf %59 : vector<128x128xf32> to vector<128x128xbf16>
    %c0_80 = arith.constant 0 : index
    %c256_81 = arith.constant 256 : index
    %61 = vector.load %arg14[%c0_80, %c256_81] : memref<128x1152xbf16, #tpu.memory_space<vmem>>, vector<128x128xbf16>
    tpu.vector_store %arg14[%c0_80, %c256_81], %60 {strides = array<i32>} : memref<128x1152xbf16, #tpu.memory_space<vmem>>, vector<128x128xbf16>,
    %c0_82 = arith.constant 0 : index
    %c1_83 = arith.constant 1 : index
    %c7_84 = arith.constant 7 : index
    %c0_85 = arith.constant 0 : index
    %62 = vector.load %arg13[%c0_82, %c1_83, %c7_84, %c0_85] : memref<2x10x24x128xf32, #tpu.memory_space<vmem>>, vector<2x8x8x128xf32>
    %63 = vector.shape_cast %62 : vector<2x8x8x128xf32> to vector<128x128xf32>
    %64 = arith.truncf %63 : vector<128x128xf32> to vector<128x128xbf16>
    %c0_86 = arith.constant 0 : index
    %c384_87 = arith.constant 384 : index
    %65 = vector.load %arg14[%c0_86, %c384_87] : memref<128x1152xbf16, #tpu.memory_space<vmem>>, vector<128x128xbf16>
    tpu.vector_store %arg14[%c0_86, %c384_87], %64 {strides = array<i32>} : memref<128x1152xbf16, #tpu.memory_space<vmem>>, vector<128x128xbf16>,
    %c0_88 = arith.constant 0 : index
    %c1_89 = arith.constant 1 : index
    %c8_90 = arith.constant 8 : index
    %c0_91 = arith.constant 0 : index
    %66 = vector.load %arg13[%c0_88, %c1_89, %c8_90, %c0_91] : memref<2x10x24x128xf32, #tpu.memory_space<vmem>>, vector<2x8x8x128xf32>
    %67 = vector.shape_cast %66 : vector<2x8x8x128xf32> to vector<128x128xf32>
    %68 = arith.truncf %67 : vector<128x128xf32> to vector<128x128xbf16>
    %c0_92 = arith.constant 0 : index
    %c512_93 = arith.constant 512 : index
    %69 = vector.load %arg14[%c0_92, %c512_93] : memref<128x1152xbf16, #tpu.memory_space<vmem>>, vector<128x128xbf16>
    tpu.vector_store %arg14[%c0_92, %c512_93], %68 {strides = array<i32>} : memref<128x1152xbf16, #tpu.memory_space<vmem>>, vector<128x128xbf16>,
    %c0_94 = arith.constant 0 : index
    %c1_95 = arith.constant 1 : index
    %c9_96 = arith.constant 9 : index
    %c0_97 = arith.constant 0 : index
    %70 = vector.load %arg13[%c0_94, %c1_95, %c9_96, %c0_97] : memref<2x10x24x128xf32, #tpu.memory_space<vmem>>, vector<2x8x8x128xf32>
    %71 = vector.shape_cast %70 : vector<2x8x8x128xf32> to vector<128x128xf32>
    %72 = arith.truncf %71 : vector<128x128xf32> to vector<128x128xbf16>
    %c0_98 = arith.constant 0 : index
    %c640_99 = arith.constant 640 : index
    %73 = vector.load %arg14[%c0_98, %c640_99] : memref<128x1152xbf16, #tpu.memory_space<vmem>>, vector<128x128xbf16>
    tpu.vector_store %arg14[%c0_98, %c640_99], %72 {strides = array<i32>} : memref<128x1152xbf16, #tpu.memory_space<vmem>>, vector<128x128xbf16>,
    %c0_100 = arith.constant 0 : index
    %c2_101 = arith.constant 2 : index
    %c7_102 = arith.constant 7 : index
    %c0_103 = arith.constant 0 : index
    %74 = vector.load %arg13[%c0_100, %c2_101, %c7_102, %c0_103] : memref<2x10x24x128xf32, #tpu.memory_space<vmem>>, vector<2x8x8x128xf32>
    %75 = vector.shape_cast %74 : vector<2x8x8x128xf32> to vector<128x128xf32>
    %76 = arith.truncf %75 : vector<128x128xf32> to vector<128x128xbf16>
    %c0_104 = arith.constant 0 : index
    %c768_105 = arith.constant 768 : index
    %77 = vector.load %arg14[%c0_104, %c768_105] : memref<128x1152xbf16, #tpu.memory_space<vmem>>, vector<128x128xbf16>
    tpu.vector_store %arg14[%c0_104, %c768_105], %76 {strides = array<i32>} : memref<128x1152xbf16, #tpu.memory_space<vmem>>, vector<128x128xbf16>,
    %c0_106 = arith.constant 0 : index
    %c2_107 = arith.constant 2 : index
    %c8_108 = arith.constant 8 : index
    %c0_109 = arith.constant 0 : index
    %78 = vector.load %arg13[%c0_106, %c2_107, %c8_108, %c0_109] : memref<2x10x24x128xf32, #tpu.memory_space<vmem>>, vector<2x8x8x128xf32>
    %79 = vector.shape_cast %78 : vector<2x8x8x128xf32> to vector<128x128xf32>
    %80 = arith.truncf %79 : vector<128x128xf32> to vector<128x128xbf16>
    %c0_110 = arith.constant 0 : index
    %c896_111 = arith.constant 896 : index
    %81 = vector.load %arg14[%c0_110, %c896_111] : memref<128x1152xbf16, #tpu.memory_space<vmem>>, vector<128x128xbf16>
    tpu.vector_store %arg14[%c0_110, %c896_111], %80 {strides = array<i32>} : memref<128x1152xbf16, #tpu.memory_space<vmem>>, vector<128x128xbf16>,
    %c0_112 = arith.constant 0 : index
    %c2_113 = arith.constant 2 : index
    %c9_114 = arith.constant 9 : index
    %c0_115 = arith.constant 0 : index
    %82 = vector.load %arg13[%c0_112, %c2_113, %c9_114, %c0_115] : memref<2x10x24x128xf32, #tpu.memory_space<vmem>>, vector<2x8x8x128xf32>
    %83 = vector.shape_cast %82 : vector<2x8x8x128xf32> to vector<128x128xf32>
    %84 = arith.truncf %83 : vector<128x128xf32> to vector<128x128xbf16>
    %c0_116 = arith.constant 0 : index
    %c1024_117 = arith.constant 1024 : index
    %85 = vector.load %arg14[%c0_116, %c1024_117] : memref<128x1152xbf16, #tpu.memory_space<vmem>>, vector<128x128xbf16>
    tpu.vector_store %arg14[%c0_116, %c1024_117], %84 {strides = array<i32>} : memref<128x1152xbf16, #tpu.memory_space<vmem>>, vector<128x128xbf16>,
    %c0_118 = arith.constant 0 : index
    %c0_119 = arith.constant 0 : index
    %86 = vector.load %arg14[%c0_118, %c0_119] : memref<128x1152xbf16, #tpu.memory_space<vmem>>, vector<128x1152xbf16>
    %c0_120 = arith.constant 0 : index
    %c0_121 = arith.constant 0 : index
    %87 = vector.load %arg4[%c0_120, %c0_121] : memref<1152x128xbf16, #tpu.memory_space<vmem>>, vector<1152x128xbf16>
    %cst_122 = arith.constant dense<0.000000e+00> : vector<128x128xf32>
    %88 = tpu.matmul %86, %87, %cst_122 {dimension_numbers = #tpu.dot_dimension_numbers<[1], [0], [0], [1], [0, 0, 1, 1], [], []>} : vector<128x1152xbf16>, vector<1152x128xbf16>, vector<128x128xf32> -> vector<128x128xf32>
    %c0_123 = arith.constant 0 : index
    %c0_124 = arith.constant 0 : index
    %89 = vector.load %arg5[%c0_123, %c0_124] : memref<1x128xf32, #tpu.memory_space<vmem>>, vector<1x128xf32>
    %90 = vector.broadcast %89 : vector<1x128xf32> to vector<128x128xf32>
    %91 = arith.addf %88, %90 : vector<128x128xf32>
    %cst_125 = arith.constant 0.000000e+00 : f32
    %92 = vector.broadcast %cst_125 : f32 to vector<128x128xf32>
    %93 = arith.maximumf %91, %92 : vector<128x128xf32>
    %94 = vector.shape_cast %93 : vector<128x128xf32> to vector<2x8x8x128xf32>
    %c0_126 = arith.constant 0 : index
    %c1_127 = arith.constant 1 : index
    %c8_128 = arith.constant 8 : index
    %c0_129 = arith.constant 0 : index
    %95 = vector.load %arg13[%c0_126, %c1_127, %c8_128, %c0_129] : memref<2x10x24x128xf32, #tpu.memory_space<vmem>>, vector<2x8x8x128xf32>
    tpu.vector_store %arg13[%c0_126, %c1_127, %c8_128, %c0_129], %94 {strides = array<i32>} : memref<2x10x24x128xf32, #tpu.memory_space<vmem>>, vector<2x8x8x128xf32>,
    %c0_130 = arith.constant 0 : index
    %c0_131 = arith.constant 0 : index
    %c7_132 = arith.constant 7 : index
    %c0_133 = arith.constant 0 : index
    %96 = vector.load %arg13[%c0_130, %c0_131, %c7_132, %c0_133] : memref<2x10x24x128xf32, #tpu.memory_space<vmem>>, vector<2x8x8x128xf32>
    %97 = vector.shape_cast %96 : vector<2x8x8x128xf32> to vector<128x128xf32>
    %98 = arith.truncf %97 : vector<128x128xf32> to vector<128x128xbf16>
    %c0_134 = arith.constant 0 : index
    %c0_135 = arith.constant 0 : index
    %99 = vector.load %arg14[%c0_134, %c0_135] : memref<128x1152xbf16, #tpu.memory_space<vmem>>, vector<128x128xbf16>
    tpu.vector_store %arg14[%c0_134, %c0_135], %98 {strides = array<i32>} : memref<128x1152xbf16, #tpu.memory_space<vmem>>, vector<128x128xbf16>,
    %c0_136 = arith.constant 0 : index
    %c0_137 = arith.constant 0 : index
    %c8_138 = arith.constant 8 : index
    %c0_139 = arith.constant 0 : index
    %100 = vector.load %arg13[%c0_136, %c0_137, %c8_138, %c0_139] : memref<2x10x24x128xf32, #tpu.memory_space<vmem>>, vector<2x8x8x128xf32>
    %101 = vector.shape_cast %100 : vector<2x8x8x128xf32> to vector<128x128xf32>
    %102 = arith.truncf %101 : vector<128x128xf32> to vector<128x128xbf16>
    %c0_140 = arith.constant 0 : index
    %c128_141 = arith.constant 128 : index
    %103 = vector.load %arg14[%c0_140, %c128_141] : memref<128x1152xbf16, #tpu.memory_space<vmem>>, vector<128x128xbf16>
    tpu.vector_store %arg14[%c0_140, %c128_141], %102 {strides = array<i32>} : memref<128x1152xbf16, #tpu.memory_space<vmem>>, vector<128x128xbf16>,
    %c0_142 = arith.constant 0 : index
    %c0_143 = arith.constant 0 : index
    %c9_144 = arith.constant 9 : index
    %c0_145 = arith.constant 0 : index
    %104 = vector.load %arg13[%c0_142, %c0_143, %c9_144, %c0_145] : memref<2x10x24x128xf32, #tpu.memory_space<vmem>>, vector<2x8x8x128xf32>
    %105 = vector.shape_cast %104 : vector<2x8x8x128xf32> to vector<128x128xf32>
    %106 = arith.truncf %105 : vector<128x128xf32> to vector<128x128xbf16>
    %c0_146 = arith.constant 0 : index
    %c256_147 = arith.constant 256 : index
    %107 = vector.load %arg14[%c0_146, %c256_147] : memref<128x1152xbf16, #tpu.memory_space<vmem>>, vector<128x128xbf16>
    tpu.vector_store %arg14[%c0_146, %c256_147], %106 {strides = array<i32>} : memref<128x1152xbf16, #tpu.memory_space<vmem>>, vector<128x128xbf16>,
    %c0_148 = arith.constant 0 : index
    %c1_149 = arith.constant 1 : index
    %c7_150 = arith.constant 7 : index
    %c0_151 = arith.constant 0 : index
    %108 = vector.load %arg13[%c0_148, %c1_149, %c7_150, %c0_151] : memref<2x10x24x128xf32, #tpu.memory_space<vmem>>, vector<2x8x8x128xf32>
    %109 = vector.shape_cast %108 : vector<2x8x8x128xf32> to vector<128x128xf32>
    %110 = arith.truncf %109 : vector<128x128xf32> to vector<128x128xbf16>
    %c0_152 = arith.constant 0 : index
    %c384_153 = arith.constant 384 : index
    %111 = vector.load %arg14[%c0_152, %c384_153] : memref<128x1152xbf16, #tpu.memory_space<vmem>>, vector<128x128xbf16>
    tpu.vector_store %arg14[%c0_152, %c384_153], %110 {strides = array<i32>} : memref<128x1152xbf16, #tpu.memory_space<vmem>>, vector<128x128xbf16>,
    %c0_154 = arith.constant 0 : index
    %c1_155 = arith.constant 1 : index
    %c8_156 = arith.constant 8 : index
    %c0_157 = arith.constant 0 : index
    %112 = vector.load %arg13[%c0_154, %c1_155, %c8_156, %c0_157] : memref<2x10x24x128xf32, #tpu.memory_space<vmem>>, vector<2x8x8x128xf32>
    %113 = vector.shape_cast %112 : vector<2x8x8x128xf32> to vector<128x128xf32>
    %114 = arith.truncf %113 : vector<128x128xf32> to vector<128x128xbf16>
    %c0_158 = arith.constant 0 : index
    %c512_159 = arith.constant 512 : index
    %115 = vector.load %arg14[%c0_158, %c512_159] : memref<128x1152xbf16, #tpu.memory_space<vmem>>, vector<128x128xbf16>
    tpu.vector_store %arg14[%c0_158, %c512_159], %114 {strides = array<i32>} : memref<128x1152xbf16, #tpu.memory_space<vmem>>, vector<128x128xbf16>,
    %c0_160 = arith.constant 0 : index
    %c1_161 = arith.constant 1 : index
    %c9_162 = arith.constant 9 : index
    %c0_163 = arith.constant 0 : index
    %116 = vector.load %arg13[%c0_160, %c1_161, %c9_162, %c0_163] : memref<2x10x24x128xf32, #tpu.memory_space<vmem>>, vector<2x8x8x128xf32>
    %117 = vector.shape_cast %116 : vector<2x8x8x128xf32> to vector<128x128xf32>
    %118 = arith.truncf %117 : vector<128x128xf32> to vector<128x128xbf16>
    %c0_164 = arith.constant 0 : index
    %c640_165 = arith.constant 640 : index
    %119 = vector.load %arg14[%c0_164, %c640_165] : memref<128x1152xbf16, #tpu.memory_space<vmem>>, vector<128x128xbf16>
    tpu.vector_store %arg14[%c0_164, %c640_165], %118 {strides = array<i32>} : memref<128x1152xbf16, #tpu.memory_space<vmem>>, vector<128x128xbf16>,
    %c0_166 = arith.constant 0 : index
    %c2_167 = arith.constant 2 : index
    %c7_168 = arith.constant 7 : index
    %c0_169 = arith.constant 0 : index
    %120 = vector.load %arg13[%c0_166, %c2_167, %c7_168, %c0_169] : memref<2x10x24x128xf32, #tpu.memory_space<vmem>>, vector<2x8x8x128xf32>
    %121 = vector.shape_cast %120 : vector<2x8x8x128xf32> to vector<128x128xf32>
    %122 = arith.truncf %121 : vector<128x128xf32> to vector<128x128xbf16>
    %c0_170 = arith.constant 0 : index
    %c768_171 = arith.constant 768 : index
    %123 = vector.load %arg14[%c0_170, %c768_171] : memref<128x1152xbf16, #tpu.memory_space<vmem>>, vector<128x128xbf16>
    tpu.vector_store %arg14[%c0_170, %c768_171], %122 {strides = array<i32>} : memref<128x1152xbf16, #tpu.memory_space<vmem>>, vector<128x128xbf16>,
    %c0_172 = arith.constant 0 : index
    %c2_173 = arith.constant 2 : index
    %c8_174 = arith.constant 8 : index
    %c0_175 = arith.constant 0 : index
    %124 = vector.load %arg13[%c0_172, %c2_173, %c8_174, %c0_175] : memref<2x10x24x128xf32, #tpu.memory_space<vmem>>, vector<2x8x8x128xf32>
    %125 = vector.shape_cast %124 : vector<2x8x8x128xf32> to vector<128x128xf32>
    %126 = arith.truncf %125 : vector<128x128xf32> to vector<128x128xbf16>
    %c0_176 = arith.constant 0 : index
    %c896_177 = arith.constant 896 : index
    %127 = vector.load %arg14[%c0_176, %c896_177] : memref<128x1152xbf16, #tpu.memory_space<vmem>>, vector<128x128xbf16>
    tpu.vector_store %arg14[%c0_176, %c896_177], %126 {strides = array<i32>} : memref<128x1152xbf16, #tpu.memory_space<vmem>>, vector<128x128xbf16>,
    %c0_178 = arith.constant 0 : index
    %c2_179 = arith.constant 2 : index
    %c9_180 = arith.constant 9 : index
    %c0_181 = arith.constant 0 : index
    %128 = vector.load %arg13[%c0_178, %c2_179, %c9_180, %c0_181] : memref<2x10x24x128xf32, #tpu.memory_space<vmem>>, vector<2x8x8x128xf32>
    %129 = vector.shape_cast %128 : vector<2x8x8x128xf32> to vector<128x128xf32>
    %130 = arith.truncf %129 : vector<128x128xf32> to vector<128x128xbf16>
    %c0_182 = arith.constant 0 : index
    %c1024_183 = arith.constant 1024 : index
    %131 = vector.load %arg14[%c0_182, %c1024_183] : memref<128x1152xbf16, #tpu.memory_space<vmem>>, vector<128x128xbf16>
    tpu.vector_store %arg14[%c0_182, %c1024_183], %130 {strides = array<i32>} : memref<128x1152xbf16, #tpu.memory_space<vmem>>, vector<128x128xbf16>,
    %c0_184 = arith.constant 0 : index
    %c0_185 = arith.constant 0 : index
    %132 = vector.load %arg14[%c0_184, %c0_185] : memref<128x1152xbf16, #tpu.memory_space<vmem>>, vector<128x1152xbf16>
    %c0_186 = arith.constant 0 : index
    %c0_187 = arith.constant 0 : index
    %133 = vector.load %arg6[%c0_186, %c0_187] : memref<1152x128xbf16, #tpu.memory_space<vmem>>, vector<1152x128xbf16>
    %cst_188 = arith.constant dense<0.000000e+00> : vector<128x128xf32>
    %134 = tpu.matmul %132, %133, %cst_188 {dimension_numbers = #tpu.dot_dimension_numbers<[1], [0], [0], [1], [0, 0, 1, 1], [], []>} : vector<128x1152xbf16>, vector<1152x128xbf16>, vector<128x128xf32> -> vector<128x128xf32>
    %c0_189 = arith.constant 0 : index
    %c0_190 = arith.constant 0 : index
    %135 = vector.load %arg7[%c0_189, %c0_190] : memref<1x128xf32, #tpu.memory_space<vmem>>, vector<1x128xf32>
    %136 = vector.broadcast %135 : vector<1x128xf32> to vector<128x128xf32>
    %137 = arith.addf %134, %136 : vector<128x128xf32>
    %cst_191 = arith.constant 0.000000e+00 : f32
    %138 = vector.broadcast %cst_191 : f32 to vector<128x128xf32>
    %139 = arith.maximumf %137, %138 : vector<128x128xf32>
    %140 = vector.shape_cast %139 : vector<128x128xf32> to vector<2x8x8x128xf32>
    %c0_192 = arith.constant 0 : index
    %c1_193 = arith.constant 1 : index
    %c8_194 = arith.constant 8 : index
    %c0_195 = arith.constant 0 : index
    %141 = vector.load %arg13[%c0_192, %c1_193, %c8_194, %c0_195] : memref<2x10x24x128xf32, #tpu.memory_space<vmem>>, vector<2x8x8x128xf32>
    tpu.vector_store %arg13[%c0_192, %c1_193, %c8_194, %c0_195], %140 {strides = array<i32>} : memref<2x10x24x128xf32, #tpu.memory_space<vmem>>, vector<2x8x8x128xf32>,
    %c0_196 = arith.constant 0 : index
    %c0_197 = arith.constant 0 : index
    %c7_198 = arith.constant 7 : index
    %c0_199 = arith.constant 0 : index
    %142 = vector.load %arg13[%c0_196, %c0_197, %c7_198, %c0_199] : memref<2x10x24x128xf32, #tpu.memory_space<vmem>>, vector<2x8x8x128xf32>
    %143 = vector.shape_cast %142 : vector<2x8x8x128xf32> to vector<128x128xf32>
    %144 = arith.truncf %143 : vector<128x128xf32> to vector<128x128xbf16>
    %c0_200 = arith.constant 0 : index
    %c0_201 = arith.constant 0 : index
    %145 = vector.load %arg14[%c0_200, %c0_201] : memref<128x1152xbf16, #tpu.memory_space<vmem>>, vector<128x128xbf16>
    tpu.vector_store %arg14[%c0_200, %c0_201], %144 {strides = array<i32>} : memref<128x1152xbf16, #tpu.memory_space<vmem>>, vector<128x128xbf16>,
    %c0_202 = arith.constant 0 : index
    %c0_203 = arith.constant 0 : index
    %c8_204 = arith.constant 8 : index
    %c0_205 = arith.constant 0 : index
    %146 = vector.load %arg13[%c0_202, %c0_203, %c8_204, %c0_205] : memref<2x10x24x128xf32, #tpu.memory_space<vmem>>, vector<2x8x8x128xf32>
    %147 = vector.shape_cast %146 : vector<2x8x8x128xf32> to vector<128x128xf32>
    %148 = arith.truncf %147 : vector<128x128xf32> to vector<128x128xbf16>
    %c0_206 = arith.constant 0 : index
    %c128_207 = arith.constant 128 : index
    %149 = vector.load %arg14[%c0_206, %c128_207] : memref<128x1152xbf16, #tpu.memory_space<vmem>>, vector<128x128xbf16>
    tpu.vector_store %arg14[%c0_206, %c128_207], %148 {strides = array<i32>} : memref<128x1152xbf16, #tpu.memory_space<vmem>>, vector<128x128xbf16>,
    %c0_208 = arith.constant 0 : index
    %c0_209 = arith.constant 0 : index
    %c9_210 = arith.constant 9 : index
    %c0_211 = arith.constant 0 : index
    %150 = vector.load %arg13[%c0_208, %c0_209, %c9_210, %c0_211] : memref<2x10x24x128xf32, #tpu.memory_space<vmem>>, vector<2x8x8x128xf32>
    %151 = vector.shape_cast %150 : vector<2x8x8x128xf32> to vector<128x128xf32>
    %152 = arith.truncf %151 : vector<128x128xf32> to vector<128x128xbf16>
    %c0_212 = arith.constant 0 : index
    %c256_213 = arith.constant 256 : index
    %153 = vector.load %arg14[%c0_212, %c256_213] : memref<128x1152xbf16, #tpu.memory_space<vmem>>, vector<128x128xbf16>
    tpu.vector_store %arg14[%c0_212, %c256_213], %152 {strides = array<i32>} : memref<128x1152xbf16, #tpu.memory_space<vmem>>, vector<128x128xbf16>,
    %c0_214 = arith.constant 0 : index
    %c1_215 = arith.constant 1 : index
    %c7_216 = arith.constant 7 : index
    %c0_217 = arith.constant 0 : index
    %154 = vector.load %arg13[%c0_214, %c1_215, %c7_216, %c0_217] : memref<2x10x24x128xf32, #tpu.memory_space<vmem>>, vector<2x8x8x128xf32>
    %155 = vector.shape_cast %154 : vector<2x8x8x128xf32> to vector<128x128xf32>
    %156 = arith.truncf %155 : vector<128x128xf32> to vector<128x128xbf16>
    %c0_218 = arith.constant 0 : index
    %c384_219 = arith.constant 384 : index
    %157 = vector.load %arg14[%c0_218, %c384_219] : memref<128x1152xbf16, #tpu.memory_space<vmem>>, vector<128x128xbf16>
    tpu.vector_store %arg14[%c0_218, %c384_219], %156 {strides = array<i32>} : memref<128x1152xbf16, #tpu.memory_space<vmem>>, vector<128x128xbf16>,
    %c0_220 = arith.constant 0 : index
    %c1_221 = arith.constant 1 : index
    %c8_222 = arith.constant 8 : index
    %c0_223 = arith.constant 0 : index
    %158 = vector.load %arg13[%c0_220, %c1_221, %c8_222, %c0_223] : memref<2x10x24x128xf32, #tpu.memory_space<vmem>>, vector<2x8x8x128xf32>
    %159 = vector.shape_cast %158 : vector<2x8x8x128xf32> to vector<128x128xf32>
    %160 = arith.truncf %159 : vector<128x128xf32> to vector<128x128xbf16>
    %c0_224 = arith.constant 0 : index
    %c512_225 = arith.constant 512 : index
    %161 = vector.load %arg14[%c0_224, %c512_225] : memref<128x1152xbf16, #tpu.memory_space<vmem>>, vector<128x128xbf16>
    tpu.vector_store %arg14[%c0_224, %c512_225], %160 {strides = array<i32>} : memref<128x1152xbf16, #tpu.memory_space<vmem>>, vector<128x128xbf16>,
    %c0_226 = arith.constant 0 : index
    %c1_227 = arith.constant 1 : index
    %c9_228 = arith.constant 9 : index
    %c0_229 = arith.constant 0 : index
    %162 = vector.load %arg13[%c0_226, %c1_227, %c9_228, %c0_229] : memref<2x10x24x128xf32, #tpu.memory_space<vmem>>, vector<2x8x8x128xf32>
    %163 = vector.shape_cast %162 : vector<2x8x8x128xf32> to vector<128x128xf32>
    %164 = arith.truncf %163 : vector<128x128xf32> to vector<128x128xbf16>
    %c0_230 = arith.constant 0 : index
    %c640_231 = arith.constant 640 : index
    %165 = vector.load %arg14[%c0_230, %c640_231] : memref<128x1152xbf16, #tpu.memory_space<vmem>>, vector<128x128xbf16>
    tpu.vector_store %arg14[%c0_230, %c640_231], %164 {strides = array<i32>} : memref<128x1152xbf16, #tpu.memory_space<vmem>>, vector<128x128xbf16>,
    %c0_232 = arith.constant 0 : index
    %c2_233 = arith.constant 2 : index
    %c7_234 = arith.constant 7 : index
    %c0_235 = arith.constant 0 : index
    %166 = vector.load %arg13[%c0_232, %c2_233, %c7_234, %c0_235] : memref<2x10x24x128xf32, #tpu.memory_space<vmem>>, vector<2x8x8x128xf32>
    %167 = vector.shape_cast %166 : vector<2x8x8x128xf32> to vector<128x128xf32>
    %168 = arith.truncf %167 : vector<128x128xf32> to vector<128x128xbf16>
    %c0_236 = arith.constant 0 : index
    %c768_237 = arith.constant 768 : index
    %169 = vector.load %arg14[%c0_236, %c768_237] : memref<128x1152xbf16, #tpu.memory_space<vmem>>, vector<128x128xbf16>
    tpu.vector_store %arg14[%c0_236, %c768_237], %168 {strides = array<i32>} : memref<128x1152xbf16, #tpu.memory_space<vmem>>, vector<128x128xbf16>,
    %c0_238 = arith.constant 0 : index
    %c2_239 = arith.constant 2 : index
    %c8_240 = arith.constant 8 : index
    %c0_241 = arith.constant 0 : index
    %170 = vector.load %arg13[%c0_238, %c2_239, %c8_240, %c0_241] : memref<2x10x24x128xf32, #tpu.memory_space<vmem>>, vector<2x8x8x128xf32>
    %171 = vector.shape_cast %170 : vector<2x8x8x128xf32> to vector<128x128xf32>
    %172 = arith.truncf %171 : vector<128x128xf32> to vector<128x128xbf16>
    %c0_242 = arith.constant 0 : index
    %c896_243 = arith.constant 896 : index
    %173 = vector.load %arg14[%c0_242, %c896_243] : memref<128x1152xbf16, #tpu.memory_space<vmem>>, vector<128x128xbf16>
    tpu.vector_store %arg14[%c0_242, %c896_243], %172 {strides = array<i32>} : memref<128x1152xbf16, #tpu.memory_space<vmem>>, vector<128x128xbf16>,
    %c0_244 = arith.constant 0 : index
    %c2_245 = arith.constant 2 : index
    %c9_246 = arith.constant 9 : index
    %c0_247 = arith.constant 0 : index
    %174 = vector.load %arg13[%c0_244, %c2_245, %c9_246, %c0_247] : memref<2x10x24x128xf32, #tpu.memory_space<vmem>>, vector<2x8x8x128xf32>
    %175 = vector.shape_cast %174 : vector<2x8x8x128xf32> to vector<128x128xf32>
    %176 = arith.truncf %175 : vector<128x128xf32> to vector<128x128xbf16>
    %c0_248 = arith.constant 0 : index
    %c1024_249 = arith.constant 1024 : index
    %177 = vector.load %arg14[%c0_248, %c1024_249] : memref<128x1152xbf16, #tpu.memory_space<vmem>>, vector<128x128xbf16>
    tpu.vector_store %arg14[%c0_248, %c1024_249], %176 {strides = array<i32>} : memref<128x1152xbf16, #tpu.memory_space<vmem>>, vector<128x128xbf16>,
    %c0_250 = arith.constant 0 : index
    %c0_251 = arith.constant 0 : index
    %178 = vector.load %arg14[%c0_250, %c0_251] : memref<128x1152xbf16, #tpu.memory_space<vmem>>, vector<128x1152xbf16>
    %c0_252 = arith.constant 0 : index
    %c0_253 = arith.constant 0 : index
    %179 = vector.load %arg8[%c0_252, %c0_253] : memref<1152x128xbf16, #tpu.memory_space<vmem>>, vector<1152x128xbf16>
    %cst_254 = arith.constant dense<0.000000e+00> : vector<128x128xf32>
    %180 = tpu.matmul %178, %179, %cst_254 {dimension_numbers = #tpu.dot_dimension_numbers<[1], [0], [0], [1], [0, 0, 1, 1], [], []>} : vector<128x1152xbf16>, vector<1152x128xbf16>, vector<128x128xf32> -> vector<128x128xf32>
    %c0_255 = arith.constant 0 : index
    %c0_256 = arith.constant 0 : index
    %181 = vector.load %arg9[%c0_255, %c0_256] : memref<1x128xf32, #tpu.memory_space<vmem>>, vector<1x128xf32>
    %182 = vector.broadcast %181 : vector<1x128xf32> to vector<128x128xf32>
    %183 = arith.addf %180, %182 : vector<128x128xf32>
    %cst_257 = arith.constant 0.000000e+00 : f32
    %184 = vector.broadcast %cst_257 : f32 to vector<128x128xf32>
    %185 = arith.maximumf %183, %184 : vector<128x128xf32>
    %186 = vector.shape_cast %185 : vector<128x128xf32> to vector<2x8x8x128xf32>
    %c0_258 = arith.constant 0 : index
    %c1_259 = arith.constant 1 : index
    %c8_260 = arith.constant 8 : index
    %c0_261 = arith.constant 0 : index
    %187 = vector.load %arg13[%c0_258, %c1_259, %c8_260, %c0_261] : memref<2x10x24x128xf32, #tpu.memory_space<vmem>>, vector<2x8x8x128xf32>
    tpu.vector_store %arg13[%c0_258, %c1_259, %c8_260, %c0_261], %186 {strides = array<i32>} : memref<2x10x24x128xf32, #tpu.memory_space<vmem>>, vector<2x8x8x128xf32>,
    %c0_262 = arith.constant 0 : index
    %c0_263 = arith.constant 0 : index
    %c7_264 = arith.constant 7 : index
    %c0_265 = arith.constant 0 : index
    %188 = vector.load %arg13[%c0_262, %c0_263, %c7_264, %c0_265] : memref<2x10x24x128xf32, #tpu.memory_space<vmem>>, vector<2x8x8x128xf32>
    %189 = vector.shape_cast %188 : vector<2x8x8x128xf32> to vector<128x128xf32>
    %190 = arith.truncf %189 : vector<128x128xf32> to vector<128x128xbf16>
    %c0_266 = arith.constant 0 : index
    %c0_267 = arith.constant 0 : index
    %191 = vector.load %arg14[%c0_266, %c0_267] : memref<128x1152xbf16, #tpu.memory_space<vmem>>, vector<128x128xbf16>
    tpu.vector_store %arg14[%c0_266, %c0_267], %190 {strides = array<i32>} : memref<128x1152xbf16, #tpu.memory_space<vmem>>, vector<128x128xbf16>,
    %c0_268 = arith.constant 0 : index
    %c0_269 = arith.constant 0 : index
    %c8_270 = arith.constant 8 : index
    %c0_271 = arith.constant 0 : index
    %192 = vector.load %arg13[%c0_268, %c0_269, %c8_270, %c0_271] : memref<2x10x24x128xf32, #tpu.memory_space<vmem>>, vector<2x8x8x128xf32>
    %193 = vector.shape_cast %192 : vector<2x8x8x128xf32> to vector<128x128xf32>
    %194 = arith.truncf %193 : vector<128x128xf32> to vector<128x128xbf16>
    %c0_272 = arith.constant 0 : index
    %c128_273 = arith.constant 128 : index
    %195 = vector.load %arg14[%c0_272, %c128_273] : memref<128x1152xbf16, #tpu.memory_space<vmem>>, vector<128x128xbf16>
    tpu.vector_store %arg14[%c0_272, %c128_273], %194 {strides = array<i32>} : memref<128x1152xbf16, #tpu.memory_space<vmem>>, vector<128x128xbf16>,
    %c0_274 = arith.constant 0 : index
    %c0_275 = arith.constant 0 : index
    %c9_276 = arith.constant 9 : index
    %c0_277 = arith.constant 0 : index
    %196 = vector.load %arg13[%c0_274, %c0_275, %c9_276, %c0_277] : memref<2x10x24x128xf32, #tpu.memory_space<vmem>>, vector<2x8x8x128xf32>
    %197 = vector.shape_cast %196 : vector<2x8x8x128xf32> to vector<128x128xf32>
    %198 = arith.truncf %197 : vector<128x128xf32> to vector<128x128xbf16>
    %c0_278 = arith.constant 0 : index
    %c256_279 = arith.constant 256 : index
    %199 = vector.load %arg14[%c0_278, %c256_279] : memref<128x1152xbf16, #tpu.memory_space<vmem>>, vector<128x128xbf16>
    tpu.vector_store %arg14[%c0_278, %c256_279], %198 {strides = array<i32>} : memref<128x1152xbf16, #tpu.memory_space<vmem>>, vector<128x128xbf16>,
    %c0_280 = arith.constant 0 : index
    %c1_281 = arith.constant 1 : index
    %c7_282 = arith.constant 7 : index
    %c0_283 = arith.constant 0 : index
    %200 = vector.load %arg13[%c0_280, %c1_281, %c7_282, %c0_283] : memref<2x10x24x128xf32, #tpu.memory_space<vmem>>, vector<2x8x8x128xf32>
    %201 = vector.shape_cast %200 : vector<2x8x8x128xf32> to vector<128x128xf32>
    %202 = arith.truncf %201 : vector<128x128xf32> to vector<128x128xbf16>
    %c0_284 = arith.constant 0 : index
    %c384_285 = arith.constant 384 : index
    %203 = vector.load %arg14[%c0_284, %c384_285] : memref<128x1152xbf16, #tpu.memory_space<vmem>>, vector<128x128xbf16>
    tpu.vector_store %arg14[%c0_284, %c384_285], %202 {strides = array<i32>} : memref<128x1152xbf16, #tpu.memory_space<vmem>>, vector<128x128xbf16>,
    %c0_286 = arith.constant 0 : index
    %c1_287 = arith.constant 1 : index
    %c8_288 = arith.constant 8 : index
    %c0_289 = arith.constant 0 : index
    %204 = vector.load %arg13[%c0_286, %c1_287, %c8_288, %c0_289] : memref<2x10x24x128xf32, #tpu.memory_space<vmem>>, vector<2x8x8x128xf32>
    %205 = vector.shape_cast %204 : vector<2x8x8x128xf32> to vector<128x128xf32>
    %206 = arith.truncf %205 : vector<128x128xf32> to vector<128x128xbf16>
    %c0_290 = arith.constant 0 : index
    %c512_291 = arith.constant 512 : index
    %207 = vector.load %arg14[%c0_290, %c512_291] : memref<128x1152xbf16, #tpu.memory_space<vmem>>, vector<128x128xbf16>
    tpu.vector_store %arg14[%c0_290, %c512_291], %206 {strides = array<i32>} : memref<128x1152xbf16, #tpu.memory_space<vmem>>, vector<128x128xbf16>,
    %c0_292 = arith.constant 0 : index
    %c1_293 = arith.constant 1 : index
    %c9_294 = arith.constant 9 : index
    %c0_295 = arith.constant 0 : index
    %208 = vector.load %arg13[%c0_292, %c1_293, %c9_294, %c0_295] : memref<2x10x24x128xf32, #tpu.memory_space<vmem>>, vector<2x8x8x128xf32>
    %209 = vector.shape_cast %208 : vector<2x8x8x128xf32> to vector<128x128xf32>
    %210 = arith.truncf %209 : vector<128x128xf32> to vector<128x128xbf16>
    %c0_296 = arith.constant 0 : index
    %c640_297 = arith.constant 640 : index
    %211 = vector.load %arg14[%c0_296, %c640_297] : memref<128x1152xbf16, #tpu.memory_space<vmem>>, vector<128x128xbf16>
    tpu.vector_store %arg14[%c0_296, %c640_297], %210 {strides = array<i32>} : memref<128x1152xbf16, #tpu.memory_space<vmem>>, vector<128x128xbf16>,
    %c0_298 = arith.constant 0 : index
    %c2_299 = arith.constant 2 : index
    %c7_300 = arith.constant 7 : index
    %c0_301 = arith.constant 0 : index
    %212 = vector.load %arg13[%c0_298, %c2_299, %c7_300, %c0_301] : memref<2x10x24x128xf32, #tpu.memory_space<vmem>>, vector<2x8x8x128xf32>
    %213 = vector.shape_cast %212 : vector<2x8x8x128xf32> to vector<128x128xf32>
    %214 = arith.truncf %213 : vector<128x128xf32> to vector<128x128xbf16>
    %c0_302 = arith.constant 0 : index
    %c768_303 = arith.constant 768 : index
    %215 = vector.load %arg14[%c0_302, %c768_303] : memref<128x1152xbf16, #tpu.memory_space<vmem>>, vector<128x128xbf16>
    tpu.vector_store %arg14[%c0_302, %c768_303], %214 {strides = array<i32>} : memref<128x1152xbf16, #tpu.memory_space<vmem>>, vector<128x128xbf16>,
    %c0_304 = arith.constant 0 : index
    %c2_305 = arith.constant 2 : index
    %c8_306 = arith.constant 8 : index
    %c0_307 = arith.constant 0 : index
    %216 = vector.load %arg13[%c0_304, %c2_305, %c8_306, %c0_307] : memref<2x10x24x128xf32, #tpu.memory_space<vmem>>, vector<2x8x8x128xf32>
    %217 = vector.shape_cast %216 : vector<2x8x8x128xf32> to vector<128x128xf32>
    %218 = arith.truncf %217 : vector<128x128xf32> to vector<128x128xbf16>
    %c0_308 = arith.constant 0 : index
    %c896_309 = arith.constant 896 : index
    %219 = vector.load %arg14[%c0_308, %c896_309] : memref<128x1152xbf16, #tpu.memory_space<vmem>>, vector<128x128xbf16>
    tpu.vector_store %arg14[%c0_308, %c896_309], %218 {strides = array<i32>} : memref<128x1152xbf16, #tpu.memory_space<vmem>>, vector<128x128xbf16>,
    %c0_310 = arith.constant 0 : index
    %c2_311 = arith.constant 2 : index
    %c9_312 = arith.constant 9 : index
    %c0_313 = arith.constant 0 : index
    %220 = vector.load %arg13[%c0_310, %c2_311, %c9_312, %c0_313] : memref<2x10x24x128xf32, #tpu.memory_space<vmem>>, vector<2x8x8x128xf32>
    %221 = vector.shape_cast %220 : vector<2x8x8x128xf32> to vector<128x128xf32>
    %222 = arith.truncf %221 : vector<128x128xf32> to vector<128x128xbf16>
    %c0_314 = arith.constant 0 : index
    %c1024_315 = arith.constant 1024 : index
    %223 = vector.load %arg14[%c0_314, %c1024_315] : memref<128x1152xbf16, #tpu.memory_space<vmem>>, vector<128x128xbf16>
    tpu.vector_store %arg14[%c0_314, %c1024_315], %222 {strides = array<i32>} : memref<128x1152xbf16, #tpu.memory_space<vmem>>, vector<128x128xbf16>,
    %c0_316 = arith.constant 0 : index
    %c0_317 = arith.constant 0 : index
    %224 = vector.load %arg14[%c0_316, %c0_317] : memref<128x1152xbf16, #tpu.memory_space<vmem>>, vector<128x1152xbf16>
    %c0_318 = arith.constant 0 : index
    %c0_319 = arith.constant 0 : index
    %225 = vector.load %arg10[%c0_318, %c0_319] : memref<1152x256xbf16, #tpu.memory_space<vmem>>, vector<1152x256xbf16>
    %cst_320 = arith.constant dense<0.000000e+00> : vector<128x256xf32>
    %226 = tpu.matmul %224, %225, %cst_320 {dimension_numbers = #tpu.dot_dimension_numbers<[1], [0], [0], [1], [0, 0, 1, 1], [], []>} : vector<128x1152xbf16>, vector<1152x256xbf16>, vector<128x256xf32> -> vector<128x256xf32>
    %c0_321 = arith.constant 0 : index
    %c0_322 = arith.constant 0 : index
    %227 = vector.load %arg11[%c0_321, %c0_322] : memref<1x256xf32, #tpu.memory_space<vmem>>, vector<1x256xf32>
    %228 = vector.broadcast %227 : vector<1x256xf32> to vector<128x256xf32>
    %229 = arith.addf %226, %228 : vector<128x256xf32>
    %230 = vector.shape_cast %229 : vector<128x256xf32> to vector<2x64x256xf32>
    %c0_323 = arith.constant 0 : index
    %c0_324 = arith.constant 0 : index
    %c0_325 = arith.constant 0 : index
    %231 = vector.load %arg12[%c0_323, %c0_324, %c0_325] : memref<2x64x256xf32, #tpu.memory_space<vmem>>, vector<2x64x256xf32>
    tpu.vector_store %arg12[%c0_323, %c0_324, %c0_325], %230 {strides = array<i32>} : memref<2x64x256xf32, #tpu.memory_space<vmem>>, vector<2x64x256xf32>,
    return
  }
  func.func @transform_0(%arg0: i32) -> (i32, i32, i32, i32) {
    %c0_i32 = arith.constant 0 : i32
    %c0_i32_0 = arith.constant 0 : i32
    %c0_i32_1 = arith.constant 0 : i32
    %c0_i32_2 = arith.constant 0 : i32
    %c0_i32_3 = arith.constant 0 : i32
    return %c0_i32, %c0_i32_0, %c0_i32_1, %c0_i32_2 : i32, i32, i32, i32
  }
  func.func @transform_1(%arg0: i32) -> (i32, i32) {
    %c0_i32 = arith.constant 0 : i32
    %c0_i32_0 = arith.constant 0 : i32
    %c0_i32_1 = arith.constant 0 : i32
    return %c0_i32, %c0_i32_0 : i32, i32
  }
  func.func @transform_2(%arg0: i32) -> (i32, i32) {
    %c0_i32 = arith.constant 0 : i32
    %c0_i32_0 = arith.constant 0 : i32
    %c0_i32_1 = arith.constant 0 : i32
    return %c0_i32, %c0_i32_0 : i32, i32
  }
  func.func @transform_3(%arg0: i32) -> (i32, i32) {
    %c0_i32 = arith.constant 0 : i32
    %c0_i32_0 = arith.constant 0 : i32
    %c0_i32_1 = arith.constant 0 : i32
    return %c0_i32, %c0_i32_0 : i32, i32
  }
  func.func @transform_4(%arg0: i32) -> (i32, i32) {
    %c0_i32 = arith.constant 0 : i32
    %c0_i32_0 = arith.constant 0 : i32
    %c0_i32_1 = arith.constant 0 : i32
    return %c0_i32, %c0_i32_0 : i32, i32
  }
  func.func @transform_5(%arg0: i32) -> (i32, i32) {
    %c0_i32 = arith.constant 0 : i32
    %c0_i32_0 = arith.constant 0 : i32
    %c0_i32_1 = arith.constant 0 : i32
    return %c0_i32, %c0_i32_0 : i32, i32
  }
  func.func @transform_6(%arg0: i32) -> (i32, i32) {
    %c0_i32 = arith.constant 0 : i32
    %c0_i32_0 = arith.constant 0 : i32
    %c0_i32_1 = arith.constant 0 : i32
    return %c0_i32, %c0_i32_0 : i32, i32
  }
  func.func @transform_7(%arg0: i32) -> (i32, i32) {
    %c0_i32 = arith.constant 0 : i32
    %c0_i32_0 = arith.constant 0 : i32
    %c0_i32_1 = arith.constant 0 : i32
    return %c0_i32, %c0_i32_0 : i32, i32
  }
  func.func @transform_8(%arg0: i32) -> (i32, i32) {
    %c0_i32 = arith.constant 0 : i32
    %c0_i32_0 = arith.constant 0 : i32
    %c0_i32_1 = arith.constant 0 : i32
    return %c0_i32, %c0_i32_0 : i32, i32
  }
  func.func @transform_9(%arg0: i32) -> (i32, i32) {
    %c0_i32 = arith.constant 0 : i32
    %c0_i32_0 = arith.constant 0 : i32
    %c0_i32_1 = arith.constant 0 : i32
    return %c0_i32, %c0_i32_0 : i32, i32
  }
  func.func @transform_10(%arg0: i32) -> (i32, i32) {
    %c0_i32 = arith.constant 0 : i32
    %c0_i32_0 = arith.constant 0 : i32
    %c0_i32_1 = arith.constant 0 : i32
    return %c0_i32, %c0_i32_0 : i32, i32
  }
  func.func @transform_11(%arg0: i32) -> (i32, i32, i32) {
    %c0_i32 = arith.constant 0 : i32
    %c0_i32_0 = arith.constant 0 : i32
    %c0_i32_1 = arith.constant 0 : i32
    %c0_i32_2 = arith.constant 0 : i32
    return %c0_i32, %c0_i32_0, %c0_i32_1 : i32, i32, i32
  }
}

</mosaic_0001>

<llo_original>
// kernel: koundinya2d_forward.1
$region0: #{koundinya2d_forward.1}
  #allocation0 [shape = 'u32[]', space=smem, size = 0x4, offset = 0x4, fixed_abs, tag = 'smem constant byte address 0x4 - core index']
  #allocation1 [shape = 'u32[144,128]{1,0:T(1,128)}', space=vmem, size = 0x12000, scoped, tag = 'internal scratch']
  #allocation2 [shape = 'f32[2,10,24,128]{3,2,1,0:T(8,128)}', space=vmem, size = 0x3c000, scoped, tag = 'scratch operand']
  #allocation3 [shape = 'bf16[128,1152]{1,0:T(16,128)(2,1)}', space=vmem, size = 0x48000, scoped, tag = 'scratch operand']
  %s0 = inlined_call_operand.vmem [shape: f32[2,8,8,128], index: 0, kind: input, shape index: {}]
  %s1 = inlined_call_operand.hbm [shape: bf16[1152,128], index: 1, kind: input, shape index: {}]
  %s2 = inlined_call_operand.vmem [shape: f32[1,128], index: 2, kind: input, shape index: {}]
  %s3 = inlined_call_operand.hbm [shape: bf16[1152,128], index: 3, kind: input, shape index: {}]
  %s4 = inlined_call_operand.vmem [shape: f32[1,128], index: 4, kind: input, shape index: {}]
  %s5 = inlined_call_operand.hbm [shape: bf16[1152,128], index: 5, kind: input, shape index: {}]
  %s6 = inlined_call_operand.vmem [shape: f32[1,128], index: 6, kind: input, shape index: {}]
  %s7 = inlined_call_operand.hbm [shape: bf16[1152,128], index: 7, kind: input, shape index: {}]
  %s8 = inlined_call_operand.vmem [shape: f32[1,128], index: 8, kind: input, shape index: {}]
  %s9 = inlined_call_operand.hbm [shape: bf16[1152,256], index: 9, kind: input, shape index: {}]
  %s10 = inlined_call_operand.vmem [shape: f32[1,256], index: 10, kind: input, shape index: {}]
  %s11 = inlined_call_operand.vmem [shape: f32[2,64,256], index: 11, kind: output, shape index: {}]
  %s12 = sld [smem:[#allocation0]]
  $region74: #{koundinya2d_forward.1} parent=0
    _
  %s14 = ssub.s32 1, %s12
  %s15 = scalar_select 0, %s14, %s12
  $region1: #{koundinya2d_forward.1} parent=0
    #allocation4 [shape = 'u8[294912]{0}', space=vmem, size = 0x48000, scoped, tag = 'input window, operand 1, single buffered']
    #allocation5 [shape = 's32[1]{0}', space=sflag, size = 0x4, scoped, tag = 'scoped memory for koundinya2d_forward.1']
    #allocation6 [shape = 'u8[294912]{0}', space=vmem, size = 0x48000, scoped, tag = 'input window, operand 3, single buffered']
    #allocation7 [shape = 's32[1]{0}', space=sflag, size = 0x4, scoped, tag = 'scoped memory for koundinya2d_forward.1']
    #allocation8 [shape = 'u8[294912]{0}', space=vmem, size = 0x48000, scoped, tag = 'input window, operand 5, single buffered']
    #allocation9 [shape = 'u8[294912]{0}', space=vmem, size = 0x48000, scoped, tag = 'input window, operand 7, single buffered']
    #allocation10 [shape = 's32[1]{0}', space=sflag, size = 0x4, scoped, tag = 'scoped memory for koundinya2d_forward.1']
    #allocation11 [shape = 'u8[589824]{0}', space=vmem, size = 0x90000, scoped, tag = 'input window, operand 9, single buffered']
    %16 = vsyncpa [#allocation5], 0
    %17 = vsyncpa [#allocation7], 0
    %18 = vsyncpa [#allocation10], 0
    // Predicated region
    $region2: #{koundinya2d_forward.1} parent=1 // pred_check
      _
    $region3: #{koundinya2d_forward.1} parent=1 // pred_check_branch
      %20 = sbr.rel (0) target = $region5
    $region4: #{koundinya2d_forward.1} parent=1 // pred_region
      _
    $region5: #{koundinya2d_forward.1} parent=1 // pred_fallthru
      _
    // Predicated region
    $region6: #{koundinya2d_forward.1} parent=1 // pred_check
      _
    $region7: #{koundinya2d_forward.1} parent=1 // pred_check_branch
      %22 = sbr.rel (0) target = $region9
    $region8: #{koundinya2d_forward.1} parent=1 // pred_region
      %s24 = ssub.s32 9216, 9216
      %25 = vsyncadd [#allocation5], %s24
      %s26 = sshll.u32 [#allocation4], 4
      %s27 = int_to_ptr.vmem [resolvable:$true] %s26
      %32 = dma.hbm_to_vmem [thread:$0]  %s1, 9216, %s27, [#allocation5], 64, 64, 4
    $region9: #{koundinya2d_forward.1} parent=1 // pred_fallthru
      _
    // Predicated region
    $region10: #{koundinya2d_forward.1} parent=1 // pred_check
      _
    $region11: #{koundinya2d_forward.1} parent=1 // pred_check_branch
      %34 = sbr.rel (0) target = $region13
    $region12: #{koundinya2d_forward.1} parent=1 // pred_region
      _
    $region13: #{koundinya2d_forward.1} parent=1 // pred_fallthru
      _
    // Predicated region
    $region14: #{koundinya2d_forward.1} parent=1 // pred_check
      _
    $region15: #{koundinya2d_forward.1} parent=1 // pred_check_branch
      %36 = sbr.rel (0) target = $region17
    $region16: #{koundinya2d_forward.1} parent=1 // pred_region
      %s38 = ssub.s32 9216, 9216
      %39 = vsyncadd [#allocation7], %s38
      %s40 = sshll.u32 [#allocation6], 4
      %s41 = int_to_ptr.vmem [resolvable:$true] %s40
      %46 = dma.hbm_to_vmem [thread:$0]  %s3, 9216, %s41, [#allocation7], 64, 64, 4
    $region17: #{koundinya2d_forward.1} parent=1 // pred_fallthru
      _
    // Predicated region
    $region18: #{koundinya2d_forward.1} parent=1 // pred_check
      _
    $region19: #{koundinya2d_forward.1} parent=1 // pred_check_branch
      %48 = sbr.rel (0) target = $region21
    $region20: #{koundinya2d_forward.1} parent=1 // pred_region
      _
    $region21: #{koundinya2d_forward.1} parent=1 // pred_fallthru
      _
    // Predicated region
    $region22: #{koundinya2d_forward.1} parent=1 // pred_check
      _
    $region23: #{koundinya2d_forward.1} parent=1 // pred_check_branch
      %50 = sbr.rel (0) target = $region25
    $region24: #{koundinya2d_forward.1} parent=1 // pred_region
      %s52 = ssub.s32 9216, 9216
      %53 = vsyncadd [#allocation7], %s52
      %s54 = sshll.u32 [#allocation8], 4
      %s55 = int_to_ptr.vmem [resolvable:$true] %s54
      %60 = dma.hbm_to_vmem [thread:$0]  %s5, 9216, %s55, [#allocation7], 64, 64, 4
    $region25: #{koundinya2d_forward.1} parent=1 // pred_fallthru
      _
    // Predicated region
    $region26: #{koundinya2d_forward.1} parent=1 // pred_check
      _
    $region27: #{koundinya2d_forward.1} parent=1 // pred_check_branch
      %62 = sbr.rel (0) target = $region29
    $region28: #{koundinya2d_forward.1} parent=1 // pred_region
      _
    $region29: #{koundinya2d_forward.1} parent=1 // pred_fallthru
      _
    // Predicated region
    $region30: #{koundinya2d_forward.1} parent=1 // pred_check
      _
    $region31: #{koundinya2d_forward.1} parent=1 // pred_check_branch
      %64 = sbr.rel (0) target = $region33
    $region32: #{koundinya2d_forward.1} parent=1 // pred_region
      %s66 = ssub.s32 9216, 9216
      %67 = vsyncadd [#allocation10], %s66
      %s68 = sshll.u32 [#allocation9], 4
      %s69 = int_to_ptr.vmem [resolvable:$true] %s68
      %74 = dma.hbm_to_vmem [thread:$0]  %s7, 9216, %s69, [#allocation10], 64, 64, 4
    $region33: #{koundinya2d_forward.1} parent=1 // pred_fallthru
      _
    // Predicated region
    $region34: #{koundinya2d_forward.1} parent=1 // pred_check
      _
    $region35: #{koundinya2d_forward.1} parent=1 // pred_check_branch
      %76 = sbr.rel (0) target = $region37
    $region36: #{koundinya2d_forward.1} parent=1 // pred_region
      _
    $region37: #{koundinya2d_forward.1} parent=1 // pred_fallthru
      _
    // Predicated region
    $region38: #{koundinya2d_forward.1} parent=1 // pred_check
      _
    $region39: #{koundinya2d_forward.1} parent=1 // pred_check_branch
      %78 = sbr.rel (0) target = $region41
    $region40: #{koundinya2d_forward.1} parent=1 // pred_region
      %s80 = ssub.s32 18432, 18432
      %81 = vsyncadd [#allocation10], %s80
      %s82 = sshll.u32 [#allocation11], 4
      %s83 = int_to_ptr.vmem [resolvable:$true] %s82
      %88 = dma.hbm_to_vmem [thread:$0]  %s9, 18432, %s83, [#allocation10], 128, 128, 8
    $region41: #{koundinya2d_forward.1} parent=1 // pred_fallthru
      _
    // Predicated region
    $region42: #{koundinya2d_forward.1} parent=1 // pred_check
      _
    $region43: #{koundinya2d_forward.1} parent=1 // pred_check_branch
      %90 = sbr.rel (0) target = $region45
    $region44: #{koundinya2d_forward.1} parent=1 // pred_region
      _
    $region45: #{koundinya2d_forward.1} parent=1 // pred_fallthru
      _
    // Predicated region
    $region46: #{koundinya2d_forward.1} parent=1 // pred_check
      _
    $region47: #{koundinya2d_forward.1} parent=1 // pred_check_branch
      %92 = sbr.rel (0) target = $region49
    $region48: #{koundinya2d_forward.1} parent=1 // pred_region
      %93 = dma.done [#allocation5], 9216
    $region49: #{koundinya2d_forward.1} parent=1 // pred_fallthru
      _
    // Predicated region
    $region50: #{koundinya2d_forward.1} parent=1 // pred_check
      _
    $region51: #{koundinya2d_forward.1} parent=1 // pred_check_branch
      %95 = sbr.rel (0) target = $region53
    $region52: #{koundinya2d_forward.1} parent=1 // pred_region
      %96 = dma.done [#allocation7], 9216
    $region53: #{koundinya2d_forward.1} parent=1 // pred_fallthru
      _
    // Predicated region
    $region54: #{koundinya2d_forward.1} parent=1 // pred_check
      _
    $region55: #{koundinya2d_forward.1} parent=1 // pred_check_branch
      %98 = sbr.rel (0) target = $region57
    $region56: #{koundinya2d_forward.1} parent=1 // pred_region
      %99 = dma.done [#allocation7], 9216
    $region57: #{koundinya2d_forward.1} parent=1 // pred_fallthru
      _
    // Predicated region
    $region58: #{koundinya2d_forward.1} parent=1 // pred_check
      _
    $region59: #{koundinya2d_forward.1} parent=1 // pred_check_branch
      %101 = sbr.rel (0) target = $region61
    $region60: #{koundinya2d_forward.1} parent=1 // pred_region
      %102 = dma.done [#allocation10], 9216
    $region61: #{koundinya2d_forward.1} parent=1 // pred_fallthru
      _
    // Predicated region
    $region62: #{koundinya2d_forward.1} parent=1 // pred_check
      _
    $region63: #{koundinya2d_forward.1} parent=1 // pred_check_branch
      %104 = sbr.rel (0) target = $region65
    $region64: #{koundinya2d_forward.1} parent=1 // pred_region
      %105 = dma.done [#allocation10], 18432
    $region65: #{koundinya2d_forward.1} parent=1 // pred_fallthru
      _
    %107 = vst [vmem:[#allocation2] sm:$0xff] 0.0
    %108 = vst [vmem:[#allocation2 + $0x8] sm:$0xff] 0.0
    %109 = vst [vmem:[#allocation2 + $0x10] sm:$0xff] 0.0
    %110 = vst [vmem:[#allocation2 + $0x18] sm:$0xff] 0.0
    %111 = vst [vmem:[#allocation2 + $0x20] sm:$0xff] 0.0
    %112 = vst [vmem:[#allocation2 + $0x28] sm:$0xff] 0.0
    %113 = vst [vmem:[#allocation2 + $0x30] sm:$0xff] 0.0
    %114 = vst [vmem:[#allocation2 + $0x38] sm:$0xff] 0.0
    %115 = vst [vmem:[#allocation2 + $0x40] sm:$0xff] 0.0
    %116 = vst [vmem:[#allocation2 + $0x48] sm:$0xff] 0.0
    %117 = vst [vmem:[#allocation2 + $0x50] sm:$0xff] 0.0
    %118 = vst [vmem:[#allocation2 + $0x58] sm:$0xff] 0.0
    %119 = vst [vmem:[#allocation2 + $0x60] sm:$0xff] 0.0
    %120 = vst [vmem:[#allocation2 + $0x68] sm:$0xff] 0.0
    %121 = vst [vmem:[#allocation2 + $0x70] sm:$0xff] 0.0
    %122 = vst [vmem:[#allocation2 + $0x78] sm:$0xff] 0.0
    %123 = vst [vmem:[#allocation2 + $0x80] sm:$0xff] 0.0
    %124 = vst [vmem:[#allocation2 + $0x88] sm:$0xff] 0.0
    %125 = vst [vmem:[#allocation2 + $0x90] sm:$0xff] 0.0
    %126 = vst [vmem:[#allocation2 + $0x98] sm:$0xff] 0.0
    %127 = vst [vmem:[#allocation2 + $0xa0] sm:$0xff] 0.0
    %128 = vst [vmem:[#allocation2 + $0xa8] sm:$0xff] 0.0
    %129 = vst [vmem:[#allocation2 + $0xb0] sm:$0xff] 0.0
    %130 = vst [vmem:[#allocation2 + $0xb8] sm:$0xff] 0.0
    %131 = vst [vmem:[#allocation2 + $0xc0] sm:$0xff] 0.0
    %132 = vst [vmem:[#allocation2 + $0xc8] sm:$0xff] 0.0
    %133 = vst [vmem:[#allocation2 + $0xd0] sm:$0xff] 0.0
    %134 = vst [vmem:[#allocation2 + $0xd8] sm:$0xff] 0.0
    %135 = vst [vmem:[#allocation2 + $0xe0] sm:$0xff] 0.0
    %136 = vst [vmem:[#allocation2 + $0xe8] sm:$0xff] 0.0
    %137 = vst [vmem:[#allocation2 + $0xf0] sm:$0xff] 0.0
    %138 = vst [vmem:[#allocation2 + $0xf8] sm:$0xff] 0.0
    %139 = vst [vmem:[#allocation2 + $0x100] sm:$0xff] 0.0
    %140 = vst [vmem:[#allocation2 + $0x108] sm:$0xff] 0.0
    %141 = vst [vmem:[#allocation2 + $0x110] sm:$0xff] 0.0
    %142 = vst [vmem:[#allocation2 + $0x118] sm:$0xff] 0.0
    %143 = vst [vmem:[#allocation2 + $0x120] sm:$0xff] 0.0
    %144 = vst [vmem:[#allocation2 + $0x128] sm:$0xff] 0.0
    %145 = vst [vmem:[#allocation2 + $0x130] sm:$0xff] 0.0
    %146 = vst [vmem:[#allocation2 + $0x138] sm:$0xff] 0.0
    %147 = vst [vmem:[#allocation2 + $0x140] sm:$0xff] 0.0
    %148 = vst [vmem:[#allocation2 + $0x148] sm:$0xff] 0.0
    %149 = vst [vmem:[#allocation2 + $0x150] sm:$0xff] 0.0
    %150 = vst [vmem:[#allocation2 + $0x158] sm:$0xff] 0.0
    %151 = vst [vmem:[#allocation2 + $0x160] sm:$0xff] 0.0
    %152 = vst [vmem:[#allocation2 + $0x168] sm:$0xff] 0.0
    %153 = vst [vmem:[#allocation2 + $0x170] sm:$0xff] 0.0
    %154 = vst [vmem:[#allocation2 + $0x178] sm:$0xff] 0.0
    %155 = vst [vmem:[#allocation2 + $0x180] sm:$0xff] 0.0
    %156 = vst [vmem:[#allocation2 + $0x188] sm:$0xff] 0.0
    %157 = vst [vmem:[#allocation2 + $0x190] sm:$0xff] 0.0
    %158 = vst [vmem:[#allocation2 + $0x198] sm:$0xff] 0.0
    %159 = vst [vmem:[#allocation2 + $0x1a0] sm:$0xff] 0.0
    %160 = vst [vmem:[#allocation2 + $0x1a8] sm:$0xff] 0.0
    %161 = vst [vmem:[#allocation2 + $0x1b0] sm:$0xff] 0.0
    %162 = vst [vmem:[#allocation2 + $0x1b8] sm:$0xff] 0.0
    %163 = vst [vmem:[#allocation2 + $0x1c0] sm:$0xff] 0.0
    %164 = vst [vmem:[#allocation2 + $0x1c8] sm:$0xff] 0.0
    %165 = vst [vmem:[#allocation2 + $0x1d0] sm:$0xff] 0.0
    %166 = vst [vmem:[#allocation2 + $0x1d8] sm:$0xff] 0.0
    %v167 = vld [vmem:[%s0] sm:$0xff]
    %v168 = vld [vmem:[%s0 + $0x8] sm:$0xff]
    %v169 = vld [vmem:[%s0 + $0x10] sm:$0xff]
    %v170 = vld [vmem:[%s0 + $0x18] sm:$0xff]
    %v171 = vld [vmem:[%s0 + $0x20] sm:$0xff]
    %v172 = vld [vmem:[%s0 + $0x28] sm:$0xff]
    %v173 = vld [vmem:[%s0 + $0x30] sm:$0xff]
    %v174 = vld [vmem:[%s0 + $0x38] sm:$0xff]
    %v175 = vld [vmem:[%s0 + $0x40] sm:$0xff]
    %v176 = vld [vmem:[%s0 + $0x48] sm:$0xff]
    %v177 = vld [vmem:[%s0 + $0x50] sm:$0xff]
    %v178 = vld [vmem:[%s0 + $0x58] sm:$0xff]
    %v179 = vld [vmem:[%s0 + $0x60] sm:$0xff]
    %v180 = vld [vmem:[%s0 + $0x68] sm:$0xff]
    %v181 = vld [vmem:[%s0 + $0x70] sm:$0xff]
    %v182 = vld [vmem:[%s0 + $0x78] sm:$0xff]
    %s183 = scalar_lea.vmem [#allocation2], 24
    %184 = vst [vmem:[%s183 + $0x8] sm:$0xff] %v167
    %185 = vst [vmem:[%s183 + $0x20] sm:$0xff] %v168
    %186 = vst [vmem:[%s183 + $0x38] sm:$0xff] %v169
    %187 = vst [vmem:[%s183 + $0x50] sm:$0xff] %v170
    %188 = vst [vmem:[%s183 + $0x68] sm:$0xff] %v171
    %189 = vst [vmem:[%s183 + $0x80] sm:$0xff] %v172
    %190 = vst [vmem:[%s183 + $0x98] sm:$0xff] %v173
    %191 = vst [vmem:[%s183 + $0xb0] sm:$0xff] %v174
    %192 = vst [vmem:[%s183 + $0xf8] sm:$0xff] %v175
    %193 = vst [vmem:[%s183 + $0x110] sm:$0xff] %v176
    %194 = vst [vmem:[%s183 + $0x128] sm:$0xff] %v177
    %195 = vst [vmem:[%s183 + $0x140] sm:$0xff] %v178
    %196 = vst [vmem:[%s183 + $0x158] sm:$0xff] %v179
    %197 = vst [vmem:[%s183 + $0x170] sm:$0xff] %v180
    %198 = vst [vmem:[%s183 + $0x188] sm:$0xff] %v181
    %199 = vst [vmem:[%s183 + $0x1a0] sm:$0xff] %v182
    %v200 = vld [vmem:[#allocation2 + $0x7] sm:$0xff]
    %v201 = vld [vmem:[#allocation2 + $0x1f] sm:$0xff]
    %v202 = vld [vmem:[#allocation2 + $0x37] sm:$0xff]
    %v203 = vld [vmem:[#allocation2 + $0x4f] sm:$0xff]
    %v204 = vld [vmem:[#allocation2 + $0x67] sm:$0xff]
    %v205 = vld [vmem:[#allocation2 + $0x7f] sm:$0xff]
    %v206 = vld [vmem:[#allocation2 + $0x97] sm:$0xff]
    %v207 = vld [vmem:[#allocation2 + $0xaf] sm:$0xff]
    %v208 = vld [vmem:[#allocation2 + $0xf7] sm:$0xff]
    %v209 = vld [vmem:[#allocation2 + $0x10f] sm:$0xff]
    %v210 = vld [vmem:[#allocation2 + $0x127] sm:$0xff]
    %v211 = vld [vmem:[#allocation2 + $0x13f] sm:$0xff]
    %v212 = vld [vmem:[#allocation2 + $0x157] sm:$0xff]
    %v213 = vld [vmem:[#allocation2 + $0x16f] sm:$0xff]
    %v214 = vld [vmem:[#allocation2 + $0x187] sm:$0xff]
    %v215 = vld [vmem:[#allocation2 + $0x19f] sm:$0xff]
    %v216 = vpack.c.bf16 %v201, %v200
    %v217 = vpack.c.bf16 %v203, %v202
    %v218 = vpack.c.bf16 %v205, %v204
    %v219 = vpack.c.bf16 %v207, %v206
    %v220 = vpack.c.bf16 %v209, %v208
    %v221 = vpack.c.bf16 %v211, %v210
    %v222 = vpack.c.bf16 %v213, %v212
    %v223 = vpack.c.bf16 %v215, %v214
    %224 = vst [vmem:[#allocation3] sm:$0xff] %v216
    %225 = vst [vmem:[#allocation3 + $0x48] sm:$0xff] %v217
    %226 = vst [vmem:[#allocation3 + $0x90] sm:$0xff] %v218
    %227 = vst [vmem:[#allocation3 + $0xd8] sm:$0xff] %v219
    %228 = vst [vmem:[#allocation3 + $0x120] sm:$0xff] %v220
    %229 = vst [vmem:[#allocation3 + $0x168] sm:$0xff] %v221
    %230 = vst [vmem:[#allocation3 + $0x1b0] sm:$0xff] %v222
    %231 = vst [vmem:[#allocation3 + $0x1f8] sm:$0xff] %v223
    %v232 = vld [vmem:[#allocation2 + $0x8] sm:$0xff]
    %v233 = vld [vmem:[#allocation2 + $0x20] sm:$0xff]
    %v234 = vld [vmem:[#allocation2 + $0x38] sm:$0xff]
    %v235 = vld [vmem:[#allocation2 + $0x50] sm:$0xff]
    %v236 = vld [vmem:[#allocation2 + $0x68] sm:$0xff]
    %v237 = vld [vmem:[#allocation2 + $0x80] sm:$0xff]
    %v238 = vld [vmem:[#allocation2 + $0x98] sm:$0xff]
    %v239 = vld [vmem:[#allocation2 + $0xb0] sm:$0xff]
    %v240 = vld [vmem:[#allocation2 + $0xf8] sm:$0xff]
    %v241 = vld [vmem:[#allocation2 + $0x110] sm:$0xff]
    %v242 = vld [vmem:[#allocation2 + $0x128] sm:$0xff]
    %v243 = vld [vmem:[#allocation2 + $0x140] sm:$0xff]
    %v244 = vld [vmem:[#allocation2 + $0x158] sm:$0xff]
    %v245 = vld [vmem:[#allocation2 + $0x170] sm:$0xff]
    %v246 = vld [vmem:[#allocation2 + $0x188] sm:$0xff]
    %v247 = vld [vmem:[#allocation2 + $0x1a0] sm:$0xff]
    %v248 = vpack.c.bf16 %v233, %v232
    %v249 = vpack.c.bf16 %v235, %v234
    %v250 = vpack.c.bf16 %v237, %v236
    %v251 = vpack.c.bf16 %v239, %v238
    %v252 = vpack.c.bf16 %v241, %v240
    %v253 = vpack.c.bf16 %v243, %v242
    %v254 = vpack.c.bf16 %v245, %v244
    %v255 = vpack.c.bf16 %v247, %v246
    %256 = vst [vmem:[#allocation3 + $0x8] sm:$0xff] %v248
    %257 = vst [vmem:[#allocation3 + $0x50] sm:$0xff] %v249
    %258 = vst [vmem:[#allocation3 + $0x98] sm:$0xff] %v250
    %259 = vst [vmem:[#allocation3 + $0xe0] sm:$0xff] %v251
    %260 = vst [vmem:[#allocation3 + $0x128] sm:$0xff] %v252
    %261 = vst [vmem:[#allocation3 + $0x170] sm:$0xff] %v253
    %262 = vst [vmem:[#allocation3 + $0x1b8] sm:$0xff] %v254
    %263 = vst [vmem:[#allocation3 + $0x200] sm:$0xff] %v255
    %v264 = vld [vmem:[#allocation2 + $0x9] sm:$0xff]
    %v265 = vld [vmem:[#allocation2 + $0x21] sm:$0xff]
    %v266 = vld [vmem:[#allocation2 + $0x39] sm:$0xff]
    %v267 = vld [vmem:[#allocation2 + $0x51] sm:$0xff]
    %v268 = vld [vmem:[#allocation2 + $0x69] sm:$0xff]
    %v269 = vld [vmem:[#allocation2 + $0x81] sm:$0xff]
    %v270 = vld [vmem:[#allocation2 + $0x99] sm:$0xff]
    %v271 = vld [vmem:[#allocation2 + $0xb1] sm:$0xff]
    %v272 = vld [vmem:[#allocation2 + $0xf9] sm:$0xff]
    %v273 = vld [vmem:[#allocation2 + $0x111] sm:$0xff]
    %v274 = vld [vmem:[#allocation2 + $0x129] sm:$0xff]
    %v275 = vld [vmem:[#allocation2 + $0x141] sm:$0xff]
    %v276 = vld [vmem:[#allocation2 + $0x159] sm:$0xff]
    %v277 = vld [vmem:[#allocation2 + $0x171] sm:$0xff]
    %v278 = vld [vmem:[#allocation2 + $0x189] sm:$0xff]
    %v279 = vld [vmem:[#allocation2 + $0x1a1] sm:$0xff]
    %v280 = vpack.c.bf16 %v265, %v264
    %v281 = vpack.c.bf16 %v267, %v266
    %v282 = vpack.c.bf16 %v269, %v268
    %v283 = vpack.c.bf16 %v271, %v270
    %v284 = vpack.c.bf16 %v273, %v272
    %v285 = vpack.c.bf16 %v275, %v274
    %v286 = vpack.c.bf16 %v277, %v276
    %v287 = vpack.c.bf16 %v279, %v278
    %288 = vst [vmem:[#allocation3 + $0x10] sm:$0xff] %v280
    %289 = vst [vmem:[#allocation3 + $0x58] sm:$0xff] %v281
    %290 = vst [vmem:[#allocation3 + $0xa0] sm:$0xff] %v282
    %291 = vst [vmem:[#allocation3 + $0xe8] sm:$0xff] %v283
    %292 = vst [vmem:[#allocation3 + $0x130] sm:$0xff] %v284
    %293 = vst [vmem:[#allocation3 + $0x178] sm:$0xff] %v285
    %294 = vst [vmem:[#allocation3 + $0x1c0] sm:$0xff] %v286
    %295 = vst [vmem:[#allocation3 + $0x208] sm:$0xff] %v287
    %v296 = vld [vmem:[%s183 + $0x7] sm:$0xff]
    %v297 = vld [vmem:[%s183 + $0x1f] sm:$0xff]
    %v298 = vld [vmem:[%s183 + $0x37] sm:$0xff]
    %v299 = vld [vmem:[%s183 + $0x4f] sm:$0xff]
    %v300 = vld [vmem:[%s183 + $0x67] sm:$0xff]
    %v301 = vld [vmem:[%s183 + $0x7f] sm:$0xff]
    %v302 = vld [vmem:[%s183 + $0x97] sm:$0xff]
    %v303 = vld [vmem:[%s183 + $0xaf] sm:$0xff]
    %v304 = vld [vmem:[%s183 + $0xf7] sm:$0xff]
    %v305 = vld [vmem:[%s183 + $0x10f] sm:$0xff]
    %v306 = vld [vmem:[%s183 + $0x127] sm:$0xff]
    %v307 = vld [vmem:[%s183 + $0x13f] sm:$0xff]
    %v308 = vld [vmem:[%s183 + $0x157] sm:$0xff]
    %v309 = vld [vmem:[%s183 + $0x16f] sm:$0xff]
    %v310 = vld [vmem:[%s183 + $0x187] sm:$0xff]
    %v311 = vld [vmem:[%s183 + $0x19f] sm:$0xff]
    %v312 = vpack.c.bf16 %v297, %v296
    %v313 = vpack.c.bf16 %v299, %v298
    %v314 = vpack.c.bf16 %v301, %v300
    %v315 = vpack.c.bf16 %v303, %v302
    %v316 = vpack.c.bf16 %v305, %v304
    %v317 = vpack.c.bf16 %v307, %v306
    %v318 = vpack.c.bf16 %v309, %v308
    %v319 = vpack.c.bf16 %v311, %v310
    %320 = vst [vmem:[#allocation3 + $0x18] sm:$0xff] %v312
    %321 = vst [vmem:[#allocation3 + $0x60] sm:$0xff] %v313
    %322 = vst [vmem:[#allocation3 + $0xa8] sm:$0xff] %v314
    %323 = vst [vmem:[#allocation3 + $0xf0] sm:$0xff] %v315
    %324 = vst [vmem:[#allocation3 + $0x138] sm:$0xff] %v316
    %325 = vst [vmem:[#allocation3 + $0x180] sm:$0xff] %v317
    %326 = vst [vmem:[#allocation3 + $0x1c8] sm:$0xff] %v318
    %327 = vst [vmem:[#allocation3 + $0x210] sm:$0xff] %v319
    %v328 = vld [vmem:[%s183 + $0x8] sm:$0xff]
    %v329 = vld [vmem:[%s183 + $0x20] sm:$0xff]
    %v330 = vld [vmem:[%s183 + $0x38] sm:$0xff]
    %v331 = vld [vmem:[%s183 + $0x50] sm:$0xff]
    %v332 = vld [vmem:[%s183 + $0x68] sm:$0xff]
    %v333 = vld [vmem:[%s183 + $0x80] sm:$0xff]
    %v334 = vld [vmem:[%s183 + $0x98] sm:$0xff]
    %v335 = vld [vmem:[%s183 + $0xb0] sm:$0xff]
    %v336 = vld [vmem:[%s183 + $0xf8] sm:$0xff]
    %v337 = vld [vmem:[%s183 + $0x110] sm:$0xff]
    %v338 = vld [vmem:[%s183 + $0x128] sm:$0xff]
    %v339 = vld [vmem:[%s183 + $0x140] sm:$0xff]
    %v340 = vld [vmem:[%s183 + $0x158] sm:$0xff]
    %v341 = vld [vmem:[%s183 + $0x170] sm:$0xff]
    %v342 = vld [vmem:[%s183 + $0x188] sm:$0xff]
    %v343 = vld [vmem:[%s183 + $0x1a0] sm:$0xff]
    %v344 = vpack.c.bf16 %v329, %v328
    %v345 = vpack.c.bf16 %v331, %v330
    %v346 = vpack.c.bf16 %v333, %v332
    %v347 = vpack.c.bf16 %v335, %v334
    %v348 = vpack.c.bf16 %v337, %v336
    %v349 = vpack.c.bf16 %v339, %v338
    %v350 = vpack.c.bf16 %v341, %v340
    %v351 = vpack.c.bf16 %v343, %v342
    %352 = vst [vmem:[#allocation3 + $0x20] sm:$0xff] %v344
    %353 = vst [vmem:[#allocation3 + $0x68] sm:$0xff] %v345
    %354 = vst [vmem:[#allocation3 + $0xb0] sm:$0xff] %v346
    %355 = vst [vmem:[#allocation3 + $0xf8] sm:$0xff] %v347
    %356 = vst [vmem:[#allocation3 + $0x140] sm:$0xff] %v348
    %357 = vst [vmem:[#allocation3 + $0x188] sm:$0xff] %v349
    %358 = vst [vmem:[#allocation3 + $0x1d0] sm:$0xff] %v350
    %359 = vst [vmem:[#allocation3 + $0x218] sm:$0xff] %v351
    %v360 = vld [vmem:[%s183 + $0x9] sm:$0xff]
    %v361 = vld [vmem:[%s183 + $0x21] sm:$0xff]
    %v362 = vld [vmem:[%s183 + $0x39] sm:$0xff]
    %v363 = vld [vmem:[%s183 + $0x51] sm:$0xff]
    %v364 = vld [vmem:[%s183 + $0x69] sm:$0xff]
    %v365 = vld [vmem:[%s183 + $0x81] sm:$0xff]
    %v366 = vld [vmem:[%s183 + $0x99] sm:$0xff]
    %v367 = vld [vmem:[%s183 + $0xb1] sm:$0xff]
    %v368 = vld [vmem:[%s183 + $0xf9] sm:$0xff]
    %v369 = vld [vmem:[%s183 + $0x111] sm:$0xff]
    %v370 = vld [vmem:[%s183 + $0x129] sm:$0xff]
    %v371 = vld [vmem:[%s183 + $0x141] sm:$0xff]
    %v372 = vld [vmem:[%s183 + $0x159] sm:$0xff]
    %v373 = vld [vmem:[%s183 + $0x171] sm:$0xff]
    %v374 = vld [vmem:[%s183 + $0x189] sm:$0xff]
    %v375 = vld [vmem:[%s183 + $0x1a1] sm:$0xff]
    %v376 = vpack.c.bf16 %v361, %v360
    %v377 = vpack.c.bf16 %v363, %v362
    %v378 = vpack.c.bf16 %v365, %v364
    %v379 = vpack.c.bf16 %v367, %v366
    %v380 = vpack.c.bf16 %v369, %v368
    %v381 = vpack.c.bf16 %v371, %v370
    %v382 = vpack.c.bf16 %v373, %v372
    %v383 = vpack.c.bf16 %v375, %v374
    %384 = vst [vmem:[#allocation3 + $0x28] sm:$0xff] %v376
    %385 = vst [vmem:[#allocation3 + $0x70] sm:$0xff] %v377
    %386 = vst [vmem:[#allocation3 + $0xb8] sm:$0xff] %v378
    %387 = vst [vmem:[#allocation3 + $0x100] sm:$0xff] %v379
    %388 = vst [vmem:[#allocation3 + $0x148] sm:$0xff] %v380
    %389 = vst [vmem:[#allocation3 + $0x190] sm:$0xff] %v381
    %390 = vst [vmem:[#allocation3 + $0x1d8] sm:$0xff] %v382
    %391 = vst [vmem:[#allocation3 + $0x220] sm:$0xff] %v383
    %s392 = scalar_lea.vmem [#allocation2], 48
    %v393 = vld [vmem:[%s392 + $0x7] sm:$0xff]
    %v394 = vld [vmem:[%s392 + $0x1f] sm:$0xff]
    %v395 = vld [vmem:[%s392 + $0x37] sm:$0xff]
    %v396 = vld [vmem:[%s392 + $0x4f] sm:$0xff]
    %v397 = vld [vmem:[%s392 + $0x67] sm:$0xff]
    %v398 = vld [vmem:[%s392 + $0x7f] sm:$0xff]
    %v399 = vld [vmem:[%s392 + $0x97] sm:$0xff]
    %v400 = vld [vmem:[%s392 + $0xaf] sm:$0xff]
    %v401 = vld [vmem:[%s392 + $0xf7] sm:$0xff]
    %v402 = vld [vmem:[%s392 + $0x10f] sm:$0xff]
    %v403 = vld [vmem:[%s392 + $0x127] sm:$0xff]
    %v404 = vld [vmem:[%s392 + $0x13f] sm:$0xff]
    %v405 = vld [vmem:[%s392 + $0x157] sm:$0xff]
    %v406 = vld [vmem:[%s392 + $0x16f] sm:$0xff]
    %v407 = vld [vmem:[%s392 + $0x187] sm:$0xff]
    %v408 = vld [vmem:[%s392 + $0x19f] sm:$0xff]
    %v409 = vpack.c.bf16 %v394, %v393
    %v410 = vpack.c.bf16 %v396, %v395
    %v411 = vpack.c.bf16 %v398, %v397
    %v412 = vpack.c.bf16 %v400, %v399
    %v413 = vpack.c.bf16 %v402, %v401
    %v414 = vpack.c.bf16 %v404, %v403
    %v415 = vpack.c.bf16 %v406, %v405
    %v416 = vpack.c.bf16 %v408, %v407
    %417 = vst [vmem:[#allocation3 + $0x30] sm:$0xff] %v409
    %418 = vst [vmem:[#allocation3 + $0x78] sm:$0xff] %v410
    %419 = vst [vmem:[#allocation3 + $0xc0] sm:$0xff] %v411
    %420 = vst [vmem:[#allocation3 + $0x108] sm:$0xff] %v412
    %421 = vst [vmem:[#allocation3 + $0x150] sm:$0xff] %v413
    %422 = vst [vmem:[#allocation3 + $0x198] sm:$0xff] %v414
    %423 = vst [vmem:[#allocation3 + $0x1e0] sm:$0xff] %v415
    %424 = vst [vmem:[#allocation3 + $0x228] sm:$0xff] %v416
    %v425 = vld [vmem:[%s392 + $0x8] sm:$0xff]
    %v426 = vld [vmem:[%s392 + $0x20] sm:$0xff]
    %v427 = vld [vmem:[%s392 + $0x38] sm:$0xff]
    %v428 = vld [vmem:[%s392 + $0x50] sm:$0xff]
    %v429 = vld [vmem:[%s392 + $0x68] sm:$0xff]
    %v430 = vld [vmem:[%s392 + $0x80] sm:$0xff]
    %v431 = vld [vmem:[%s392 + $0x98] sm:$0xff]
    %v432 = vld [vmem:[%s392 + $0xb0] sm:$0xff]
    %v433 = vld [vmem:[%s392 + $0xf8] sm:$0xff]
    %v434 = vld [vmem:[%s392 + $0x110] sm:$0xff]
    %v435 = vld [vmem:[%s392 + $0x128] sm:$0xff]
    %v436 = vld [vmem:[%s392 + $0x140] sm:$0xff]
    %v437 = vld [vmem:[%s392 + $0x158] sm:$0xff]
    %v438 = vld [vmem:[%s392 + $0x170] sm:$0xff]
    %v439 = vld [vmem:[%s392 + $0x188] sm:$0xff]
    %v440 = vld [vmem:[%s392 + $0x1a0] sm:$0xff]
    %v441 = vpack.c.bf16 %v426, %v425
    %v442 = vpack.c.bf16 %v428, %v427
    %v443 = vpack.c.bf16 %v430, %v429
    %v444 = vpack.c.bf16 %v432, %v431
    %v445 = vpack.c.bf16 %v434, %v433
    %v446 = vpack.c.bf16 %v436, %v435
    %v447 = vpack.c.bf16 %v438, %v437
    %v448 = vpack.c.bf16 %v440, %v439
    %449 = vst [vmem:[#allocation3 + $0x38] sm:$0xff] %v441
    %450 = vst [vmem:[#allocation3 + $0x80] sm:$0xff] %v442
    %451 = vst [vmem:[#allocation3 + $0xc8] sm:$0xff] %v443
    %452 = vst [vmem:[#allocation3 + $0x110] sm:$0xff] %v444
    %453 = vst [vmem:[#allocation3 + $0x158] sm:$0xff] %v445
    %454 = vst [vmem:[#allocation3 + $0x1a0] sm:$0xff] %v446
    %455 = vst [vmem:[#allocation3 + $0x1e8] sm:$0xff] %v447
    %456 = vst [vmem:[#allocation3 + $0x230] sm:$0xff] %v448
    %v457 = vld [vmem:[%s392 + $0x9] sm:$0xff]
    %v458 = vld [vmem:[%s392 + $0x21] sm:$0xff]
    %v459 = vld [vmem:[%s392 + $0x39] sm:$0xff]
    %v460 = vld [vmem:[%s392 + $0x51] sm:$0xff]
    %v461 = vld [vmem:[%s392 + $0x69] sm:$0xff]
    %v462 = vld [vmem:[%s392 + $0x81] sm:$0xff]
    %v463 = vld [vmem:[%s392 + $0x99] sm:$0xff]
    %v464 = vld [vmem:[%s392 + $0xb1] sm:$0xff]
    %v465 = vld [vmem:[%s392 + $0xf9] sm:$0xff]
    %v466 = vld [vmem:[%s392 + $0x111] sm:$0xff]
    %v467 = vld [vmem:[%s392 + $0x129] sm:$0xff]
    %v468 = vld [vmem:[%s392 + $0x141] sm:$0xff]
    %v469 = vld [vmem:[%s392 + $0x159] sm:$0xff]
    %v470 = vld [vmem:[%s392 + $0x171] sm:$0xff]
    %v471 = vld [vmem:[%s392 + $0x189] sm:$0xff]
    %v472 = vld [vmem:[%s392 + $0x1a1] sm:$0xff]
    %v473 = vpack.c.bf16 %v458, %v457
    %v474 = vpack.c.bf16 %v460, %v459
    %v475 = vpack.c.bf16 %v462, %v461
    %v476 = vpack.c.bf16 %v464, %v463
    %v477 = vpack.c.bf16 %v466, %v465
    %v478 = vpack.c.bf16 %v468, %v467
    %v479 = vpack.c.bf16 %v470, %v469
    %v480 = vpack.c.bf16 %v472, %v471
    %481 = vst [vmem:[#allocation3 + $0x40] sm:$0xff] %v473
    %482 = vst [vmem:[#allocation3 + $0x88] sm:$0xff] %v474
    %483 = vst [vmem:[#allocation3 + $0xd0] sm:$0xff] %v475
    %484 = vst [vmem:[#allocation3 + $0x118] sm:$0xff] %v476
    %485 = vst [vmem:[#allocation3 + $0x160] sm:$0xff] %v477
    %486 = vst [vmem:[#allocation3 + $0x1a8] sm:$0xff] %v478
    %487 = vst [vmem:[#allocation3 + $0x1f0] sm:$0xff] %v479
    %488 = vst [vmem:[#allocation3 + $0x238] sm:$0xff] %v480
    %v489 = vld [vmem:[#allocation3] sm:$0xff]
    %v490 = vld [vmem:[#allocation3 + $0x8] sm:$0xff]
    %v491 = vld [vmem:[#allocation3 + $0x10] sm:$0xff]
    %v492 = vld [vmem:[#allocation3 + $0x18] sm:$0xff]
    %v493 = vld [vmem:[#allocation3 + $0x20] sm:$0xff]
    %v494 = vld [vmem:[#allocation3 + $0x28] sm:$0xff]
    %v495 = vld [vmem:[#allocation3 + $0x30] sm:$0xff]
    %v496 = vld [vmem:[#allocation3 + $0x38] sm:$0xff]
    %v497 = vld [vmem:[#allocation3 + $0x40] sm:$0xff]
    %v498 = vld [vmem:[#allocation3 + $0x48] sm:$0xff]
    %v499 = vld [vmem:[#allocation3 + $0x50] sm:$0xff]
    %v500 = vld [vmem:[#allocation3 + $0x58] sm:$0xff]
    %v501 = vld [vmem:[#allocation3 + $0x60] sm:$0xff]
    %v502 = vld [vmem:[#allocation3 + $0x68] sm:$0xff]
    %v503 = vld [vmem:[#allocation3 + $0x70] sm:$0xff]
    %v504 = vld [vmem:[#allocation3 + $0x78] sm:$0xff]
    %v505 = vld [vmem:[#allocation3 + $0x80] sm:$0xff]
    %v506 = vld [vmem:[#allocation3 + $0x88] sm:$0xff]
    %v507 = vld [vmem:[#allocation3 + $0x90] sm:$0xff]
    %v508 = vld [vmem:[#allocation3 + $0x98] sm:$0xff]
    %v509 = vld [vmem:[#allocation3 + $0xa0] sm:$0xff]
    %v510 = vld [vmem:[#allocation3 + $0xa8] sm:$0xff]
    %v511 = vld [vmem:[#allocation3 + $0xb0] sm:$0xff]
    %v512 = vld [vmem:[#allocation3 + $0xb8] sm:$0xff]
    %v513 = vld [vmem:[#allocation3 + $0xc0] sm:$0xff]
    %v514 = vld [vmem:[#allocation3 + $0xc8] sm:$0xff]
    %v515 = vld [vmem:[#allocation3 + $0xd0] sm:$0xff]
    %v516 = vld [vmem:[#allocation3 + $0xd8] sm:$0xff]
    %v517 = vld [vmem:[#allocation3 + $0xe0] sm:$0xff]
    %v518 = vld [vmem:[#allocation3 + $0xe8] sm:$0xff]
    %v519 = vld [vmem:[#allocation3 + $0xf0] sm:$0xff]
    %v520 = vld [vmem:[#allocation3 + $0xf8] sm:$0xff]
    %v521 = vld [vmem:[#allocation3 + $0x100] sm:$0xff]
    %v522 = vld [vmem:[#allocation3 + $0x108] sm:$0xff]
    %v523 = vld [vmem:[#allocation3 + $0x110] sm:$0xff]
    %v524 = vld [vmem:[#allocation3 + $0x118] sm:$0xff]
    %v525 = vld [vmem:[#allocation3 + $0x120] sm:$0xff]
    %v526 = vld [vmem:[#allocation3 + $0x128] sm:$0xff]
    %v527 = vld [vmem:[#allocation3 + $0x130] sm:$0xff]
    %v528 = vld [vmem:[#allocation3 + $0x138] sm:$0xff]
    %v529 = vld [vmem:[#allocation3 + $0x140] sm:$0xff]
    %v530 = vld [vmem:[#allocation3 + $0x148] sm:$0xff]
    %v531 = vld [vmem:[#allocation3 + $0x150] sm:$0xff]
    %v532 = vld [vmem:[#allocation3 + $0x158] sm:$0xff]
    %v533 = vld [vmem:[#allocation3 + $0x160] sm:$0xff]
    %v534 = vld [vmem:[#allocation3 + $0x168] sm:$0xff]
    %v535 = vld [vmem:[#allocation3 + $0x170] sm:$0xff]
    %v536 = vld [vmem:[#allocation3 + $0x178] sm:$0xff]
    %v537 = vld [vmem:[#allocation3 + $0x180] sm:$0xff]
    %v538 = vld [vmem:[#allocation3 + $0x188] sm:$0xff]
    %v539 = vld [vmem:[#allocation3 + $0x190] sm:$0xff]
    %v540 = vld [vmem:[#allocation3 + $0x198] sm:$0xff]
    %v541 = vld [vmem:[#allocation3 + $0x1a0] sm:$0xff]
    %v542 = vld [vmem:[#allocation3 + $0x1a8] sm:$0xff]
    %v543 = vld [vmem:[#allocation3 + $0x1b0] sm:$0xff]
    %v544 = vld [vmem:[#allocation3 + $0x1b8] sm:$0xff]
    %v545 = vld [vmem:[#allocation3 + $0x1c0] sm:$0xff]
    %v546 = vld [vmem:[#allocation3 + $0x1c8] sm:$0xff]
    %v547 = vld [vmem:[#allocation3 + $0x1d0] sm:$0xff]
    %v548 = vld [vmem:[#allocation3 + $0x1d8] sm:$0xff]
    %v549 = vld [vmem:[#allocation3 + $0x1e0] sm:$0xff]
    %v550 = vld [vmem:[#allocation3 + $0x1e8] sm:$0xff]
    %v551 = vld [vmem:[#allocation3 + $0x1f0] sm:$0xff]
    %v552 = vld [vmem:[#allocation3 + $0x1f8] sm:$0xff]
    %v553 = vld [vmem:[#allocation3 + $0x200] sm:$0xff]
    %v554 = vld [vmem:[#allocation3 + $0x208] sm:$0xff]
    %v555 = vld [vmem:[#allocation3 + $0x210] sm:$0xff]
    %v556 = vld [vmem:[#allocation3 + $0x218] sm:$0xff]
    %v557 = vld [vmem:[#allocation3 + $0x220] sm:$0xff]
    %v558 = vld [vmem:[#allocation3 + $0x228] sm:$0xff]
    %v559 = vld [vmem:[#allocation3 + $0x230] sm:$0xff]
    %v560 = vld [vmem:[#allocation3 + $0x238] sm:$0xff]
    %v561 = vld [vmem:[#allocation4] sm:$0xf]
    %v562 = vld [vmem:[#allocation4 + $0x4] sm:$0xf]
    %v563 = vld [vmem:[#allocation4 + $0x8] sm:$0xf]
    %v564 = vld [vmem:[#allocation4 + $0xc] sm:$0xf]
    %v565 = vld [vmem:[#allocation4 + $0x10] sm:$0xf]
    %v566 = vld [vmem:[#allocation4 + $0x14] sm:$0xf]
    %v567 = vld [vmem:[#allocation4 + $0x18] sm:$0xf]
    %v568 = vld [vmem:[#allocation4 + $0x1c] sm:$0xf]
    %v569 = vld [vmem:[#allocation4 + $0x20] sm:$0xf]
    %v570 = vld [vmem:[#allocation4 + $0x24] sm:$0xf]
    %v571 = vld [vmem:[#allocation4 + $0x28] sm:$0xf]
    %v572 = vld [vmem:[#allocation4 + $0x2c] sm:$0xf]
    %v573 = vld [vmem:[#allocation4 + $0x30] sm:$0xf]
    %v574 = vld [vmem:[#allocation4 + $0x34] sm:$0xf]
    %v575 = vld [vmem:[#allocation4 + $0x38] sm:$0xf]
    %v576 = vld [vmem:[#allocation4 + $0x3c] sm:$0xf]
    %v577 = vld [vmem:[#allocation4 + $0x40] sm:$0xf]
    %v578 = vld [vmem:[#allocation4 + $0x44] sm:$0xf]
    %v579 = vld [vmem:[#allocation4 + $0x48] sm:$0xf]
    %v580 = vld [vmem:[#allocation4 + $0x4c] sm:$0xf]
    %v581 = vld [vmem:[#allocation4 + $0x50] sm:$0xf]
    %v582 = vld [vmem:[#allocation4 + $0x54] sm:$0xf]
    %v583 = vld [vmem:[#allocation4 + $0x58] sm:$0xf]
    %v584 = vld [vmem:[#allocation4 + $0x5c] sm:$0xf]
    %v585 = vld [vmem:[#allocation4 + $0x60] sm:$0xf]
    %v586 = vld [vmem:[#allocation4 + $0x64] sm:$0xf]
    %v587 = vld [vmem:[#allocation4 + $0x68] sm:$0xf]
    %v588 = vld [vmem:[#allocation4 + $0x6c] sm:$0xf]
    %v589 = vld [vmem:[#allocation4 + $0x70] sm:$0xf]
    %v590 = vld [vmem:[#allocation4 + $0x74] sm:$0xf]
    %v591 = vld [vmem:[#allocation4 + $0x78] sm:$0xf]
    %v592 = vld [vmem:[#allocation4 + $0x7c] sm:$0xf]
    %v593 = vld [vmem:[#allocation4 + $0x80] sm:$0xf]
    %v594 = vld [vmem:[#allocation4 + $0x84] sm:$0xf]
    %v595 = vld [vmem:[#allocation4 + $0x88] sm:$0xf]
    %v596 = vld [vmem:[#allocation4 + $0x8c] sm:$0xf]
    %v597 = vld [vmem:[#allocation4 + $0x90] sm:$0xf]
    %v598 = vld [vmem:[#allocation4 + $0x94] sm:$0xf]
    %v599 = vld [vmem:[#allocation4 + $0x98] sm:$0xf]
    %v600 = vld [vmem:[#allocation4 + $0x9c] sm:$0xf]
    %v601 = vld [vmem:[#allocation4 + $0xa0] sm:$0xf]
    %v602 = vld [vmem:[#allocation4 + $0xa4] sm:$0xf]
    %v603 = vld [vmem:[#allocation4 + $0xa8] sm:$0xf]
    %v604 = vld [vmem:[#allocation4 + $0xac] sm:$0xf]
    %v605 = vld [vmem:[#allocation4 + $0xb0] sm:$0xf]
    %v606 = vld [vmem:[#allocation4 + $0xb4] sm:$0xf]
    %v607 = vld [vmem:[#allocation4 + $0xb8] sm:$0xf]
    %v608 = vld [vmem:[#allocation4 + $0xbc] sm:$0xf]
    %v609 = vld [vmem:[#allocation4 + $0xc0] sm:$0xf]
    %v610 = vld [vmem:[#allocation4 + $0xc4] sm:$0xf]
    %v611 = vld [vmem:[#allocation4 + $0xc8] sm:$0xf]
    %v612 = vld [vmem:[#allocation4 + $0xcc] sm:$0xf]
    %v613 = vld [vmem:[#allocation4 + $0xd0] sm:$0xf]
    %v614 = vld [vmem:[#allocation4 + $0xd4] sm:$0xf]
    %v615 = vld [vmem:[#allocation4 + $0xd8] sm:$0xf]
    %v616 = vld [vmem:[#allocation4 + $0xdc] sm:$0xf]
    %v617 = vld [vmem:[#allocation4 + $0xe0] sm:$0xf]
    %v618 = vld [vmem:[#allocation4 + $0xe4] sm:$0xf]
    %v619 = vld [vmem:[#allocation4 + $0xe8] sm:$0xf]
    %v620 = vld [vmem:[#allocation4 + $0xec] sm:$0xf]
    %v621 = vld [vmem:[#allocation4 + $0xf0] sm:$0xf]
    %v622 = vld [vmem:[#allocation4 + $0xf4] sm:$0xf]
    %v623 = vld [vmem:[#allocation4 + $0xf8] sm:$0xf]
    %v624 = vld [vmem:[#allocation4 + $0xfc] sm:$0xf]
    %v625 = vld [vmem:[#allocation4 + $0x100] sm:$0xf]
    %v626 = vld [vmem:[#allocation4 + $0x104] sm:$0xf]
    %v627 = vld [vmem:[#allocation4 + $0x108] sm:$0xf]
    %v628 = vld [vmem:[#allocation4 + $0x10c] sm:$0xf]
    %v629 = vld [vmem:[#allocation4 + $0x110] sm:$0xf]
    %v630 = vld [vmem:[#allocation4 + $0x114] sm:$0xf]
    %v631 = vld [vmem:[#allocation4 + $0x118] sm:$0xf]
    %v632 = vld [vmem:[#allocation4 + $0x11c] sm:$0xf]
    %v633 = vld [vmem:[#allocation4 + $0x120] sm:$0xf]
    %v634 = vld [vmem:[#allocation4 + $0x124] sm:$0xf]
    %v635 = vld [vmem:[#allocation4 + $0x128] sm:$0xf]
    %v636 = vld [vmem:[#allocation4 + $0x12c] sm:$0xf]
    %v637 = vld [vmem:[#allocation4 + $0x130] sm:$0xf]
    %v638 = vld [vmem:[#allocation4 + $0x134] sm:$0xf]
    %v639 = vld [vmem:[#allocation4 + $0x138] sm:$0xf]
    %v640 = vld [vmem:[#allocation4 + $0x13c] sm:$0xf]
    %v641 = vld [vmem:[#allocation4 + $0x140] sm:$0xf]
    %v642 = vld [vmem:[#allocation4 + $0x144] sm:$0xf]
    %v643 = vld [vmem:[#allocation4 + $0x148] sm:$0xf]
    %v644 = vld [vmem:[#allocation4 + $0x14c] sm:$0xf]
    %v645 = vld [vmem:[#allocation4 + $0x150] sm:$0xf]
    %v646 = vld [vmem:[#allocation4 + $0x154] sm:$0xf]
    %v647 = vld [vmem:[#allocation4 + $0x158] sm:$0xf]
    %v648 = vld [vmem:[#allocation4 + $0x15c] sm:$0xf]
    %v649 = vld [vmem:[#allocation4 + $0x160] sm:$0xf]
    %v650 = vld [vmem:[#allocation4 + $0x164] sm:$0xf]
    %v651 = vld [vmem:[#allocation4 + $0x168] sm:$0xf]
    %v652 = vld [vmem:[#allocation4 + $0x16c] sm:$0xf]
    %v653 = vld [vmem:[#allocation4 + $0x170] sm:$0xf]
    %v654 = vld [vmem:[#allocation4 + $0x174] sm:$0xf]
    %v655 = vld [vmem:[#allocation4 + $0x178] sm:$0xf]
    %v656 = vld [vmem:[#allocation4 + $0x17c] sm:$0xf]
    %v657 = vld [vmem:[#allocation4 + $0x180] sm:$0xf]
    %v658 = vld [vmem:[#allocation4 + $0x184] sm:$0xf]
    %v659 = vld [vmem:[#allocation4 + $0x188] sm:$0xf]
    %v660 = vld [vmem:[#allocation4 + $0x18c] sm:$0xf]
    %v661 = vld [vmem:[#allocation4 + $0x190] sm:$0xf]
    %v662 = vld [vmem:[#allocation4 + $0x194] sm:$0xf]
    %v663 = vld [vmem:[#allocation4 + $0x198] sm:$0xf]
    %v664 = vld [vmem:[#allocation4 + $0x19c] sm:$0xf]
    %v665 = vld [vmem:[#allocation4 + $0x1a0] sm:$0xf]
    %v666 = vld [vmem:[#allocation4 + $0x1a4] sm:$0xf]
    %v667 = vld [vmem:[#allocation4 + $0x1a8] sm:$0xf]
    %v668 = vld [vmem:[#allocation4 + $0x1ac] sm:$0xf]
    %v669 = vld [vmem:[#allocation4 + $0x1b0] sm:$0xf]
    %v670 = vld [vmem:[#allocation4 + $0x1b4] sm:$0xf]
    %v671 = vld [vmem:[#allocation4 + $0x1b8] sm:$0xf]
    %v672 = vld [vmem:[#allocation4 + $0x1bc] sm:$0xf]
    %v673 = vld [vmem:[#allocation4 + $0x1c0] sm:$0xf]
    %v674 = vld [vmem:[#allocation4 + $0x1c4] sm:$0xf]
    %v675 = vld [vmem:[#allocation4 + $0x1c8] sm:$0xf]
    %v676 = vld [vmem:[#allocation4 + $0x1cc] sm:$0xf]
    %v677 = vld [vmem:[#allocation4 + $0x1d0] sm:$0xf]
    %v678 = vld [vmem:[#allocation4 + $0x1d4] sm:$0xf]
    %v679 = vld [vmem:[#allocation4 + $0x1d8] sm:$0xf]
    %v680 = vld [vmem:[#allocation4 + $0x1dc] sm:$0xf]
    %v681 = vld [vmem:[#allocation4 + $0x1e0] sm:$0xf]
    %v682 = vld [vmem:[#allocation4 + $0x1e4] sm:$0xf]
    %v683 = vld [vmem:[#allocation4 + $0x1e8] sm:$0xf]
    %v684 = vld [vmem:[#allocation4 + $0x1ec] sm:$0xf]
    %v685 = vld [vmem:[#allocation4 + $0x1f0] sm:$0xf]
    %v686 = vld [vmem:[#allocation4 + $0x1f4] sm:$0xf]
    %v687 = vld [vmem:[#allocation4 + $0x1f8] sm:$0xf]
    %v688 = vld [vmem:[#allocation4 + $0x1fc] sm:$0xf]
    %v689 = vld [vmem:[#allocation4 + $0x200] sm:$0xf]
    %v690 = vld [vmem:[#allocation4 + $0x204] sm:$0xf]
    %v691 = vld [vmem:[#allocation4 + $0x208] sm:$0xf]
    %v692 = vld [vmem:[#allocation4 + $0x20c] sm:$0xf]
    %v693 = vld [vmem:[#allocation4 + $0x210] sm:$0xf]
    %v694 = vld [vmem:[#allocation4 + $0x214] sm:$0xf]
    %v695 = vld [vmem:[#allocation4 + $0x218] sm:$0xf]
    %v696 = vld [vmem:[#allocation4 + $0x21c] sm:$0xf]
    %v697 = vld [vmem:[#allocation4 + $0x220] sm:$0xf]
    %v698 = vld [vmem:[#allocation4 + $0x224] sm:$0xf]
    %v699 = vld [vmem:[#allocation4 + $0x228] sm:$0xf]
    %v700 = vld [vmem:[#allocation4 + $0x22c] sm:$0xf]
    %v701 = vld [vmem:[#allocation4 + $0x230] sm:$0xf]
    %v702 = vld [vmem:[#allocation4 + $0x234] sm:$0xf]
    %v703 = vld [vmem:[#allocation4 + $0x238] sm:$0xf]
    %v704 = vld [vmem:[#allocation4 + $0x23c] sm:$0xf]
    %v705 = vld [vmem:[%s2] sm:$0x1]
    %v707 = vlaneseq
    %v708 = vshrl.u32 %v707, 7
    %v709 = vsub.s32 0, %v708
    %v710 = vrot.slane %v705, %v709
    %v856 = vunpack.c.l.b16 %v561
    %v857 = vunpack.c.l.b16 %v562
    %v858 = vunpack.c.l.b16 %v563
    %v859 = vunpack.c.l.b16 %v564
    %v860 = vunpack.c.l.b16 %v565
    %v861 = vunpack.c.l.b16 %v566
    %v862 = vunpack.c.l.b16 %v567
    %v863 = vunpack.c.l.b16 %v568
    %v864 = vunpack.c.l.b16 %v569
    %v865 = vunpack.c.l.b16 %v570
    %v866 = vunpack.c.l.b16 %v571
    %v867 = vunpack.c.l.b16 %v572
    %v868 = vunpack.c.l.b16 %v573
    %v869 = vunpack.c.l.b16 %v574
    %v870 = vunpack.c.l.b16 %v575
    %v871 = vunpack.c.l.b16 %v576
    %v872 = vunpack.c.l.b16 %v577
    %v873 = vunpack.c.l.b16 %v578
    %v874 = vunpack.c.l.b16 %v579
    %v875 = vunpack.c.l.b16 %v580
    %v876 = vunpack.c.l.b16 %v581
    %v877 = vunpack.c.l.b16 %v582
    %v878 = vunpack.c.l.b16 %v583
    %v879 = vunpack.c.l.b16 %v584
    %v880 = vunpack.c.l.b16 %v585
    %v881 = vunpack.c.l.b16 %v586
    %v882 = vunpack.c.l.b16 %v587
    %v883 = vunpack.c.l.b16 %v588
    %v884 = vunpack.c.l.b16 %v589
    %v885 = vunpack.c.l.b16 %v590
    %v886 = vunpack.c.l.b16 %v591
    %v887 = vunpack.c.l.b16 %v592
    %v888 = vunpack.c.l.b16 %v593
    %v889 = vunpack.c.l.b16 %v594
    %v890 = vunpack.c.l.b16 %v595
    %v891 = vunpack.c.l.b16 %v596
    %v892 = vunpack.c.l.b16 %v597
    %v893 = vunpack.c.l.b16 %v598
    %v894 = vunpack.c.l.b16 %v599
    %v895 = vunpack.c.l.b16 %v600
    %v896 = vunpack.c.l.b16 %v601
    %v897 = vunpack.c.l.b16 %v602
    %v898 = vunpack.c.l.b16 %v603
    %v899 = vunpack.c.l.b16 %v604
    %v900 = vunpack.c.l.b16 %v605
    %v901 = vunpack.c.l.b16 %v606
    %v902 = vunpack.c.l.b16 %v607
    %v903 = vunpack.c.l.b16 %v608
    %v904 = vunpack.c.l.b16 %v609
    %v905 = vunpack.c.l.b16 %v610
    %v906 = vunpack.c.l.b16 %v611
    %v907 = vunpack.c.l.b16 %v612
    %v908 = vunpack.c.l.b16 %v613
    %v909 = vunpack.c.l.b16 %v614
    %v910 = vunpack.c.l.b16 %v615
    %v911 = vunpack.c.l.b16 %v616
    %v912 = vunpack.c.l.b16 %v617
    %v913 = vunpack.c.l.b16 %v618
    %v914 = vunpack.c.l.b16 %v619
    %v915 = vunpack.c.l.b16 %v620
    %v916 = vunpack.c.l.b16 %v621
    %v917 = vunpack.c.l.b16 %v622
    %v918 = vunpack.c.l.b16 %v623
    %v919 = vunpack.c.l.b16 %v624
    %v920 = vunpack.c.l.b16 %v625
    %v921 = vunpack.c.l.b16 %v626
    %v922 = vunpack.c.l.b16 %v627
    %v923 = vunpack.c.l.b16 %v628
    %v924 = vunpack.c.l.b16 %v629
    %v925 = vunpack.c.l.b16 %v630
    %v926 = vunpack.c.l.b16 %v631
    %v927 = vunpack.c.l.b16 %v632
    %v928 = vunpack.c.l.b16 %v633
    %v929 = vunpack.c.l.b16 %v634
    %v930 = vunpack.c.l.b16 %v635
    %v931 = vunpack.c.l.b16 %v636
    %v932 = vunpack.c.l.b16 %v637
    %v933 = vunpack.c.l.b16 %v638
    %v934 = vunpack.c.l.b16 %v639
    %v935 = vunpack.c.l.b16 %v640
    %v936 = vunpack.c.l.b16 %v641
    %v937 = vunpack.c.l.b16 %v642
    %v938 = vunpack.c.l.b16 %v643
    %v939 = vunpack.c.l.b16 %v644
    %v940 = vunpack.c.l.b16 %v645
    %v941 = vunpack.c.l.b16 %v646
    %v942 = vunpack.c.l.b16 %v647
    %v943 = vunpack.c.l.b16 %v648
    %v944 = vunpack.c.l.b16 %v649
    %v945 = vunpack.c.l.b16 %v650
    %v946 = vunpack.c.l.b16 %v651
    %v947 = vunpack.c.l.b16 %v652
    %v948 = vunpack.c.l.b16 %v653
    %v949 = vunpack.c.l.b16 %v654
    %v950 = vunpack.c.l.b16 %v655
    %v951 = vunpack.c.l.b16 %v656
    %v952 = vunpack.c.l.b16 %v657
    %v953 = vunpack.c.l.b16 %v658
    %v954 = vunpack.c.l.b16 %v659
    %v955 = vunpack.c.l.b16 %v660
    %v956 = vunpack.c.l.b16 %v661
    %v957 = vunpack.c.l.b16 %v662
    %v958 = vunpack.c.l.b16 %v663
    %v959 = vunpack.c.l.b16 %v664
    %v960 = vunpack.c.l.b16 %v665
    %v961 = vunpack.c.l.b16 %v666
    %v962 = vunpack.c.l.b16 %v667
    %v963 = vunpack.c.l.b16 %v668
    %v964 = vunpack.c.l.b16 %v669
    %v965 = vunpack.c.l.b16 %v670
    %v966 = vunpack.c.l.b16 %v671
    %v967 = vunpack.c.l.b16 %v672
    %v968 = vunpack.c.l.b16 %v673
    %v969 = vunpack.c.l.b16 %v674
    %v970 = vunpack.c.l.b16 %v675
    %v971 = vunpack.c.l.b16 %v676
    %v972 = vunpack.c.l.b16 %v677
    %v973 = vunpack.c.l.b16 %v678
    %v974 = vunpack.c.l.b16 %v679
    %v975 = vunpack.c.l.b16 %v680
    %v976 = vunpack.c.l.b16 %v681
    %v977 = vunpack.c.l.b16 %v682
    %v978 = vunpack.c.l.b16 %v683
    %v979 = vunpack.c.l.b16 %v684
    %v980 = vunpack.c.l.b16 %v685
    %v981 = vunpack.c.l.b16 %v686
    %v982 = vunpack.c.l.b16 %v687
    %v983 = vunpack.c.l.b16 %v688
    %v984 = vunpack.c.l.b16 %v689
    %v985 = vunpack.c.l.b16 %v690
    %v986 = vunpack.c.l.b16 %v691
    %v987 = vunpack.c.l.b16 %v692
    %v988 = vunpack.c.l.b16 %v693
    %v989 = vunpack.c.l.b16 %v694
    %v990 = vunpack.c.l.b16 %v695
    %v991 = vunpack.c.l.b16 %v696
    %v992 = vunpack.c.l.b16 %v697
    %v993 = vunpack.c.l.b16 %v698
    %v994 = vunpack.c.l.b16 %v699
    %v995 = vunpack.c.l.b16 %v700
    %v996 = vunpack.c.l.b16 %v701
    %v997 = vunpack.c.l.b16 %v702
    %v998 = vunpack.c.l.b16 %v703
    %v999 = vunpack.c.l.b16 %v704
    %v1000 = vpack.c.b16 %v857, %v856
    %v1001 = vpack.c.b16 %v859, %v858
    %v1002 = vpack.c.b16 %v861, %v860
    %v1003 = vpack.c.b16 %v863, %v862
    %v1004 = vpack.c.b16 %v865, %v864
    %v1005 = vpack.c.b16 %v867, %v866
    %v1006 = vpack.c.b16 %v869, %v868
    %v1007 = vpack.c.b16 %v871, %v870
    %v1008 = vpack.c.b16 %v873, %v872
    %v1009 = vpack.c.b16 %v875, %v874
    %v1010 = vpack.c.b16 %v877, %v876
    %v1011 = vpack.c.b16 %v879, %v878
    %v1012 = vpack.c.b16 %v881, %v880
    %v1013 = vpack.c.b16 %v883, %v882
    %v1014 = vpack.c.b16 %v885, %v884
    %v1015 = vpack.c.b16 %v887, %v886
    %v1016 = vpack.c.b16 %v889, %v888
    %v1017 = vpack.c.b16 %v891, %v890
    %v1018 = vpack.c.b16 %v893, %v892
    %v1019 = vpack.c.b16 %v895, %v894
    %v1020 = vpack.c.b16 %v897, %v896
    %v1021 = vpack.c.b16 %v899, %v898
    %v1022 = vpack.c.b16 %v901, %v900
    %v1023 = vpack.c.b16 %v903, %v902
    %v1024 = vpack.c.b16 %v905, %v904
    %v1025 = vpack.c.b16 %v907, %v906
    %v1026 = vpack.c.b16 %v909, %v908
    %v1027 = vpack.c.b16 %v911, %v910
    %v1028 = vpack.c.b16 %v913, %v912
    %v1029 = vpack.c.b16 %v915, %v914
    %v1030 = vpack.c.b16 %v917, %v916
    %v1031 = vpack.c.b16 %v919, %v918
    %v1032 = vpack.c.b16 %v921, %v920
    %v1033 = vpack.c.b16 %v923, %v922
    %v1034 = vpack.c.b16 %v925, %v924
    %v1035 = vpack.c.b16 %v927, %v926
    %v1036 = vpack.c.b16 %v929, %v928
    %v1037 = vpack.c.b16 %v931, %v930
    %v1038 = vpack.c.b16 %v933, %v932
    %v1039 = vpack.c.b16 %v935, %v934
    %v1040 = vpack.c.b16 %v937, %v936
    %v1041 = vpack.c.b16 %v939, %v938
    %v1042 = vpack.c.b16 %v941, %v940
    %v1043 = vpack.c.b16 %v943, %v942
    %v1044 = vpack.c.b16 %v945, %v944
    %v1045 = vpack.c.b16 %v947, %v946
    %v1046 = vpack.c.b16 %v949, %v948
    %v1047 = vpack.c.b16 %v951, %v950
    %v1048 = vpack.c.b16 %v953, %v952
    %v1049 = vpack.c.b16 %v955, %v954
    %v1050 = vpack.c.b16 %v957, %v956
    %v1051 = vpack.c.b16 %v959, %v958
    %v1052 = vpack.c.b16 %v961, %v960
    %v1053 = vpack.c.b16 %v963, %v962
    %v1054 = vpack.c.b16 %v965, %v964
    %v1055 = vpack.c.b16 %v967, %v966
    %v1056 = vpack.c.b16 %v969, %v968
    %v1057 = vpack.c.b16 %v971, %v970
    %v1058 = vpack.c.b16 %v973, %v972
    %v1059 = vpack.c.b16 %v975, %v974
    %v1060 = vpack.c.b16 %v977, %v976
    %v1061 = vpack.c.b16 %v979, %v978
    %v1062 = vpack.c.b16 %v981, %v980
    %v1063 = vpack.c.b16 %v983, %v982
    %v1064 = vpack.c.b16 %v985, %v984
    %v1065 = vpack.c.b16 %v987, %v986
    %v1066 = vpack.c.b16 %v989, %v988
    %v1067 = vpack.c.b16 %v991, %v990
    %v1068 = vpack.c.b16 %v993, %v992
    %v1069 = vpack.c.b16 %v995, %v994
    %v1070 = vpack.c.b16 %v997, %v996
    %v1071 = vpack.c.b16 %v999, %v998
    %1144 = vmatprep.subr.bf16.mxu0 0
    %1145 = vmatpush1.bf16.msra.mxu0 %v1000
    %1146 = vmatprep.subr.bf16.mxu0 0
    %1147 = vmatpush1.bf16.msra.mxu0 %v1001
    %1148 = vmatprep.subr.bf16.mxu0 0
    %1149 = vmatpush1.bf16.msra.mxu0 %v1002
    %1150 = vmatprep.subr.bf16.mxu0 0
    %1151 = vmatpush1.bf16.msra.mxu0 %v1003
    %1152 = vmatprep.subr.bf16.mxu0 0
    %1153 = vmatpush1.bf16.msra.mxu0 %v1004
    %1154 = vmatprep.subr.bf16.mxu0 0
    %1155 = vmatpush1.bf16.msra.mxu0 %v1005
    %1156 = vmatprep.subr.bf16.mxu0 0
    %1157 = vmatpush1.bf16.msra.mxu0 %v1006
    %1158 = vmatprep.subr.bf16.mxu0 0
    %1159 = vmatpush1.bf16.msra.mxu0 %v1007
    %1160 = vmatprep.subr.bf16.mxu0 0
    %1161 = vmatpush1.bf16.msra.mxu0 %v1008
    %1162 = vmatprep.subr.bf16.mxu0 0
    %1163 = vmatpush1.bf16.msra.mxu0 %v1009
    %1164 = vmatprep.subr.bf16.mxu0 0
    %1165 = vmatpush1.bf16.msra.mxu0 %v1010
    %1166 = vmatprep.subr.bf16.mxu0 0
    %1167 = vmatpush1.bf16.msra.mxu0 %v1011
    %1168 = vmatprep.subr.bf16.mxu0 0
    %1169 = vmatpush1.bf16.msra.mxu0 %v1012
    %1170 = vmatprep.subr.bf16.mxu0 0
    %1171 = vmatpush1.bf16.msra.mxu0 %v1013
    %1172 = vmatprep.subr.bf16.mxu0 0
    %1173 = vmatpush1.bf16.msra.mxu0 %v1014
    %1174 = vmatprep.subr.bf16.mxu0 0
    %1175 = vmatpush1.bf16.msra.mxu0 %v1015
    %1176 = vmatprep.mubr.bf16.mxu0 %v490
    %1177 = vmatmul.mubr.bf16.gmra.mrb[0].mxu0 %v489
    %v1178 = vpop.f32.mrb[0].mxu0
    %v1179 = vadd.f32 %v710, %v1178
    %v1180 = vpop.f32.mrb[0].mxu0
    %v1181 = vpop.f32.mrb[0].mxu0
    %v1182 = vadd.f32 %v710, %v1181
    %v1183 = vpop.f32.mrb[0].mxu0
    %1184 = vmatprep.mubr.bf16.mxu0 %v499
    %1185 = vmatmul.mubr.bf16.gmra.mrb[0].mxu0 %v498
    %v1186 = vpop.f32.mrb[0].mxu0
    %v1187 = vadd.f32 %v710, %v1186
    %v1188 = vpop.f32.mrb[0].mxu0
    %v1189 = vpop.f32.mrb[0].mxu0
    %v1190 = vadd.f32 %v710, %v1189
    %v1191 = vpop.f32.mrb[0].mxu0
    %1192 = vmatprep.mubr.bf16.mxu0 %v508
    %1193 = vmatmul.mubr.bf16.gmra.mrb[0].mxu0 %v507
    %v1194 = vpop.f32.mrb[0].mxu0
    %v1195 = vadd.f32 %v710, %v1194
    %v1196 = vpop.f32.mrb[0].mxu0
    %v1197 = vpop.f32.mrb[0].mxu0
    %v1198 = vadd.f32 %v710, %v1197
    %v1199 = vpop.f32.mrb[0].mxu0
    %1200 = vmatprep.mubr.bf16.mxu0 %v517
    %1201 = vmatmul.mubr.bf16.gmra.mrb[0].mxu0 %v516
    %v1202 = vpop.f32.mrb[0].mxu0
    %v1203 = vadd.f32 %v710, %v1202
    %v1204 = vpop.f32.mrb[0].mxu0
    %v1205 = vpop.f32.mrb[0].mxu0
    %v1206 = vadd.f32 %v710, %v1205
    %v1207 = vpop.f32.mrb[0].mxu0
    %1208 = vmatprep.mubr.bf16.mxu0 %v526
    %1209 = vmatmul.mubr.bf16.gmra.mrb[0].mxu0 %v525
    %v1210 = vpop.f32.mrb[0].mxu0
    %v1211 = vadd.f32 %v710, %v1210
    %v1212 = vpop.f32.mrb[0].mxu0
    %v1213 = vpop.f32.mrb[0].mxu0
    %v1214 = vadd.f32 %v710, %v1213
    %v1215 = vpop.f32.mrb[0].mxu0
    %1216 = vmatprep.mubr.bf16.mxu0 %v535
    %1217 = vmatmul.mubr.bf16.gmra.mrb[0].mxu0 %v534
    %v1218 = vpop.f32.mrb[0].mxu0
    %v1219 = vadd.f32 %v710, %v1218
    %v1220 = vpop.f32.mrb[0].mxu0
    %v1221 = vpop.f32.mrb[0].mxu0
    %v1222 = vadd.f32 %v710, %v1221
    %v1223 = vpop.f32.mrb[0].mxu0
    %1224 = vmatprep.mubr.bf16.mxu0 %v544
    %1225 = vmatmul.mubr.bf16.gmra.mrb[0].mxu0 %v543
    %v1226 = vpop.f32.mrb[0].mxu0
    %v1227 = vadd.f32 %v710, %v1226
    %v1228 = vpop.f32.mrb[0].mxu0
    %v1229 = vpop.f32.mrb[0].mxu0
    %v1230 = vadd.f32 %v710, %v1229
    %v1231 = vpop.f32.mrb[0].mxu0
    %1232 = vmatprep.mubr.bf16.mxu0 %v553
    %1233 = vmatmul.mubr.bf16.gmra.mrb[0].mxu0 %v552
    %v1234 = vpop.f32.mrb[0].mxu0
    %v1235 = vadd.f32 %v710, %v1234
    %v1236 = vpop.f32.mrb[0].mxu0
    %v1237 = vpop.f32.mrb[0].mxu0
    %v1238 = vadd.f32 %v710, %v1237
    %v1239 = vpop.f32.mrb[0].mxu0
    %1240 = vdwg.mxu0
    %1241 = vmatprep.subr.bf16.mxu0 0
    %1242 = vmatpush1.bf16.msra.mxu0 %v1016
    %1243 = vmatprep.subr.bf16.mxu0 0
    %1244 = vmatpush1.bf16.msra.mxu0 %v1017
    %1245 = vmatprep.subr.bf16.mxu0 0
    %1246 = vmatpush1.bf16.msra.mxu0 %v1018
    %1247 = vmatprep.subr.bf16.mxu0 0
    %1248 = vmatpush1.bf16.msra.mxu0 %v1019
    %1249 = vmatprep.subr.bf16.mxu0 0
    %1250 = vmatpush1.bf16.msra.mxu0 %v1020
    %1251 = vmatprep.subr.bf16.mxu0 0
    %1252 = vmatpush1.bf16.msra.mxu0 %v1021
    %1253 = vmatprep.subr.bf16.mxu0 0
    %1254 = vmatpush1.bf16.msra.mxu0 %v1022
    %1255 = vmatprep.subr.bf16.mxu0 0
    %1256 = vmatpush1.bf16.msra.mxu0 %v1023
    %1257 = vmatprep.subr.bf16.mxu0 0
    %1258 = vmatpush1.bf16.msra.mxu0 %v1024
    %1259 = vmatprep.subr.bf16.mxu0 0
    %1260 = vmatpush1.bf16.msra.mxu0 %v1025
    %1261 = vmatprep.subr.bf16.mxu0 0
    %1262 = vmatpush1.bf16.msra.mxu0 %v1026
    %1263 = vmatprep.subr.bf16.mxu0 0
    %1264 = vmatpush1.bf16.msra.mxu0 %v1027
    %1265 = vmatprep.subr.bf16.mxu0 0
    %1266 = vmatpush1.bf16.msra.mxu0 %v1028
    %1267 = vmatprep.subr.bf16.mxu0 0
    %1268 = vmatpush1.bf16.msra.mxu0 %v1029
    %1269 = vmatprep.subr.bf16.mxu0 0
    %1270 = vmatpush1.bf16.msra.mxu0 %v1030
    %1271 = vmatprep.subr.bf16.mxu0 0
    %1272 = vmatpush1.bf16.msra.mxu0 %v1031
    %1273 = vmatprep.mubr.bf16.mxu0 %v492
    %1274 = vmatmul.mubr.bf16.gmra.mrb[0].mxu0 %v491
    %v1275 = vpop.f32.mrb[0].mxu0
    %v1276 = vadd.f32 %v1179, %v1275
    %v1277 = vpop.f32.mrb[0].mxu0
    %v1278 = vpop.f32.mrb[0].mxu0
    %v1279 = vadd.f32 %v1182, %v1278
    %v1280 = vpop.f32.mrb[0].mxu0
    %1281 = vmatprep.mubr.bf16.mxu0 %v501
    %1282 = vmatmul.mubr.bf16.gmra.mrb[0].mxu0 %v500
    %v1283 = vpop.f32.mrb[0].mxu0
    %v1284 = vadd.f32 %v1187, %v1283
    %v1285 = vpop.f32.mrb[0].mxu0
    %v1286 = vpop.f32.mrb[0].mxu0
    %v1287 = vadd.f32 %v1190, %v1286
    %v1288 = vpop.f32.mrb[0].mxu0
    %1289 = vmatprep.mubr.bf16.mxu0 %v510
    %1290 = vmatmul.mubr.bf16.gmra.mrb[0].mxu0 %v509
    %v1291 = vpop.f32.mrb[0].mxu0
    %v1292 = vadd.f32 %v1195, %v1291
    %v1293 = vpop.f32.mrb[0].mxu0
    %v1294 = vpop.f32.mrb[0].mxu0
    %v1295 = vadd.f32 %v1198, %v1294
    %v1296 = vpop.f32.mrb[0].mxu0
    %1297 = vmatprep.mubr.bf16.mxu0 %v519
    %1298 = vmatmul.mubr.bf16.gmra.mrb[0].mxu0 %v518
    %v1299 = vpop.f32.mrb[0].mxu0
    %v1300 = vadd.f32 %v1203, %v1299
    %v1301 = vpop.f32.mrb[0].mxu0
    %v1302 = vpop.f32.mrb[0].mxu0
    %v1303 = vadd.f32 %v1206, %v1302
    %v1304 = vpop.f32.mrb[0].mxu0
    %1305 = vmatprep.mubr.bf16.mxu0 %v528
    %1306 = vmatmul.mubr.bf16.gmra.mrb[0].mxu0 %v527
    %v1307 = vpop.f32.mrb[0].mxu0
    %v1308 = vadd.f32 %v1211, %v1307
    %v1309 = vpop.f32.mrb[0].mxu0
    %v1310 = vpop.f32.mrb[0].mxu0
    %v1311 = vadd.f32 %v1214, %v1310
    %v1312 = vpop.f32.mrb[0].mxu0
    %1313 = vmatprep.mubr.bf16.mxu0 %v537
    %1314 = vmatmul.mubr.bf16.gmra.mrb[0].mxu0 %v536
    %v1315 = vpop.f32.mrb[0].mxu0
    %v1316 = vadd.f32 %v1219, %v1315
    %v1317 = vpop.f32.mrb[0].mxu0
    %v1318 = vpop.f32.mrb[0].mxu0
    %v1319 = vadd.f32 %v1222, %v1318
    %v1320 = vpop.f32.mrb[0].mxu0
    %1321 = vmatprep.mubr.bf16.mxu0 %v546
    %1322 = vmatmul.mubr.bf16.gmra.mrb[0].mxu0 %v545
    %v1323 = vpop.f32.mrb[0].mxu0
    %v1324 = vadd.f32 %v1227, %v1323
    %v1325 = vpop.f32.mrb[0].mxu0
    %v1326 = vpop.f32.mrb[0].mxu0
    %v1327 = vadd.f32 %v1230, %v1326
    %v1328 = vpop.f32.mrb[0].mxu0
    %1329 = vmatprep.mubr.bf16.mxu0 %v555
    %1330 = vmatmul.mubr.bf16.gmra.mrb[0].mxu0 %v554
    %v1331 = vpop.f32.mrb[0].mxu0
    %v1332 = vadd.f32 %v1235, %v1331
    %v1333 = vpop.f32.mrb[0].mxu0
    %v1334 = vpop.f32.mrb[0].mxu0
    %v1335 = vadd.f32 %v1238, %v1334
    %v1336 = vpop.f32.mrb[0].mxu0
    %1337 = vdwg.mxu0
    %1338 = vmatprep.subr.bf16.mxu0 0
    %1339 = vmatpush1.bf16.msra.mxu0 %v1032
    %1340 = vmatprep.subr.bf16.mxu0 0
    %1341 = vmatpush1.bf16.msra.mxu0 %v1033
    %1342 = vmatprep.subr.bf16.mxu0 0
    %1343 = vmatpush1.bf16.msra.mxu0 %v1034
    %1344 = vmatprep.subr.bf16.mxu0 0
    %1345 = vmatpush1.bf16.msra.mxu0 %v1035
    %1346 = vmatprep.subr.bf16.mxu0 0
    %1347 = vmatpush1.bf16.msra.mxu0 %v1036
    %1348 = vmatprep.subr.bf16.mxu0 0
    %1349 = vmatpush1.bf16.msra.mxu0 %v1037
    %1350 = vmatprep.subr.bf16.mxu0 0
    %1351 = vmatpush1.bf16.msra.mxu0 %v1038
    %1352 = vmatprep.subr.bf16.mxu0 0
    %1353 = vmatpush1.bf16.msra.mxu0 %v1039
    %1354 = vmatprep.subr.bf16.mxu0 0
    %1355 = vmatpush1.bf16.msra.mxu0 %v1040
    %1356 = vmatprep.subr.bf16.mxu0 0
    %1357 = vmatpush1.bf16.msra.mxu0 %v1041
    %1358 = vmatprep.subr.bf16.mxu0 0
    %1359 = vmatpush1.bf16.msra.mxu0 %v1042
    %1360 = vmatprep.subr.bf16.mxu0 0
    %1361 = vmatpush1.bf16.msra.mxu0 %v1043
    %1362 = vmatprep.subr.bf16.mxu0 0
    %1363 = vmatpush1.bf16.msra.mxu0 %v1044
    %1364 = vmatprep.subr.bf16.mxu0 0
    %1365 = vmatpush1.bf16.msra.mxu0 %v1045
    %1366 = vmatprep.subr.bf16.mxu0 0
    %1367 = vmatpush1.bf16.msra.mxu0 %v1046
    %1368 = vmatprep.subr.bf16.mxu0 0
    %1369 = vmatpush1.bf16.msra.mxu0 %v1047
    %1370 = vmatprep.mubr.bf16.mxu0 %v494
    %1371 = vmatmul.mubr.bf16.gmra.mrb[0].mxu0 %v493
    %v1372 = vpop.f32.mrb[0].mxu0
    %v1373 = vadd.f32 %v1276, %v1372
    %v1374 = vpop.f32.mrb[0].mxu0
    %v1375 = vpop.f32.mrb[0].mxu0
    %v1376 = vadd.f32 %v1279, %v1375
    %v1377 = vpop.f32.mrb[0].mxu0
    %1378 = vmatprep.mubr.bf16.mxu0 %v503
    %1379 = vmatmul.mubr.bf16.gmra.mrb[0].mxu0 %v502
    %v1380 = vpop.f32.mrb[0].mxu0
    %v1381 = vadd.f32 %v1284, %v1380
    %v1382 = vpop.f32.mrb[0].mxu0
    %v1383 = vpop.f32.mrb[0].mxu0
    %v1384 = vadd.f32 %v1287, %v1383
    %v1385 = vpop.f32.mrb[0].mxu0
    %1386 = vmatprep.mubr.bf16.mxu0 %v512
    %1387 = vmatmul.mubr.bf16.gmra.mrb[0].mxu0 %v511
    %v1388 = vpop.f32.mrb[0].mxu0
    %v1389 = vadd.f32 %v1292, %v1388
    %v1390 = vpop.f32.mrb[0].mxu0
    %v1391 = vpop.f32.mrb[0].mxu0
    %v1392 = vadd.f32 %v1295, %v1391
    %v1393 = vpop.f32.mrb[0].mxu0
    %1394 = vmatprep.mubr.bf16.mxu0 %v521
    %1395 = vmatmul.mubr.bf16.gmra.mrb[0].mxu0 %v520
    %v1396 = vpop.f32.mrb[0].mxu0
    %v1397 = vadd.f32 %v1300, %v1396
    %v1398 = vpop.f32.mrb[0].mxu0
    %v1399 = vpop.f32.mrb[0].mxu0
    %v1400 = vadd.f32 %v1303, %v1399
    %v1401 = vpop.f32.mrb[0].mxu0
    %1402 = vmatprep.mubr.bf16.mxu0 %v530
    %1403 = vmatmul.mubr.bf16.gmra.mrb[0].mxu0 %v529
    %v1404 = vpop.f32.mrb[0].mxu0
    %v1405 = vadd.f32 %v1308, %v1404
    %v1406 = vpop.f32.mrb[0].mxu0
    %v1407 = vpop.f32.mrb[0].mxu0
    %v1408 = vadd.f32 %v1311, %v1407
    %v1409 = vpop.f32.mrb[0].mxu0
    %1410 = vmatprep.mubr.bf16.mxu0 %v539
    %1411 = vmatmul.mubr.bf16.gmra.mrb[0].mxu0 %v538
    %v1412 = vpop.f32.mrb[0].mxu0
    %v1413 = vadd.f32 %v1316, %v1412
    %v1414 = vpop.f32.mrb[0].mxu0
    %v1415 = vpop.f32.mrb[0].mxu0
    %v1416 = vadd.f32 %v1319, %v1415
    %v1417 = vpop.f32.mrb[0].mxu0
    %1418 = vmatprep.mubr.bf16.mxu0 %v548
    %1419 = vmatmul.mubr.bf16.gmra.mrb[0].mxu0 %v547
    %v1420 = vpop.f32.mrb[0].mxu0
    %v1421 = vadd.f32 %v1324, %v1420
    %v1422 = vpop.f32.mrb[0].mxu0
    %v1423 = vpop.f32.mrb[0].mxu0
    %v1424 = vadd.f32 %v1327, %v1423
    %v1425 = vpop.f32.mrb[0].mxu0
    %1426 = vmatprep.mubr.bf16.mxu0 %v557
    %1427 = vmatmul.mubr.bf16.gmra.mrb[0].mxu0 %v556
    %v1428 = vpop.f32.mrb[0].mxu0
    %v1429 = vadd.f32 %v1332, %v1428
    %v1430 = vpop.f32.mrb[0].mxu0
    %v1431 = vpop.f32.mrb[0].mxu0
    %v1432 = vadd.f32 %v1335, %v1431
    %v1433 = vpop.f32.mrb[0].mxu0
    %1434 = vdwg.mxu0
    %1435 = vmatprep.subr.bf16.mxu0 0
    %1436 = vmatpush1.bf16.msra.mxu0 %v1048
    %1437 = vmatprep.subr.bf16.mxu0 0
    %1438 = vmatpush1.bf16.msra.mxu0 %v1049
    %1439 = vmatprep.subr.bf16.mxu0 0
    %1440 = vmatpush1.bf16.msra.mxu0 %v1050
    %1441 = vmatprep.subr.bf16.mxu0 0
    %1442 = vmatpush1.bf16.msra.mxu0 %v1051
    %1443 = vmatprep.subr.bf16.mxu0 0
    %1444 = vmatpush1.bf16.msra.mxu0 %v1052
    %1445 = vmatprep.subr.bf16.mxu0 0
    %1446 = vmatpush1.bf16.msra.mxu0 %v1053
    %1447 = vmatprep.subr.bf16.mxu0 0
    %1448 = vmatpush1.bf16.msra.mxu0 %v1054
    %1449 = vmatprep.subr.bf16.mxu0 0
    %1450 = vmatpush1.bf16.msra.mxu0 %v1055
    %1451 = vmatprep.subr.bf16.mxu0 0
    %1452 = vmatpush1.bf16.msra.mxu0 %v1056
    %1453 = vmatprep.subr.bf16.mxu0 0
    %1454 = vmatpush1.bf16.msra.mxu0 %v1057
    %1455 = vmatprep.subr.bf16.mxu0 0
    %1456 = vmatpush1.bf16.msra.mxu0 %v1058
    %1457 = vmatprep.subr.bf16.mxu0 0
    %1458 = vmatpush1.bf16.msra.mxu0 %v1059
    %1459 = vmatprep.subr.bf16.mxu0 0
    %1460 = vmatpush1.bf16.msra.mxu0 %v1060
    %1461 = vmatprep.subr.bf16.mxu0 0
    %1462 = vmatpush1.bf16.msra.mxu0 %v1061
    %1463 = vmatprep.subr.bf16.mxu0 0
    %1464 = vmatpush1.bf16.msra.mxu0 %v1062
    %1465 = vmatprep.subr.bf16.mxu0 0
    %1466 = vmatpush1.bf16.msra.mxu0 %v1063
    %1467 = vmatprep.mubr.bf16.mxu0 %v496
    %1468 = vmatmul.mubr.bf16.gmra.mrb[0].mxu0 %v495
    %v1469 = vpop.f32.mrb[0].mxu0
    %v1470 = vadd.f32 %v1373, %v1469
    %v1471 = vpop.f32.mrb[0].mxu0
    %v1472 = vpop.f32.mrb[0].mxu0
    %v1473 = vadd.f32 %v1376, %v1472
    %v1474 = vpop.f32.mrb[0].mxu0
    %1475 = vmatprep.mubr.bf16.mxu0 %v505
    %1476 = vmatmul.mubr.bf16.gmra.mrb[0].mxu0 %v504
    %v1477 = vpop.f32.mrb[0].mxu0
    %v1478 = vadd.f32 %v1381, %v1477
    %v1479 = vpop.f32.mrb[0].mxu0
    %v1480 = vpop.f32.mrb[0].mxu0
    %v1481 = vadd.f32 %v1384, %v1480
    %v1482 = vpop.f32.mrb[0].mxu0
    %1483 = vmatprep.mubr.bf16.mxu0 %v514
    %1484 = vmatmul.mubr.bf16.gmra.mrb[0].mxu0 %v513
    %v1485 = vpop.f32.mrb[0].mxu0
    %v1486 = vadd.f32 %v1389, %v1485
    %v1487 = vpop.f32.mrb[0].mxu0
    %v1488 = vpop.f32.mrb[0].mxu0
    %v1489 = vadd.f32 %v1392, %v1488
    %v1490 = vpop.f32.mrb[0].mxu0
    %1491 = vmatprep.mubr.bf16.mxu0 %v523
    %1492 = vmatmul.mubr.bf16.gmra.mrb[0].mxu0 %v522
    %v1493 = vpop.f32.mrb[0].mxu0
    %v1494 = vadd.f32 %v1397, %v1493
    %v1495 = vpop.f32.mrb[0].mxu0
    %v1496 = vpop.f32.mrb[0].mxu0
    %v1497 = vadd.f32 %v1400, %v1496
    %v1498 = vpop.f32.mrb[0].mxu0
    %1499 = vmatprep.mubr.bf16.mxu0 %v532
    %1500 = vmatmul.mubr.bf16.gmra.mrb[0].mxu0 %v531
    %v1501 = vpop.f32.mrb[0].mxu0
    %v1502 = vadd.f32 %v1405, %v1501
    %v1503 = vpop.f32.mrb[0].mxu0
    %v1504 = vpop.f32.mrb[0].mxu0
    %v1505 = vadd.f32 %v1408, %v1504
    %v1506 = vpop.f32.mrb[0].mxu0
    %1507 = vmatprep.mubr.bf16.mxu0 %v541
    %1508 = vmatmul.mubr.bf16.gmra.mrb[0].mxu0 %v540
    %v1509 = vpop.f32.mrb[0].mxu0
    %v1510 = vadd.f32 %v1413, %v1509
    %v1511 = vpop.f32.mrb[0].mxu0
    %v1512 = vpop.f32.mrb[0].mxu0
    %v1513 = vadd.f32 %v1416, %v1512
    %v1514 = vpop.f32.mrb[0].mxu0
    %1515 = vmatprep.mubr.bf16.mxu0 %v550
    %1516 = vmatmul.mubr.bf16.gmra.mrb[0].mxu0 %v549
    %v1517 = vpop.f32.mrb[0].mxu0
    %v1518 = vadd.f32 %v1421, %v1517
    %v1519 = vpop.f32.mrb[0].mxu0
    %v1520 = vpop.f32.mrb[0].mxu0
    %v1521 = vadd.f32 %v1424, %v1520
    %v1522 = vpop.f32.mrb[0].mxu0
    %1523 = vmatprep.mubr.bf16.mxu0 %v559
    %1524 = vmatmul.mubr.bf16.gmra.mrb[0].mxu0 %v558
    %v1525 = vpop.f32.mrb[0].mxu0
    %v1526 = vadd.f32 %v1429, %v1525
    %v1527 = vpop.f32.mrb[0].mxu0
    %v1528 = vpop.f32.mrb[0].mxu0
    %v1529 = vadd.f32 %v1432, %v1528
    %v1530 = vpop.f32.mrb[0].mxu0
    %1531 = vdwg.mxu0
    %1532 = vmatprep.subr.bf16.mxu0 0
    %1533 = vmatpush1.bf16.msra.mxu0 %v1064
    %1534 = vmatprep.subr.bf16.mxu0 0
    %1535 = vmatpush1.bf16.msra.mxu0 %v1065
    %1536 = vmatprep.subr.bf16.mxu0 0
    %1537 = vmatpush1.bf16.msra.mxu0 %v1066
    %1538 = vmatprep.subr.bf16.mxu0 0
    %1539 = vmatpush1.bf16.msra.mxu0 %v1067
    %1540 = vmatprep.subr.bf16.mxu0 0
    %1541 = vmatpush1.bf16.msra.mxu0 %v1068
    %1542 = vmatprep.subr.bf16.mxu0 0
    %1543 = vmatpush1.bf16.msra.mxu0 %v1069
    %1544 = vmatprep.subr.bf16.mxu0 0
    %1545 = vmatpush1.bf16.msra.mxu0 %v1070
    %1546 = vmatprep.subr.bf16.mxu0 0
    %1547 = vmatpush1.bf16.msra.mxu0 %v1071
    %1548 = vmatprep.subr.bf16.mxu0 0
    %1549 = vmatpush1.bf16.msra.mxu0 0
    %1550 = vmatprep.subr.bf16.mxu0 0
    %1551 = vmatpush1.bf16.msra.mxu0 0
    %1552 = vmatprep.subr.bf16.mxu0 0
    %1553 = vmatpush1.bf16.msra.mxu0 0
    %1554 = vmatprep.subr.bf16.mxu0 0
    %1555 = vmatpush1.bf16.msra.mxu0 0
    %1556 = vmatprep.subr.bf16.mxu0 0
    %1557 = vmatpush1.bf16.msra.mxu0 0
    %1558 = vmatprep.subr.bf16.mxu0 0
    %1559 = vmatpush1.bf16.msra.mxu0 0
    %1560 = vmatprep.subr.bf16.mxu0 0
    %1561 = vmatpush1.bf16.msra.mxu0 0
    %1562 = vmatprep.subr.bf16.mxu0 0
    %1563 = vmatpush1.bf16.msra.mxu0 0
    %1564 = vmatprep.mubr.bf16.mxu0 0
    %1565 = vmatmul.mubr.bf16.gmra.mrb[0].mxu0 %v497
    %v1566 = vpop.f32.mrb[0].mxu0
    %v1567 = vadd.f32 %v1470, %v1566
    %v1568 = vpop.f32.mrb[0].mxu0
    %v1569 = vpop.f32.mrb[0].mxu0
    %v1570 = vadd.f32 %v1473, %v1569
    %v1571 = vpop.f32.mrb[0].mxu0
    %1572 = vmatprep.mubr.bf16.mxu0 0
    %1573 = vmatmul.mubr.bf16.gmra.mrb[0].mxu0 %v506
    %v1574 = vpop.f32.mrb[0].mxu0
    %v1575 = vadd.f32 %v1478, %v1574
    %v1576 = vpop.f32.mrb[0].mxu0
    %v1577 = vpop.f32.mrb[0].mxu0
    %v1578 = vadd.f32 %v1481, %v1577
    %v1579 = vpop.f32.mrb[0].mxu0
    %1580 = vmatprep.mubr.bf16.mxu0 0
    %1581 = vmatmul.mubr.bf16.gmra.mrb[0].mxu0 %v515
    %v1582 = vpop.f32.mrb[0].mxu0
    %v1583 = vadd.f32 %v1486, %v1582
    %v1584 = vpop.f32.mrb[0].mxu0
    %v1585 = vpop.f32.mrb[0].mxu0
    %v1586 = vadd.f32 %v1489, %v1585
    %v1587 = vpop.f32.mrb[0].mxu0
    %1588 = vmatprep.mubr.bf16.mxu0 0
    %1589 = vmatmul.mubr.bf16.gmra.mrb[0].mxu0 %v524
    %v1590 = vpop.f32.mrb[0].mxu0
    %v1591 = vadd.f32 %v1494, %v1590
    %v1592 = vpop.f32.mrb[0].mxu0
    %v1593 = vpop.f32.mrb[0].mxu0
    %v1594 = vadd.f32 %v1497, %v1593
    %v1595 = vpop.f32.mrb[0].mxu0
    %1596 = vmatprep.mubr.bf16.mxu0 0
    %1597 = vmatmul.mubr.bf16.gmra.mrb[0].mxu0 %v533
    %v1598 = vpop.f32.mrb[0].mxu0
    %v1599 = vadd.f32 %v1502, %v1598
    %v1600 = vpop.f32.mrb[0].mxu0
    %v1601 = vpop.f32.mrb[0].mxu0
    %v1602 = vadd.f32 %v1505, %v1601
    %v1603 = vpop.f32.mrb[0].mxu0
    %1604 = vmatprep.mubr.bf16.mxu0 0
    %1605 = vmatmul.mubr.bf16.gmra.mrb[0].mxu0 %v542
    %v1606 = vpop.f32.mrb[0].mxu0
    %v1607 = vadd.f32 %v1510, %v1606
    %v1608 = vpop.f32.mrb[0].mxu0
    %v1609 = vpop.f32.mrb[0].mxu0
    %v1610 = vadd.f32 %v1513, %v1609
    %v1611 = vpop.f32.mrb[0].mxu0
    %1612 = vmatprep.mubr.bf16.mxu0 0
    %1613 = vmatmul.mubr.bf16.gmra.mrb[0].mxu0 %v551
    %v1614 = vpop.f32.mrb[0].mxu0
    %v1615 = vadd.f32 %v1518, %v1614
    %v1616 = vpop.f32.mrb[0].mxu0
    %v1617 = vpop.f32.mrb[0].mxu0
    %v1618 = vadd.f32 %v1521, %v1617
    %v1619 = vpop.f32.mrb[0].mxu0
    %1620 = vmatprep.mubr.bf16.mxu0 0
    %1621 = vmatmul.mubr.bf16.gmra.mrb[0].mxu0 %v560
    %v1622 = vpop.f32.mrb[0].mxu0
    %v1623 = vadd.f32 %v1526, %v1622
    %v1624 = vpop.f32.mrb[0].mxu0
    %v1625 = vpop.f32.mrb[0].mxu0
    %v1626 = vadd.f32 %v1529, %v1625
    %v1627 = vpop.f32.mrb[0].mxu0
    %1628 = vdwg.mxu0
    %v1629 = vmax.f32 %v1567, 0.0
    %v1630 = vmax.f32 %v1570, 0.0
    %v1631 = vmax.f32 %v1575, 0.0
    %v1632 = vmax.f32 %v1578, 0.0
    %v1633 = vmax.f32 %v1583, 0.0
    %v1634 = vmax.f32 %v1586, 0.0
    %v1635 = vmax.f32 %v1591, 0.0
    %v1636 = vmax.f32 %v1594, 0.0
    %v1637 = vmax.f32 %v1599, 0.0
    %v1638 = vmax.f32 %v1602, 0.0
    %v1639 = vmax.f32 %v1607, 0.0
    %v1640 = vmax.f32 %v1610, 0.0
    %v1641 = vmax.f32 %v1615, 0.0
    %v1642 = vmax.f32 %v1618, 0.0
    %v1643 = vmax.f32 %v1623, 0.0
    %v1644 = vmax.f32 %v1626, 0.0
    %1645 = vst [vmem:[%s183 + $0x8] sm:$0xff] %v1629
    %1646 = vst [vmem:[%s183 + $0x20] sm:$0xff] %v1630
    %1647 = vst [vmem:[%s183 + $0x38] sm:$0xff] %v1631
    %1648 = vst [vmem:[%s183 + $0x50] sm:$0xff] %v1632
    %1649 = vst [vmem:[%s183 + $0x68] sm:$0xff] %v1633
    %1650 = vst [vmem:[%s183 + $0x80] sm:$0xff] %v1634
    %1651 = vst [vmem:[%s183 + $0x98] sm:$0xff] %v1635
    %1652 = vst [vmem:[%s183 + $0xb0] sm:$0xff] %v1636
    %1653 = vst [vmem:[%s183 + $0xf8] sm:$0xff] %v1637
    %1654 = vst [vmem:[%s183 + $0x110] sm:$0xff] %v1638
    %1655 = vst [vmem:[%s183 + $0x128] sm:$0xff] %v1639
    %1656 = vst [vmem:[%s183 + $0x140] sm:$0xff] %v1640
    %1657 = vst [vmem:[%s183 + $0x158] sm:$0xff] %v1641
    %1658 = vst [vmem:[%s183 + $0x170] sm:$0xff] %v1642
    %1659 = vst [vmem:[%s183 + $0x188] sm:$0xff] %v1643
    %1660 = vst [vmem:[%s183 + $0x1a0] sm:$0xff] %v1644
    %v1661 = vld [vmem:[#allocation2 + $0x7] sm:$0xff]
    %v1662 = vld [vmem:[#allocation2 + $0x1f] sm:$0xff]
    %v1663 = vld [vmem:[#allocation2 + $0x37] sm:$0xff]
    %v1664 = vld [vmem:[#allocation2 + $0x4f] sm:$0xff]
    %v1665 = vld [vmem:[#allocation2 + $0x67] sm:$0xff]
    %v1666 = vld [vmem:[#allocation2 + $0x7f] sm:$0xff]
    %v1667 = vld [vmem:[#allocation2 + $0x97] sm:$0xff]
    %v1668 = vld [vmem:[#allocation2 + $0xaf] sm:$0xff]
    %v1669 = vld [vmem:[#allocation2 + $0xf7] sm:$0xff]
    %v1670 = vld [vmem:[#allocation2 + $0x10f] sm:$0xff]
    %v1671 = vld [vmem:[#allocation2 + $0x127] sm:$0xff]
    %v1672 = vld [vmem:[#allocation2 + $0x13f] sm:$0xff]
    %v1673 = vld [vmem:[#allocation2 + $0x157] sm:$0xff]
    %v1674 = vld [vmem:[#allocation2 + $0x16f] sm:$0xff]
    %v1675 = vld [vmem:[#allocation2 + $0x187] sm:$0xff]
    %v1676 = vld [vmem:[#allocation2 + $0x19f] sm:$0xff]
    %v1677 = vpack.c.bf16 %v1662, %v1661
    %v1678 = vpack.c.bf16 %v1664, %v1663
    %v1679 = vpack.c.bf16 %v1666, %v1665
    %v1680 = vpack.c.bf16 %v1668, %v1667
    %v1681 = vpack.c.bf16 %v1670, %v1669
    %v1682 = vpack.c.bf16 %v1672, %v1671
    %v1683 = vpack.c.bf16 %v1674, %v1673
    %v1684 = vpack.c.bf16 %v1676, %v1675
    %1685 = vst [vmem:[#allocation3] sm:$0xff] %v1677
    %1686 = vst [vmem:[#allocation3 + $0x48] sm:$0xff] %v1678
    %1687 = vst [vmem:[#allocation3 + $0x90] sm:$0xff] %v1679
    %1688 = vst [vmem:[#allocation3 + $0xd8] sm:$0xff] %v1680
    %1689 = vst [vmem:[#allocation3 + $0x120] sm:$0xff] %v1681
    %1690 = vst [vmem:[#allocation3 + $0x168] sm:$0xff] %v1682
    %1691 = vst [vmem:[#allocation3 + $0x1b0] sm:$0xff] %v1683
    %1692 = vst [vmem:[#allocation3 + $0x1f8] sm:$0xff] %v1684
    %v1693 = vld [vmem:[#allocation2 + $0x8] sm:$0xff]
    %v1694 = vld [vmem:[#allocation2 + $0x20] sm:$0xff]
    %v1695 = vld [vmem:[#allocation2 + $0x38] sm:$0xff]
    %v1696 = vld [vmem:[#allocation2 + $0x50] sm:$0xff]
    %v1697 = vld [vmem:[#allocation2 + $0x68] sm:$0xff]
    %v1698 = vld [vmem:[#allocation2 + $0x80] sm:$0xff]
    %v1699 = vld [vmem:[#allocation2 + $0x98] sm:$0xff]
    %v1700 = vld [vmem:[#allocation2 + $0xb0] sm:$0xff]
    %v1701 = vld [vmem:[#allocation2 + $0xf8] sm:$0xff]
    %v1702 = vld [vmem:[#allocation2 + $0x110] sm:$0xff]
    %v1703 = vld [vmem:[#allocation2 + $0x128] sm:$0xff]
    %v1704 = vld [vmem:[#allocation2 + $0x140] sm:$0xff]
    %v1705 = vld [vmem:[#allocation2 + $0x158] sm:$0xff]
    %v1706 = vld [vmem:[#allocation2 + $0x170] sm:$0xff]
    %v1707 = vld [vmem:[#allocation2 + $0x188] sm:$0xff]
    %v1708 = vld [vmem:[#allocation2 + $0x1a0] sm:$0xff]
    %v1709 = vpack.c.bf16 %v1694, %v1693
    %v1710 = vpack.c.bf16 %v1696, %v1695
    %v1711 = vpack.c.bf16 %v1698, %v1697
    %v1712 = vpack.c.bf16 %v1700, %v1699
    %v1713 = vpack.c.bf16 %v1702, %v1701
    %v1714 = vpack.c.bf16 %v1704, %v1703
    %v1715 = vpack.c.bf16 %v1706, %v1705
    %v1716 = vpack.c.bf16 %v1708, %v1707
    %1717 = vst [vmem:[#allocation3 + $0x8] sm:$0xff] %v1709
    %1718 = vst [vmem:[#allocation3 + $0x50] sm:$0xff] %v1710
    %1719 = vst [vmem:[#allocation3 + $0x98] sm:$0xff] %v1711
    %1720 = vst [vmem:[#allocation3 + $0xe0] sm:$0xff] %v1712
    %1721 = vst [vmem:[#allocation3 + $0x128] sm:$0xff] %v1713
    %1722 = vst [vmem:[#allocation3 + $0x170] sm:$0xff] %v1714
    %1723 = vst [vmem:[#allocation3 + $0x1b8] sm:$0xff] %v1715
    %1724 = vst [vmem:[#allocation3 + $0x200] sm:$0xff] %v1716
    %v1725 = vld [vmem:[#allocation2 + $0x9] sm:$0xff]
    %v1726 = vld [vmem:[#allocation2 + $0x21] sm:$0xff]
    %v1727 = vld [vmem:[#allocation2 + $0x39] sm:$0xff]
    %v1728 = vld [vmem:[#allocation2 + $0x51] sm:$0xff]
    %v1729 = vld [vmem:[#allocation2 + $0x69] sm:$0xff]
    %v1730 = vld [vmem:[#allocation2 + $0x81] sm:$0xff]
    %v1731 = vld [vmem:[#allocation2 + $0x99] sm:$0xff]
    %v1732 = vld [vmem:[#allocation2 + $0xb1] sm:$0xff]
    %v1733 = vld [vmem:[#allocation2 + $0xf9] sm:$0xff]
    %v1734 = vld [vmem:[#allocation2 + $0x111] sm:$0xff]
    %v1735 = vld [vmem:[#allocation2 + $0x129] sm:$0xff]
    %v1736 = vld [vmem:[#allocation2 + $0x141] sm:$0xff]
    %v1737 = vld [vmem:[#allocation2 + $0x159] sm:$0xff]
    %v1738 = vld [vmem:[#allocation2 + $0x171] sm:$0xff]
    %v1739 = vld [vmem:[#allocation2 + $0x189] sm:$0xff]
    %v1740 = vld [vmem:[#allocation2 + $0x1a1] sm:$0xff]
    %v1741 = vpack.c.bf16 %v1726, %v1725
    %v1742 = vpack.c.bf16 %v1728, %v1727
    %v1743 = vpack.c.bf16 %v1730, %v1729
    %v1744 = vpack.c.bf16 %v1732, %v1731
    %v1745 = vpack.c.bf16 %v1734, %v1733
    %v1746 = vpack.c.bf16 %v1736, %v1735
    %v1747 = vpack.c.bf16 %v1738, %v1737
    %v1748 = vpack.c.bf16 %v1740, %v1739
    %1749 = vst [vmem:[#allocation3 + $0x10] sm:$0xff] %v1741
    %1750 = vst [vmem:[#allocation3 + $0x58] sm:$0xff] %v1742
    %1751 = vst [vmem:[#allocation3 + $0xa0] sm:$0xff] %v1743
    %1752 = vst [vmem:[#allocation3 + $0xe8] sm:$0xff] %v1744
    %1753 = vst [vmem:[#allocation3 + $0x130] sm:$0xff] %v1745
    %1754 = vst [vmem:[#allocation3 + $0x178] sm:$0xff] %v1746
    %1755 = vst [vmem:[#allocation3 + $0x1c0] sm:$0xff] %v1747
    %1756 = vst [vmem:[#allocation3 + $0x208] sm:$0xff] %v1748
    %v1757 = vld [vmem:[%s183 + $0x7] sm:$0xff]
    %v1758 = vld [vmem:[%s183 + $0x1f] sm:$0xff]
    %v1759 = vld [vmem:[%s183 + $0x37] sm:$0xff]
    %v1760 = vld [vmem:[%s183 + $0x4f] sm:$0xff]
    %v1761 = vld [vmem:[%s183 + $0x67] sm:$0xff]
    %v1762 = vld [vmem:[%s183 + $0x7f] sm:$0xff]
    %v1763 = vld [vmem:[%s183 + $0x97] sm:$0xff]
    %v1764 = vld [vmem:[%s183 + $0xaf] sm:$0xff]
    %v1765 = vld [vmem:[%s183 + $0xf7] sm:$0xff]
    %v1766 = vld [vmem:[%s183 + $0x10f] sm:$0xff]
    %v1767 = vld [vmem:[%s183 + $0x127] sm:$0xff]
    %v1768 = vld [vmem:[%s183 + $0x13f] sm:$0xff]
    %v1769 = vld [vmem:[%s183 + $0x157] sm:$0xff]
    %v1770 = vld [vmem:[%s183 + $0x16f] sm:$0xff]
    %v1771 = vld [vmem:[%s183 + $0x187] sm:$0xff]
    %v1772 = vld [vmem:[%s183 + $0x19f] sm:$0xff]
    %v1773 = vpack.c.bf16 %v1758, %v1757
    %v1774 = vpack.c.bf16 %v1760, %v1759
    %v1775 = vpack.c.bf16 %v1762, %v1761
    %v1776 = vpack.c.bf16 %v1764, %v1763
    %v1777 = vpack.c.bf16 %v1766, %v1765
    %v1778 = vpack.c.bf16 %v1768, %v1767
    %v1779 = vpack.c.bf16 %v1770, %v1769
    %v1780 = vpack.c.bf16 %v1772, %v1771
    %1781 = vst [vmem:[#allocation3 + $0x18] sm:$0xff] %v1773
    %1782 = vst [vmem:[#allocation3 + $0x60] sm:$0xff] %v1774
    %1783 = vst [vmem:[#allocation3 + $0xa8] sm:$0xff] %v1775
    %1784 = vst [vmem:[#allocation3 + $0xf0] sm:$0xff] %v1776
    %1785 = vst [vmem:[#allocation3 + $0x138] sm:$0xff] %v1777
    %1786 = vst [vmem:[#allocation3 + $0x180] sm:$0xff] %v1778
    %1787 = vst [vmem:[#allocation3 + $0x1c8] sm:$0xff] %v1779
    %1788 = vst [vmem:[#allocation3 + $0x210] sm:$0xff] %v1780
    %v1789 = vld [vmem:[%s183 + $0x8] sm:$0xff]
    %v1790 = vld [vmem:[%s183 + $0x20] sm:$0xff]
    %v1791 = vld [vmem:[%s183 + $0x38] sm:$0xff]
    %v1792 = vld [vmem:[%s183 + $0x50] sm:$0xff]
    %v1793 = vld [vmem:[%s183 + $0x68] sm:$0xff]
    %v1794 = vld [vmem:[%s183 + $0x80] sm:$0xff]
    %v1795 = vld [vmem:[%s183 + $0x98] sm:$0xff]
    %v1796 = vld [vmem:[%s183 + $0xb0] sm:$0xff]
    %v1797 = vld [vmem:[%s183 + $0xf8] sm:$0xff]
    %v1798 = vld [vmem:[%s183 + $0x110] sm:$0xff]
    %v1799 = vld [vmem:[%s183 + $0x128] sm:$0xff]
    %v1800 = vld [vmem:[%s183 + $0x140] sm:$0xff]
    %v1801 = vld [vmem:[%s183 + $0x158] sm:$0xff]
    %v1802 = vld [vmem:[%s183 + $0x170] sm:$0xff]
    %v1803 = vld [vmem:[%s183 + $0x188] sm:$0xff]
    %v1804 = vld [vmem:[%s183 + $0x1a0] sm:$0xff]
    %v1805 = vpack.c.bf16 %v1790, %v1789
    %v1806 = vpack.c.bf16 %v1792, %v1791
    %v1807 = vpack.c.bf16 %v1794, %v1793
    %v1808 = vpack.c.bf16 %v1796, %v1795
    %v1809 = vpack.c.bf16 %v1798, %v1797
    %v1810 = vpack.c.bf16 %v1800, %v1799
    %v1811 = vpack.c.bf16 %v1802, %v1801
    %v1812 = vpack.c.bf16 %v1804, %v1803
    %1813 = vst [vmem:[#allocation3 + $0x20] sm:$0xff] %v1805
    %1814 = vst [vmem:[#allocation3 + $0x68] sm:$0xff] %v1806
    %1815 = vst [vmem:[#allocation3 + $0xb0] sm:$0xff] %v1807
    %1816 = vst [vmem:[#allocation3 + $0xf8] sm:$0xff] %v1808
    %1817 = vst [vmem:[#allocation3 + $0x140] sm:$0xff] %v1809
    %1818 = vst [vmem:[#allocation3 + $0x188] sm:$0xff] %v1810
    %1819 = vst [vmem:[#allocation3 + $0x1d0] sm:$0xff] %v1811
    %1820 = vst [vmem:[#allocation3 + $0x218] sm:$0xff] %v1812
    %v1821 = vld [vmem:[%s183 + $0x9] sm:$0xff]
    %v1822 = vld [vmem:[%s183 + $0x21] sm:$0xff]
    %v1823 = vld [vmem:[%s183 + $0x39] sm:$0xff]
    %v1824 = vld [vmem:[%s183 + $0x51] sm:$0xff]
    %v1825 = vld [vmem:[%s183 + $0x69] sm:$0xff]
    %v1826 = vld [vmem:[%s183 + $0x81] sm:$0xff]
    %v1827 = vld [vmem:[%s183 + $0x99] sm:$0xff]
    %v1828 = vld [vmem:[%s183 + $0xb1] sm:$0xff]
    %v1829 = vld [vmem:[%s183 + $0xf9] sm:$0xff]
    %v1830 = vld [vmem:[%s183 + $0x111] sm:$0xff]
    %v1831 = vld [vmem:[%s183 + $0x129] sm:$0xff]
    %v1832 = vld [vmem:[%s183 + $0x141] sm:$0xff]
    %v1833 = vld [vmem:[%s183 + $0x159] sm:$0xff]
    %v1834 = vld [vmem:[%s183 + $0x171] sm:$0xff]
    %v1835 = vld [vmem:[%s183 + $0x189] sm:$0xff]
    %v1836 = vld [vmem:[%s183 + $0x1a1] sm:$0xff]
    %v1837 = vpack.c.bf16 %v1822, %v1821
    %v1838 = vpack.c.bf16 %v1824, %v1823
    %v1839 = vpack.c.bf16 %v1826, %v1825
    %v1840 = vpack.c.bf16 %v1828, %v1827
    %v1841 = vpack.c.bf16 %v1830, %v1829
    %v1842 = vpack.c.bf16 %v1832, %v1831
    %v1843 = vpack.c.bf16 %v1834, %v1833
    %v1844 = vpack.c.bf16 %v1836, %v1835
    %1845 = vst [vmem:[#allocation3 + $0x28] sm:$0xff] %v1837
    %1846 = vst [vmem:[#allocation3 + $0x70] sm:$0xff] %v1838
    %1847 = vst [vmem:[#allocation3 + $0xb8] sm:$0xff] %v1839
    %1848 = vst [vmem:[#allocation3 + $0x100] sm:$0xff] %v1840
    %1849 = vst [vmem:[#allocation3 + $0x148] sm:$0xff] %v1841
    %1850 = vst [vmem:[#allocation3 + $0x190] sm:$0xff] %v1842
    %1851 = vst [vmem:[#allocation3 + $0x1d8] sm:$0xff] %v1843
    %1852 = vst [vmem:[#allocation3 + $0x220] sm:$0xff] %v1844
    %v1853 = vld [vmem:[%s392 + $0x7] sm:$0xff]
    %v1854 = vld [vmem:[%s392 + $0x1f] sm:$0xff]
    %v1855 = vld [vmem:[%s392 + $0x37] sm:$0xff]
    %v1856 = vld [vmem:[%s392 + $0x4f] sm:$0xff]
    %v1857 = vld [vmem:[%s392 + $0x67] sm:$0xff]
    %v1858 = vld [vmem:[%s392 + $0x7f] sm:$0xff]
    %v1859 = vld [vmem:[%s392 + $0x97] sm:$0xff]
    %v1860 = vld [vmem:[%s392 + $0xaf] sm:$0xff]
    %v1861 = vld [vmem:[%s392 + $0xf7] sm:$0xff]
    %v1862 = vld [vmem:[%s392 + $0x10f] sm:$0xff]
    %v1863 = vld [vmem:[%s392 + $0x127] sm:$0xff]
    %v1864 = vld [vmem:[%s392 + $0x13f] sm:$0xff]
    %v1865 = vld [vmem:[%s392 + $0x157] sm:$0xff]
    %v1866 = vld [vmem:[%s392 + $0x16f] sm:$0xff]
    %v1867 = vld [vmem:[%s392 + $0x187] sm:$0xff]
    %v1868 = vld [vmem:[%s392 + $0x19f] sm:$0xff]
    %v1869 = vpack.c.bf16 %v1854, %v1853
    %v1870 = vpack.c.bf16 %v1856, %v1855
    %v1871 = vpack.c.bf16 %v1858, %v1857
    %v1872 = vpack.c.bf16 %v1860, %v1859
    %v1873 = vpack.c.bf16 %v1862, %v1861
    %v1874 = vpack.c.bf16 %v1864, %v1863
    %v1875 = vpack.c.bf16 %v1866, %v1865
    %v1876 = vpack.c.bf16 %v1868, %v1867
    %1877 = vst [vmem:[#allocation3 + $0x30] sm:$0xff] %v1869
    %1878 = vst [vmem:[#allocation3 + $0x78] sm:$0xff] %v1870
    %1879 = vst [vmem:[#allocation3 + $0xc0] sm:$0xff] %v1871
    %1880 = vst [vmem:[#allocation3 + $0x108] sm:$0xff] %v1872
    %1881 = vst [vmem:[#allocation3 + $0x150] sm:$0xff] %v1873
    %1882 = vst [vmem:[#allocation3 + $0x198] sm:$0xff] %v1874
    %1883 = vst [vmem:[#allocation3 + $0x1e0] sm:$0xff] %v1875
    %1884 = vst [vmem:[#allocation3 + $0x228] sm:$0xff] %v1876
    %v1885 = vld [vmem:[%s392 + $0x8] sm:$0xff]
    %v1886 = vld [vmem:[%s392 + $0x20] sm:$0xff]
    %v1887 = vld [vmem:[%s392 + $0x38] sm:$0xff]
    %v1888 = vld [vmem:[%s392 + $0x50] sm:$0xff]
    %v1889 = vld [vmem:[%s392 + $0x68] sm:$0xff]
    %v1890 = vld [vmem:[%s392 + $0x80] sm:$0xff]
    %v1891 = vld [vmem:[%s392 + $0x98] sm:$0xff]
    %v1892 = vld [vmem:[%s392 + $0xb0] sm:$0xff]
    %v1893 = vld [vmem:[%s392 + $0xf8] sm:$0xff]
    %v1894 = vld [vmem:[%s392 + $0x110] sm:$0xff]
    %v1895 = vld [vmem:[%s392 + $0x128] sm:$0xff]
    %v1896 = vld [vmem:[%s392 + $0x140] sm:$0xff]
    %v1897 = vld [vmem:[%s392 + $0x158] sm:$0xff]
    %v1898 = vld [vmem:[%s392 + $0x170] sm:$0xff]
    %v1899 = vld [vmem:[%s392 + $0x188] sm:$0xff]
    %v1900 = vld [vmem:[%s392 + $0x1a0] sm:$0xff]
    %v1901 = vpack.c.bf16 %v1886, %v1885
    %v1902 = vpack.c.bf16 %v1888, %v1887
    %v1903 = vpack.c.bf16 %v1890, %v1889
    %v1904 = vpack.c.bf16 %v1892, %v1891
    %v1905 = vpack.c.bf16 %v1894, %v1893
    %v1906 = vpack.c.bf16 %v1896, %v1895
    %v1907 = vpack.c.bf16 %v1898, %v1897
    %v1908 = vpack.c.bf16 %v1900, %v1899
    %1909 = vst [vmem:[#allocation3 + $0x38] sm:$0xff] %v1901
    %1910 = vst [vmem:[#allocation3 + $0x80] sm:$0xff] %v1902
    %1911 = vst [vmem:[#allocation3 + $0xc8] sm:$0xff] %v1903
    %1912 = vst [vmem:[#allocation3 + $0x110] sm:$0xff] %v1904
    %1913 = vst [vmem:[#allocation3 + $0x158] sm:$0xff] %v1905
    %1914 = vst [vmem:[#allocation3 + $0x1a0] sm:$0xff] %v1906
    %1915 = vst [vmem:[#allocation3 + $0x1e8] sm:$0xff] %v1907
    %1916 = vst [vmem:[#allocation3 + $0x230] sm:$0xff] %v1908
    %v1917 = vld [vmem:[%s392 + $0x9] sm:$0xff]
    %v1918 = vld [vmem:[%s392 + $0x21] sm:$0xff]
    %v1919 = vld [vmem:[%s392 + $0x39] sm:$0xff]
    %v1920 = vld [vmem:[%s392 + $0x51] sm:$0xff]
    %v1921 = vld [vmem:[%s392 + $0x69] sm:$0xff]
    %v1922 = vld [vmem:[%s392 + $0x81] sm:$0xff]
    %v1923 = vld [vmem:[%s392 + $0x99] sm:$0xff]
    %v1924 = vld [vmem:[%s392 + $0xb1] sm:$0xff]
    %v1925 = vld [vmem:[%s392 + $0xf9] sm:$0xff]
    %v1926 = vld [vmem:[%s392 + $0x111] sm:$0xff]
    %v1927 = vld [vmem:[%s392 + $0x129] sm:$0xff]
    %v1928 = vld [vmem:[%s392 + $0x141] sm:$0xff]
    %v1929 = vld [vmem:[%s392 + $0x159] sm:$0xff]
    %v1930 = vld [vmem:[%s392 + $0x171] sm:$0xff]
    %v1931 = vld [vmem:[%s392 + $0x189] sm:$0xff]
    %v1932 = vld [vmem:[%s392 + $0x1a1] sm:$0xff]
    %v1933 = vpack.c.bf16 %v1918, %v1917
    %v1934 = vpack.c.bf16 %v1920, %v1919
    %v1935 = vpack.c.bf16 %v1922, %v1921
    %v1936 = vpack.c.bf16 %v1924, %v1923
    %v1937 = vpack.c.bf16 %v1926, %v1925
    %v1938 = vpack.c.bf16 %v1928, %v1927
    %v1939 = vpack.c.bf16 %v1930, %v1929
    %v1940 = vpack.c.bf16 %v1932, %v1931
    %1941 = vst [vmem:[#allocation3 + $0x40] sm:$0xff] %v1933
    %1942 = vst [vmem:[#allocation3 + $0x88] sm:$0xff] %v1934
    %1943 = vst [vmem:[#allocation3 + $0xd0] sm:$0xff] %v1935
    %1944 = vst [vmem:[#allocation3 + $0x118] sm:$0xff] %v1936
    %1945 = vst [vmem:[#allocation3 + $0x160] sm:$0xff] %v1937
    %1946 = vst [vmem:[#allocation3 + $0x1a8] sm:$0xff] %v1938
    %1947 = vst [vmem:[#allocation3 + $0x1f0] sm:$0xff] %v1939
    %1948 = vst [vmem:[#allocation3 + $0x238] sm:$0xff] %v1940
    %v1949 = vld [vmem:[#allocation3] sm:$0xff]
    %v1950 = vld [vmem:[#allocation3 + $0x8] sm:$0xff]
    %v1951 = vld [vmem:[#allocation3 + $0x10] sm:$0xff]
    %v1952 = vld [vmem:[#allocation3 + $0x18] sm:$0xff]
    %v1953 = vld [vmem:[#allocation3 + $0x20] sm:$0xff]
    %v1954 = vld [vmem:[#allocation3 + $0x28] sm:$0xff]
    %v1955 = vld [vmem:[#allocation3 + $0x30] sm:$0xff]
    %v1956 = vld [vmem:[#allocation3 + $0x38] sm:$0xff]
    %v1957 = vld [vmem:[#allocation3 + $0x40] sm:$0xff]
    %v1958 = vld [vmem:[#allocation3 + $0x48] sm:$0xff]
    %v1959 = vld [vmem:[#allocation3 + $0x50] sm:$0xff]
    %v1960 = vld [vmem:[#allocation3 + $0x58] sm:$0xff]
    %v1961 = vld [vmem:[#allocation3 + $0x60] sm:$0xff]
    %v1962 = vld [vmem:[#allocation3 + $0x68] sm:$0xff]
    %v1963 = vld [vmem:[#allocation3 + $0x70] sm:$0xff]
    %v1964 = vld [vmem:[#allocation3 + $0x78] sm:$0xff]
    %v1965 = vld [vmem:[#allocation3 + $0x80] sm:$0xff]
    %v1966 = vld [vmem:[#allocation3 + $0x88] sm:$0xff]
    %v1967 = vld [vmem:[#allocation3 + $0x90] sm:$0xff]
    %v1968 = vld [vmem:[#allocation3 + $0x98] sm:$0xff]
    %v1969 = vld [vmem:[#allocation3 + $0xa0] sm:$0xff]
    %v1970 = vld [vmem:[#allocation3 + $0xa8] sm:$0xff]
    %v1971 = vld [vmem:[#allocation3 + $0xb0] sm:$0xff]
    %v1972 = vld [vmem:[#allocation3 + $0xb8] sm:$0xff]
    %v1973 = vld [vmem:[#allocation3 + $0xc0] sm:$0xff]
    %v1974 = vld [vmem:[#allocation3 + $0xc8] sm:$0xff]
    %v1975 = vld [vmem:[#allocation3 + $0xd0] sm:$0xff]
    %v1976 = vld [vmem:[#allocation3 + $0xd8] sm:$0xff]
    %v1977 = vld [vmem:[#allocation3 + $0xe0] sm:$0xff]
    %v1978 = vld [vmem:[#allocation3 + $0xe8] sm:$0xff]
    %v1979 = vld [vmem:[#allocation3 + $0xf0] sm:$0xff]
    %v1980 = vld [vmem:[#allocation3 + $0xf8] sm:$0xff]
    %v1981 = vld [vmem:[#allocation3 + $0x100] sm:$0xff]
    %v1982 = vld [vmem:[#allocation3 + $0x108] sm:$0xff]
    %v1983 = vld [vmem:[#allocation3 + $0x110] sm:$0xff]
    %v1984 = vld [vmem:[#allocation3 + $0x118] sm:$0xff]
    %v1985 = vld [vmem:[#allocation3 + $0x120] sm:$0xff]
    %v1986 = vld [vmem:[#allocation3 + $0x128] sm:$0xff]
    %v1987 = vld [vmem:[#allocation3 + $0x130] sm:$0xff]
    %v1988 = vld [vmem:[#allocation3 + $0x138] sm:$0xff]
    %v1989 = vld [vmem:[#allocation3 + $0x140] sm:$0xff]
    %v1990 = vld [vmem:[#allocation3 + $0x148] sm:$0xff]
    %v1991 = vld [vmem:[#allocation3 + $0x150] sm:$0xff]
    %v1992 = vld [vmem:[#allocation3 + $0x158] sm:$0xff]
    %v1993 = vld [vmem:[#allocation3 + $0x160] sm:$0xff]
    %v1994 = vld [vmem:[#allocation3 + $0x168] sm:$0xff]
    %v1995 = vld [vmem:[#allocation3 + $0x170] sm:$0xff]
    %v1996 = vld [vmem:[#allocation3 + $0x178] sm:$0xff]
    %v1997 = vld [vmem:[#allocation3 + $0x180] sm:$0xff]
    %v1998 = vld [vmem:[#allocation3 + $0x188] sm:$0xff]
    %v1999 = vld [vmem:[#allocation3 + $0x190] sm:$0xff]
    %v2000 = vld [vmem:[#allocation3 + $0x198] sm:$0xff]
    %v2001 = vld [vmem:[#allocation3 + $0x1a0] sm:$0xff]
    %v2002 = vld [vmem:[#allocation3 + $0x1a8] sm:$0xff]
    %v2003 = vld [vmem:[#allocation3 + $0x1b0] sm:$0xff]
    %v2004 = vld [vmem:[#allocation3 + $0x1b8] sm:$0xff]
    %v2005 = vld [vmem:[#allocation3 + $0x1c0] sm:$0xff]
    %v2006 = vld [vmem:[#allocation3 + $0x1c8] sm:$0xff]
    %v2007 = vld [vmem:[#allocation3 + $0x1d0] sm:$0xff]
    %v2008 = vld [vmem:[#allocation3 + $0x1d8] sm:$0xff]
    %v2009 = vld [vmem:[#allocation3 + $0x1e0] sm:$0xff]
    %v2010 = vld [vmem:[#allocation3 + $0x1e8] sm:$0xff]
    %v2011 = vld [vmem:[#allocation3 + $0x1f0] sm:$0xff]
    %v2012 = vld [vmem:[#allocation3 + $0x1f8] sm:$0xff]
    %v2013 = vld [vmem:[#allocation3 + $0x200] sm:$0xff]
    %v2014 = vld [vmem:[#allocation3 + $0x208] sm:$0xff]
    %v2015 = vld [vmem:[#allocation3 + $0x210] sm:$0xff]
    %v2016 = vld [vmem:[#allocation3 + $0x218] sm:$0xff]
    %v2017 = vld [vmem:[#allocation3 + $0x220] sm:$0xff]
    %v2018 = vld [vmem:[#allocation3 + $0x228] sm:$0xff]
    %v2019 = vld [vmem:[#allocation3 + $0x230] sm:$0xff]
    %v2020 = vld [vmem:[#allocation3 + $0x238] sm:$0xff]
    %v2021 = vld [vmem:[#allocation6] sm:$0xf]
    %v2022 = vld [vmem:[#allocation6 + $0x4] sm:$0xf]
    %v2023 = vld [vmem:[#allocation6 + $0x8] sm:$0xf]
    %v2024 = vld [vmem:[#allocation6 + $0xc] sm:$0xf]
    %v2025 = vld [vmem:[#allocation6 + $0x10] sm:$0xf]
    %v2026 = vld [vmem:[#allocation6 + $0x14] sm:$0xf]
    %v2027 = vld [vmem:[#allocation6 + $0x18] sm:$0xf]
    %v2028 = vld [vmem:[#allocation6 + $0x1c] sm:$0xf]
    %v2029 = vld [vmem:[#allocation6 + $0x20] sm:$0xf]
    %v2030 = vld [vmem:[#allocation6 + $0x24] sm:$0xf]
    %v2031 = vld [vmem:[#allocation6 + $0x28] sm:$0xf]
    %v2032 = vld [vmem:[#allocation6 + $0x2c] sm:$0xf]
    %v2033 = vld [vmem:[#allocation6 + $0x30] sm:$0xf]
    %v2034 = vld [vmem:[#allocation6 + $0x34] sm:$0xf]
    %v2035 = vld [vmem:[#allocation6 + $0x38] sm:$0xf]
    %v2036 = vld [vmem:[#allocation6 + $0x3c] sm:$0xf]
    %v2037 = vld [vmem:[#allocation6 + $0x40] sm:$0xf]
    %v2038 = vld [vmem:[#allocation6 + $0x44] sm:$0xf]
    %v2039 = vld [vmem:[#allocation6 + $0x48] sm:$0xf]
    %v2040 = vld [vmem:[#allocation6 + $0x4c] sm:$0xf]
    %v2041 = vld [vmem:[#allocation6 + $0x50] sm:$0xf]
    %v2042 = vld [vmem:[#allocation6 + $0x54] sm:$0xf]
    %v2043 = vld [vmem:[#allocation6 + $0x58] sm:$0xf]
    %v2044 = vld [vmem:[#allocation6 + $0x5c] sm:$0xf]
    %v2045 = vld [vmem:[#allocation6 + $0x60] sm:$0xf]
    %v2046 = vld [vmem:[#allocation6 + $0x64] sm:$0xf]
    %v2047 = vld [vmem:[#allocation6 + $0x68] sm:$0xf]
    %v2048 = vld [vmem:[#allocation6 + $0x6c] sm:$0xf]
    %v2049 = vld [vmem:[#allocation6 + $0x70] sm:$0xf]
    %v2050 = vld [vmem:[#allocation6 + $0x74] sm:$0xf]
    %v2051 = vld [vmem:[#allocation6 + $0x78] sm:$0xf]
    %v2052 = vld [vmem:[#allocation6 + $0x7c] sm:$0xf]
    %v2053 = vld [vmem:[#allocation6 + $0x80] sm:$0xf]
    %v2054 = vld [vmem:[#allocation6 + $0x84] sm:$0xf]
    %v2055 = vld [vmem:[#allocation6 + $0x88] sm:$0xf]
    %v2056 = vld [vmem:[#allocation6 + $0x8c] sm:$0xf]
    %v2057 = vld [vmem:[#allocation6 + $0x90] sm:$0xf]
    %v2058 = vld [vmem:[#allocation6 + $0x94] sm:$0xf]
    %v2059 = vld [vmem:[#allocation6 + $0x98] sm:$0xf]
    %v2060 = vld [vmem:[#allocation6 + $0x9c] sm:$0xf]
    %v2061 = vld [vmem:[#allocation6 + $0xa0] sm:$0xf]
    %v2062 = vld [vmem:[#allocation6 + $0xa4] sm:$0xf]
    %v2063 = vld [vmem:[#allocation6 + $0xa8] sm:$0xf]
    %v2064 = vld [vmem:[#allocation6 + $0xac] sm:$0xf]
    %v2065 = vld [vmem:[#allocation6 + $0xb0] sm:$0xf]
    %v2066 = vld [vmem:[#allocation6 + $0xb4] sm:$0xf]
    %v2067 = vld [vmem:[#allocation6 + $0xb8] sm:$0xf]
    %v2068 = vld [vmem:[#allocation6 + $0xbc] sm:$0xf]
    %v2069 = vld [vmem:[#allocation6 + $0xc0] sm:$0xf]
    %v2070 = vld [vmem:[#allocation6 + $0xc4] sm:$0xf]
    %v2071 = vld [vmem:[#allocation6 + $0xc8] sm:$0xf]
    %v2072 = vld [vmem:[#allocation6 + $0xcc] sm:$0xf]
    %v2073 = vld [vmem:[#allocation6 + $0xd0] sm:$0xf]
    %v2074 = vld [vmem:[#allocation6 + $0xd4] sm:$0xf]
    %v2075 = vld [vmem:[#allocation6 + $0xd8] sm:$0xf]
    %v2076 = vld [vmem:[#allocation6 + $0xdc] sm:$0xf]
    %v2077 = vld [vmem:[#allocation6 + $0xe0] sm:$0xf]
    %v2078 = vld [vmem:[#allocation6 + $0xe4] sm:$0xf]
    %v2079 = vld [vmem:[#allocation6 + $0xe8] sm:$0xf]
    %v2080 = vld [vmem:[#allocation6 + $0xec] sm:$0xf]
    %v2081 = vld [vmem:[#allocation6 + $0xf0] sm:$0xf]
    %v2082 = vld [vmem:[#allocation6 + $0xf4] sm:$0xf]
    %v2083 = vld [vmem:[#allocation6 + $0xf8] sm:$0xf]
    %v2084 = vld [vmem:[#allocation6 + $0xfc] sm:$0xf]
    %v2085 = vld [vmem:[#allocation6 + $0x100] sm:$0xf]
    %v2086 = vld [vmem:[#allocation6 + $0x104] sm:$0xf]
    %v2087 = vld [vmem:[#allocation6 + $0x108] sm:$0xf]
    %v2088 = vld [vmem:[#allocation6 + $0x10c] sm:$0xf]
    %v2089 = vld [vmem:[#allocation6 + $0x110] sm:$0xf]
    %v2090 = vld [vmem:[#allocation6 + $0x114] sm:$0xf]
    %v2091 = vld [vmem:[#allocation6 + $0x118] sm:$0xf]
    %v2092 = vld [vmem:[#allocation6 + $0x11c] sm:$0xf]
    %v2093 = vld [vmem:[#allocation6 + $0x120] sm:$0xf]
    %v2094 = vld [vmem:[#allocation6 + $0x124] sm:$0xf]
    %v2095 = vld [vmem:[#allocation6 + $0x128] sm:$0xf]
    %v2096 = vld [vmem:[#allocation6 + $0x12c] sm:$0xf]
    %v2097 = vld [vmem:[#allocation6 + $0x130] sm:$0xf]
    %v2098 = vld [vmem:[#allocation6 + $0x134] sm:$0xf]
    %v2099 = vld [vmem:[#allocation6 + $0x138] sm:$0xf]
    %v2100 = vld [vmem:[#allocation6 + $0x13c] sm:$0xf]
    %v2101 = vld [vmem:[#allocation6 + $0x140] sm:$0xf]
    %v2102 = vld [vmem:[#allocation6 + $0x144] sm:$0xf]
    %v2103 = vld [vmem:[#allocation6 + $0x148] sm:$0xf]
    %v2104 = vld [vmem:[#allocation6 + $0x14c] sm:$0xf]
    %v2105 = vld [vmem:[#allocation6 + $0x150] sm:$0xf]
    %v2106 = vld [vmem:[#allocation6 + $0x154] sm:$0xf]
    %v2107 = vld [vmem:[#allocation6 + $0x158] sm:$0xf]
    %v2108 = vld [vmem:[#allocation6 + $0x15c] sm:$0xf]
    %v2109 = vld [vmem:[#allocation6 + $0x160] sm:$0xf]
    %v2110 = vld [vmem:[#allocation6 + $0x164] sm:$0xf]
    %v2111 = vld [vmem:[#allocation6 + $0x168] sm:$0xf]
    %v2112 = vld [vmem:[#allocation6 + $0x16c] sm:$0xf]
    %v2113 = vld [vmem:[#allocation6 + $0x170] sm:$0xf]
    %v2114 = vld [vmem:[#allocation6 + $0x174] sm:$0xf]
    %v2115 = vld [vmem:[#allocation6 + $0x178] sm:$0xf]
    %v2116 = vld [vmem:[#allocation6 + $0x17c] sm:$0xf]
    %v2117 = vld [vmem:[#allocation6 + $0x180] sm:$0xf]
    %v2118 = vld [vmem:[#allocation6 + $0x184] sm:$0xf]
    %v2119 = vld [vmem:[#allocation6 + $0x188] sm:$0xf]
    %v2120 = vld [vmem:[#allocation6 + $0x18c] sm:$0xf]
    %v2121 = vld [vmem:[#allocation6 + $0x190] sm:$0xf]
    %v2122 = vld [vmem:[#allocation6 + $0x194] sm:$0xf]
    %v2123 = vld [vmem:[#allocation6 + $0x198] sm:$0xf]
    %v2124 = vld [vmem:[#allocation6 + $0x19c] sm:$0xf]
    %v2125 = vld [vmem:[#allocation6 + $0x1a0] sm:$0xf]
    %v2126 = vld [vmem:[#allocation6 + $0x1a4] sm:$0xf]
    %v2127 = vld [vmem:[#allocation6 + $0x1a8] sm:$0xf]
    %v2128 = vld [vmem:[#allocation6 + $0x1ac] sm:$0xf]
    %v2129 = vld [vmem:[#allocation6 + $0x1b0] sm:$0xf]
    %v2130 = vld [vmem:[#allocation6 + $0x1b4] sm:$0xf]
    %v2131 = vld [vmem:[#allocation6 + $0x1b8] sm:$0xf]
    %v2132 = vld [vmem:[#allocation6 + $0x1bc] sm:$0xf]
    %v2133 = vld [vmem:[#allocation6 + $0x1c0] sm:$0xf]
    %v2134 = vld [vmem:[#allocation6 + $0x1c4] sm:$0xf]
    %v2135 = vld [vmem:[#allocation6 + $0x1c8] sm:$0xf]
    %v2136 = vld [vmem:[#allocation6 + $0x1cc] sm:$0xf]
    %v2137 = vld [vmem:[#allocation6 + $0x1d0] sm:$0xf]
    %v2138 = vld [vmem:[#allocation6 + $0x1d4] sm:$0xf]
    %v2139 = vld [vmem:[#allocation6 + $0x1d8] sm:$0xf]
    %v2140 = vld [vmem:[#allocation6 + $0x1dc] sm:$0xf]
    %v2141 = vld [vmem:[#allocation6 + $0x1e0] sm:$0xf]
    %v2142 = vld [vmem:[#allocation6 + $0x1e4] sm:$0xf]
    %v2143 = vld [vmem:[#allocation6 + $0x1e8] sm:$0xf]
    %v2144 = vld [vmem:[#allocation6 + $0x1ec] sm:$0xf]
    %v2145 = vld [vmem:[#allocation6 + $0x1f0] sm:$0xf]
    %v2146 = vld [vmem:[#allocation6 + $0x1f4] sm:$0xf]
    %v2147 = vld [vmem:[#allocation6 + $0x1f8] sm:$0xf]
    %v2148 = vld [vmem:[#allocation6 + $0x1fc] sm:$0xf]
    %v2149 = vld [vmem:[#allocation6 + $0x200] sm:$0xf]
    %v2150 = vld [vmem:[#allocation6 + $0x204] sm:$0xf]
    %v2151 = vld [vmem:[#allocation6 + $0x208] sm:$0xf]
    %v2152 = vld [vmem:[#allocation6 + $0x20c] sm:$0xf]
    %v2153 = vld [vmem:[#allocation6 + $0x210] sm:$0xf]
    %v2154 = vld [vmem:[#allocation6 + $0x214] sm:$0xf]
    %v2155 = vld [vmem:[#allocation6 + $0x218] sm:$0xf]
    %v2156 = vld [vmem:[#allocation6 + $0x21c] sm:$0xf]
    %v2157 = vld [vmem:[#allocation6 + $0x220] sm:$0xf]
    %v2158 = vld [vmem:[#allocation6 + $0x224] sm:$0xf]
    %v2159 = vld [vmem:[#allocation6 + $0x228] sm:$0xf]
    %v2160 = vld [vmem:[#allocation6 + $0x22c] sm:$0xf]
    %v2161 = vld [vmem:[#allocation6 + $0x230] sm:$0xf]
    %v2162 = vld [vmem:[#allocation6 + $0x234] sm:$0xf]
    %v2163 = vld [vmem:[#allocation6 + $0x238] sm:$0xf]
    %v2164 = vld [vmem:[#allocation6 + $0x23c] sm:$0xf]
    %v2165 = vld [vmem:[%s4] sm:$0x1]
    %v2167 = vlaneseq
    %v2168 = vshrl.u32 %v2167, 7
    %v2169 = vsub.s32 0, %v2168
    %v2170 = vrot.slane %v2165, %v2169
    %v2316 = vunpack.c.l.b16 %v2021
    %v2317 = vunpack.c.l.b16 %v2022
    %v2318 = vunpack.c.l.b16 %v2023
    %v2319 = vunpack.c.l.b16 %v2024
    %v2320 = vunpack.c.l.b16 %v2025
    %v2321 = vunpack.c.l.b16 %v2026
    %v2322 = vunpack.c.l.b16 %v2027
    %v2323 = vunpack.c.l.b16 %v2028
    %v2324 = vunpack.c.l.b16 %v2029
    %v2325 = vunpack.c.l.b16 %v2030
    %v2326 = vunpack.c.l.b16 %v2031
    %v2327 = vunpack.c.l.b16 %v2032
    %v2328 = vunpack.c.l.b16 %v2033
    %v2329 = vunpack.c.l.b16 %v2034
    %v2330 = vunpack.c.l.b16 %v2035
    %v2331 = vunpack.c.l.b16 %v2036
    %v2332 = vunpack.c.l.b16 %v2037
    %v2333 = vunpack.c.l.b16 %v2038
    %v2334 = vunpack.c.l.b16 %v2039
    %v2335 = vunpack.c.l.b16 %v2040
    %v2336 = vunpack.c.l.b16 %v2041
    %v2337 = vunpack.c.l.b16 %v2042
    %v2338 = vunpack.c.l.b16 %v2043
    %v2339 = vunpack.c.l.b16 %v2044
    %v2340 = vunpack.c.l.b16 %v2045
    %v2341 = vunpack.c.l.b16 %v2046
    %v2342 = vunpack.c.l.b16 %v2047
    %v2343 = vunpack.c.l.b16 %v2048
    %v2344 = vunpack.c.l.b16 %v2049
    %v2345 = vunpack.c.l.b16 %v2050
    %v2346 = vunpack.c.l.b16 %v2051
    %v2347 = vunpack.c.l.b16 %v2052
    %v2348 = vunpack.c.l.b16 %v2053
    %v2349 = vunpack.c.l.b16 %v2054
    %v2350 = vunpack.c.l.b16 %v2055
    %v2351 = vunpack.c.l.b16 %v2056
    %v2352 = vunpack.c.l.b16 %v2057
    %v2353 = vunpack.c.l.b16 %v2058
    %v2354 = vunpack.c.l.b16 %v2059
    %v2355 = vunpack.c.l.b16 %v2060
    %v2356 = vunpack.c.l.b16 %v2061
    %v2357 = vunpack.c.l.b16 %v2062
    %v2358 = vunpack.c.l.b16 %v2063
    %v2359 = vunpack.c.l.b16 %v2064
    %v2360 = vunpack.c.l.b16 %v2065
    %v2361 = vunpack.c.l.b16 %v2066
    %v2362 = vunpack.c.l.b16 %v2067
    %v2363 = vunpack.c.l.b16 %v2068
    %v2364 = vunpack.c.l.b16 %v2069
    %v2365 = vunpack.c.l.b16 %v2070
    %v2366 = vunpack.c.l.b16 %v2071
    %v2367 = vunpack.c.l.b16 %v2072
    %v2368 = vunpack.c.l.b16 %v2073
    %v2369 = vunpack.c.l.b16 %v2074
    %v2370 = vunpack.c.l.b16 %v2075
    %v2371 = vunpack.c.l.b16 %v2076
    %v2372 = vunpack.c.l.b16 %v2077
    %v2373 = vunpack.c.l.b16 %v2078
    %v2374 = vunpack.c.l.b16 %v2079
    %v2375 = vunpack.c.l.b16 %v2080
    %v2376 = vunpack.c.l.b16 %v2081
    %v2377 = vunpack.c.l.b16 %v2082
    %v2378 = vunpack.c.l.b16 %v2083
    %v2379 = vunpack.c.l.b16 %v2084
    %v2380 = vunpack.c.l.b16 %v2085
    %v2381 = vunpack.c.l.b16 %v2086
    %v2382 = vunpack.c.l.b16 %v2087
    %v2383 = vunpack.c.l.b16 %v2088
    %v2384 = vunpack.c.l.b16 %v2089
    %v2385 = vunpack.c.l.b16 %v2090
    %v2386 = vunpack.c.l.b16 %v2091
    %v2387 = vunpack.c.l.b16 %v2092
    %v2388 = vunpack.c.l.b16 %v2093
    %v2389 = vunpack.c.l.b16 %v2094
    %v2390 = vunpack.c.l.b16 %v2095
    %v2391 = vunpack.c.l.b16 %v2096
    %v2392 = vunpack.c.l.b16 %v2097
    %v2393 = vunpack.c.l.b16 %v2098
    %v2394 = vunpack.c.l.b16 %v2099
    %v2395 = vunpack.c.l.b16 %v2100
    %v2396 = vunpack.c.l.b16 %v2101
    %v2397 = vunpack.c.l.b16 %v2102
    %v2398 = vunpack.c.l.b16 %v2103
    %v2399 = vunpack.c.l.b16 %v2104
    %v2400 = vunpack.c.l.b16 %v2105
    %v2401 = vunpack.c.l.b16 %v2106
    %v2402 = vunpack.c.l.b16 %v2107
    %v2403 = vunpack.c.l.b16 %v2108
    %v2404 = vunpack.c.l.b16 %v2109
    %v2405 = vunpack.c.l.b16 %v2110
    %v2406 = vunpack.c.l.b16 %v2111
    %v2407 = vunpack.c.l.b16 %v2112
    %v2408 = vunpack.c.l.b16 %v2113
    %v2409 = vunpack.c.l.b16 %v2114
    %v2410 = vunpack.c.l.b16 %v2115
    %v2411 = vunpack.c.l.b16 %v2116
    %v2412 = vunpack.c.l.b16 %v2117
    %v2413 = vunpack.c.l.b16 %v2118
    %v2414 = vunpack.c.l.b16 %v2119
    %v2415 = vunpack.c.l.b16 %v2120
    %v2416 = vunpack.c.l.b16 %v2121
    %v2417 = vunpack.c.l.b16 %v2122
    %v2418 = vunpack.c.l.b16 %v2123
    %v2419 = vunpack.c.l.b16 %v2124
    %v2420 = vunpack.c.l.b16 %v2125
    %v2421 = vunpack.c.l.b16 %v2126
    %v2422 = vunpack.c.l.b16 %v2127
    %v2423 = vunpack.c.l.b16 %v2128
    %v2424 = vunpack.c.l.b16 %v2129
    %v2425 = vunpack.c.l.b16 %v2130
    %v2426 = vunpack.c.l.b16 %v2131
    %v2427 = vunpack.c.l.b16 %v2132
    %v2428 = vunpack.c.l.b16 %v2133
    %v2429 = vunpack.c.l.b16 %v2134
    %v2430 = vunpack.c.l.b16 %v2135
    %v2431 = vunpack.c.l.b16 %v2136
    %v2432 = vunpack.c.l.b16 %v2137
    %v2433 = vunpack.c.l.b16 %v2138
    %v2434 = vunpack.c.l.b16 %v2139
    %v2435 = vunpack.c.l.b16 %v2140
    %v2436 = vunpack.c.l.b16 %v2141
    %v2437 = vunpack.c.l.b16 %v2142
    %v2438 = vunpack.c.l.b16 %v2143
    %v2439 = vunpack.c.l.b16 %v2144
    %v2440 = vunpack.c.l.b16 %v2145
    %v2441 = vunpack.c.l.b16 %v2146
    %v2442 = vunpack.c.l.b16 %v2147
    %v2443 = vunpack.c.l.b16 %v2148
    %v2444 = vunpack.c.l.b16 %v2149
    %v2445 = vunpack.c.l.b16 %v2150
    %v2446 = vunpack.c.l.b16 %v2151
    %v2447 = vunpack.c.l.b16 %v2152
    %v2448 = vunpack.c.l.b16 %v2153
    %v2449 = vunpack.c.l.b16 %v2154
    %v2450 = vunpack.c.l.b16 %v2155
    %v2451 = vunpack.c.l.b16 %v2156
    %v2452 = vunpack.c.l.b16 %v2157
    %v2453 = vunpack.c.l.b16 %v2158
    %v2454 = vunpack.c.l.b16 %v2159
    %v2455 = vunpack.c.l.b16 %v2160
    %v2456 = vunpack.c.l.b16 %v2161
    %v2457 = vunpack.c.l.b16 %v2162
    %v2458 = vunpack.c.l.b16 %v2163
    %v2459 = vunpack.c.l.b16 %v2164
    %v2460 = vpack.c.b16 %v2317, %v2316
    %v2461 = vpack.c.b16 %v2319, %v2318
    %v2462 = vpack.c.b16 %v2321, %v2320
    %v2463 = vpack.c.b16 %v2323, %v2322
    %v2464 = vpack.c.b16 %v2325, %v2324
    %v2465 = vpack.c.b16 %v2327, %v2326
    %v2466 = vpack.c.b16 %v2329, %v2328
    %v2467 = vpack.c.b16 %v2331, %v2330
    %v2468 = vpack.c.b16 %v2333, %v2332
    %v2469 = vpack.c.b16 %v2335, %v2334
    %v2470 = vpack.c.b16 %v2337, %v2336
    %v2471 = vpack.c.b16 %v2339, %v2338
    %v2472 = vpack.c.b16 %v2341, %v2340
    %v2473 = vpack.c.b16 %v2343, %v2342
    %v2474 = vpack.c.b16 %v2345, %v2344
    %v2475 = vpack.c.b16 %v2347, %v2346
    %v2476 = vpack.c.b16 %v2349, %v2348
    %v2477 = vpack.c.b16 %v2351, %v2350
    %v2478 = vpack.c.b16 %v2353, %v2352
    %v2479 = vpack.c.b16 %v2355, %v2354
    %v2480 = vpack.c.b16 %v2357, %v2356
    %v2481 = vpack.c.b16 %v2359, %v2358
    %v2482 = vpack.c.b16 %v2361, %v2360
    %v2483 = vpack.c.b16 %v2363, %v2362
    %v2484 = vpack.c.b16 %v2365, %v2364
    %v2485 = vpack.c.b16 %v2367, %v2366
    %v2486 = vpack.c.b16 %v2369, %v2368
    %v2487 = vpack.c.b16 %v2371, %v2370
    %v2488 = vpack.c.b16 %v2373, %v2372
    %v2489 = vpack.c.b16 %v2375, %v2374
    %v2490 = vpack.c.b16 %v2377, %v2376
    %v2491 = vpack.c.b16 %v2379, %v2378
    %v2492 = vpack.c.b16 %v2381, %v2380
    %v2493 = vpack.c.b16 %v2383, %v2382
    %v2494 = vpack.c.b16 %v2385, %v2384
    %v2495 = vpack.c.b16 %v2387, %v2386
    %v2496 = vpack.c.b16 %v2389, %v2388
    %v2497 = vpack.c.b16 %v2391, %v2390
    %v2498 = vpack.c.b16 %v2393, %v2392
    %v2499 = vpack.c.b16 %v2395, %v2394
    %v2500 = vpack.c.b16 %v2397, %v2396
    %v2501 = vpack.c.b16 %v2399, %v2398
    %v2502 = vpack.c.b16 %v2401, %v2400
    %v2503 = vpack.c.b16 %v2403, %v2402
    %v2504 = vpack.c.b16 %v2405, %v2404
    %v2505 = vpack.c.b16 %v2407, %v2406
    %v2506 = vpack.c.b16 %v2409, %v2408
    %v2507 = vpack.c.b16 %v2411, %v2410
    %v2508 = vpack.c.b16 %v2413, %v2412
    %v2509 = vpack.c.b16 %v2415, %v2414
    %v2510 = vpack.c.b16 %v2417, %v2416
    %v2511 = vpack.c.b16 %v2419, %v2418
    %v2512 = vpack.c.b16 %v2421, %v2420
    %v2513 = vpack.c.b16 %v2423, %v2422
    %v2514 = vpack.c.b16 %v2425, %v2424
    %v2515 = vpack.c.b16 %v2427, %v2426
    %v2516 = vpack.c.b16 %v2429, %v2428
    %v2517 = vpack.c.b16 %v2431, %v2430
    %v2518 = vpack.c.b16 %v2433, %v2432
    %v2519 = vpack.c.b16 %v2435, %v2434
    %v2520 = vpack.c.b16 %v2437, %v2436
    %v2521 = vpack.c.b16 %v2439, %v2438
    %v2522 = vpack.c.b16 %v2441, %v2440
    %v2523 = vpack.c.b16 %v2443, %v2442
    %v2524 = vpack.c.b16 %v2445, %v2444
    %v2525 = vpack.c.b16 %v2447, %v2446
    %v2526 = vpack.c.b16 %v2449, %v2448
    %v2527 = vpack.c.b16 %v2451, %v2450
    %v2528 = vpack.c.b16 %v2453, %v2452
    %v2529 = vpack.c.b16 %v2455, %v2454
    %v2530 = vpack.c.b16 %v2457, %v2456
    %v2531 = vpack.c.b16 %v2459, %v2458
    %2604 = vmatprep.subr.bf16.mxu0 0
    %2605 = vmatpush1.bf16.msra.mxu0 %v2460
    %2606 = vmatprep.subr.bf16.mxu0 0
    %2607 = vmatpush1.bf16.msra.mxu0 %v2461
    %2608 = vmatprep.subr.bf16.mxu0 0
    %2609 = vmatpush1.bf16.msra.mxu0 %v2462
    %2610 = vmatprep.subr.bf16.mxu0 0
    %2611 = vmatpush1.bf16.msra.mxu0 %v2463
    %2612 = vmatprep.subr.bf16.mxu0 0
    %2613 = vmatpush1.bf16.msra.mxu0 %v2464
    %2614 = vmatprep.subr.bf16.mxu0 0
    %2615 = vmatpush1.bf16.msra.mxu0 %v2465
    %2616 = vmatprep.subr.bf16.mxu0 0
    %2617 = vmatpush1.bf16.msra.mxu0 %v2466
    %2618 = vmatprep.subr.bf16.mxu0 0
    %2619 = vmatpush1.bf16.msra.mxu0 %v2467
    %2620 = vmatprep.subr.bf16.mxu0 0
    %2621 = vmatpush1.bf16.msra.mxu0 %v2468
    %2622 = vmatprep.subr.bf16.mxu0 0
    %2623 = vmatpush1.bf16.msra.mxu0 %v2469
    %2624 = vmatprep.subr.bf16.mxu0 0
    %2625 = vmatpush1.bf16.msra.mxu0 %v2470
    %2626 = vmatprep.subr.bf16.mxu0 0
    %2627 = vmatpush1.bf16.msra.mxu0 %v2471
    %2628 = vmatprep.subr.bf16.mxu0 0
    %2629 = vmatpush1.bf16.msra.mxu0 %v2472
    %2630 = vmatprep.subr.bf16.mxu0 0
    %2631 = vmatpush1.bf16.msra.mxu0 %v2473
    %2632 = vmatprep.subr.bf16.mxu0 0
    %2633 = vmatpush1.bf16.msra.mxu0 %v2474
    %2634 = vmatprep.subr.bf16.mxu0 0
    %2635 = vmatpush1.bf16.msra.mxu0 %v2475
    %2636 = vmatprep.mubr.bf16.mxu0 %v1950
    %2637 = vmatmul.mubr.bf16.gmra.mrb[0].mxu0 %v1949
    %v2638 = vpop.f32.mrb[0].mxu0
    %v2639 = vadd.f32 %v2170, %v2638
    %v2640 = vpop.f32.mrb[0].mxu0
    %v2641 = vpop.f32.mrb[0].mxu0
    %v2642 = vadd.f32 %v2170, %v2641
    %v2643 = vpop.f32.mrb[0].mxu0
    %2644 = vmatprep.mubr.bf16.mxu0 %v1959
    %2645 = vmatmul.mubr.bf16.gmra.mrb[0].mxu0 %v1958
    %v2646 = vpop.f32.mrb[0].mxu0
    %v2647 = vadd.f32 %v2170, %v2646
    %v2648 = vpop.f32.mrb[0].mxu0
    %v2649 = vpop.f32.mrb[0].mxu0
    %v2650 = vadd.f32 %v2170, %v2649
    %v2651 = vpop.f32.mrb[0].mxu0
    %2652 = vmatprep.mubr.bf16.mxu0 %v1968
    %2653 = vmatmul.mubr.bf16.gmra.mrb[0].mxu0 %v1967
    %v2654 = vpop.f32.mrb[0].mxu0
    %v2655 = vadd.f32 %v2170, %v2654
    %v2656 = vpop.f32.mrb[0].mxu0
    %v2657 = vpop.f32.mrb[0].mxu0
    %v2658 = vadd.f32 %v2170, %v2657
    %v2659 = vpop.f32.mrb[0].mxu0
    %2660 = vmatprep.mubr.bf16.mxu0 %v1977
    %2661 = vmatmul.mubr.bf16.gmra.mrb[0].mxu0 %v1976
    %v2662 = vpop.f32.mrb[0].mxu0
    %v2663 = vadd.f32 %v2170, %v2662
    %v2664 = vpop.f32.mrb[0].mxu0
    %v2665 = vpop.f32.mrb[0].mxu0
    %v2666 = vadd.f32 %v2170, %v2665
    %v2667 = vpop.f32.mrb[0].mxu0
    %2668 = vmatprep.mubr.bf16.mxu0 %v1986
    %2669 = vmatmul.mubr.bf16.gmra.mrb[0].mxu0 %v1985
    %v2670 = vpop.f32.mrb[0].mxu0
    %v2671 = vadd.f32 %v2170, %v2670
    %v2672 = vpop.f32.mrb[0].mxu0
    %v2673 = vpop.f32.mrb[0].mxu0
    %v2674 = vadd.f32 %v2170, %v2673
    %v2675 = vpop.f32.mrb[0].mxu0
    %2676 = vmatprep.mubr.bf16.mxu0 %v1995
    %2677 = vmatmul.mubr.bf16.gmra.mrb[0].mxu0 %v1994
    %v2678 = vpop.f32.mrb[0].mxu0
    %v2679 = vadd.f32 %v2170, %v2678
    %v2680 = vpop.f32.mrb[0].mxu0
    %v2681 = vpop.f32.mrb[0].mxu0
    %v2682 = vadd.f32 %v2170, %v2681
    %v2683 = vpop.f32.mrb[0].mxu0
    %2684 = vmatprep.mubr.bf16.mxu0 %v2004
    %2685 = vmatmul.mubr.bf16.gmra.mrb[0].mxu0 %v2003
    %v2686 = vpop.f32.mrb[0].mxu0
    %v2687 = vadd.f32 %v2170, %v2686
    %v2688 = vpop.f32.mrb[0].mxu0
    %v2689 = vpop.f32.mrb[0].mxu0
    %v2690 = vadd.f32 %v2170, %v2689
    %v2691 = vpop.f32.mrb[0].mxu0
    %2692 = vmatprep.mubr.bf16.mxu0 %v2013
    %2693 = vmatmul.mubr.bf16.gmra.mrb[0].mxu0 %v2012
    %v2694 = vpop.f32.mrb[0].mxu0
    %v2695 = vadd.f32 %v2170, %v2694
    %v2696 = vpop.f32.mrb[0].mxu0
    %v2697 = vpop.f32.mrb[0].mxu0
    %v2698 = vadd.f32 %v2170, %v2697
    %v2699 = vpop.f32.mrb[0].mxu0
    %2700 = vdwg.mxu0
    %2701 = vmatprep.subr.bf16.mxu0 0
    %2702 = vmatpush1.bf16.msra.mxu0 %v2476
    %2703 = vmatprep.subr.bf16.mxu0 0
    %2704 = vmatpush1.bf16.msra.mxu0 %v2477
    %2705 = vmatprep.subr.bf16.mxu0 0
    %2706 = vmatpush1.bf16.msra.mxu0 %v2478
    %2707 = vmatprep.subr.bf16.mxu0 0
    %2708 = vmatpush1.bf16.msra.mxu0 %v2479
    %2709 = vmatprep.subr.bf16.mxu0 0
    %2710 = vmatpush1.bf16.msra.mxu0 %v2480
    %2711 = vmatprep.subr.bf16.mxu0 0
    %2712 = vmatpush1.bf16.msra.mxu0 %v2481
    %2713 = vmatprep.subr.bf16.mxu0 0
    %2714 = vmatpush1.bf16.msra.mxu0 %v2482
    %2715 = vmatprep.subr.bf16.mxu0 0
    %2716 = vmatpush1.bf16.msra.mxu0 %v2483
    %2717 = vmatprep.subr.bf16.mxu0 0
    %2718 = vmatpush1.bf16.msra.mxu0 %v2484
    %2719 = vmatprep.subr.bf16.mxu0 0
    %2720 = vmatpush1.bf16.msra.mxu0 %v2485
    %2721 = vmatprep.subr.bf16.mxu0 0
    %2722 = vmatpush1.bf16.msra.mxu0 %v2486
    %2723 = vmatprep.subr.bf16.mxu0 0
    %2724 = vmatpush1.bf16.msra.mxu0 %v2487
    %2725 = vmatprep.subr.bf16.mxu0 0
    %2726 = vmatpush1.bf16.msra.mxu0 %v2488
    %2727 = vmatprep.subr.bf16.mxu0 0
    %2728 = vmatpush1.bf16.msra.mxu0 %v2489
    %2729 = vmatprep.subr.bf16.mxu0 0
    %2730 = vmatpush1.bf16.msra.mxu0 %v2490
    %2731 = vmatprep.subr.bf16.mxu0 0
    %2732 = vmatpush1.bf16.msra.mxu0 %v2491
    %2733 = vmatprep.mubr.bf16.mxu0 %v1952
    %2734 = vmatmul.mubr.bf16.gmra.mrb[0].mxu0 %v1951
    %v2735 = vpop.f32.mrb[0].mxu0
    %v2736 = vadd.f32 %v2639, %v2735
    %v2737 = vpop.f32.mrb[0].mxu0
    %v2738 = vpop.f32.mrb[0].mxu0
    %v2739 = vadd.f32 %v2642, %v2738
    %v2740 = vpop.f32.mrb[0].mxu0
    %2741 = vmatprep.mubr.bf16.mxu0 %v1961
    %2742 = vmatmul.mubr.bf16.gmra.mrb[0].mxu0 %v1960
    %v2743 = vpop.f32.mrb[0].mxu0
    %v2744 = vadd.f32 %v2647, %v2743
    %v2745 = vpop.f32.mrb[0].mxu0
    %v2746 = vpop.f32.mrb[0].mxu0
    %v2747 = vadd.f32 %v2650, %v2746
    %v2748 = vpop.f32.mrb[0].mxu0
    %2749 = vmatprep.mubr.bf16.mxu0 %v1970
    %2750 = vmatmul.mubr.bf16.gmra.mrb[0].mxu0 %v1969
    %v2751 = vpop.f32.mrb[0].mxu0
    %v2752 = vadd.f32 %v2655, %v2751
    %v2753 = vpop.f32.mrb[0].mxu0
    %v2754 = vpop.f32.mrb[0].mxu0
    %v2755 = vadd.f32 %v2658, %v2754
    %v2756 = vpop.f32.mrb[0].mxu0
    %2757 = vmatprep.mubr.bf16.mxu0 %v1979
    %2758 = vmatmul.mubr.bf16.gmra.mrb[0].mxu0 %v1978
    %v2759 = vpop.f32.mrb[0].mxu0
    %v2760 = vadd.f32 %v2663, %v2759
    %v2761 = vpop.f32.mrb[0].mxu0
    %v2762 = vpop.f32.mrb[0].mxu0
    %v2763 = vadd.f32 %v2666, %v2762
    %v2764 = vpop.f32.mrb[0].mxu0
    %2765 = vmatprep.mubr.bf16.mxu0 %v1988
    %2766 = vmatmul.mubr.bf16.gmra.mrb[0].mxu0 %v1987
    %v2767 = vpop.f32.mrb[0].mxu0
    %v2768 = vadd.f32 %v2671, %v2767
    %v2769 = vpop.f32.mrb[0].mxu0
    %v2770 = vpop.f32.mrb[0].mxu0
    %v2771 = vadd.f32 %v2674, %v2770
    %v2772 = vpop.f32.mrb[0].mxu0
    %2773 = vmatprep.mubr.bf16.mxu0 %v1997
    %2774 = vmatmul.mubr.bf16.gmra.mrb[0].mxu0 %v1996
    %v2775 = vpop.f32.mrb[0].mxu0
    %v2776 = vadd.f32 %v2679, %v2775
    %v2777 = vpop.f32.mrb[0].mxu0
    %v2778 = vpop.f32.mrb[0].mxu0
    %v2779 = vadd.f32 %v2682, %v2778
    %v2780 = vpop.f32.mrb[0].mxu0
    %2781 = vmatprep.mubr.bf16.mxu0 %v2006
    %2782 = vmatmul.mubr.bf16.gmra.mrb[0].mxu0 %v2005
    %v2783 = vpop.f32.mrb[0].mxu0
    %v2784 = vadd.f32 %v2687, %v2783
    %v2785 = vpop.f32.mrb[0].mxu0
    %v2786 = vpop.f32.mrb[0].mxu0
    %v2787 = vadd.f32 %v2690, %v2786
    %v2788 = vpop.f32.mrb[0].mxu0
    %2789 = vmatprep.mubr.bf16.mxu0 %v2015
    %2790 = vmatmul.mubr.bf16.gmra.mrb[0].mxu0 %v2014
    %v2791 = vpop.f32.mrb[0].mxu0
    %v2792 = vadd.f32 %v2695, %v2791
    %v2793 = vpop.f32.mrb[0].mxu0
    %v2794 = vpop.f32.mrb[0].mxu0
    %v2795 = vadd.f32 %v2698, %v2794
    %v2796 = vpop.f32.mrb[0].mxu0
    %2797 = vdwg.mxu0
    %2798 = vmatprep.subr.bf16.mxu0 0
    %2799 = vmatpush1.bf16.msra.mxu0 %v2492
    %2800 = vmatprep.subr.bf16.mxu0 0
    %2801 = vmatpush1.bf16.msra.mxu0 %v2493
    %2802 = vmatprep.subr.bf16.mxu0 0
    %2803 = vmatpush1.bf16.msra.mxu0 %v2494
    %2804 = vmatprep.subr.bf16.mxu0 0
    %2805 = vmatpush1.bf16.msra.mxu0 %v2495
    %2806 = vmatprep.subr.bf16.mxu0 0
    %2807 = vmatpush1.bf16.msra.mxu0 %v2496
    %2808 = vmatprep.subr.bf16.mxu0 0
    %2809 = vmatpush1.bf16.msra.mxu0 %v2497
    %2810 = vmatprep.subr.bf16.mxu0 0
    %2811 = vmatpush1.bf16.msra.mxu0 %v2498
    %2812 = vmatprep.subr.bf16.mxu0 0
    %2813 = vmatpush1.bf16.msra.mxu0 %v2499
    %2814 = vmatprep.subr.bf16.mxu0 0
    %2815 = vmatpush1.bf16.msra.mxu0 %v2500
    %2816 = vmatprep.subr.bf16.mxu0 0
    %2817 = vmatpush1.bf16.msra.mxu0 %v2501
    %2818 = vmatprep.subr.bf16.mxu0 0
    %2819 = vmatpush1.bf16.msra.mxu0 %v2502
    %2820 = vmatprep.subr.bf16.mxu0 0
    %2821 = vmatpush1.bf16.msra.mxu0 %v2503
    %2822 = vmatprep.subr.bf16.mxu0 0
    %2823 = vmatpush1.bf16.msra.mxu0 %v2504
    %2824 = vmatprep.subr.bf16.mxu0 0
    %2825 = vmatpush1.bf16.msra.mxu0 %v2505
    %2826 = vmatprep.subr.bf16.mxu0 0
    %2827 = vmatpush1.bf16.msra.mxu0 %v2506
    %2828 = vmatprep.subr.bf16.mxu0 0
    %2829 = vmatpush1.bf16.msra.mxu0 %v2507
    %2830 = vmatprep.mubr.bf16.mxu0 %v1954
    %2831 = vmatmul.mubr.bf16.gmra.mrb[0].mxu0 %v1953
    %v2832 = vpop.f32.mrb[0].mxu0
    %v2833 = vadd.f32 %v2736, %v2832
    %v2834 = vpop.f32.mrb[0].mxu0
    %v2835 = vpop.f32.mrb[0].mxu0
    %v2836 = vadd.f32 %v2739, %v2835
    %v2837 = vpop.f32.mrb[0].mxu0
    %2838 = vmatprep.mubr.bf16.mxu0 %v1963
    %2839 = vmatmul.mubr.bf16.gmra.mrb[0].mxu0 %v1962
    %v2840 = vpop.f32.mrb[0].mxu0
    %v2841 = vadd.f32 %v2744, %v2840
    %v2842 = vpop.f32.mrb[0].mxu0
    %v2843 = vpop.f32.mrb[0].mxu0
    %v2844 = vadd.f32 %v2747, %v2843
    %v2845 = vpop.f32.mrb[0].mxu0
    %2846 = vmatprep.mubr.bf16.mxu0 %v1972
    %2847 = vmatmul.mubr.bf16.gmra.mrb[0].mxu0 %v1971
    %v2848 = vpop.f32.mrb[0].mxu0
    %v2849 = vadd.f32 %v2752, %v2848
    %v2850 = vpop.f32.mrb[0].mxu0
    %v2851 = vpop.f32.mrb[0].mxu0
    %v2852 = vadd.f32 %v2755, %v2851
    %v2853 = vpop.f32.mrb[0].mxu0
    %2854 = vmatprep.mubr.bf16.mxu0 %v1981
    %2855 = vmatmul.mubr.bf16.gmra.mrb[0].mxu0 %v1980
    %v2856 = vpop.f32.mrb[0].mxu0
    %v2857 = vadd.f32 %v2760, %v2856
    %v2858 = vpop.f32.mrb[0].mxu0
    %v2859 = vpop.f32.mrb[0].mxu0
    %v2860 = vadd.f32 %v2763, %v2859
    %v2861 = vpop.f32.mrb[0].mxu0
    %2862 = vmatprep.mubr.bf16.mxu0 %v1990
    %2863 = vmatmul.mubr.bf16.gmra.mrb[0].mxu0 %v1989
    %v2864 = vpop.f32.mrb[0].mxu0
    %v2865 = vadd.f32 %v2768, %v2864
    %v2866 = vpop.f32.mrb[0].mxu0
    %v2867 = vpop.f32.mrb[0].mxu0
    %v2868 = vadd.f32 %v2771, %v2867
    %v2869 = vpop.f32.mrb[0].mxu0
    %2870 = vmatprep.mubr.bf16.mxu0 %v1999
    %2871 = vmatmul.mubr.bf16.gmra.mrb[0].mxu0 %v1998
    %v2872 = vpop.f32.mrb[0].mxu0
    %v2873 = vadd.f32 %v2776, %v2872
    %v2874 = vpop.f32.mrb[0].mxu0
    %v2875 = vpop.f32.mrb[0].mxu0
    %v2876 = vadd.f32 %v2779, %v2875
    %v2877 = vpop.f32.mrb[0].mxu0
    %2878 = vmatprep.mubr.bf16.mxu0 %v2008
    %2879 = vmatmul.mubr.bf16.gmra.mrb[0].mxu0 %v2007
    %v2880 = vpop.f32.mrb[0].mxu0
    %v2881 = vadd.f32 %v2784, %v2880
    %v2882 = vpop.f32.mrb[0].mxu0
    %v2883 = vpop.f32.mrb[0].mxu0
    %v2884 = vadd.f32 %v2787, %v2883
    %v2885 = vpop.f32.mrb[0].mxu0
    %2886 = vmatprep.mubr.bf16.mxu0 %v2017
    %2887 = vmatmul.mubr.bf16.gmra.mrb[0].mxu0 %v2016
    %v2888 = vpop.f32.mrb[0].mxu0
    %v2889 = vadd.f32 %v2792, %v2888
    %v2890 = vpop.f32.mrb[0].mxu0
    %v2891 = vpop.f32.mrb[0].mxu0
    %v2892 = vadd.f32 %v2795, %v2891
    %v2893 = vpop.f32.mrb[0].mxu0
    %2894 = vdwg.mxu0
    %2895 = vmatprep.subr.bf16.mxu0 0
    %2896 = vmatpush1.bf16.msra.mxu0 %v2508
    %2897 = vmatprep.subr.bf16.mxu0 0
    %2898 = vmatpush1.bf16.msra.mxu0 %v2509
    %2899 = vmatprep.subr.bf16.mxu0 0
    %2900 = vmatpush1.bf16.msra.mxu0 %v2510
    %2901 = vmatprep.subr.bf16.mxu0 0
    %2902 = vmatpush1.bf16.msra.mxu0 %v2511
    %2903 = vmatprep.subr.bf16.mxu0 0
    %2904 = vmatpush1.bf16.msra.mxu0 %v2512
    %2905 = vmatprep.subr.bf16.mxu0 0
    %2906 = vmatpush1.bf16.msra.mxu0 %v2513
    %2907 = vmatprep.subr.bf16.mxu0 0
    %2908 = vmatpush1.bf16.msra.mxu0 %v2514
    %2909 = vmatprep.subr.bf16.mxu0 0
    %2910 = vmatpush1.bf16.msra.mxu0 %v2515
    %2911 = vmatprep.subr.bf16.mxu0 0
    %2912 = vmatpush1.bf16.msra.mxu0 %v2516
    %2913 = vmatprep.subr.bf16.mxu0 0
    %2914 = vmatpush1.bf16.msra.mxu0 %v2517
    %2915 = vmatprep.subr.bf16.mxu0 0
    %2916 = vmatpush1.bf16.msra.mxu0 %v2518
    %2917 = vmatprep.subr.bf16.mxu0 0
    %2918 = vmatpush1.bf16.msra.mxu0 %v2519
    %2919 = vmatprep.subr.bf16.mxu0 0
    %2920 = vmatpush1.bf16.msra.mxu0 %v2520
    %2921 = vmatprep.subr.bf16.mxu0 0
    %2922 = vmatpush1.bf16.msra.mxu0 %v2521
    %2923 = vmatprep.subr.bf16.mxu0 0
    %2924 = vmatpush1.bf16.msra.mxu0 %v2522
    %2925 = vmatprep.subr.bf16.mxu0 0
    %2926 = vmatpush1.bf16.msra.mxu0 %v2523
    %2927 = vmatprep.mubr.bf16.mxu0 %v1956
    %2928 = vmatmul.mubr.bf16.gmra.mrb[0].mxu0 %v1955
    %v2929 = vpop.f32.mrb[0].mxu0
    %v2930 = vadd.f32 %v2833, %v2929
    %v2931 = vpop.f32.mrb[0].mxu0
    %v2932 = vpop.f32.mrb[0].mxu0
    %v2933 = vadd.f32 %v2836, %v2932
    %v2934 = vpop.f32.mrb[0].mxu0
    %2935 = vmatprep.mubr.bf16.mxu0 %v1965
    %2936 = vmatmul.mubr.bf16.gmra.mrb[0].mxu0 %v1964
    %v2937 = vpop.f32.mrb[0].mxu0
    %v2938 = vadd.f32 %v2841, %v2937
    %v2939 = vpop.f32.mrb[0].mxu0
    %v2940 = vpop.f32.mrb[0].mxu0
    %v2941 = vadd.f32 %v2844, %v2940
    %v2942 = vpop.f32.mrb[0].mxu0
    %2943 = vmatprep.mubr.bf16.mxu0 %v1974
    %2944 = vmatmul.mubr.bf16.gmra.mrb[0].mxu0 %v1973
    %v2945 = vpop.f32.mrb[0].mxu0
    %v2946 = vadd.f32 %v2849, %v2945
    %v2947 = vpop.f32.mrb[0].mxu0
    %v2948 = vpop.f32.mrb[0].mxu0
    %v2949 = vadd.f32 %v2852, %v2948
    %v2950 = vpop.f32.mrb[0].mxu0
    %2951 = vmatprep.mubr.bf16.mxu0 %v1983
    %2952 = vmatmul.mubr.bf16.gmra.mrb[0].mxu0 %v1982
    %v2953 = vpop.f32.mrb[0].mxu0
    %v2954 = vadd.f32 %v2857, %v2953
    %v2955 = vpop.f32.mrb[0].mxu0
    %v2956 = vpop.f32.mrb[0].mxu0
    %v2957 = vadd.f32 %v2860, %v2956
    %v2958 = vpop.f32.mrb[0].mxu0
    %2959 = vmatprep.mubr.bf16.mxu0 %v1992
    %2960 = vmatmul.mubr.bf16.gmra.mrb[0].mxu0 %v1991
    %v2961 = vpop.f32.mrb[0].mxu0
    %v2962 = vadd.f32 %v2865, %v2961
    %v2963 = vpop.f32.mrb[0].mxu0
    %v2964 = vpop.f32.mrb[0].mxu0
    %v2965 = vadd.f32 %v2868, %v2964
    %v2966 = vpop.f32.mrb[0].mxu0
    %2967 = vmatprep.mubr.bf16.mxu0 %v2001
    %2968 = vmatmul.mubr.bf16.gmra.mrb[0].mxu0 %v2000
    %v2969 = vpop.f32.mrb[0].mxu0
    %v2970 = vadd.f32 %v2873, %v2969
    %v2971 = vpop.f32.mrb[0].mxu0
    %v2972 = vpop.f32.mrb[0].mxu0
    %v2973 = vadd.f32 %v2876, %v2972
    %v2974 = vpop.f32.mrb[0].mxu0
    %2975 = vmatprep.mubr.bf16.mxu0 %v2010
    %2976 = vmatmul.mubr.bf16.gmra.mrb[0].mxu0 %v2009
    %v2977 = vpop.f32.mrb[0].mxu0
    %v2978 = vadd.f32 %v2881, %v2977
    %v2979 = vpop.f32.mrb[0].mxu0
    %v2980 = vpop.f32.mrb[0].mxu0
    %v2981 = vadd.f32 %v2884, %v2980
    %v2982 = vpop.f32.mrb[0].mxu0
    %2983 = vmatprep.mubr.bf16.mxu0 %v2019
    %2984 = vmatmul.mubr.bf16.gmra.mrb[0].mxu0 %v2018
    %v2985 = vpop.f32.mrb[0].mxu0
    %v2986 = vadd.f32 %v2889, %v2985
    %v2987 = vpop.f32.mrb[0].mxu0
    %v2988 = vpop.f32.mrb[0].mxu0
    %v2989 = vadd.f32 %v2892, %v2988
    %v2990 = vpop.f32.mrb[0].mxu0
    %2991 = vdwg.mxu0
    %2992 = vmatprep.subr.bf16.mxu0 0
    %2993 = vmatpush1.bf16.msra.mxu0 %v2524
    %2994 = vmatprep.subr.bf16.mxu0 0
    %2995 = vmatpush1.bf16.msra.mxu0 %v2525
    %2996 = vmatprep.subr.bf16.mxu0 0
    %2997 = vmatpush1.bf16.msra.mxu0 %v2526
    %2998 = vmatprep.subr.bf16.mxu0 0
    %2999 = vmatpush1.bf16.msra.mxu0 %v2527
    %3000 = vmatprep.subr.bf16.mxu0 0
    %3001 = vmatpush1.bf16.msra.mxu0 %v2528
    %3002 = vmatprep.subr.bf16.mxu0 0
    %3003 = vmatpush1.bf16.msra.mxu0 %v2529
    %3004 = vmatprep.subr.bf16.mxu0 0
    %3005 = vmatpush1.bf16.msra.mxu0 %v2530
    %3006 = vmatprep.subr.bf16.mxu0 0
    %3007 = vmatpush1.bf16.msra.mxu0 %v2531
    %3008 = vmatprep.subr.bf16.mxu0 0
    %3009 = vmatpush1.bf16.msra.mxu0 0
    %3010 = vmatprep.subr.bf16.mxu0 0
    %3011 = vmatpush1.bf16.msra.mxu0 0
    %3012 = vmatprep.subr.bf16.mxu0 0
    %3013 = vmatpush1.bf16.msra.mxu0 0
    %3014 = vmatprep.subr.bf16.mxu0 0
    %3015 = vmatpush1.bf16.msra.mxu0 0
    %3016 = vmatprep.subr.bf16.mxu0 0
    %3017 = vmatpush1.bf16.msra.mxu0 0
    %3018 = vmatprep.subr.bf16.mxu0 0
    %3019 = vmatpush1.bf16.msra.mxu0 0
    %3020 = vmatprep.subr.bf16.mxu0 0
    %3021 = vmatpush1.bf16.msra.mxu0 0
    %3022 = vmatprep.subr.bf16.mxu0 0
    %3023 = vmatpush1.bf16.msra.mxu0 0
    %3024 = vmatprep.mubr.bf16.mxu0 0
    %3025 = vmatmul.mubr.bf16.gmra.mrb[0].mxu0 %v1957
    %v3026 = vpop.f32.mrb[0].mxu0
    %v3027 = vadd.f32 %v2930, %v3026
    %v3028 = vpop.f32.mrb[0].mxu0
    %v3029 = vpop.f32.mrb[0].mxu0
    %v3030 = vadd.f32 %v2933, %v3029
    %v3031 = vpop.f32.mrb[0].mxu0
    %3032 = vmatprep.mubr.bf16.mxu0 0
    %3033 = vmatmul.mubr.bf16.gmra.mrb[0].mxu0 %v1966
    %v3034 = vpop.f32.mrb[0].mxu0
    %v3035 = vadd.f32 %v2938, %v3034
    %v3036 = vpop.f32.mrb[0].mxu0
    %v3037 = vpop.f32.mrb[0].mxu0
    %v3038 = vadd.f32 %v2941, %v3037
    %v3039 = vpop.f32.mrb[0].mxu0
    %3040 = vmatprep.mubr.bf16.mxu0 0
    %3041 = vmatmul.mubr.bf16.gmra.mrb[0].mxu0 %v1975
    %v3042 = vpop.f32.mrb[0].mxu0
    %v3043 = vadd.f32 %v2946, %v3042
    %v3044 = vpop.f32.mrb[0].mxu0
    %v3045 = vpop.f32.mrb[0].mxu0
    %v3046 = vadd.f32 %v2949, %v3045
    %v3047 = vpop.f32.mrb[0].mxu0
    %3048 = vmatprep.mubr.bf16.mxu0 0
    %3049 = vmatmul.mubr.bf16.gmra.mrb[0].mxu0 %v1984
    %v3050 = vpop.f32.mrb[0].mxu0
    %v3051 = vadd.f32 %v2954, %v3050
    %v3052 = vpop.f32.mrb[0].mxu0
    %v3053 = vpop.f32.mrb[0].mxu0
    %v3054 = vadd.f32 %v2957, %v3053
    %v3055 = vpop.f32.mrb[0].mxu0
    %3056 = vmatprep.mubr.bf16.mxu0 0
    %3057 = vmatmul.mubr.bf16.gmra.mrb[0].mxu0 %v1993
    %v3058 = vpop.f32.mrb[0].mxu0
    %v3059 = vadd.f32 %v2962, %v3058
    %v3060 = vpop.f32.mrb[0].mxu0
    %v3061 = vpop.f32.mrb[0].mxu0
    %v3062 = vadd.f32 %v2965, %v3061
    %v3063 = vpop.f32.mrb[0].mxu0
    %3064 = vmatprep.mubr.bf16.mxu0 0
    %3065 = vmatmul.mubr.bf16.gmra.mrb[0].mxu0 %v2002
    %v3066 = vpop.f32.mrb[0].mxu0
    %v3067 = vadd.f32 %v2970, %v3066
    %v3068 = vpop.f32.mrb[0].mxu0
    %v3069 = vpop.f32.mrb[0].mxu0
    %v3070 = vadd.f32 %v2973, %v3069
    %v3071 = vpop.f32.mrb[0].mxu0
    %3072 = vmatprep.mubr.bf16.mxu0 0
    %3073 = vmatmul.mubr.bf16.gmra.mrb[0].mxu0 %v2011
    %v3074 = vpop.f32.mrb[0].mxu0
    %v3075 = vadd.f32 %v2978, %v3074
    %v3076 = vpop.f32.mrb[0].mxu0
    %v3077 = vpop.f32.mrb[0].mxu0
    %v3078 = vadd.f32 %v2981, %v3077
    %v3079 = vpop.f32.mrb[0].mxu0
    %3080 = vmatprep.mubr.bf16.mxu0 0
    %3081 = vmatmul.mubr.bf16.gmra.mrb[0].mxu0 %v2020
    %v3082 = vpop.f32.mrb[0].mxu0
    %v3083 = vadd.f32 %v2986, %v3082
    %v3084 = vpop.f32.mrb[0].mxu0
    %v3085 = vpop.f32.mrb[0].mxu0
    %v3086 = vadd.f32 %v2989, %v3085
    %v3087 = vpop.f32.mrb[0].mxu0
    %3088 = vdwg.mxu0
    %v3089 = vmax.f32 %v3027, 0.0
    %v3090 = vmax.f32 %v3030, 0.0
    %v3091 = vmax.f32 %v3035, 0.0
    %v3092 = vmax.f32 %v3038, 0.0
    %v3093 = vmax.f32 %v3043, 0.0
    %v3094 = vmax.f32 %v3046, 0.0
    %v3095 = vmax.f32 %v3051, 0.0
    %v3096 = vmax.f32 %v3054, 0.0
    %v3097 = vmax.f32 %v3059, 0.0
    %v3098 = vmax.f32 %v3062, 0.0
    %v3099 = vmax.f32 %v3067, 0.0
    %v3100 = vmax.f32 %v3070, 0.0
    %v3101 = vmax.f32 %v3075, 0.0
    %v3102 = vmax.f32 %v3078, 0.0
    %v3103 = vmax.f32 %v3083, 0.0
    %v3104 = vmax.f32 %v3086, 0.0
    %3105 = vst [vmem:[%s183 + $0x8] sm:$0xff] %v3089
    %3106 = vst [vmem:[%s183 + $0x20] sm:$0xff] %v3090
    %3107 = vst [vmem:[%s183 + $0x38] sm:$0xff] %v3091
    %3108 = vst [vmem:[%s183 + $0x50] sm:$0xff] %v3092
    %3109 = vst [vmem:[%s183 + $0x68] sm:$0xff] %v3093
    %3110 = vst [vmem:[%s183 + $0x80] sm:$0xff] %v3094
    %3111 = vst [vmem:[%s183 + $0x98] sm:$0xff] %v3095
    %3112 = vst [vmem:[%s183 + $0xb0] sm:$0xff] %v3096
    %3113 = vst [vmem:[%s183 + $0xf8] sm:$0xff] %v3097
    %3114 = vst [vmem:[%s183 + $0x110] sm:$0xff] %v3098
    %3115 = vst [vmem:[%s183 + $0x128] sm:$0xff] %v3099
    %3116 = vst [vmem:[%s183 + $0x140] sm:$0xff] %v3100
    %3117 = vst [vmem:[%s183 + $0x158] sm:$0xff] %v3101
    %3118 = vst [vmem:[%s183 + $0x170] sm:$0xff] %v3102
    %3119 = vst [vmem:[%s183 + $0x188] sm:$0xff] %v3103
    %3120 = vst [vmem:[%s183 + $0x1a0] sm:$0xff] %v3104
    %v3121 = vld [vmem:[#allocation2 + $0x7] sm:$0xff]
    %v3122 = vld [vmem:[#allocation2 + $0x1f] sm:$0xff]
    %v3123 = vld [vmem:[#allocation2 + $0x37] sm:$0xff]
    %v3124 = vld [vmem:[#allocation2 + $0x4f] sm:$0xff]
    %v3125 = vld [vmem:[#allocation2 + $0x67] sm:$0xff]
    %v3126 = vld [vmem:[#allocation2 + $0x7f] sm:$0xff]
    %v3127 = vld [vmem:[#allocation2 + $0x97] sm:$0xff]
    %v3128 = vld [vmem:[#allocation2 + $0xaf] sm:$0xff]
    %v3129 = vld [vmem:[#allocation2 + $0xf7] sm:$0xff]
    %v3130 = vld [vmem:[#allocation2 + $0x10f] sm:$0xff]
    %v3131 = vld [vmem:[#allocation2 + $0x127] sm:$0xff]
    %v3132 = vld [vmem:[#allocation2 + $0x13f] sm:$0xff]
    %v3133 = vld [vmem:[#allocation2 + $0x157] sm:$0xff]
    %v3134 = vld [vmem:[#allocation2 + $0x16f] sm:$0xff]
    %v3135 = vld [vmem:[#allocation2 + $0x187] sm:$0xff]
    %v3136 = vld [vmem:[#allocation2 + $0x19f] sm:$0xff]
    %v3137 = vpack.c.bf16 %v3122, %v3121
    %v3138 = vpack.c.bf16 %v3124, %v3123
    %v3139 = vpack.c.bf16 %v3126, %v3125
    %v3140 = vpack.c.bf16 %v3128, %v3127
    %v3141 = vpack.c.bf16 %v3130, %v3129
    %v3142 = vpack.c.bf16 %v3132, %v3131
    %v3143 = vpack.c.bf16 %v3134, %v3133
    %v3144 = vpack.c.bf16 %v3136, %v3135
    %3145 = vst [vmem:[#allocation3] sm:$0xff] %v3137
    %3146 = vst [vmem:[#allocation3 + $0x48] sm:$0xff] %v3138
    %3147 = vst [vmem:[#allocation3 + $0x90] sm:$0xff] %v3139
    %3148 = vst [vmem:[#allocation3 + $0xd8] sm:$0xff] %v3140
    %3149 = vst [vmem:[#allocation3 + $0x120] sm:$0xff] %v3141
    %3150 = vst [vmem:[#allocation3 + $0x168] sm:$0xff] %v3142
    %3151 = vst [vmem:[#allocation3 + $0x1b0] sm:$0xff] %v3143
    %3152 = vst [vmem:[#allocation3 + $0x1f8] sm:$0xff] %v3144
    %v3153 = vld [vmem:[#allocation2 + $0x8] sm:$0xff]
    %v3154 = vld [vmem:[#allocation2 + $0x20] sm:$0xff]
    %v3155 = vld [vmem:[#allocation2 + $0x38] sm:$0xff]
    %v3156 = vld [vmem:[#allocation2 + $0x50] sm:$0xff]
    %v3157 = vld [vmem:[#allocation2 + $0x68] sm:$0xff]
    %v3158 = vld [vmem:[#allocation2 + $0x80] sm:$0xff]
    %v3159 = vld [vmem:[#allocation2 + $0x98] sm:$0xff]
    %v3160 = vld [vmem:[#allocation2 + $0xb0] sm:$0xff]
    %v3161 = vld [vmem:[#allocation2 + $0xf8] sm:$0xff]
    %v3162 = vld [vmem:[#allocation2 + $0x110] sm:$0xff]
    %v3163 = vld [vmem:[#allocation2 + $0x128] sm:$0xff]
    %v3164 = vld [vmem:[#allocation2 + $0x140] sm:$0xff]
    %v3165 = vld [vmem:[#allocation2 + $0x158] sm:$0xff]
    %v3166 = vld [vmem:[#allocation2 + $0x170] sm:$0xff]
    %v3167 = vld [vmem:[#allocation2 + $0x188] sm:$0xff]
    %v3168 = vld [vmem:[#allocation2 + $0x1a0] sm:$0xff]
    %v3169 = vpack.c.bf16 %v3154, %v3153
    %v3170 = vpack.c.bf16 %v3156, %v3155
    %v3171 = vpack.c.bf16 %v3158, %v3157
    %v3172 = vpack.c.bf16 %v3160, %v3159
    %v3173 = vpack.c.bf16 %v3162, %v3161
    %v3174 = vpack.c.bf16 %v3164, %v3163
    %v3175 = vpack.c.bf16 %v3166, %v3165
    %v3176 = vpack.c.bf16 %v3168, %v3167
    %3177 = vst [vmem:[#allocation3 + $0x8] sm:$0xff] %v3169
    %3178 = vst [vmem:[#allocation3 + $0x50] sm:$0xff] %v3170
    %3179 = vst [vmem:[#allocation3 + $0x98] sm:$0xff] %v3171
    %3180 = vst [vmem:[#allocation3 + $0xe0] sm:$0xff] %v3172
    %3181 = vst [vmem:[#allocation3 + $0x128] sm:$0xff] %v3173
    %3182 = vst [vmem:[#allocation3 + $0x170] sm:$0xff] %v3174
    %3183 = vst [vmem:[#allocation3 + $0x1b8] sm:$0xff] %v3175
    %3184 = vst [vmem:[#allocation3 + $0x200] sm:$0xff] %v3176
    %v3185 = vld [vmem:[#allocation2 + $0x9] sm:$0xff]
    %v3186 = vld [vmem:[#allocation2 + $0x21] sm:$0xff]
    %v3187 = vld [vmem:[#allocation2 + $0x39] sm:$0xff]
    %v3188 = vld [vmem:[#allocation2 + $0x51] sm:$0xff]
    %v3189 = vld [vmem:[#allocation2 + $0x69] sm:$0xff]
    %v3190 = vld [vmem:[#allocation2 + $0x81] sm:$0xff]
    %v3191 = vld [vmem:[#allocation2 + $0x99] sm:$0xff]
    %v3192 = vld [vmem:[#allocation2 + $0xb1] sm:$0xff]
    %v3193 = vld [vmem:[#allocation2 + $0xf9] sm:$0xff]
    %v3194 = vld [vmem:[#allocation2 + $0x111] sm:$0xff]
    %v3195 = vld [vmem:[#allocation2 + $0x129] sm:$0xff]
    %v3196 = vld [vmem:[#allocation2 + $0x141] sm:$0xff]
    %v3197 = vld [vmem:[#allocation2 + $0x159] sm:$0xff]
    %v3198 = vld [vmem:[#allocation2 + $0x171] sm:$0xff]
    %v3199 = vld [vmem:[#allocation2 + $0x189] sm:$0xff]
    %v3200 = vld [vmem:[#allocation2 + $0x1a1] sm:$0xff]
    %v3201 = vpack.c.bf16 %v3186, %v3185
    %v3202 = vpack.c.bf16 %v3188, %v3187
    %v3203 = vpack.c.bf16 %v3190, %v3189
    %v3204 = vpack.c.bf16 %v3192, %v3191
    %v3205 = vpack.c.bf16 %v3194, %v3193
    %v3206 = vpack.c.bf16 %v3196, %v3195
    %v3207 = vpack.c.bf16 %v3198, %v3197
    %v3208 = vpack.c.bf16 %v3200, %v3199
    %3209 = vst [vmem:[#allocation3 + $0x10] sm:$0xff] %v3201
    %3210 = vst [vmem:[#allocation3 + $0x58] sm:$0xff] %v3202
    %3211 = vst [vmem:[#allocation3 + $0xa0] sm:$0xff] %v3203
    %3212 = vst [vmem:[#allocation3 + $0xe8] sm:$0xff] %v3204
    %3213 = vst [vmem:[#allocation3 + $0x130] sm:$0xff] %v3205
    %3214 = vst [vmem:[#allocation3 + $0x178] sm:$0xff] %v3206
    %3215 = vst [vmem:[#allocation3 + $0x1c0] sm:$0xff] %v3207
    %3216 = vst [vmem:[#allocation3 + $0x208] sm:$0xff] %v3208
    %v3217 = vld [vmem:[%s183 + $0x7] sm:$0xff]
    %v3218 = vld [vmem:[%s183 + $0x1f] sm:$0xff]
    %v3219 = vld [vmem:[%s183 + $0x37] sm:$0xff]
    %v3220 = vld [vmem:[%s183 + $0x4f] sm:$0xff]
    %v3221 = vld [vmem:[%s183 + $0x67] sm:$0xff]
    %v3222 = vld [vmem:[%s183 + $0x7f] sm:$0xff]
    %v3223 = vld [vmem:[%s183 + $0x97] sm:$0xff]
    %v3224 = vld [vmem:[%s183 + $0xaf] sm:$0xff]
    %v3225 = vld [vmem:[%s183 + $0xf7] sm:$0xff]
    %v3226 = vld [vmem:[%s183 + $0x10f] sm:$0xff]
    %v3227 = vld [vmem:[%s183 + $0x127] sm:$0xff]
    %v3228 = vld [vmem:[%s183 + $0x13f] sm:$0xff]
    %v3229 = vld [vmem:[%s183 + $0x157] sm:$0xff]
    %v3230 = vld [vmem:[%s183 + $0x16f] sm:$0xff]
    %v3231 = vld [vmem:[%s183 + $0x187] sm:$0xff]
    %v3232 = vld [vmem:[%s183 + $0x19f] sm:$0xff]
    %v3233 = vpack.c.bf16 %v3218, %v3217
    %v3234 = vpack.c.bf16 %v3220, %v3219
    %v3235 = vpack.c.bf16 %v3222, %v3221
    %v3236 = vpack.c.bf16 %v3224, %v3223
    %v3237 = vpack.c.bf16 %v3226, %v3225
    %v3238 = vpack.c.bf16 %v3228, %v3227
    %v3239 = vpack.c.bf16 %v3230, %v3229
    %v3240 = vpack.c.bf16 %v3232, %v3231
    %3241 = vst [vmem:[#allocation3 + $0x18] sm:$0xff] %v3233
    %3242 = vst [vmem:[#allocation3 + $0x60] sm:$0xff] %v3234
    %3243 = vst [vmem:[#allocation3 + $0xa8] sm:$0xff] %v3235
    %3244 = vst [vmem:[#allocation3 + $0xf0] sm:$0xff] %v3236
    %3245 = vst [vmem:[#allocation3 + $0x138] sm:$0xff] %v3237
    %3246 = vst [vmem:[#allocation3 + $0x180] sm:$0xff] %v3238
    %3247 = vst [vmem:[#allocation3 + $0x1c8] sm:$0xff] %v3239
    %3248 = vst [vmem:[#allocation3 + $0x210] sm:$0xff] %v3240
    %v3249 = vld [vmem:[%s183 + $0x8] sm:$0xff]
    %v3250 = vld [vmem:[%s183 + $0x20] sm:$0xff]
    %v3251 = vld [vmem:[%s183 + $0x38] sm:$0xff]
    %v3252 = vld [vmem:[%s183 + $0x50] sm:$0xff]
    %v3253 = vld [vmem:[%s183 + $0x68] sm:$0xff]
    %v3254 = vld [vmem:[%s183 + $0x80] sm:$0xff]
    %v3255 = vld [vmem:[%s183 + $0x98] sm:$0xff]
    %v3256 = vld [vmem:[%s183 + $0xb0] sm:$0xff]
    %v3257 = vld [vmem:[%s183 + $0xf8] sm:$0xff]
    %v3258 = vld [vmem:[%s183 + $0x110] sm:$0xff]
    %v3259 = vld [vmem:[%s183 + $0x128] sm:$0xff]
    %v3260 = vld [vmem:[%s183 + $0x140] sm:$0xff]
    %v3261 = vld [vmem:[%s183 + $0x158] sm:$0xff]
    %v3262 = vld [vmem:[%s183 + $0x170] sm:$0xff]
    %v3263 = vld [vmem:[%s183 + $0x188] sm:$0xff]
    %v3264 = vld [vmem:[%s183 + $0x1a0] sm:$0xff]
    %v3265 = vpack.c.bf16 %v3250, %v3249
    %v3266 = vpack.c.bf16 %v3252, %v3251
    %v3267 = vpack.c.bf16 %v3254, %v3253
    %v3268 = vpack.c.bf16 %v3256, %v3255
    %v3269 = vpack.c.bf16 %v3258, %v3257
    %v3270 = vpack.c.bf16 %v3260, %v3259
    %v3271 = vpack.c.bf16 %v3262, %v3261
    %v3272 = vpack.c.bf16 %v3264, %v3263
    %3273 = vst [vmem:[#allocation3 + $0x20] sm:$0xff] %v3265
    %3274 = vst [vmem:[#allocation3 + $0x68] sm:$0xff] %v3266
    %3275 = vst [vmem:[#allocation3 + $0xb0] sm:$0xff] %v3267
    %3276 = vst [vmem:[#allocation3 + $0xf8] sm:$0xff] %v3268
    %3277 = vst [vmem:[#allocation3 + $0x140] sm:$0xff] %v3269
    %3278 = vst [vmem:[#allocation3 + $0x188] sm:$0xff] %v3270
    %3279 = vst [vmem:[#allocation3 + $0x1d0] sm:$0xff] %v3271
    %3280 = vst [vmem:[#allocation3 + $0x218] sm:$0xff] %v3272
    %v3281 = vld [vmem:[%s183 + $0x9] sm:$0xff]
    %v3282 = vld [vmem:[%s183 + $0x21] sm:$0xff]
    %v3283 = vld [vmem:[%s183 + $0x39] sm:$0xff]
    %v3284 = vld [vmem:[%s183 + $0x51] sm:$0xff]
    %v3285 = vld [vmem:[%s183 + $0x69] sm:$0xff]
    %v3286 = vld [vmem:[%s183 + $0x81] sm:$0xff]
    %v3287 = vld [vmem:[%s183 + $0x99] sm:$0xff]
    %v3288 = vld [vmem:[%s183 + $0xb1] sm:$0xff]
    %v3289 = vld [vmem:[%s183 + $0xf9] sm:$0xff]
    %v3290 = vld [vmem:[%s183 + $0x111] sm:$0xff]
    %v3291 = vld [vmem:[%s183 + $0x129] sm:$0xff]
    %v3292 = vld [vmem:[%s183 + $0x141] sm:$0xff]
    %v3293 = vld [vmem:[%s183 + $0x159] sm:$0xff]
    %v3294 = vld [vmem:[%s183 + $0x171] sm:$0xff]
    %v3295 = vld [vmem:[%s183 + $0x189] sm:$0xff]
    %v3296 = vld [vmem:[%s183 + $0x1a1] sm:$0xff]
    %v3297 = vpack.c.bf16 %v3282, %v3281
    %v3298 = vpack.c.bf16 %v3284, %v3283
    %v3299 = vpack.c.bf16 %v3286, %v3285
    %v3300 = vpack.c.bf16 %v3288, %v3287
    %v3301 = vpack.c.bf16 %v3290, %v3289
    %v3302 = vpack.c.bf16 %v3292, %v3291
    %v3303 = vpack.c.bf16 %v3294, %v3293
    %v3304 = vpack.c.bf16 %v3296, %v3295
    %3305 = vst [vmem:[#allocation3 + $0x28] sm:$0xff] %v3297
    %3306 = vst [vmem:[#allocation3 + $0x70] sm:$0xff] %v3298
    %3307 = vst [vmem:[#allocation3 + $0xb8] sm:$0xff] %v3299
    %3308 = vst [vmem:[#allocation3 + $0x100] sm:$0xff] %v3300
    %3309 = vst [vmem:[#allocation3 + $0x148] sm:$0xff] %v3301
    %3310 = vst [vmem:[#allocation3 + $0x190] sm:$0xff] %v3302
    %3311 = vst [vmem:[#allocation3 + $0x1d8] sm:$0xff] %v3303
    %3312 = vst [vmem:[#allocation3 + $0x220] sm:$0xff] %v3304
    %v3313 = vld [vmem:[%s392 + $0x7] sm:$0xff]
    %v3314 = vld [vmem:[%s392 + $0x1f] sm:$0xff]
    %v3315 = vld [vmem:[%s392 + $0x37] sm:$0xff]
    %v3316 = vld [vmem:[%s392 + $0x4f] sm:$0xff]
    %v3317 = vld [vmem:[%s392 + $0x67] sm:$0xff]
    %v3318 = vld [vmem:[%s392 + $0x7f] sm:$0xff]
    %v3319 = vld [vmem:[%s392 + $0x97] sm:$0xff]
    %v3320 = vld [vmem:[%s392 + $0xaf] sm:$0xff]
    %v3321 = vld [vmem:[%s392 + $0xf7] sm:$0xff]
    %v3322 = vld [vmem:[%s392 + $0x10f] sm:$0xff]
    %v3323 = vld [vmem:[%s392 + $0x127] sm:$0xff]
    %v3324 = vld [vmem:[%s392 + $0x13f] sm:$0xff]
    %v3325 = vld [vmem:[%s392 + $0x157] sm:$0xff]
    %v3326 = vld [vmem:[%s392 + $0x16f] sm:$0xff]
    %v3327 = vld [vmem:[%s392 + $0x187] sm:$0xff]
    %v3328 = vld [vmem:[%s392 + $0x19f] sm:$0xff]
    %v3329 = vpack.c.bf16 %v3314, %v3313
    %v3330 = vpack.c.bf16 %v3316, %v3315
    %v3331 = vpack.c.bf16 %v3318, %v3317
    %v3332 = vpack.c.bf16 %v3320, %v3319
    %v3333 = vpack.c.bf16 %v3322, %v3321
    %v3334 = vpack.c.bf16 %v3324, %v3323
    %v3335 = vpack.c.bf16 %v3326, %v3325
    %v3336 = vpack.c.bf16 %v3328, %v3327
    %3337 = vst [vmem:[#allocation3 + $0x30] sm:$0xff] %v3329
    %3338 = vst [vmem:[#allocation3 + $0x78] sm:$0xff] %v3330
    %3339 = vst [vmem:[#allocation3 + $0xc0] sm:$0xff] %v3331
    %3340 = vst [vmem:[#allocation3 + $0x108] sm:$0xff] %v3332
    %3341 = vst [vmem:[#allocation3 + $0x150] sm:$0xff] %v3333
    %3342 = vst [vmem:[#allocation3 + $0x198] sm:$0xff] %v3334
    %3343 = vst [vmem:[#allocation3 + $0x1e0] sm:$0xff] %v3335
    %3344 = vst [vmem:[#allocation3 + $0x228] sm:$0xff] %v3336
    %v3345 = vld [vmem:[%s392 + $0x8] sm:$0xff]
    %v3346 = vld [vmem:[%s392 + $0x20] sm:$0xff]
    %v3347 = vld [vmem:[%s392 + $0x38] sm:$0xff]
    %v3348 = vld [vmem:[%s392 + $0x50] sm:$0xff]
    %v3349 = vld [vmem:[%s392 + $0x68] sm:$0xff]
    %v3350 = vld [vmem:[%s392 + $0x80] sm:$0xff]
    %v3351 = vld [vmem:[%s392 + $0x98] sm:$0xff]
    %v3352 = vld [vmem:[%s392 + $0xb0] sm:$0xff]
    %v3353 = vld [vmem:[%s392 + $0xf8] sm:$0xff]
    %v3354 = vld [vmem:[%s392 + $0x110] sm:$0xff]
    %v3355 = vld [vmem:[%s392 + $0x128] sm:$0xff]
    %v3356 = vld [vmem:[%s392 + $0x140] sm:$0xff]
    %v3357 = vld [vmem:[%s392 + $0x158] sm:$0xff]
    %v3358 = vld [vmem:[%s392 + $0x170] sm:$0xff]
    %v3359 = vld [vmem:[%s392 + $0x188] sm:$0xff]
    %v3360 = vld [vmem:[%s392 + $0x1a0] sm:$0xff]
    %v3361 = vpack.c.bf16 %v3346, %v3345
    %v3362 = vpack.c.bf16 %v3348, %v3347
    %v3363 = vpack.c.bf16 %v3350, %v3349
    %v3364 = vpack.c.bf16 %v3352, %v3351
    %v3365 = vpack.c.bf16 %v3354, %v3353
    %v3366 = vpack.c.bf16 %v3356, %v3355
    %v3367 = vpack.c.bf16 %v3358, %v3357
    %v3368 = vpack.c.bf16 %v3360, %v3359
    %3369 = vst [vmem:[#allocation3 + $0x38] sm:$0xff] %v3361
    %3370 = vst [vmem:[#allocation3 + $0x80] sm:$0xff] %v3362
    %3371 = vst [vmem:[#allocation3 + $0xc8] sm:$0xff] %v3363
    %3372 = vst [vmem:[#allocation3 + $0x110] sm:$0xff] %v3364
    %3373 = vst [vmem:[#allocation3 + $0x158] sm:$0xff] %v3365
    %3374 = vst [vmem:[#allocation3 + $0x1a0] sm:$0xff] %v3366
    %3375 = vst [vmem:[#allocation3 + $0x1e8] sm:$0xff] %v3367
    %3376 = vst [vmem:[#allocation3 + $0x230] sm:$0xff] %v3368
    %v3377 = vld [vmem:[%s392 + $0x9] sm:$0xff]
    %v3378 = vld [vmem:[%s392 + $0x21] sm:$0xff]
    %v3379 = vld [vmem:[%s392 + $0x39] sm:$0xff]
    %v3380 = vld [vmem:[%s392 + $0x51] sm:$0xff]
    %v3381 = vld [vmem:[%s392 + $0x69] sm:$0xff]
    %v3382 = vld [vmem:[%s392 + $0x81] sm:$0xff]
    %v3383 = vld [vmem:[%s392 + $0x99] sm:$0xff]
    %v3384 = vld [vmem:[%s392 + $0xb1] sm:$0xff]
    %v3385 = vld [vmem:[%s392 + $0xf9] sm:$0xff]
    %v3386 = vld [vmem:[%s392 + $0x111] sm:$0xff]
    %v3387 = vld [vmem:[%s392 + $0x129] sm:$0xff]
    %v3388 = vld [vmem:[%s392 + $0x141] sm:$0xff]
    %v3389 = vld [vmem:[%s392 + $0x159] sm:$0xff]
    %v3390 = vld [vmem:[%s392 + $0x171] sm:$0xff]
    %v3391 = vld [vmem:[%s392 + $0x189] sm:$0xff]
    %v3392 = vld [vmem:[%s392 + $0x1a1] sm:$0xff]
    %v3393 = vpack.c.bf16 %v3378, %v3377
    %v3394 = vpack.c.bf16 %v3380, %v3379
    %v3395 = vpack.c.bf16 %v3382, %v3381
    %v3396 = vpack.c.bf16 %v3384, %v3383
    %v3397 = vpack.c.bf16 %v3386, %v3385
    %v3398 = vpack.c.bf16 %v3388, %v3387
    %v3399 = vpack.c.bf16 %v3390, %v3389
    %v3400 = vpack.c.bf16 %v3392, %v3391
    %3401 = vst [vmem:[#allocation3 + $0x40] sm:$0xff] %v3393
    %3402 = vst [vmem:[#allocation3 + $0x88] sm:$0xff] %v3394
    %3403 = vst [vmem:[#allocation3 + $0xd0] sm:$0xff] %v3395
    %3404 = vst [vmem:[#allocation3 + $0x118] sm:$0xff] %v3396
    %3405 = vst [vmem:[#allocation3 + $0x160] sm:$0xff] %v3397
    %3406 = vst [vmem:[#allocation3 + $0x1a8] sm:$0xff] %v3398
    %3407 = vst [vmem:[#allocation3 + $0x1f0] sm:$0xff] %v3399
    %3408 = vst [vmem:[#allocation3 + $0x238] sm:$0xff] %v3400
    %v3409 = vld [vmem:[#allocation3] sm:$0xff]
    %v3410 = vld [vmem:[#allocation3 + $0x8] sm:$0xff]
    %v3411 = vld [vmem:[#allocation3 + $0x10] sm:$0xff]
    %v3412 = vld [vmem:[#allocation3 + $0x18] sm:$0xff]
    %v3413 = vld [vmem:[#allocation3 + $0x20] sm:$0xff]
    %v3414 = vld [vmem:[#allocation3 + $0x28] sm:$0xff]
    %v3415 = vld [vmem:[#allocation3 + $0x30] sm:$0xff]
    %v3416 = vld [vmem:[#allocation3 + $0x38] sm:$0xff]
    %v3417 = vld [vmem:[#allocation3 + $0x40] sm:$0xff]
    %v3418 = vld [vmem:[#allocation3 + $0x48] sm:$0xff]
    %v3419 = vld [vmem:[#allocation3 + $0x50] sm:$0xff]
    %v3420 = vld [vmem:[#allocation3 + $0x58] sm:$0xff]
    %v3421 = vld [vmem:[#allocation3 + $0x60] sm:$0xff]
    %v3422 = vld [vmem:[#allocation3 + $0x68] sm:$0xff]
    %v3423 = vld [vmem:[#allocation3 + $0x70] sm:$0xff]
    %v3424 = vld [vmem:[#allocation3 + $0x78] sm:$0xff]
    %v3425 = vld [vmem:[#allocation3 + $0x80] sm:$0xff]
    %v3426 = vld [vmem:[#allocation3 + $0x88] sm:$0xff]
    %v3427 = vld [vmem:[#allocation3 + $0x90] sm:$0xff]
    %v3428 = vld [vmem:[#allocation3 + $0x98] sm:$0xff]
    %v3429 = vld [vmem:[#allocation3 + $0xa0] sm:$0xff]
    %v3430 = vld [vmem:[#allocation3 + $0xa8] sm:$0xff]
    %v3431 = vld [vmem:[#allocation3 + $0xb0] sm:$0xff]
    %v3432 = vld [vmem:[#allocation3 + $0xb8] sm:$0xff]
    %v3433 = vld [vmem:[#allocation3 + $0xc0] sm:$0xff]
    %v3434 = vld [vmem:[#allocation3 + $0xc8] sm:$0xff]
    %v3435 = vld [vmem:[#allocation3 + $0xd0] sm:$0xff]
    %v3436 = vld [vmem:[#allocation3 + $0xd8] sm:$0xff]
    %v3437 = vld [vmem:[#allocation3 + $0xe0] sm:$0xff]
    %v3438 = vld [vmem:[#allocation3 + $0xe8] sm:$0xff]
    %v3439 = vld [vmem:[#allocation3 + $0xf0] sm:$0xff]
    %v3440 = vld [vmem:[#allocation3 + $0xf8] sm:$0xff]
    %v3441 = vld [vmem:[#allocation3 + $0x100] sm:$0xff]
    %v3442 = vld [vmem:[#allocation3 + $0x108] sm:$0xff]
    %v3443 = vld [vmem:[#allocation3 + $0x110] sm:$0xff]
    %v3444 = vld [vmem:[#allocation3 + $0x118] sm:$0xff]
    %v3445 = vld [vmem:[#allocation3 + $0x120] sm:$0xff]
    %v3446 = vld [vmem:[#allocation3 + $0x128] sm:$0xff]
    %v3447 = vld [vmem:[#allocation3 + $0x130] sm:$0xff]
    %v3448 = vld [vmem:[#allocation3 + $0x138] sm:$0xff]
    %v3449 = vld [vmem:[#allocation3 + $0x140] sm:$0xff]
    %v3450 = vld [vmem:[#allocation3 + $0x148] sm:$0xff]
    %v3451 = vld [vmem:[#allocation3 + $0x150] sm:$0xff]
    %v3452 = vld [vmem:[#allocation3 + $0x158] sm:$0xff]
    %v3453 = vld [vmem:[#allocation3 + $0x160] sm:$0xff]
    %v3454 = vld [vmem:[#allocation3 + $0x168] sm:$0xff]
    %v3455 = vld [vmem:[#allocation3 + $0x170] sm:$0xff]
    %v3456 = vld [vmem:[#allocation3 + $0x178] sm:$0xff]
    %v3457 = vld [vmem:[#allocation3 + $0x180] sm:$0xff]
    %v3458 = vld [vmem:[#allocation3 + $0x188] sm:$0xff]
    %v3459 = vld [vmem:[#allocation3 + $0x190] sm:$0xff]
    %v3460 = vld [vmem:[#allocation3 + $0x198] sm:$0xff]
    %v3461 = vld [vmem:[#allocation3 + $0x1a0] sm:$0xff]
    %v3462 = vld [vmem:[#allocation3 + $0x1a8] sm:$0xff]
    %v3463 = vld [vmem:[#allocation3 + $0x1b0] sm:$0xff]
    %v3464 = vld [vmem:[#allocation3 + $0x1b8] sm:$0xff]
    %v3465 = vld [vmem:[#allocation3 + $0x1c0] sm:$0xff]
    %v3466 = vld [vmem:[#allocation3 + $0x1c8] sm:$0xff]
    %v3467 = vld [vmem:[#allocation3 + $0x1d0] sm:$0xff]
    %v3468 = vld [vmem:[#allocation3 + $0x1d8] sm:$0xff]
    %v3469 = vld [vmem:[#allocation3 + $0x1e0] sm:$0xff]
    %v3470 = vld [vmem:[#allocation3 + $0x1e8] sm:$0xff]
    %v3471 = vld [vmem:[#allocation3 + $0x1f0] sm:$0xff]
    %v3472 = vld [vmem:[#allocation3 + $0x1f8] sm:$0xff]
    %v3473 = vld [vmem:[#allocation3 + $0x200] sm:$0xff]
    %v3474 = vld [vmem:[#allocation3 + $0x208] sm:$0xff]
    %v3475 = vld [vmem:[#allocation3 + $0x210] sm:$0xff]
    %v3476 = vld [vmem:[#allocation3 + $0x218] sm:$0xff]
    %v3477 = vld [vmem:[#allocation3 + $0x220] sm:$0xff]
    %v3478 = vld [vmem:[#allocation3 + $0x228] sm:$0xff]
    %v3479 = vld [vmem:[#allocation3 + $0x230] sm:$0xff]
    %v3480 = vld [vmem:[#allocation3 + $0x238] sm:$0xff]
    %v3481 = vld [vmem:[#allocation8] sm:$0xf]
    %v3482 = vld [vmem:[#allocation8 + $0x4] sm:$0xf]
    %v3483 = vld [vmem:[#allocation8 + $0x8] sm:$0xf]
    %v3484 = vld [vmem:[#allocation8 + $0xc] sm:$0xf]
    %v3485 = vld [vmem:[#allocation8 + $0x10] sm:$0xf]
    %v3486 = vld [vmem:[#allocation8 + $0x14] sm:$0xf]
    %v3487 = vld [vmem:[#allocation8 + $0x18] sm:$0xf]
    %v3488 = vld [vmem:[#allocation8 + $0x1c] sm:$0xf]
    %v3489 = vld [vmem:[#allocation8 + $0x20] sm:$0xf]
    %v3490 = vld [vmem:[#allocation8 + $0x24] sm:$0xf]
    %v3491 = vld [vmem:[#allocation8 + $0x28] sm:$0xf]
    %v3492 = vld [vmem:[#allocation8 + $0x2c] sm:$0xf]
    %v3493 = vld [vmem:[#allocation8 + $0x30] sm:$0xf]
    %v3494 = vld [vmem:[#allocation8 + $0x34] sm:$0xf]
    %v3495 = vld [vmem:[#allocation8 + $0x38] sm:$0xf]
    %v3496 = vld [vmem:[#allocation8 + $0x3c] sm:$0xf]
    %v3497 = vld [vmem:[#allocation8 + $0x40] sm:$0xf]
    %v3498 = vld [vmem:[#allocation8 + $0x44] sm:$0xf]
    %v3499 = vld [vmem:[#allocation8 + $0x48] sm:$0xf]
    %v3500 = vld [vmem:[#allocation8 + $0x4c] sm:$0xf]
    %v3501 = vld [vmem:[#allocation8 + $0x50] sm:$0xf]
    %v3502 = vld [vmem:[#allocation8 + $0x54] sm:$0xf]
    %v3503 = vld [vmem:[#allocation8 + $0x58] sm:$0xf]
    %v3504 = vld [vmem:[#allocation8 + $0x5c] sm:$0xf]
    %v3505 = vld [vmem:[#allocation8 + $0x60] sm:$0xf]
    %v3506 = vld [vmem:[#allocation8 + $0x64] sm:$0xf]
    %v3507 = vld [vmem:[#allocation8 + $0x68] sm:$0xf]
    %v3508 = vld [vmem:[#allocation8 + $0x6c] sm:$0xf]
    %v3509 = vld [vmem:[#allocation8 + $0x70] sm:$0xf]
    %v3510 = vld [vmem:[#allocation8 + $0x74] sm:$0xf]
    %v3511 = vld [vmem:[#allocation8 + $0x78] sm:$0xf]
    %v3512 = vld [vmem:[#allocation8 + $0x7c] sm:$0xf]
    %v3513 = vld [vmem:[#allocation8 + $0x80] sm:$0xf]
    %v3514 = vld [vmem:[#allocation8 + $0x84] sm:$0xf]
    %v3515 = vld [vmem:[#allocation8 + $0x88] sm:$0xf]
    %v3516 = vld [vmem:[#allocation8 + $0x8c] sm:$0xf]
    %v3517 = vld [vmem:[#allocation8 + $0x90] sm:$0xf]
    %v3518 = vld [vmem:[#allocation8 + $0x94] sm:$0xf]
    %v3519 = vld [vmem:[#allocation8 + $0x98] sm:$0xf]
    %v3520 = vld [vmem:[#allocation8 + $0x9c] sm:$0xf]
    %v3521 = vld [vmem:[#allocation8 + $0xa0] sm:$0xf]
    %v3522 = vld [vmem:[#allocation8 + $0xa4] sm:$0xf]
    %v3523 = vld [vmem:[#allocation8 + $0xa8] sm:$0xf]
    %v3524 = vld [vmem:[#allocation8 + $0xac] sm:$0xf]
    %v3525 = vld [vmem:[#allocation8 + $0xb0] sm:$0xf]
    %v3526 = vld [vmem:[#allocation8 + $0xb4] sm:$0xf]
    %v3527 = vld [vmem:[#allocation8 + $0xb8] sm:$0xf]
    %v3528 = vld [vmem:[#allocation8 + $0xbc] sm:$0xf]
    %v3529 = vld [vmem:[#allocation8 + $0xc0] sm:$0xf]
    %v3530 = vld [vmem:[#allocation8 + $0xc4] sm:$0xf]
    %v3531 = vld [vmem:[#allocation8 + $0xc8] sm:$0xf]
    %v3532 = vld [vmem:[#allocation8 + $0xcc] sm:$0xf]
    %v3533 = vld [vmem:[#allocation8 + $0xd0] sm:$0xf]
    %v3534 = vld [vmem:[#allocation8 + $0xd4] sm:$0xf]
    %v3535 = vld [vmem:[#allocation8 + $0xd8] sm:$0xf]
    %v3536 = vld [vmem:[#allocation8 + $0xdc] sm:$0xf]
    %v3537 = vld [vmem:[#allocation8 + $0xe0] sm:$0xf]
    %v3538 = vld [vmem:[#allocation8 + $0xe4] sm:$0xf]
    %v3539 = vld [vmem:[#allocation8 + $0xe8] sm:$0xf]
    %v3540 = vld [vmem:[#allocation8 + $0xec] sm:$0xf]
    %v3541 = vld [vmem:[#allocation8 + $0xf0] sm:$0xf]
    %v3542 = vld [vmem:[#allocation8 + $0xf4] sm:$0xf]
    %v3543 = vld [vmem:[#allocation8 + $0xf8] sm:$0xf]
    %v3544 = vld [vmem:[#allocation8 + $0xfc] sm:$0xf]
    %v3545 = vld [vmem:[#allocation8 + $0x100] sm:$0xf]
    %v3546 = vld [vmem:[#allocation8 + $0x104] sm:$0xf]
    %v3547 = vld [vmem:[#allocation8 + $0x108] sm:$0xf]
    %v3548 = vld [vmem:[#allocation8 + $0x10c] sm:$0xf]
    %v3549 = vld [vmem:[#allocation8 + $0x110] sm:$0xf]
    %v3550 = vld [vmem:[#allocation8 + $0x114] sm:$0xf]
    %v3551 = vld [vmem:[#allocation8 + $0x118] sm:$0xf]
    %v3552 = vld [vmem:[#allocation8 + $0x11c] sm:$0xf]
    %v3553 = vld [vmem:[#allocation8 + $0x120] sm:$0xf]
    %v3554 = vld [vmem:[#allocation8 + $0x124] sm:$0xf]
    %v3555 = vld [vmem:[#allocation8 + $0x128] sm:$0xf]
    %v3556 = vld [vmem:[#allocation8 + $0x12c] sm:$0xf]
    %v3557 = vld [vmem:[#allocation8 + $0x130] sm:$0xf]
    %v3558 = vld [vmem:[#allocation8 + $0x134] sm:$0xf]
    %v3559 = vld [vmem:[#allocation8 + $0x138] sm:$0xf]
    %v3560 = vld [vmem:[#allocation8 + $0x13c] sm:$0xf]
    %v3561 = vld [vmem:[#allocation8 + $0x140] sm:$0xf]
    %v3562 = vld [vmem:[#allocation8 + $0x144] sm:$0xf]
    %v3563 = vld [vmem:[#allocation8 + $0x148] sm:$0xf]
    %v3564 = vld [vmem:[#allocation8 + $0x14c] sm:$0xf]
    %v3565 = vld [vmem:[#allocation8 + $0x150] sm:$0xf]
    %v3566 = vld [vmem:[#allocation8 + $0x154] sm:$0xf]
    %v3567 = vld [vmem:[#allocation8 + $0x158] sm:$0xf]
    %v3568 = vld [vmem:[#allocation8 + $0x15c] sm:$0xf]
    %v3569 = vld [vmem:[#allocation8 + $0x160] sm:$0xf]
    %v3570 = vld [vmem:[#allocation8 + $0x164] sm:$0xf]
    %v3571 = vld [vmem:[#allocation8 + $0x168] sm:$0xf]
    %v3572 = vld [vmem:[#allocation8 + $0x16c] sm:$0xf]
    %v3573 = vld [vmem:[#allocation8 + $0x170] sm:$0xf]
    %v3574 = vld [vmem:[#allocation8 + $0x174] sm:$0xf]
    %v3575 = vld [vmem:[#allocation8 + $0x178] sm:$0xf]
    %v3576 = vld [vmem:[#allocation8 + $0x17c] sm:$0xf]
    %v3577 = vld [vmem:[#allocation8 + $0x180] sm:$0xf]
    %v3578 = vld [vmem:[#allocation8 + $0x184] sm:$0xf]
    %v3579 = vld [vmem:[#allocation8 + $0x188] sm:$0xf]
    %v3580 = vld [vmem:[#allocation8 + $0x18c] sm:$0xf]
    %v3581 = vld [vmem:[#allocation8 + $0x190] sm:$0xf]
    %v3582 = vld [vmem:[#allocation8 + $0x194] sm:$0xf]
    %v3583 = vld [vmem:[#allocation8 + $0x198] sm:$0xf]
    %v3584 = vld [vmem:[#allocation8 + $0x19c] sm:$0xf]
    %v3585 = vld [vmem:[#allocation8 + $0x1a0] sm:$0xf]
    %v3586 = vld [vmem:[#allocation8 + $0x1a4] sm:$0xf]
    %v3587 = vld [vmem:[#allocation8 + $0x1a8] sm:$0xf]
    %v3588 = vld [vmem:[#allocation8 + $0x1ac] sm:$0xf]
    %v3589 = vld [vmem:[#allocation8 + $0x1b0] sm:$0xf]
    %v3590 = vld [vmem:[#allocation8 + $0x1b4] sm:$0xf]
    %v3591 = vld [vmem:[#allocation8 + $0x1b8] sm:$0xf]
    %v3592 = vld [vmem:[#allocation8 + $0x1bc] sm:$0xf]
    %v3593 = vld [vmem:[#allocation8 + $0x1c0] sm:$0xf]
    %v3594 = vld [vmem:[#allocation8 + $0x1c4] sm:$0xf]
    %v3595 = vld [vmem:[#allocation8 + $0x1c8] sm:$0xf]
    %v3596 = vld [vmem:[#allocation8 + $0x1cc] sm:$0xf]
    %v3597 = vld [vmem:[#allocation8 + $0x1d0] sm:$0xf]
    %v3598 = vld [vmem:[#allocation8 + $0x1d4] sm:$0xf]
    %v3599 = vld [vmem:[#allocation8 + $0x1d8] sm:$0xf]
    %v3600 = vld [vmem:[#allocation8 + $0x1dc] sm:$0xf]
    %v3601 = vld [vmem:[#allocation8 + $0x1e0] sm:$0xf]
    %v3602 = vld [vmem:[#allocation8 + $0x1e4] sm:$0xf]
    %v3603 = vld [vmem:[#allocation8 + $0x1e8] sm:$0xf]
    %v3604 = vld [vmem:[#allocation8 + $0x1ec] sm:$0xf]
    %v3605 = vld [vmem:[#allocation8 + $0x1f0] sm:$0xf]
    %v3606 = vld [vmem:[#allocation8 + $0x1f4] sm:$0xf]
    %v3607 = vld [vmem:[#allocation8 + $0x1f8] sm:$0xf]
    %v3608 = vld [vmem:[#allocation8 + $0x1fc] sm:$0xf]
    %v3609 = vld [vmem:[#allocation8 + $0x200] sm:$0xf]
    %v3610 = vld [vmem:[#allocation8 + $0x204] sm:$0xf]
    %v3611 = vld [vmem:[#allocation8 + $0x208] sm:$0xf]
    %v3612 = vld [vmem:[#allocation8 + $0x20c] sm:$0xf]
    %v3613 = vld [vmem:[#allocation8 + $0x210] sm:$0xf]
    %v3614 = vld [vmem:[#allocation8 + $0x214] sm:$0xf]
    %v3615 = vld [vmem:[#allocation8 + $0x218] sm:$0xf]
    %v3616 = vld [vmem:[#allocation8 + $0x21c] sm:$0xf]
    %v3617 = vld [vmem:[#allocation8 + $0x220] sm:$0xf]
    %v3618 = vld [vmem:[#allocation8 + $0x224] sm:$0xf]
    %v3619 = vld [vmem:[#allocation8 + $0x228] sm:$0xf]
    %v3620 = vld [vmem:[#allocation8 + $0x22c] sm:$0xf]
    %v3621 = vld [vmem:[#allocation8 + $0x230] sm:$0xf]
    %v3622 = vld [vmem:[#allocation8 + $0x234] sm:$0xf]
    %v3623 = vld [vmem:[#allocation8 + $0x238] sm:$0xf]
    %v3624 = vld [vmem:[#allocation8 + $0x23c] sm:$0xf]
    %v3625 = vld [vmem:[%s6] sm:$0x1]
    %v3627 = vlaneseq
    %v3628 = vshrl.u32 %v3627, 7
    %v3629 = vsub.s32 0, %v3628
    %v3630 = vrot.slane %v3625, %v3629
    %v3776 = vunpack.c.l.b16 %v3481
    %v3777 = vunpack.c.l.b16 %v3482
    %v3778 = vunpack.c.l.b16 %v3483
    %v3779 = vunpack.c.l.b16 %v3484
    %v3780 = vunpack.c.l.b16 %v3485
    %v3781 = vunpack.c.l.b16 %v3486
    %v3782 = vunpack.c.l.b16 %v3487
    %v3783 = vunpack.c.l.b16 %v3488
    %v3784 = vunpack.c.l.b16 %v3489
    %v3785 = vunpack.c.l.b16 %v3490
    %v3786 = vunpack.c.l.b16 %v3491
    %v3787 = vunpack.c.l.b16 %v3492
    %v3788 = vunpack.c.l.b16 %v3493
    %v3789 = vunpack.c.l.b16 %v3494
    %v3790 = vunpack.c.l.b16 %v3495
    %v3791 = vunpack.c.l.b16 %v3496
    %v3792 = vunpack.c.l.b16 %v3497
    %v3793 = vunpack.c.l.b16 %v3498
    %v3794 = vunpack.c.l.b16 %v3499
    %v3795 = vunpack.c.l.b16 %v3500
    %v3796 = vunpack.c.l.b16 %v3501
    %v3797 = vunpack.c.l.b16 %v3502
    %v3798 = vunpack.c.l.b16 %v3503
    %v3799 = vunpack.c.l.b16 %v3504
    %v3800 = vunpack.c.l.b16 %v3505
    %v3801 = vunpack.c.l.b16 %v3506
    %v3802 = vunpack.c.l.b16 %v3507
    %v3803 = vunpack.c.l.b16 %v3508
    %v3804 = vunpack.c.l.b16 %v3509
    %v3805 = vunpack.c.l.b16 %v3510
    %v3806 = vunpack.c.l.b16 %v3511
    %v3807 = vunpack.c.l.b16 %v3512
    %v3808 = vunpack.c.l.b16 %v3513
    %v3809 = vunpack.c.l.b16 %v3514
    %v3810 = vunpack.c.l.b16 %v3515
    %v3811 = vunpack.c.l.b16 %v3516
    %v3812 = vunpack.c.l.b16 %v3517
    %v3813 = vunpack.c.l.b16 %v3518
    %v3814 = vunpack.c.l.b16 %v3519
    %v3815 = vunpack.c.l.b16 %v3520
    %v3816 = vunpack.c.l.b16 %v3521
    %v3817 = vunpack.c.l.b16 %v3522
    %v3818 = vunpack.c.l.b16 %v3523
    %v3819 = vunpack.c.l.b16 %v3524
    %v3820 = vunpack.c.l.b16 %v3525
    %v3821 = vunpack.c.l.b16 %v3526
    %v3822 = vunpack.c.l.b16 %v3527
    %v3823 = vunpack.c.l.b16 %v3528
    %v3824 = vunpack.c.l.b16 %v3529
    %v3825 = vunpack.c.l.b16 %v3530
    %v3826 = vunpack.c.l.b16 %v3531
    %v3827 = vunpack.c.l.b16 %v3532
    %v3828 = vunpack.c.l.b16 %v3533
    %v3829 = vunpack.c.l.b16 %v3534
    %v3830 = vunpack.c.l.b16 %v3535
    %v3831 = vunpack.c.l.b16 %v3536
    %v3832 = vunpack.c.l.b16 %v3537
    %v3833 = vunpack.c.l.b16 %v3538
    %v3834 = vunpack.c.l.b16 %v3539
    %v3835 = vunpack.c.l.b16 %v3540
    %v3836 = vunpack.c.l.b16 %v3541
    %v3837 = vunpack.c.l.b16 %v3542
    %v3838 = vunpack.c.l.b16 %v3543
    %v3839 = vunpack.c.l.b16 %v3544
    %v3840 = vunpack.c.l.b16 %v3545
    %v3841 = vunpack.c.l.b16 %v3546
    %v3842 = vunpack.c.l.b16 %v3547
    %v3843 = vunpack.c.l.b16 %v3548
    %v3844 = vunpack.c.l.b16 %v3549
    %v3845 = vunpack.c.l.b16 %v3550
    %v3846 = vunpack.c.l.b16 %v3551
    %v3847 = vunpack.c.l.b16 %v3552
    %v3848 = vunpack.c.l.b16 %v3553
    %v3849 = vunpack.c.l.b16 %v3554
    %v3850 = vunpack.c.l.b16 %v3555
    %v3851 = vunpack.c.l.b16 %v3556
    %v3852 = vunpack.c.l.b16 %v3557
    %v3853 = vunpack.c.l.b16 %v3558
    %v3854 = vunpack.c.l.b16 %v3559
    %v3855 = vunpack.c.l.b16 %v3560
    %v3856 = vunpack.c.l.b16 %v3561
    %v3857 = vunpack.c.l.b16 %v3562
    %v3858 = vunpack.c.l.b16 %v3563
    %v3859 = vunpack.c.l.b16 %v3564
    %v3860 = vunpack.c.l.b16 %v3565
    %v3861 = vunpack.c.l.b16 %v3566
    %v3862 = vunpack.c.l.b16 %v3567
    %v3863 = vunpack.c.l.b16 %v3568
    %v3864 = vunpack.c.l.b16 %v3569
    %v3865 = vunpack.c.l.b16 %v3570
    %v3866 = vunpack.c.l.b16 %v3571
    %v3867 = vunpack.c.l.b16 %v3572
    %v3868 = vunpack.c.l.b16 %v3573
    %v3869 = vunpack.c.l.b16 %v3574
    %v3870 = vunpack.c.l.b16 %v3575
    %v3871 = vunpack.c.l.b16 %v3576
    %v3872 = vunpack.c.l.b16 %v3577
    %v3873 = vunpack.c.l.b16 %v3578
    %v3874 = vunpack.c.l.b16 %v3579
    %v3875 = vunpack.c.l.b16 %v3580
    %v3876 = vunpack.c.l.b16 %v3581
    %v3877 = vunpack.c.l.b16 %v3582
    %v3878 = vunpack.c.l.b16 %v3583
    %v3879 = vunpack.c.l.b16 %v3584
    %v3880 = vunpack.c.l.b16 %v3585
    %v3881 = vunpack.c.l.b16 %v3586
    %v3882 = vunpack.c.l.b16 %v3587
    %v3883 = vunpack.c.l.b16 %v3588
    %v3884 = vunpack.c.l.b16 %v3589
    %v3885 = vunpack.c.l.b16 %v3590
    %v3886 = vunpack.c.l.b16 %v3591
    %v3887 = vunpack.c.l.b16 %v3592
    %v3888 = vunpack.c.l.b16 %v3593
    %v3889 = vunpack.c.l.b16 %v3594
    %v3890 = vunpack.c.l.b16 %v3595
    %v3891 = vunpack.c.l.b16 %v3596
    %v3892 = vunpack.c.l.b16 %v3597
    %v3893 = vunpack.c.l.b16 %v3598
    %v3894 = vunpack.c.l.b16 %v3599
    %v3895 = vunpack.c.l.b16 %v3600
    %v3896 = vunpack.c.l.b16 %v3601
    %v3897 = vunpack.c.l.b16 %v3602
    %v3898 = vunpack.c.l.b16 %v3603
    %v3899 = vunpack.c.l.b16 %v3604
    %v3900 = vunpack.c.l.b16 %v3605
    %v3901 = vunpack.c.l.b16 %v3606
    %v3902 = vunpack.c.l.b16 %v3607
    %v3903 = vunpack.c.l.b16 %v3608
    %v3904 = vunpack.c.l.b16 %v3609
    %v3905 = vunpack.c.l.b16 %v3610
    %v3906 = vunpack.c.l.b16 %v3611
    %v3907 = vunpack.c.l.b16 %v3612
    %v3908 = vunpack.c.l.b16 %v3613
    %v3909 = vunpack.c.l.b16 %v3614
    %v3910 = vunpack.c.l.b16 %v3615
    %v3911 = vunpack.c.l.b16 %v3616
    %v3912 = vunpack.c.l.b16 %v3617
    %v3913 = vunpack.c.l.b16 %v3618
    %v3914 = vunpack.c.l.b16 %v3619
    %v3915 = vunpack.c.l.b16 %v3620
    %v3916 = vunpack.c.l.b16 %v3621
    %v3917 = vunpack.c.l.b16 %v3622
    %v3918 = vunpack.c.l.b16 %v3623
    %v3919 = vunpack.c.l.b16 %v3624
    %v3920 = vpack.c.b16 %v3777, %v3776
    %v3921 = vpack.c.b16 %v3779, %v3778
    %v3922 = vpack.c.b16 %v3781, %v3780
    %v3923 = vpack.c.b16 %v3783, %v3782
    %v3924 = vpack.c.b16 %v3785, %v3784
    %v3925 = vpack.c.b16 %v3787, %v3786
    %v3926 = vpack.c.b16 %v3789, %v3788
    %v3927 = vpack.c.b16 %v3791, %v3790
    %v3928 = vpack.c.b16 %v3793, %v3792
    %v3929 = vpack.c.b16 %v3795, %v3794
    %v3930 = vpack.c.b16 %v3797, %v3796
    %v3931 = vpack.c.b16 %v3799, %v3798
    %v3932 = vpack.c.b16 %v3801, %v3800
    %v3933 = vpack.c.b16 %v3803, %v3802
    %v3934 = vpack.c.b16 %v3805, %v3804
    %v3935 = vpack.c.b16 %v3807, %v3806
    %v3936 = vpack.c.b16 %v3809, %v3808
    %v3937 = vpack.c.b16 %v3811, %v3810
    %v3938 = vpack.c.b16 %v3813, %v3812
    %v3939 = vpack.c.b16 %v3815, %v3814
    %v3940 = vpack.c.b16 %v3817, %v3816
    %v3941 = vpack.c.b16 %v3819, %v3818
    %v3942 = vpack.c.b16 %v3821, %v3820
    %v3943 = vpack.c.b16 %v3823, %v3822
    %v3944 = vpack.c.b16 %v3825, %v3824
    %v3945 = vpack.c.b16 %v3827, %v3826
    %v3946 = vpack.c.b16 %v3829, %v3828
    %v3947 = vpack.c.b16 %v3831, %v3830
    %v3948 = vpack.c.b16 %v3833, %v3832
    %v3949 = vpack.c.b16 %v3835, %v3834
    %v3950 = vpack.c.b16 %v3837, %v3836
    %v3951 = vpack.c.b16 %v3839, %v3838
    %v3952 = vpack.c.b16 %v3841, %v3840
    %v3953 = vpack.c.b16 %v3843, %v3842
    %v3954 = vpack.c.b16 %v3845, %v3844
    %v3955 = vpack.c.b16 %v3847, %v3846
    %v3956 = vpack.c.b16 %v3849, %v3848
    %v3957 = vpack.c.b16 %v3851, %v3850
    %v3958 = vpack.c.b16 %v3853, %v3852
    %v3959 = vpack.c.b16 %v3855, %v3854
    %v3960 = vpack.c.b16 %v3857, %v3856
    %v3961 = vpack.c.b16 %v3859, %v3858
    %v3962 = vpack.c.b16 %v3861, %v3860
    %v3963 = vpack.c.b16 %v3863, %v3862
    %v3964 = vpack.c.b16 %v3865, %v3864
    %v3965 = vpack.c.b16 %v3867, %v3866
    %v3966 = vpack.c.b16 %v3869, %v3868
    %v3967 = vpack.c.b16 %v3871, %v3870
    %v3968 = vpack.c.b16 %v3873, %v3872
    %v3969 = vpack.c.b16 %v3875, %v3874
    %v3970 = vpack.c.b16 %v3877, %v3876
    %v3971 = vpack.c.b16 %v3879, %v3878
    %v3972 = vpack.c.b16 %v3881, %v3880
    %v3973 = vpack.c.b16 %v3883, %v3882
    %v3974 = vpack.c.b16 %v3885, %v3884
    %v3975 = vpack.c.b16 %v3887, %v3886
    %v3976 = vpack.c.b16 %v3889, %v3888
    %v3977 = vpack.c.b16 %v3891, %v3890
    %v3978 = vpack.c.b16 %v3893, %v3892
    %v3979 = vpack.c.b16 %v3895, %v3894
    %v3980 = vpack.c.b16 %v3897, %v3896
    %v3981 = vpack.c.b16 %v3899, %v3898
    %v3982 = vpack.c.b16 %v3901, %v3900
    %v3983 = vpack.c.b16 %v3903, %v3902
    %v3984 = vpack.c.b16 %v3905, %v3904
    %v3985 = vpack.c.b16 %v3907, %v3906
    %v3986 = vpack.c.b16 %v3909, %v3908
    %v3987 = vpack.c.b16 %v3911, %v3910
    %v3988 = vpack.c.b16 %v3913, %v3912
    %v3989 = vpack.c.b16 %v3915, %v3914
    %v3990 = vpack.c.b16 %v3917, %v3916
    %v3991 = vpack.c.b16 %v3919, %v3918
    %4064 = vmatprep.subr.bf16.mxu0 0
    %4065 = vmatpush1.bf16.msra.mxu0 %v3920
    %4066 = vmatprep.subr.bf16.mxu0 0
    %4067 = vmatpush1.bf16.msra.mxu0 %v3921
    %4068 = vmatprep.subr.bf16.mxu0 0
    %4069 = vmatpush1.bf16.msra.mxu0 %v3922
    %4070 = vmatprep.subr.bf16.mxu0 0
    %4071 = vmatpush1.bf16.msra.mxu0 %v3923
    %4072 = vmatprep.subr.bf16.mxu0 0
    %4073 = vmatpush1.bf16.msra.mxu0 %v3924
    %4074 = vmatprep.subr.bf16.mxu0 0
    %4075 = vmatpush1.bf16.msra.mxu0 %v3925
    %4076 = vmatprep.subr.bf16.mxu0 0
    %4077 = vmatpush1.bf16.msra.mxu0 %v3926
    %4078 = vmatprep.subr.bf16.mxu0 0
    %4079 = vmatpush1.bf16.msra.mxu0 %v3927
    %4080 = vmatprep.subr.bf16.mxu0 0
    %4081 = vmatpush1.bf16.msra.mxu0 %v3928
    %4082 = vmatprep.subr.bf16.mxu0 0
    %4083 = vmatpush1.bf16.msra.mxu0 %v3929
    %4084 = vmatprep.subr.bf16.mxu0 0
    %4085 = vmatpush1.bf16.msra.mxu0 %v3930
    %4086 = vmatprep.subr.bf16.mxu0 0
    %4087 = vmatpush1.bf16.msra.mxu0 %v3931
    %4088 = vmatprep.subr.bf16.mxu0 0
    %4089 = vmatpush1.bf16.msra.mxu0 %v3932
    %4090 = vmatprep.subr.bf16.mxu0 0
    %4091 = vmatpush1.bf16.msra.mxu0 %v3933
    %4092 = vmatprep.subr.bf16.mxu0 0
    %4093 = vmatpush1.bf16.msra.mxu0 %v3934
    %4094 = vmatprep.subr.bf16.mxu0 0
    %4095 = vmatpush1.bf16.msra.mxu0 %v3935
    %4096 = vmatprep.mubr.bf16.mxu0 %v3410
    %4097 = vmatmul.mubr.bf16.gmra.mrb[0].mxu0 %v3409
    %v4098 = vpop.f32.mrb[0].mxu0
    %v4099 = vadd.f32 %v3630, %v4098
    %v4100 = vpop.f32.mrb[0].mxu0
    %v4101 = vpop.f32.mrb[0].mxu0
    %v4102 = vadd.f32 %v3630, %v4101
    %v4103 = vpop.f32.mrb[0].mxu0
    %4104 = vmatprep.mubr.bf16.mxu0 %v3419
    %4105 = vmatmul.mubr.bf16.gmra.mrb[0].mxu0 %v3418
    %v4106 = vpop.f32.mrb[0].mxu0
    %v4107 = vadd.f32 %v3630, %v4106
    %v4108 = vpop.f32.mrb[0].mxu0
    %v4109 = vpop.f32.mrb[0].mxu0
    %v4110 = vadd.f32 %v3630, %v4109
    %v4111 = vpop.f32.mrb[0].mxu0
    %4112 = vmatprep.mubr.bf16.mxu0 %v3428
    %4113 = vmatmul.mubr.bf16.gmra.mrb[0].mxu0 %v3427
    %v4114 = vpop.f32.mrb[0].mxu0
    %v4115 = vadd.f32 %v3630, %v4114
    %v4116 = vpop.f32.mrb[0].mxu0
    %v4117 = vpop.f32.mrb[0].mxu0
    %v4118 = vadd.f32 %v3630, %v4117
    %v4119 = vpop.f32.mrb[0].mxu0
    %4120 = vmatprep.mubr.bf16.mxu0 %v3437
    %4121 = vmatmul.mubr.bf16.gmra.mrb[0].mxu0 %v3436
    %v4122 = vpop.f32.mrb[0].mxu0
    %v4123 = vadd.f32 %v3630, %v4122
    %v4124 = vpop.f32.mrb[0].mxu0
    %v4125 = vpop.f32.mrb[0].mxu0
    %v4126 = vadd.f32 %v3630, %v4125
    %v4127 = vpop.f32.mrb[0].mxu0
    %4128 = vmatprep.mubr.bf16.mxu0 %v3446
    %4129 = vmatmul.mubr.bf16.gmra.mrb[0].mxu0 %v3445
    %v4130 = vpop.f32.mrb[0].mxu0
    %v4131 = vadd.f32 %v3630, %v4130
    %v4132 = vpop.f32.mrb[0].mxu0
    %v4133 = vpop.f32.mrb[0].mxu0
    %v4134 = vadd.f32 %v3630, %v4133
    %v4135 = vpop.f32.mrb[0].mxu0
    %4136 = vmatprep.mubr.bf16.mxu0 %v3455
    %4137 = vmatmul.mubr.bf16.gmra.mrb[0].mxu0 %v3454
    %v4138 = vpop.f32.mrb[0].mxu0
    %v4139 = vadd.f32 %v3630, %v4138
    %v4140 = vpop.f32.mrb[0].mxu0
    %v4141 = vpop.f32.mrb[0].mxu0
    %v4142 = vadd.f32 %v3630, %v4141
    %v4143 = vpop.f32.mrb[0].mxu0
    %4144 = vmatprep.mubr.bf16.mxu0 %v3464
    %4145 = vmatmul.mubr.bf16.gmra.mrb[0].mxu0 %v3463
    %v4146 = vpop.f32.mrb[0].mxu0
    %v4147 = vadd.f32 %v3630, %v4146
    %v4148 = vpop.f32.mrb[0].mxu0
    %v4149 = vpop.f32.mrb[0].mxu0
    %v4150 = vadd.f32 %v3630, %v4149
    %v4151 = vpop.f32.mrb[0].mxu0
    %4152 = vmatprep.mubr.bf16.mxu0 %v3473
    %4153 = vmatmul.mubr.bf16.gmra.mrb[0].mxu0 %v3472
    %v4154 = vpop.f32.mrb[0].mxu0
    %v4155 = vadd.f32 %v3630, %v4154
    %v4156 = vpop.f32.mrb[0].mxu0
    %v4157 = vpop.f32.mrb[0].mxu0
    %v4158 = vadd.f32 %v3630, %v4157
    %v4159 = vpop.f32.mrb[0].mxu0
    %4160 = vdwg.mxu0
    %4161 = vmatprep.subr.bf16.mxu0 0
    %4162 = vmatpush1.bf16.msra.mxu0 %v3936
    %4163 = vmatprep.subr.bf16.mxu0 0
    %4164 = vmatpush1.bf16.msra.mxu0 %v3937
    %4165 = vmatprep.subr.bf16.mxu0 0
    %4166 = vmatpush1.bf16.msra.mxu0 %v3938
    %4167 = vmatprep.subr.bf16.mxu0 0
    %4168 = vmatpush1.bf16.msra.mxu0 %v3939
    %4169 = vmatprep.subr.bf16.mxu0 0
    %4170 = vmatpush1.bf16.msra.mxu0 %v3940
    %4171 = vmatprep.subr.bf16.mxu0 0
    %4172 = vmatpush1.bf16.msra.mxu0 %v3941
    %4173 = vmatprep.subr.bf16.mxu0 0
    %4174 = vmatpush1.bf16.msra.mxu0 %v3942
    %4175 = vmatprep.subr.bf16.mxu0 0
    %4176 = vmatpush1.bf16.msra.mxu0 %v3943
    %4177 = vmatprep.subr.bf16.mxu0 0
    %4178 = vmatpush1.bf16.msra.mxu0 %v3944
    %4179 = vmatprep.subr.bf16.mxu0 0
    %4180 = vmatpush1.bf16.msra.mxu0 %v3945
    %4181 = vmatprep.subr.bf16.mxu0 0
    %4182 = vmatpush1.bf16.msra.mxu0 %v3946
    %4183 = vmatprep.subr.bf16.mxu0 0
    %4184 = vmatpush1.bf16.msra.mxu0 %v3947
    %4185 = vmatprep.subr.bf16.mxu0 0
    %4186 = vmatpush1.bf16.msra.mxu0 %v3948
    %4187 = vmatprep.subr.bf16.mxu0 0
    %4188 = vmatpush1.bf16.msra.mxu0 %v3949
    %4189 = vmatprep.subr.bf16.mxu0 0
    %4190 = vmatpush1.bf16.msra.mxu0 %v3950
    %4191 = vmatprep.subr.bf16.mxu0 0
    %4192 = vmatpush1.bf16.msra.mxu0 %v3951
    %4193 = vmatprep.mubr.bf16.mxu0 %v3412
    %4194 = vmatmul.mubr.bf16.gmra.mrb[0].mxu0 %v3411
    %v4195 = vpop.f32.mrb[0].mxu0
    %v4196 = vadd.f32 %v4099, %v4195
    %v4197 = vpop.f32.mrb[0].mxu0
    %v4198 = vpop.f32.mrb[0].mxu0
    %v4199 = vadd.f32 %v4102, %v4198
    %v4200 = vpop.f32.mrb[0].mxu0
    %4201 = vmatprep.mubr.bf16.mxu0 %v3421
    %4202 = vmatmul.mubr.bf16.gmra.mrb[0].mxu0 %v3420
    %v4203 = vpop.f32.mrb[0].mxu0
    %v4204 = vadd.f32 %v4107, %v4203
    %v4205 = vpop.f32.mrb[0].mxu0
    %v4206 = vpop.f32.mrb[0].mxu0
    %v4207 = vadd.f32 %v4110, %v4206
    %v4208 = vpop.f32.mrb[0].mxu0
    %4209 = vmatprep.mubr.bf16.mxu0 %v3430
    %4210 = vmatmul.mubr.bf16.gmra.mrb[0].mxu0 %v3429
    %v4211 = vpop.f32.mrb[0].mxu0
    %v4212 = vadd.f32 %v4115, %v4211
    %v4213 = vpop.f32.mrb[0].mxu0
    %v4214 = vpop.f32.mrb[0].mxu0
    %v4215 = vadd.f32 %v4118, %v4214
    %v4216 = vpop.f32.mrb[0].mxu0
    %4217 = vmatprep.mubr.bf16.mxu0 %v3439
    %4218 = vmatmul.mubr.bf16.gmra.mrb[0].mxu0 %v3438
    %v4219 = vpop.f32.mrb[0].mxu0
    %v4220 = vadd.f32 %v4123, %v4219
    %v4221 = vpop.f32.mrb[0].mxu0
    %v4222 = vpop.f32.mrb[0].mxu0
    %v4223 = vadd.f32 %v4126, %v4222
    %v4224 = vpop.f32.mrb[0].mxu0
    %4225 = vmatprep.mubr.bf16.mxu0 %v3448
    %4226 = vmatmul.mubr.bf16.gmra.mrb[0].mxu0 %v3447
    %v4227 = vpop.f32.mrb[0].mxu0
    %v4228 = vadd.f32 %v4131, %v4227
    %v4229 = vpop.f32.mrb[0].mxu0
    %v4230 = vpop.f32.mrb[0].mxu0
    %v4231 = vadd.f32 %v4134, %v4230
    %v4232 = vpop.f32.mrb[0].mxu0
    %4233 = vmatprep.mubr.bf16.mxu0 %v3457
    %4234 = vmatmul.mubr.bf16.gmra.mrb[0].mxu0 %v3456
    %v4235 = vpop.f32.mrb[0].mxu0
    %v4236 = vadd.f32 %v4139, %v4235
    %v4237 = vpop.f32.mrb[0].mxu0
    %v4238 = vpop.f32.mrb[0].mxu0
    %v4239 = vadd.f32 %v4142, %v4238
    %v4240 = vpop.f32.mrb[0].mxu0
    %4241 = vmatprep.mubr.bf16.mxu0 %v3466
    %4242 = vmatmul.mubr.bf16.gmra.mrb[0].mxu0 %v3465
    %v4243 = vpop.f32.mrb[0].mxu0
    %v4244 = vadd.f32 %v4147, %v4243
    %v4245 = vpop.f32.mrb[0].mxu0
    %v4246 = vpop.f32.mrb[0].mxu0
    %v4247 = vadd.f32 %v4150, %v4246
    %v4248 = vpop.f32.mrb[0].mxu0
    %4249 = vmatprep.mubr.bf16.mxu0 %v3475
    %4250 = vmatmul.mubr.bf16.gmra.mrb[0].mxu0 %v3474
    %v4251 = vpop.f32.mrb[0].mxu0
    %v4252 = vadd.f32 %v4155, %v4251
    %v4253 = vpop.f32.mrb[0].mxu0
    %v4254 = vpop.f32.mrb[0].mxu0
    %v4255 = vadd.f32 %v4158, %v4254
    %v4256 = vpop.f32.mrb[0].mxu0
    %4257 = vdwg.mxu0
    %4258 = vmatprep.subr.bf16.mxu0 0
    %4259 = vmatpush1.bf16.msra.mxu0 %v3952
    %4260 = vmatprep.subr.bf16.mxu0 0
    %4261 = vmatpush1.bf16.msra.mxu0 %v3953
    %4262 = vmatprep.subr.bf16.mxu0 0
    %4263 = vmatpush1.bf16.msra.mxu0 %v3954
    %4264 = vmatprep.subr.bf16.mxu0 0
    %4265 = vmatpush1.bf16.msra.mxu0 %v3955
    %4266 = vmatprep.subr.bf16.mxu0 0
    %4267 = vmatpush1.bf16.msra.mxu0 %v3956
    %4268 = vmatprep.subr.bf16.mxu0 0
    %4269 = vmatpush1.bf16.msra.mxu0 %v3957
    %4270 = vmatprep.subr.bf16.mxu0 0
    %4271 = vmatpush1.bf16.msra.mxu0 %v3958
    %4272 = vmatprep.subr.bf16.mxu0 0
    %4273 = vmatpush1.bf16.msra.mxu0 %v3959
    %4274 = vmatprep.subr.bf16.mxu0 0
    %4275 = vmatpush1.bf16.msra.mxu0 %v3960
    %4276 = vmatprep.subr.bf16.mxu0 0
    %4277 = vmatpush1.bf16.msra.mxu0 %v3961
    %4278 = vmatprep.subr.bf16.mxu0 0
    %4279 = vmatpush1.bf16.msra.mxu0 %v3962
    %4280 = vmatprep.subr.bf16.mxu0 0
    %4281 = vmatpush1.bf16.msra.mxu0 %v3963
    %4282 = vmatprep.subr.bf16.mxu0 0
    %4283 = vmatpush1.bf16.msra.mxu0 %v3964
    %4284 = vmatprep.subr.bf16.mxu0 0
    %4285 = vmatpush1.bf16.msra.mxu0 %v3965
    %4286 = vmatprep.subr.bf16.mxu0 0
    %4287 = vmatpush1.bf16.msra.mxu0 %v3966
    %4288 = vmatprep.subr.bf16.mxu0 0
    %4289 = vmatpush1.bf16.msra.mxu0 %v3967
    %4290 = vmatprep.mubr.bf16.mxu0 %v3414
    %4291 = vmatmul.mubr.bf16.gmra.mrb[0].mxu0 %v3413
    %v4292 = vpop.f32.mrb[0].mxu0
    %v4293 = vadd.f32 %v4196, %v4292
    %v4294 = vpop.f32.mrb[0].mxu0
    %v4295 = vpop.f32.mrb[0].mxu0
    %v4296 = vadd.f32 %v4199, %v4295
    %v4297 = vpop.f32.mrb[0].mxu0
    %4298 = vmatprep.mubr.bf16.mxu0 %v3423
    %4299 = vmatmul.mubr.bf16.gmra.mrb[0].mxu0 %v3422
    %v4300 = vpop.f32.mrb[0].mxu0
    %v4301 = vadd.f32 %v4204, %v4300
    %v4302 = vpop.f32.mrb[0].mxu0
    %v4303 = vpop.f32.mrb[0].mxu0
    %v4304 = vadd.f32 %v4207, %v4303
    %v4305 = vpop.f32.mrb[0].mxu0
    %4306 = vmatprep.mubr.bf16.mxu0 %v3432
    %4307 = vmatmul.mubr.bf16.gmra.mrb[0].mxu0 %v3431
    %v4308 = vpop.f32.mrb[0].mxu0
    %v4309 = vadd.f32 %v4212, %v4308
    %v4310 = vpop.f32.mrb[0].mxu0
    %v4311 = vpop.f32.mrb[0].mxu0
    %v4312 = vadd.f32 %v4215, %v4311
    %v4313 = vpop.f32.mrb[0].mxu0
    %4314 = vmatprep.mubr.bf16.mxu0 %v3441
    %4315 = vmatmul.mubr.bf16.gmra.mrb[0].mxu0 %v3440
    %v4316 = vpop.f32.mrb[0].mxu0
    %v4317 = vadd.f32 %v4220, %v4316
    %v4318 = vpop.f32.mrb[0].mxu0
    %v4319 = vpop.f32.mrb[0].mxu0
    %v4320 = vadd.f32 %v4223, %v4319
    %v4321 = vpop.f32.mrb[0].mxu0
    %4322 = vmatprep.mubr.bf16.mxu0 %v3450
    %4323 = vmatmul.mubr.bf16.gmra.mrb[0].mxu0 %v3449
    %v4324 = vpop.f32.mrb[0].mxu0
    %v4325 = vadd.f32 %v4228, %v4324
    %v4326 = vpop.f32.mrb[0].mxu0
    %v4327 = vpop.f32.mrb[0].mxu0
    %v4328 = vadd.f32 %v4231, %v4327
    %v4329 = vpop.f32.mrb[0].mxu0
    %4330 = vmatprep.mubr.bf16.mxu0 %v3459
    %4331 = vmatmul.mubr.bf16.gmra.mrb[0].mxu0 %v3458
    %v4332 = vpop.f32.mrb[0].mxu0
    %v4333 = vadd.f32 %v4236, %v4332
    %v4334 = vpop.f32.mrb[0].mxu0
    %v4335 = vpop.f32.mrb[0].mxu0
    %v4336 = vadd.f32 %v4239, %v4335
    %v4337 = vpop.f32.mrb[0].mxu0
    %4338 = vmatprep.mubr.bf16.mxu0 %v3468
    %4339 = vmatmul.mubr.bf16.gmra.mrb[0].mxu0 %v3467
    %v4340 = vpop.f32.mrb[0].mxu0
    %v4341 = vadd.f32 %v4244, %v4340
    %v4342 = vpop.f32.mrb[0].mxu0
    %v4343 = vpop.f32.mrb[0].mxu0
    %v4344 = vadd.f32 %v4247, %v4343
    %v4345 = vpop.f32.mrb[0].mxu0
    %4346 = vmatprep.mubr.bf16.mxu0 %v3477
    %4347 = vmatmul.mubr.bf16.gmra.mrb[0].mxu0 %v3476
    %v4348 = vpop.f32.mrb[0].mxu0
    %v4349 = vadd.f32 %v4252, %v4348
    %v4350 = vpop.f32.mrb[0].mxu0
    %v4351 = vpop.f32.mrb[0].mxu0
    %v4352 = vadd.f32 %v4255, %v4351
    %v4353 = vpop.f32.mrb[0].mxu0
    %4354 = vdwg.mxu0
    %4355 = vmatprep.subr.bf16.mxu0 0
    %4356 = vmatpush1.bf16.msra.mxu0 %v3968
    %4357 = vmatprep.subr.bf16.mxu0 0
    %4358 = vmatpush1.bf16.msra.mxu0 %v3969
    %4359 = vmatprep.subr.bf16.mxu0 0
    %4360 = vmatpush1.bf16.msra.mxu0 %v3970
    %4361 = vmatprep.subr.bf16.mxu0 0
    %4362 = vmatpush1.bf16.msra.mxu0 %v3971
    %4363 = vmatprep.subr.bf16.mxu0 0
    %4364 = vmatpush1.bf16.msra.mxu0 %v3972
    %4365 = vmatprep.subr.bf16.mxu0 0
    %4366 = vmatpush1.bf16.msra.mxu0 %v3973
    %4367 = vmatprep.subr.bf16.mxu0 0
    %4368 = vmatpush1.bf16.msra.mxu0 %v3974
    %4369 = vmatprep.subr.bf16.mxu0 0
    %4370 = vmatpush1.bf16.msra.mxu0 %v3975
    %4371 = vmatprep.subr.bf16.mxu0 0
    %4372 = vmatpush1.bf16.msra.mxu0 %v3976
    %4373 = vmatprep.subr.bf16.mxu0 0
    %4374 = vmatpush1.bf16.msra.mxu0 %v3977
    %4375 = vmatprep.subr.bf16.mxu0 0
    %4376 = vmatpush1.bf16.msra.mxu0 %v3978
    %4377 = vmatprep.subr.bf16.mxu0 0
    %4378 = vmatpush1.bf16.msra.mxu0 %v3979
    %4379 = vmatprep.subr.bf16.mxu0 0
    %4380 = vmatpush1.bf16.msra.mxu0 %v3980
    %4381 = vmatprep.subr.bf16.mxu0 0
    %4382 = vmatpush1.bf16.msra.mxu0 %v3981
    %4383 = vmatprep.subr.bf16.mxu0 0
    %4384 = vmatpush1.bf16.msra.mxu0 %v3982
    %4385 = vmatprep.subr.bf16.mxu0 0
    %4386 = vmatpush1.bf16.msra.mxu0 %v3983
    %4387 = vmatprep.mubr.bf16.mxu0 %v3416
    %4388 = vmatmul.mubr.bf16.gmra.mrb[0].mxu0 %v3415
    %v4389 = vpop.f32.mrb[0].mxu0
    %v4390 = vadd.f32 %v4293, %v4389
    %v4391 = vpop.f32.mrb[0].mxu0
    %v4392 = vpop.f32.mrb[0].mxu0
    %v4393 = vadd.f32 %v4296, %v4392
    %v4394 = vpop.f32.mrb[0].mxu0
    %4395 = vmatprep.mubr.bf16.mxu0 %v3425
    %4396 = vmatmul.mubr.bf16.gmra.mrb[0].mxu0 %v3424
    %v4397 = vpop.f32.mrb[0].mxu0
    %v4398 = vadd.f32 %v4301, %v4397
    %v4399 = vpop.f32.mrb[0].mxu0
    %v4400 = vpop.f32.mrb[0].mxu0
    %v4401 = vadd.f32 %v4304, %v4400
    %v4402 = vpop.f32.mrb[0].mxu0
    %4403 = vmatprep.mubr.bf16.mxu0 %v3434
    %4404 = vmatmul.mubr.bf16.gmra.mrb[0].mxu0 %v3433
    %v4405 = vpop.f32.mrb[0].mxu0
    %v4406 = vadd.f32 %v4309, %v4405
    %v4407 = vpop.f32.mrb[0].mxu0
    %v4408 = vpop.f32.mrb[0].mxu0
    %v4409 = vadd.f32 %v4312, %v4408
    %v4410 = vpop.f32.mrb[0].mxu0
    %4411 = vmatprep.mubr.bf16.mxu0 %v3443
    %4412 = vmatmul.mubr.bf16.gmra.mrb[0].mxu0 %v3442
    %v4413 = vpop.f32.mrb[0].mxu0
    %v4414 = vadd.f32 %v4317, %v4413
    %v4415 = vpop.f32.mrb[0].mxu0
    %v4416 = vpop.f32.mrb[0].mxu0
    %v4417 = vadd.f32 %v4320, %v4416
    %v4418 = vpop.f32.mrb[0].mxu0
    %4419 = vmatprep.mubr.bf16.mxu0 %v3452
    %4420 = vmatmul.mubr.bf16.gmra.mrb[0].mxu0 %v3451
    %v4421 = vpop.f32.mrb[0].mxu0
    %v4422 = vadd.f32 %v4325, %v4421
    %v4423 = vpop.f32.mrb[0].mxu0
    %v4424 = vpop.f32.mrb[0].mxu0
    %v4425 = vadd.f32 %v4328, %v4424
    %v4426 = vpop.f32.mrb[0].mxu0
    %4427 = vmatprep.mubr.bf16.mxu0 %v3461
    %4428 = vmatmul.mubr.bf16.gmra.mrb[0].mxu0 %v3460
    %v4429 = vpop.f32.mrb[0].mxu0
    %v4430 = vadd.f32 %v4333, %v4429
    %v4431 = vpop.f32.mrb[0].mxu0
    %v4432 = vpop.f32.mrb[0].mxu0
    %v4433 = vadd.f32 %v4336, %v4432
    %v4434 = vpop.f32.mrb[0].mxu0
    %4435 = vmatprep.mubr.bf16.mxu0 %v3470
    %4436 = vmatmul.mubr.bf16.gmra.mrb[0].mxu0 %v3469
    %v4437 = vpop.f32.mrb[0].mxu0
    %v4438 = vadd.f32 %v4341, %v4437
    %v4439 = vpop.f32.mrb[0].mxu0
    %v4440 = vpop.f32.mrb[0].mxu0
    %v4441 = vadd.f32 %v4344, %v4440
    %v4442 = vpop.f32.mrb[0].mxu0
    %4443 = vmatprep.mubr.bf16.mxu0 %v3479
    %4444 = vmatmul.mubr.bf16.gmra.mrb[0].mxu0 %v3478
    %v4445 = vpop.f32.mrb[0].mxu0
    %v4446 = vadd.f32 %v4349, %v4445
    %v4447 = vpop.f32.mrb[0].mxu0
    %v4448 = vpop.f32.mrb[0].mxu0
    %v4449 = vadd.f32 %v4352, %v4448
    %v4450 = vpop.f32.mrb[0].mxu0
    %4451 = vdwg.mxu0
    %4452 = vmatprep.subr.bf16.mxu0 0
    %4453 = vmatpush1.bf16.msra.mxu0 %v3984
    %4454 = vmatprep.subr.bf16.mxu0 0
    %4455 = vmatpush1.bf16.msra.mxu0 %v3985
    %4456 = vmatprep.subr.bf16.mxu0 0
    %4457 = vmatpush1.bf16.msra.mxu0 %v3986
    %4458 = vmatprep.subr.bf16.mxu0 0
    %4459 = vmatpush1.bf16.msra.mxu0 %v3987
    %4460 = vmatprep.subr.bf16.mxu0 0
    %4461 = vmatpush1.bf16.msra.mxu0 %v3988
    %4462 = vmatprep.subr.bf16.mxu0 0
    %4463 = vmatpush1.bf16.msra.mxu0 %v3989
    %4464 = vmatprep.subr.bf16.mxu0 0
    %4465 = vmatpush1.bf16.msra.mxu0 %v3990
    %4466 = vmatprep.subr.bf16.mxu0 0
    %4467 = vmatpush1.bf16.msra.mxu0 %v3991
    %4468 = vmatprep.subr.bf16.mxu0 0
    %4469 = vmatpush1.bf16.msra.mxu0 0
    %4470 = vmatprep.subr.bf16.mxu0 0
    %4471 = vmatpush1.bf16.msra.mxu0 0
    %4472 = vmatprep.subr.bf16.mxu0 0
    %4473 = vmatpush1.bf16.msra.mxu0 0
    %4474 = vmatprep.subr.bf16.mxu0 0
    %4475 = vmatpush1.bf16.msra.mxu0 0
    %4476 = vmatprep.subr.bf16.mxu0 0
    %4477 = vmatpush1.bf16.msra.mxu0 0
    %4478 = vmatprep.subr.bf16.mxu0 0
    %4479 = vmatpush1.bf16.msra.mxu0 0
    %4480 = vmatprep.subr.bf16.mxu0 0
    %4481 = vmatpush1.bf16.msra.mxu0 0
    %4482 = vmatprep.subr.bf16.mxu0 0
    %4483 = vmatpush1.bf16.msra.mxu0 0
    %4484 = vmatprep.mubr.bf16.mxu0 0
    %4485 = vmatmul.mubr.bf16.gmra.mrb[0].mxu0 %v3417
    %v4486 = vpop.f32.mrb[0].mxu0
    %v4487 = vadd.f32 %v4390, %v4486
    %v4488 = vpop.f32.mrb[0].mxu0
    %v4489 = vpop.f32.mrb[0].mxu0
    %v4490 = vadd.f32 %v4393, %v4489
    %v4491 = vpop.f32.mrb[0].mxu0
    %4492 = vmatprep.mubr.bf16.mxu0 0
    %4493 = vmatmul.mubr.bf16.gmra.mrb[0].mxu0 %v3426
    %v4494 = vpop.f32.mrb[0].mxu0
    %v4495 = vadd.f32 %v4398, %v4494
    %v4496 = vpop.f32.mrb[0].mxu0
    %v4497 = vpop.f32.mrb[0].mxu0
    %v4498 = vadd.f32 %v4401, %v4497
    %v4499 = vpop.f32.mrb[0].mxu0
    %4500 = vmatprep.mubr.bf16.mxu0 0
    %4501 = vmatmul.mubr.bf16.gmra.mrb[0].mxu0 %v3435
    %v4502 = vpop.f32.mrb[0].mxu0
    %v4503 = vadd.f32 %v4406, %v4502
    %v4504 = vpop.f32.mrb[0].mxu0
    %v4505 = vpop.f32.mrb[0].mxu0
    %v4506 = vadd.f32 %v4409, %v4505
    %v4507 = vpop.f32.mrb[0].mxu0
    %4508 = vmatprep.mubr.bf16.mxu0 0
    %4509 = vmatmul.mubr.bf16.gmra.mrb[0].mxu0 %v3444
    %v4510 = vpop.f32.mrb[0].mxu0
    %v4511 = vadd.f32 %v4414, %v4510
    %v4512 = vpop.f32.mrb[0].mxu0
    %v4513 = vpop.f32.mrb[0].mxu0
    %v4514 = vadd.f32 %v4417, %v4513
    %v4515 = vpop.f32.mrb[0].mxu0
    %4516 = vmatprep.mubr.bf16.mxu0 0
    %4517 = vmatmul.mubr.bf16.gmra.mrb[0].mxu0 %v3453
    %v4518 = vpop.f32.mrb[0].mxu0
    %v4519 = vadd.f32 %v4422, %v4518
    %v4520 = vpop.f32.mrb[0].mxu0
    %v4521 = vpop.f32.mrb[0].mxu0
    %v4522 = vadd.f32 %v4425, %v4521
    %v4523 = vpop.f32.mrb[0].mxu0
    %4524 = vmatprep.mubr.bf16.mxu0 0
    %4525 = vmatmul.mubr.bf16.gmra.mrb[0].mxu0 %v3462
    %v4526 = vpop.f32.mrb[0].mxu0
    %v4527 = vadd.f32 %v4430, %v4526
    %v4528 = vpop.f32.mrb[0].mxu0
    %v4529 = vpop.f32.mrb[0].mxu0
    %v4530 = vadd.f32 %v4433, %v4529
    %v4531 = vpop.f32.mrb[0].mxu0
    %4532 = vmatprep.mubr.bf16.mxu0 0
    %4533 = vmatmul.mubr.bf16.gmra.mrb[0].mxu0 %v3471
    %v4534 = vpop.f32.mrb[0].mxu0
    %v4535 = vadd.f32 %v4438, %v4534
    %v4536 = vpop.f32.mrb[0].mxu0
    %v4537 = vpop.f32.mrb[0].mxu0
    %v4538 = vadd.f32 %v4441, %v4537
    %v4539 = vpop.f32.mrb[0].mxu0
    %4540 = vmatprep.mubr.bf16.mxu0 0
    %4541 = vmatmul.mubr.bf16.gmra.mrb[0].mxu0 %v3480
    %v4542 = vpop.f32.mrb[0].mxu0
    %v4543 = vadd.f32 %v4446, %v4542
    %v4544 = vpop.f32.mrb[0].mxu0
    %v4545 = vpop.f32.mrb[0].mxu0
    %v4546 = vadd.f32 %v4449, %v4545
    %v4547 = vpop.f32.mrb[0].mxu0
    %4548 = vdwg.mxu0
    %v4549 = vmax.f32 %v4487, 0.0
    %v4550 = vmax.f32 %v4490, 0.0
    %v4551 = vmax.f32 %v4495, 0.0
    %v4552 = vmax.f32 %v4498, 0.0
    %v4553 = vmax.f32 %v4503, 0.0
    %v4554 = vmax.f32 %v4506, 0.0
    %v4555 = vmax.f32 %v4511, 0.0
    %v4556 = vmax.f32 %v4514, 0.0
    %v4557 = vmax.f32 %v4519, 0.0
    %v4558 = vmax.f32 %v4522, 0.0
    %v4559 = vmax.f32 %v4527, 0.0
    %v4560 = vmax.f32 %v4530, 0.0
    %v4561 = vmax.f32 %v4535, 0.0
    %v4562 = vmax.f32 %v4538, 0.0
    %v4563 = vmax.f32 %v4543, 0.0
    %v4564 = vmax.f32 %v4546, 0.0
    %4565 = vst [vmem:[%s183 + $0x8] sm:$0xff] %v4549
    %4566 = vst [vmem:[%s183 + $0x20] sm:$0xff] %v4550
    %4567 = vst [vmem:[%s183 + $0x38] sm:$0xff] %v4551
    %4568 = vst [vmem:[%s183 + $0x50] sm:$0xff] %v4552
    %4569 = vst [vmem:[%s183 + $0x68] sm:$0xff] %v4553
    %4570 = vst [vmem:[%s183 + $0x80] sm:$0xff] %v4554
    %4571 = vst [vmem:[%s183 + $0x98] sm:$0xff] %v4555
    %4572 = vst [vmem:[%s183 + $0xb0] sm:$0xff] %v4556
    %4573 = vst [vmem:[%s183 + $0xf8] sm:$0xff] %v4557
    %4574 = vst [vmem:[%s183 + $0x110] sm:$0xff] %v4558
    %4575 = vst [vmem:[%s183 + $0x128] sm:$0xff] %v4559
    %4576 = vst [vmem:[%s183 + $0x140] sm:$0xff] %v4560
    %4577 = vst [vmem:[%s183 + $0x158] sm:$0xff] %v4561
    %4578 = vst [vmem:[%s183 + $0x170] sm:$0xff] %v4562
    %4579 = vst [vmem:[%s183 + $0x188] sm:$0xff] %v4563
    %4580 = vst [vmem:[%s183 + $0x1a0] sm:$0xff] %v4564
    %v4581 = vld [vmem:[#allocation2 + $0x7] sm:$0xff]
    %v4582 = vld [vmem:[#allocation2 + $0x1f] sm:$0xff]
    %v4583 = vld [vmem:[#allocation2 + $0x37] sm:$0xff]
    %v4584 = vld [vmem:[#allocation2 + $0x4f] sm:$0xff]
    %v4585 = vld [vmem:[#allocation2 + $0x67] sm:$0xff]
    %v4586 = vld [vmem:[#allocation2 + $0x7f] sm:$0xff]
    %v4587 = vld [vmem:[#allocation2 + $0x97] sm:$0xff]
    %v4588 = vld [vmem:[#allocation2 + $0xaf] sm:$0xff]
    %v4589 = vld [vmem:[#allocation2 + $0xf7] sm:$0xff]
    %v4590 = vld [vmem:[#allocation2 + $0x10f] sm:$0xff]
    %v4591 = vld [vmem:[#allocation2 + $0x127] sm:$0xff]
    %v4592 = vld [vmem:[#allocation2 + $0x13f] sm:$0xff]
    %v4593 = vld [vmem:[#allocation2 + $0x157] sm:$0xff]
    %v4594 = vld [vmem:[#allocation2 + $0x16f] sm:$0xff]
    %v4595 = vld [vmem:[#allocation2 + $0x187] sm:$0xff]
    %v4596 = vld [vmem:[#allocation2 + $0x19f] sm:$0xff]
    %v4597 = vpack.c.bf16 %v4582, %v4581
    %v4598 = vpack.c.bf16 %v4584, %v4583
    %v4599 = vpack.c.bf16 %v4586, %v4585
    %v4600 = vpack.c.bf16 %v4588, %v4587
    %v4601 = vpack.c.bf16 %v4590, %v4589
    %v4602 = vpack.c.bf16 %v4592, %v4591
    %v4603 = vpack.c.bf16 %v4594, %v4593
    %v4604 = vpack.c.bf16 %v4596, %v4595
    %4605 = vst [vmem:[#allocation3] sm:$0xff] %v4597
    %4606 = vst [vmem:[#allocation3 + $0x48] sm:$0xff] %v4598
    %4607 = vst [vmem:[#allocation3 + $0x90] sm:$0xff] %v4599
    %4608 = vst [vmem:[#allocation3 + $0xd8] sm:$0xff] %v4600
    %4609 = vst [vmem:[#allocation3 + $0x120] sm:$0xff] %v4601
    %4610 = vst [vmem:[#allocation3 + $0x168] sm:$0xff] %v4602
    %4611 = vst [vmem:[#allocation3 + $0x1b0] sm:$0xff] %v4603
    %4612 = vst [vmem:[#allocation3 + $0x1f8] sm:$0xff] %v4604
    %v4613 = vld [vmem:[#allocation2 + $0x8] sm:$0xff]
    %v4614 = vld [vmem:[#allocation2 + $0x20] sm:$0xff]
    %v4615 = vld [vmem:[#allocation2 + $0x38] sm:$0xff]
    %v4616 = vld [vmem:[#allocation2 + $0x50] sm:$0xff]
    %v4617 = vld [vmem:[#allocation2 + $0x68] sm:$0xff]
    %v4618 = vld [vmem:[#allocation2 + $0x80] sm:$0xff]
    %v4619 = vld [vmem:[#allocation2 + $0x98] sm:$0xff]
    %v4620 = vld [vmem:[#allocation2 + $0xb0] sm:$0xff]
    %v4621 = vld [vmem:[#allocation2 + $0xf8] sm:$0xff]
    %v4622 = vld [vmem:[#allocation2 + $0x110] sm:$0xff]
    %v4623 = vld [vmem:[#allocation2 + $0x128] sm:$0xff]
    %v4624 = vld [vmem:[#allocation2 + $0x140] sm:$0xff]
    %v4625 = vld [vmem:[#allocation2 + $0x158] sm:$0xff]
    %v4626 = vld [vmem:[#allocation2 + $0x170] sm:$0xff]
    %v4627 = vld [vmem:[#allocation2 + $0x188] sm:$0xff]
    %v4628 = vld [vmem:[#allocation2 + $0x1a0] sm:$0xff]
    %v4629 = vpack.c.bf16 %v4614, %v4613
    %v4630 = vpack.c.bf16 %v4616, %v4615
    %v4631 = vpack.c.bf16 %v4618, %v4617
    %v4632 = vpack.c.bf16 %v4620, %v4619
    %v4633 = vpack.c.bf16 %v4622, %v4621
    %v4634 = vpack.c.bf16 %v4624, %v4623
    %v4635 = vpack.c.bf16 %v4626, %v4625
    %v4636 = vpack.c.bf16 %v4628, %v4627
    %4637 = vst [vmem:[#allocation3 + $0x8] sm:$0xff] %v4629
    %4638 = vst [vmem:[#allocation3 + $0x50] sm:$0xff] %v4630
    %4639 = vst [vmem:[#allocation3 + $0x98] sm:$0xff] %v4631
    %4640 = vst [vmem:[#allocation3 + $0xe0] sm:$0xff] %v4632
    %4641 = vst [vmem:[#allocation3 + $0x128] sm:$0xff] %v4633
    %4642 = vst [vmem:[#allocation3 + $0x170] sm:$0xff] %v4634
    %4643 = vst [vmem:[#allocation3 + $0x1b8] sm:$0xff] %v4635
    %4644 = vst [vmem:[#allocation3 + $0x200] sm:$0xff] %v4636
    %v4645 = vld [vmem:[#allocation2 + $0x9] sm:$0xff]
    %v4646 = vld [vmem:[#allocation2 + $0x21] sm:$0xff]
    %v4647 = vld [vmem:[#allocation2 + $0x39] sm:$0xff]
    %v4648 = vld [vmem:[#allocation2 + $0x51] sm:$0xff]
    %v4649 = vld [vmem:[#allocation2 + $0x69] sm:$0xff]
    %v4650 = vld [vmem:[#allocation2 + $0x81] sm:$0xff]
    %v4651 = vld [vmem:[#allocation2 + $0x99] sm:$0xff]
    %v4652 = vld [vmem:[#allocation2 + $0xb1] sm:$0xff]
    %v4653 = vld [vmem:[#allocation2 + $0xf9] sm:$0xff]
    %v4654 = vld [vmem:[#allocation2 + $0x111] sm:$0xff]
    %v4655 = vld [vmem:[#allocation2 + $0x129] sm:$0xff]
    %v4656 = vld [vmem:[#allocation2 + $0x141] sm:$0xff]
    %v4657 = vld [vmem:[#allocation2 + $0x159] sm:$0xff]
    %v4658 = vld [vmem:[#allocation2 + $0x171] sm:$0xff]
    %v4659 = vld [vmem:[#allocation2 + $0x189] sm:$0xff]
    %v4660 = vld [vmem:[#allocation2 + $0x1a1] sm:$0xff]
    %v4661 = vpack.c.bf16 %v4646, %v4645
    %v4662 = vpack.c.bf16 %v4648, %v4647
    %v4663 = vpack.c.bf16 %v4650, %v4649
    %v4664 = vpack.c.bf16 %v4652, %v4651
    %v4665 = vpack.c.bf16 %v4654, %v4653
    %v4666 = vpack.c.bf16 %v4656, %v4655
    %v4667 = vpack.c.bf16 %v4658, %v4657
    %v4668 = vpack.c.bf16 %v4660, %v4659
    %4669 = vst [vmem:[#allocation3 + $0x10] sm:$0xff] %v4661
    %4670 = vst [vmem:[#allocation3 + $0x58] sm:$0xff] %v4662
    %4671 = vst [vmem:[#allocation3 + $0xa0] sm:$0xff] %v4663
    %4672 = vst [vmem:[#allocation3 + $0xe8] sm:$0xff] %v4664
    %4673 = vst [vmem:[#allocation3 + $0x130] sm:$0xff] %v4665
    %4674 = vst [vmem:[#allocation3 + $0x178] sm:$0xff] %v4666
    %4675 = vst [vmem:[#allocation3 + $0x1c0] sm:$0xff] %v4667
    %4676 = vst [vmem:[#allocation3 + $0x208] sm:$0xff] %v4668
    %v4677 = vld [vmem:[%s183 + $0x7] sm:$0xff]
    %v4678 = vld [vmem:[%s183 + $0x1f] sm:$0xff]
    %v4679 = vld [vmem:[%s183 + $0x37] sm:$0xff]
    %v4680 = vld [vmem:[%s183 + $0x4f] sm:$0xff]
    %v4681 = vld [vmem:[%s183 + $0x67] sm:$0xff]
    %v4682 = vld [vmem:[%s183 + $0x7f] sm:$0xff]
    %v4683 = vld [vmem:[%s183 + $0x97] sm:$0xff]
    %v4684 = vld [vmem:[%s183 + $0xaf] sm:$0xff]
    %v4685 = vld [vmem:[%s183 + $0xf7] sm:$0xff]
    %v4686 = vld [vmem:[%s183 + $0x10f] sm:$0xff]
    %v4687 = vld [vmem:[%s183 + $0x127] sm:$0xff]
    %v4688 = vld [vmem:[%s183 + $0x13f] sm:$0xff]
    %v4689 = vld [vmem:[%s183 + $0x157] sm:$0xff]
    %v4690 = vld [vmem:[%s183 + $0x16f] sm:$0xff]
    %v4691 = vld [vmem:[%s183 + $0x187] sm:$0xff]
    %v4692 = vld [vmem:[%s183 + $0x19f] sm:$0xff]
    %v4693 = vpack.c.bf16 %v4678, %v4677
    %v4694 = vpack.c.bf16 %v4680, %v4679
    %v4695 = vpack.c.bf16 %v4682, %v4681
    %v4696 = vpack.c.bf16 %v4684, %v4683
    %v4697 = vpack.c.bf16 %v4686, %v4685
    %v4698 = vpack.c.bf16 %v4688, %v4687
    %v4699 = vpack.c.bf16 %v4690, %v4689
    %v4700 = vpack.c.bf16 %v4692, %v4691
    %4701 = vst [vmem:[#allocation3 + $0x18] sm:$0xff] %v4693
    %4702 = vst [vmem:[#allocation3 + $0x60] sm:$0xff] %v4694
    %4703 = vst [vmem:[#allocation3 + $0xa8] sm:$0xff] %v4695
    %4704 = vst [vmem:[#allocation3 + $0xf0] sm:$0xff] %v4696
    %4705 = vst [vmem:[#allocation3 + $0x138] sm:$0xff] %v4697
    %4706 = vst [vmem:[#allocation3 + $0x180] sm:$0xff] %v4698
    %4707 = vst [vmem:[#allocation3 + $0x1c8] sm:$0xff] %v4699
    %4708 = vst [vmem:[#allocation3 + $0x210] sm:$0xff] %v4700
    %v4709 = vld [vmem:[%s183 + $0x8] sm:$0xff]
    %v4710 = vld [vmem:[%s183 + $0x20] sm:$0xff]
    %v4711 = vld [vmem:[%s183 + $0x38] sm:$0xff]
    %v4712 = vld [vmem:[%s183 + $0x50] sm:$0xff]
    %v4713 = vld [vmem:[%s183 + $0x68] sm:$0xff]
    %v4714 = vld [vmem:[%s183 + $0x80] sm:$0xff]
    %v4715 = vld [vmem:[%s183 + $0x98] sm:$0xff]
    %v4716 = vld [vmem:[%s183 + $0xb0] sm:$0xff]
    %v4717 = vld [vmem:[%s183 + $0xf8] sm:$0xff]
    %v4718 = vld [vmem:[%s183 + $0x110] sm:$0xff]
    %v4719 = vld [vmem:[%s183 + $0x128] sm:$0xff]
    %v4720 = vld [vmem:[%s183 + $0x140] sm:$0xff]
    %v4721 = vld [vmem:[%s183 + $0x158] sm:$0xff]
    %v4722 = vld [vmem:[%s183 + $0x170] sm:$0xff]
    %v4723 = vld [vmem:[%s183 + $0x188] sm:$0xff]
    %v4724 = vld [vmem:[%s183 + $0x1a0] sm:$0xff]
    %v4725 = vpack.c.bf16 %v4710, %v4709
    %v4726 = vpack.c.bf16 %v4712, %v4711
    %v4727 = vpack.c.bf16 %v4714, %v4713
    %v4728 = vpack.c.bf16 %v4716, %v4715
    %v4729 = vpack.c.bf16 %v4718, %v4717
    %v4730 = vpack.c.bf16 %v4720, %v4719
    %v4731 = vpack.c.bf16 %v4722, %v4721
    %v4732 = vpack.c.bf16 %v4724, %v4723
    %4733 = vst [vmem:[#allocation3 + $0x20] sm:$0xff] %v4725
    %4734 = vst [vmem:[#allocation3 + $0x68] sm:$0xff] %v4726
    %4735 = vst [vmem:[#allocation3 + $0xb0] sm:$0xff] %v4727
    %4736 = vst [vmem:[#allocation3 + $0xf8] sm:$0xff] %v4728
    %4737 = vst [vmem:[#allocation3 + $0x140] sm:$0xff] %v4729
    %4738 = vst [vmem:[#allocation3 + $0x188] sm:$0xff] %v4730
    %4739 = vst [vmem:[#allocation3 + $0x1d0] sm:$0xff] %v4731
    %4740 = vst [vmem:[#allocation3 + $0x218] sm:$0xff] %v4732
    %v4741 = vld [vmem:[%s183 + $0x9] sm:$0xff]
    %v4742 = vld [vmem:[%s183 + $0x21] sm:$0xff]
    %v4743 = vld [vmem:[%s183 + $0x39] sm:$0xff]
    %v4744 = vld [vmem:[%s183 + $0x51] sm:$0xff]
    %v4745 = vld [vmem:[%s183 + $0x69] sm:$0xff]
    %v4746 = vld [vmem:[%s183 + $0x81] sm:$0xff]
    %v4747 = vld [vmem:[%s183 + $0x99] sm:$0xff]
    %v4748 = vld [vmem:[%s183 + $0xb1] sm:$0xff]
    %v4749 = vld [vmem:[%s183 + $0xf9] sm:$0xff]
    %v4750 = vld [vmem:[%s183 + $0x111] sm:$0xff]
    %v4751 = vld [vmem:[%s183 + $0x129] sm:$0xff]
    %v4752 = vld [vmem:[%s183 + $0x141] sm:$0xff]
    %v4753 = vld [vmem:[%s183 + $0x159] sm:$0xff]
    %v4754 = vld [vmem:[%s183 + $0x171] sm:$0xff]
    %v4755 = vld [vmem:[%s183 + $0x189] sm:$0xff]
    %v4756 = vld [vmem:[%s183 + $0x1a1] sm:$0xff]
    %v4757 = vpack.c.bf16 %v4742, %v4741
    %v4758 = vpack.c.bf16 %v4744, %v4743
    %v4759 = vpack.c.bf16 %v4746, %v4745
    %v4760 = vpack.c.bf16 %v4748, %v4747
    %v4761 = vpack.c.bf16 %v4750, %v4749
    %v4762 = vpack.c.bf16 %v4752, %v4751
    %v4763 = vpack.c.bf16 %v4754, %v4753
    %v4764 = vpack.c.bf16 %v4756, %v4755
    %4765 = vst [vmem:[#allocation3 + $0x28] sm:$0xff] %v4757
    %4766 = vst [vmem:[#allocation3 + $0x70] sm:$0xff] %v4758
    %4767 = vst [vmem:[#allocation3 + $0xb8] sm:$0xff] %v4759
    %4768 = vst [vmem:[#allocation3 + $0x100] sm:$0xff] %v4760
    %4769 = vst [vmem:[#allocation3 + $0x148] sm:$0xff] %v4761
    %4770 = vst [vmem:[#allocation3 + $0x190] sm:$0xff] %v4762
    %4771 = vst [vmem:[#allocation3 + $0x1d8] sm:$0xff] %v4763
    %4772 = vst [vmem:[#allocation3 + $0x220] sm:$0xff] %v4764
    %v4773 = vld [vmem:[%s392 + $0x7] sm:$0xff]
    %v4774 = vld [vmem:[%s392 + $0x1f] sm:$0xff]
    %v4775 = vld [vmem:[%s392 + $0x37] sm:$0xff]
    %v4776 = vld [vmem:[%s392 + $0x4f] sm:$0xff]
    %v4777 = vld [vmem:[%s392 + $0x67] sm:$0xff]
    %v4778 = vld [vmem:[%s392 + $0x7f] sm:$0xff]
    %v4779 = vld [vmem:[%s392 + $0x97] sm:$0xff]
    %v4780 = vld [vmem:[%s392 + $0xaf] sm:$0xff]
    %v4781 = vld [vmem:[%s392 + $0xf7] sm:$0xff]
    %v4782 = vld [vmem:[%s392 + $0x10f] sm:$0xff]
    %v4783 = vld [vmem:[%s392 + $0x127] sm:$0xff]
    %v4784 = vld [vmem:[%s392 + $0x13f] sm:$0xff]
    %v4785 = vld [vmem:[%s392 + $0x157] sm:$0xff]
    %v4786 = vld [vmem:[%s392 + $0x16f] sm:$0xff]
    %v4787 = vld [vmem:[%s392 + $0x187] sm:$0xff]
    %v4788 = vld [vmem:[%s392 + $0x19f] sm:$0xff]
    %v4789 = vpack.c.bf16 %v4774, %v4773
    %v4790 = vpack.c.bf16 %v4776, %v4775
    %v4791 = vpack.c.bf16 %v4778, %v4777
    %v4792 = vpack.c.bf16 %v4780, %v4779
    %v4793 = vpack.c.bf16 %v4782, %v4781
    %v4794 = vpack.c.bf16 %v4784, %v4783
    %v4795 = vpack.c.bf16 %v4786, %v4785
    %v4796 = vpack.c.bf16 %v4788, %v4787
    %4797 = vst [vmem:[#allocation3 + $0x30] sm:$0xff] %v4789
    %4798 = vst [vmem:[#allocation3 + $0x78] sm:$0xff] %v4790
    %4799 = vst [vmem:[#allocation3 + $0xc0] sm:$0xff] %v4791
    %4800 = vst [vmem:[#allocation3 + $0x108] sm:$0xff] %v4792
    %4801 = vst [vmem:[#allocation3 + $0x150] sm:$0xff] %v4793
    %4802 = vst [vmem:[#allocation3 + $0x198] sm:$0xff] %v4794
    %4803 = vst [vmem:[#allocation3 + $0x1e0] sm:$0xff] %v4795
    %4804 = vst [vmem:[#allocation3 + $0x228] sm:$0xff] %v4796
    %v4805 = vld [vmem:[%s392 + $0x8] sm:$0xff]
    %v4806 = vld [vmem:[%s392 + $0x20] sm:$0xff]
    %v4807 = vld [vmem:[%s392 + $0x38] sm:$0xff]
    %v4808 = vld [vmem:[%s392 + $0x50] sm:$0xff]
    %v4809 = vld [vmem:[%s392 + $0x68] sm:$0xff]
    %v4810 = vld [vmem:[%s392 + $0x80] sm:$0xff]
    %v4811 = vld [vmem:[%s392 + $0x98] sm:$0xff]
    %v4812 = vld [vmem:[%s392 + $0xb0] sm:$0xff]
    %v4813 = vld [vmem:[%s392 + $0xf8] sm:$0xff]
    %v4814 = vld [vmem:[%s392 + $0x110] sm:$0xff]
    %v4815 = vld [vmem:[%s392 + $0x128] sm:$0xff]
    %v4816 = vld [vmem:[%s392 + $0x140] sm:$0xff]
    %v4817 = vld [vmem:[%s392 + $0x158] sm:$0xff]
    %v4818 = vld [vmem:[%s392 + $0x170] sm:$0xff]
    %v4819 = vld [vmem:[%s392 + $0x188] sm:$0xff]
    %v4820 = vld [vmem:[%s392 + $0x1a0] sm:$0xff]
    %v4821 = vpack.c.bf16 %v4806, %v4805
    %v4822 = vpack.c.bf16 %v4808, %v4807
    %v4823 = vpack.c.bf16 %v4810, %v4809
    %v4824 = vpack.c.bf16 %v4812, %v4811
    %v4825 = vpack.c.bf16 %v4814, %v4813
    %v4826 = vpack.c.bf16 %v4816, %v4815
    %v4827 = vpack.c.bf16 %v4818, %v4817
    %v4828 = vpack.c.bf16 %v4820, %v4819
    %4829 = vst [vmem:[#allocation3 + $0x38] sm:$0xff] %v4821
    %4830 = vst [vmem:[#allocation3 + $0x80] sm:$0xff] %v4822
    %4831 = vst [vmem:[#allocation3 + $0xc8] sm:$0xff] %v4823
    %4832 = vst [vmem:[#allocation3 + $0x110] sm:$0xff] %v4824
    %4833 = vst [vmem:[#allocation3 + $0x158] sm:$0xff] %v4825
    %4834 = vst [vmem:[#allocation3 + $0x1a0] sm:$0xff] %v4826
    %4835 = vst [vmem:[#allocation3 + $0x1e8] sm:$0xff] %v4827
    %4836 = vst [vmem:[#allocation3 + $0x230] sm:$0xff] %v4828
    %v4837 = vld [vmem:[%s392 + $0x9] sm:$0xff]
    %v4838 = vld [vmem:[%s392 + $0x21] sm:$0xff]
    %v4839 = vld [vmem:[%s392 + $0x39] sm:$0xff]
    %v4840 = vld [vmem:[%s392 + $0x51] sm:$0xff]
    %v4841 = vld [vmem:[%s392 + $0x69] sm:$0xff]
    %v4842 = vld [vmem:[%s392 + $0x81] sm:$0xff]
    %v4843 = vld [vmem:[%s392 + $0x99] sm:$0xff]
    %v4844 = vld [vmem:[%s392 + $0xb1] sm:$0xff]
    %v4845 = vld [vmem:[%s392 + $0xf9] sm:$0xff]
    %v4846 = vld [vmem:[%s392 + $0x111] sm:$0xff]
    %v4847 = vld [vmem:[%s392 + $0x129] sm:$0xff]
    %v4848 = vld [vmem:[%s392 + $0x141] sm:$0xff]
    %v4849 = vld [vmem:[%s392 + $0x159] sm:$0xff]
    %v4850 = vld [vmem:[%s392 + $0x171] sm:$0xff]
    %v4851 = vld [vmem:[%s392 + $0x189] sm:$0xff]
    %v4852 = vld [vmem:[%s392 + $0x1a1] sm:$0xff]
    %v4853 = vpack.c.bf16 %v4838, %v4837
    %v4854 = vpack.c.bf16 %v4840, %v4839
    %v4855 = vpack.c.bf16 %v4842, %v4841
    %v4856 = vpack.c.bf16 %v4844, %v4843
    %v4857 = vpack.c.bf16 %v4846, %v4845
    %v4858 = vpack.c.bf16 %v4848, %v4847
    %v4859 = vpack.c.bf16 %v4850, %v4849
    %v4860 = vpack.c.bf16 %v4852, %v4851
    %4861 = vst [vmem:[#allocation3 + $0x40] sm:$0xff] %v4853
    %4862 = vst [vmem:[#allocation3 + $0x88] sm:$0xff] %v4854
    %4863 = vst [vmem:[#allocation3 + $0xd0] sm:$0xff] %v4855
    %4864 = vst [vmem:[#allocation3 + $0x118] sm:$0xff] %v4856
    %4865 = vst [vmem:[#allocation3 + $0x160] sm:$0xff] %v4857
    %4866 = vst [vmem:[#allocation3 + $0x1a8] sm:$0xff] %v4858
    %4867 = vst [vmem:[#allocation3 + $0x1f0] sm:$0xff] %v4859
    %4868 = vst [vmem:[#allocation3 + $0x238] sm:$0xff] %v4860
    %v4869 = vld [vmem:[#allocation3] sm:$0xff]
    %v4870 = vld [vmem:[#allocation3 + $0x8] sm:$0xff]
    %v4871 = vld [vmem:[#allocation3 + $0x10] sm:$0xff]
    %v4872 = vld [vmem:[#allocation3 + $0x18] sm:$0xff]
    %v4873 = vld [vmem:[#allocation3 + $0x20] sm:$0xff]
    %v4874 = vld [vmem:[#allocation3 + $0x28] sm:$0xff]
    %v4875 = vld [vmem:[#allocation3 + $0x30] sm:$0xff]
    %v4876 = vld [vmem:[#allocation3 + $0x38] sm:$0xff]
    %v4877 = vld [vmem:[#allocation3 + $0x40] sm:$0xff]
    %v4878 = vld [vmem:[#allocation3 + $0x48] sm:$0xff]
    %v4879 = vld [vmem:[#allocation3 + $0x50] sm:$0xff]
    %v4880 = vld [vmem:[#allocation3 + $0x58] sm:$0xff]
    %v4881 = vld [vmem:[#allocation3 + $0x60] sm:$0xff]
    %v4882 = vld [vmem:[#allocation3 + $0x68] sm:$0xff]
    %v4883 = vld [vmem:[#allocation3 + $0x70] sm:$0xff]
    %v4884 = vld [vmem:[#allocation3 + $0x78] sm:$0xff]
    %v4885 = vld [vmem:[#allocation3 + $0x80] sm:$0xff]
    %v4886 = vld [vmem:[#allocation3 + $0x88] sm:$0xff]
    %v4887 = vld [vmem:[#allocation3 + $0x90] sm:$0xff]
    %v4888 = vld [vmem:[#allocation3 + $0x98] sm:$0xff]
    %v4889 = vld [vmem:[#allocation3 + $0xa0] sm:$0xff]
    %v4890 = vld [vmem:[#allocation3 + $0xa8] sm:$0xff]
    %v4891 = vld [vmem:[#allocation3 + $0xb0] sm:$0xff]
    %v4892 = vld [vmem:[#allocation3 + $0xb8] sm:$0xff]
    %v4893 = vld [vmem:[#allocation3 + $0xc0] sm:$0xff]
    %v4894 = vld [vmem:[#allocation3 + $0xc8] sm:$0xff]
    %v4895 = vld [vmem:[#allocation3 + $0xd0] sm:$0xff]
    %v4896 = vld [vmem:[#allocation3 + $0xd8] sm:$0xff]
    %v4897 = vld [vmem:[#allocation3 + $0xe0] sm:$0xff]
    %v4898 = vld [vmem:[#allocation3 + $0xe8] sm:$0xff]
    %v4899 = vld [vmem:[#allocation3 + $0xf0] sm:$0xff]
    %v4900 = vld [vmem:[#allocation3 + $0xf8] sm:$0xff]
    %v4901 = vld [vmem:[#allocation3 + $0x100] sm:$0xff]
    %v4902 = vld [vmem:[#allocation3 + $0x108] sm:$0xff]
    %v4903 = vld [vmem:[#allocation3 + $0x110] sm:$0xff]
    %v4904 = vld [vmem:[#allocation3 + $0x118] sm:$0xff]
    %v4905 = vld [vmem:[#allocation3 + $0x120] sm:$0xff]
    %v4906 = vld [vmem:[#allocation3 + $0x128] sm:$0xff]
    %v4907 = vld [vmem:[#allocation3 + $0x130] sm:$0xff]
    %v4908 = vld [vmem:[#allocation3 + $0x138] sm:$0xff]
    %v4909 = vld [vmem:[#allocation3 + $0x140] sm:$0xff]
    %v4910 = vld [vmem:[#allocation3 + $0x148] sm:$0xff]
    %v4911 = vld [vmem:[#allocation3 + $0x150] sm:$0xff]
    %v4912 = vld [vmem:[#allocation3 + $0x158] sm:$0xff]
    %v4913 = vld [vmem:[#allocation3 + $0x160] sm:$0xff]
    %v4914 = vld [vmem:[#allocation3 + $0x168] sm:$0xff]
    %v4915 = vld [vmem:[#allocation3 + $0x170] sm:$0xff]
    %v4916 = vld [vmem:[#allocation3 + $0x178] sm:$0xff]
    %v4917 = vld [vmem:[#allocation3 + $0x180] sm:$0xff]
    %v4918 = vld [vmem:[#allocation3 + $0x188] sm:$0xff]
    %v4919 = vld [vmem:[#allocation3 + $0x190] sm:$0xff]
    %v4920 = vld [vmem:[#allocation3 + $0x198] sm:$0xff]
    %v4921 = vld [vmem:[#allocation3 + $0x1a0] sm:$0xff]
    %v4922 = vld [vmem:[#allocation3 + $0x1a8] sm:$0xff]
    %v4923 = vld [vmem:[#allocation3 + $0x1b0] sm:$0xff]
    %v4924 = vld [vmem:[#allocation3 + $0x1b8] sm:$0xff]
    %v4925 = vld [vmem:[#allocation3 + $0x1c0] sm:$0xff]
    %v4926 = vld [vmem:[#allocation3 + $0x1c8] sm:$0xff]
    %v4927 = vld [vmem:[#allocation3 + $0x1d0] sm:$0xff]
    %v4928 = vld [vmem:[#allocation3 + $0x1d8] sm:$0xff]
    %v4929 = vld [vmem:[#allocation3 + $0x1e0] sm:$0xff]
    %v4930 = vld [vmem:[#allocation3 + $0x1e8] sm:$0xff]
    %v4931 = vld [vmem:[#allocation3 + $0x1f0] sm:$0xff]
    %v4932 = vld [vmem:[#allocation3 + $0x1f8] sm:$0xff]
    %v4933 = vld [vmem:[#allocation3 + $0x200] sm:$0xff]
    %v4934 = vld [vmem:[#allocation3 + $0x208] sm:$0xff]
    %v4935 = vld [vmem:[#allocation3 + $0x210] sm:$0xff]
    %v4936 = vld [vmem:[#allocation3 + $0x218] sm:$0xff]
    %v4937 = vld [vmem:[#allocation3 + $0x220] sm:$0xff]
    %v4938 = vld [vmem:[#allocation3 + $0x228] sm:$0xff]
    %v4939 = vld [vmem:[#allocation3 + $0x230] sm:$0xff]
    %v4940 = vld [vmem:[#allocation3 + $0x238] sm:$0xff]
    %v4941 = vld [vmem:[#allocation9] sm:$0xf]
    %v4942 = vld [vmem:[#allocation9 + $0x4] sm:$0xf]
    %v4943 = vld [vmem:[#allocation9 + $0x8] sm:$0xf]
    %v4944 = vld [vmem:[#allocation9 + $0xc] sm:$0xf]
    %v4945 = vld [vmem:[#allocation9 + $0x10] sm:$0xf]
    %v4946 = vld [vmem:[#allocation9 + $0x14] sm:$0xf]
    %v4947 = vld [vmem:[#allocation9 + $0x18] sm:$0xf]
    %v4948 = vld [vmem:[#allocation9 + $0x1c] sm:$0xf]
    %v4949 = vld [vmem:[#allocation9 + $0x20] sm:$0xf]
    %v4950 = vld [vmem:[#allocation9 + $0x24] sm:$0xf]
    %v4951 = vld [vmem:[#allocation9 + $0x28] sm:$0xf]
    %v4952 = vld [vmem:[#allocation9 + $0x2c] sm:$0xf]
    %v4953 = vld [vmem:[#allocation9 + $0x30] sm:$0xf]
    %v4954 = vld [vmem:[#allocation9 + $0x34] sm:$0xf]
    %v4955 = vld [vmem:[#allocation9 + $0x38] sm:$0xf]
    %v4956 = vld [vmem:[#allocation9 + $0x3c] sm:$0xf]
    %v4957 = vld [vmem:[#allocation9 + $0x40] sm:$0xf]
    %v4958 = vld [vmem:[#allocation9 + $0x44] sm:$0xf]
    %v4959 = vld [vmem:[#allocation9 + $0x48] sm:$0xf]
    %v4960 = vld [vmem:[#allocation9 + $0x4c] sm:$0xf]
    %v4961 = vld [vmem:[#allocation9 + $0x50] sm:$0xf]
    %v4962 = vld [vmem:[#allocation9 + $0x54] sm:$0xf]
    %v4963 = vld [vmem:[#allocation9 + $0x58] sm:$0xf]
    %v4964 = vld [vmem:[#allocation9 + $0x5c] sm:$0xf]
    %v4965 = vld [vmem:[#allocation9 + $0x60] sm:$0xf]
    %v4966 = vld [vmem:[#allocation9 + $0x64] sm:$0xf]
    %v4967 = vld [vmem:[#allocation9 + $0x68] sm:$0xf]
    %v4968 = vld [vmem:[#allocation9 + $0x6c] sm:$0xf]
    %v4969 = vld [vmem:[#allocation9 + $0x70] sm:$0xf]
    %v4970 = vld [vmem:[#allocation9 + $0x74] sm:$0xf]
    %v4971 = vld [vmem:[#allocation9 + $0x78] sm:$0xf]
    %v4972 = vld [vmem:[#allocation9 + $0x7c] sm:$0xf]
    %v4973 = vld [vmem:[#allocation9 + $0x80] sm:$0xf]
    %v4974 = vld [vmem:[#allocation9 + $0x84] sm:$0xf]
    %v4975 = vld [vmem:[#allocation9 + $0x88] sm:$0xf]
    %v4976 = vld [vmem:[#allocation9 + $0x8c] sm:$0xf]
    %v4977 = vld [vmem:[#allocation9 + $0x90] sm:$0xf]
    %v4978 = vld [vmem:[#allocation9 + $0x94] sm:$0xf]
    %v4979 = vld [vmem:[#allocation9 + $0x98] sm:$0xf]
    %v4980 = vld [vmem:[#allocation9 + $0x9c] sm:$0xf]
    %v4981 = vld [vmem:[#allocation9 + $0xa0] sm:$0xf]
    %v4982 = vld [vmem:[#allocation9 + $0xa4] sm:$0xf]
    %v4983 = vld [vmem:[#allocation9 + $0xa8] sm:$0xf]
    %v4984 = vld [vmem:[#allocation9 + $0xac] sm:$0xf]
    %v4985 = vld [vmem:[#allocation9 + $0xb0] sm:$0xf]
    %v4986 = vld [vmem:[#allocation9 + $0xb4] sm:$0xf]
    %v4987 = vld [vmem:[#allocation9 + $0xb8] sm:$0xf]
    %v4988 = vld [vmem:[#allocation9 + $0xbc] sm:$0xf]
    %v4989 = vld [vmem:[#allocation9 + $0xc0] sm:$0xf]
    %v4990 = vld [vmem:[#allocation9 + $0xc4] sm:$0xf]
    %v4991 = vld [vmem:[#allocation9 + $0xc8] sm:$0xf]
    %v4992 = vld [vmem:[#allocation9 + $0xcc] sm:$0xf]
    %v4993 = vld [vmem:[#allocation9 + $0xd0] sm:$0xf]
    %v4994 = vld [vmem:[#allocation9 + $0xd4] sm:$0xf]
    %v4995 = vld [vmem:[#allocation9 + $0xd8] sm:$0xf]
    %v4996 = vld [vmem:[#allocation9 + $0xdc] sm:$0xf]
    %v4997 = vld [vmem:[#allocation9 + $0xe0] sm:$0xf]
    %v4998 = vld [vmem:[#allocation9 + $0xe4] sm:$0xf]
    %v4999 = vld [vmem:[#allocation9 + $0xe8] sm:$0xf]
    %v5000 = vld [vmem:[#allocation9 + $0xec] sm:$0xf]
    %v5001 = vld [vmem:[#allocation9 + $0xf0] sm:$0xf]
    %v5002 = vld [vmem:[#allocation9 + $0xf4] sm:$0xf]
    %v5003 = vld [vmem:[#allocation9 + $0xf8] sm:$0xf]
    %v5004 = vld [vmem:[#allocation9 + $0xfc] sm:$0xf]
    %v5005 = vld [vmem:[#allocation9 + $0x100] sm:$0xf]
    %v5006 = vld [vmem:[#allocation9 + $0x104] sm:$0xf]
    %v5007 = vld [vmem:[#allocation9 + $0x108] sm:$0xf]
    %v5008 = vld [vmem:[#allocation9 + $0x10c] sm:$0xf]
    %v5009 = vld [vmem:[#allocation9 + $0x110] sm:$0xf]
    %v5010 = vld [vmem:[#allocation9 + $0x114] sm:$0xf]
    %v5011 = vld [vmem:[#allocation9 + $0x118] sm:$0xf]
    %v5012 = vld [vmem:[#allocation9 + $0x11c] sm:$0xf]
    %v5013 = vld [vmem:[#allocation9 + $0x120] sm:$0xf]
    %v5014 = vld [vmem:[#allocation9 + $0x124] sm:$0xf]
    %v5015 = vld [vmem:[#allocation9 + $0x128] sm:$0xf]
    %v5016 = vld [vmem:[#allocation9 + $0x12c] sm:$0xf]
    %v5017 = vld [vmem:[#allocation9 + $0x130] sm:$0xf]
    %v5018 = vld [vmem:[#allocation9 + $0x134] sm:$0xf]
    %v5019 = vld [vmem:[#allocation9 + $0x138] sm:$0xf]
    %v5020 = vld [vmem:[#allocation9 + $0x13c] sm:$0xf]
    %v5021 = vld [vmem:[#allocation9 + $0x140] sm:$0xf]
    %v5022 = vld [vmem:[#allocation9 + $0x144] sm:$0xf]
    %v5023 = vld [vmem:[#allocation9 + $0x148] sm:$0xf]
    %v5024 = vld [vmem:[#allocation9 + $0x14c] sm:$0xf]
    %v5025 = vld [vmem:[#allocation9 + $0x150] sm:$0xf]
    %v5026 = vld [vmem:[#allocation9 + $0x154] sm:$0xf]
    %v5027 = vld [vmem:[#allocation9 + $0x158] sm:$0xf]
    %v5028 = vld [vmem:[#allocation9 + $0x15c] sm:$0xf]
    %v5029 = vld [vmem:[#allocation9 + $0x160] sm:$0xf]
    %v5030 = vld [vmem:[#allocation9 + $0x164] sm:$0xf]
    %v5031 = vld [vmem:[#allocation9 + $0x168] sm:$0xf]
    %v5032 = vld [vmem:[#allocation9 + $0x16c] sm:$0xf]
    %v5033 = vld [vmem:[#allocation9 + $0x170] sm:$0xf]
    %v5034 = vld [vmem:[#allocation9 + $0x174] sm:$0xf]
    %v5035 = vld [vmem:[#allocation9 + $0x178] sm:$0xf]
    %v5036 = vld [vmem:[#allocation9 + $0x17c] sm:$0xf]
    %v5037 = vld [vmem:[#allocation9 + $0x180] sm:$0xf]
    %v5038 = vld [vmem:[#allocation9 + $0x184] sm:$0xf]
    %v5039 = vld [vmem:[#allocation9 + $0x188] sm:$0xf]
    %v5040 = vld [vmem:[#allocation9 + $0x18c] sm:$0xf]
    %v5041 = vld [vmem:[#allocation9 + $0x190] sm:$0xf]
    %v5042 = vld [vmem:[#allocation9 + $0x194] sm:$0xf]
    %v5043 = vld [vmem:[#allocation9 + $0x198] sm:$0xf]
    %v5044 = vld [vmem:[#allocation9 + $0x19c] sm:$0xf]
    %v5045 = vld [vmem:[#allocation9 + $0x1a0] sm:$0xf]
    %v5046 = vld [vmem:[#allocation9 + $0x1a4] sm:$0xf]
    %v5047 = vld [vmem:[#allocation9 + $0x1a8] sm:$0xf]
    %v5048 = vld [vmem:[#allocation9 + $0x1ac] sm:$0xf]
    %v5049 = vld [vmem:[#allocation9 + $0x1b0] sm:$0xf]
    %v5050 = vld [vmem:[#allocation9 + $0x1b4] sm:$0xf]
    %v5051 = vld [vmem:[#allocation9 + $0x1b8] sm:$0xf]
    %v5052 = vld [vmem:[#allocation9 + $0x1bc] sm:$0xf]
    %v5053 = vld [vmem:[#allocation9 + $0x1c0] sm:$0xf]
    %v5054 = vld [vmem:[#allocation9 + $0x1c4] sm:$0xf]
    %v5055 = vld [vmem:[#allocation9 + $0x1c8] sm:$0xf]
    %v5056 = vld [vmem:[#allocation9 + $0x1cc] sm:$0xf]
    %v5057 = vld [vmem:[#allocation9 + $0x1d0] sm:$0xf]
    %v5058 = vld [vmem:[#allocation9 + $0x1d4] sm:$0xf]
    %v5059 = vld [vmem:[#allocation9 + $0x1d8] sm:$0xf]
    %v5060 = vld [vmem:[#allocation9 + $0x1dc] sm:$0xf]
    %v5061 = vld [vmem:[#allocation9 + $0x1e0] sm:$0xf]
    %v5062 = vld [vmem:[#allocation9 + $0x1e4] sm:$0xf]
    %v5063 = vld [vmem:[#allocation9 + $0x1e8] sm:$0xf]
    %v5064 = vld [vmem:[#allocation9 + $0x1ec] sm:$0xf]
    %v5065 = vld [vmem:[#allocation9 + $0x1f0] sm:$0xf]
    %v5066 = vld [vmem:[#allocation9 + $0x1f4] sm:$0xf]
    %v5067 = vld [vmem:[#allocation9 + $0x1f8] sm:$0xf]
    %v5068 = vld [vmem:[#allocation9 + $0x1fc] sm:$0xf]
    %v5069 = vld [vmem:[#allocation9 + $0x200] sm:$0xf]
    %v5070 = vld [vmem:[#allocation9 + $0x204] sm:$0xf]
    %v5071 = vld [vmem:[#allocation9 + $0x208] sm:$0xf]
    %v5072 = vld [vmem:[#allocation9 + $0x20c] sm:$0xf]
    %v5073 = vld [vmem:[#allocation9 + $0x210] sm:$0xf]
    %v5074 = vld [vmem:[#allocation9 + $0x214] sm:$0xf]
    %v5075 = vld [vmem:[#allocation9 + $0x218] sm:$0xf]
    %v5076 = vld [vmem:[#allocation9 + $0x21c] sm:$0xf]
    %v5077 = vld [vmem:[#allocation9 + $0x220] sm:$0xf]
    %v5078 = vld [vmem:[#allocation9 + $0x224] sm:$0xf]
    %v5079 = vld [vmem:[#allocation9 + $0x228] sm:$0xf]
    %v5080 = vld [vmem:[#allocation9 + $0x22c] sm:$0xf]
    %v5081 = vld [vmem:[#allocation9 + $0x230] sm:$0xf]
    %v5082 = vld [vmem:[#allocation9 + $0x234] sm:$0xf]
    %v5083 = vld [vmem:[#allocation9 + $0x238] sm:$0xf]
    %v5084 = vld [vmem:[#allocation9 + $0x23c] sm:$0xf]
    %v5085 = vld [vmem:[%s8] sm:$0x1]
    %v5087 = vlaneseq
    %v5088 = vshrl.u32 %v5087, 7
    %v5089 = vsub.s32 0, %v5088
    %v5090 = vrot.slane %v5085, %v5089
    %v5236 = vunpack.c.l.b16 %v4941
    %v5237 = vunpack.c.l.b16 %v4942
    %v5238 = vunpack.c.l.b16 %v4943
    %v5239 = vunpack.c.l.b16 %v4944
    %v5240 = vunpack.c.l.b16 %v4945
    %v5241 = vunpack.c.l.b16 %v4946
    %v5242 = vunpack.c.l.b16 %v4947
    %v5243 = vunpack.c.l.b16 %v4948
    %v5244 = vunpack.c.l.b16 %v4949
    %v5245 = vunpack.c.l.b16 %v4950
    %v5246 = vunpack.c.l.b16 %v4951
    %v5247 = vunpack.c.l.b16 %v4952
    %v5248 = vunpack.c.l.b16 %v4953
    %v5249 = vunpack.c.l.b16 %v4954
    %v5250 = vunpack.c.l.b16 %v4955
    %v5251 = vunpack.c.l.b16 %v4956
    %v5252 = vunpack.c.l.b16 %v4957
    %v5253 = vunpack.c.l.b16 %v4958
    %v5254 = vunpack.c.l.b16 %v4959
    %v5255 = vunpack.c.l.b16 %v4960
    %v5256 = vunpack.c.l.b16 %v4961
    %v5257 = vunpack.c.l.b16 %v4962
    %v5258 = vunpack.c.l.b16 %v4963
    %v5259 = vunpack.c.l.b16 %v4964
    %v5260 = vunpack.c.l.b16 %v4965
    %v5261 = vunpack.c.l.b16 %v4966
    %v5262 = vunpack.c.l.b16 %v4967
    %v5263 = vunpack.c.l.b16 %v4968
    %v5264 = vunpack.c.l.b16 %v4969
    %v5265 = vunpack.c.l.b16 %v4970
    %v5266 = vunpack.c.l.b16 %v4971
    %v5267 = vunpack.c.l.b16 %v4972
    %v5268 = vunpack.c.l.b16 %v4973
    %v5269 = vunpack.c.l.b16 %v4974
    %v5270 = vunpack.c.l.b16 %v4975
    %v5271 = vunpack.c.l.b16 %v4976
    %v5272 = vunpack.c.l.b16 %v4977
    %v5273 = vunpack.c.l.b16 %v4978
    %v5274 = vunpack.c.l.b16 %v4979
    %v5275 = vunpack.c.l.b16 %v4980
    %v5276 = vunpack.c.l.b16 %v4981
    %v5277 = vunpack.c.l.b16 %v4982
    %v5278 = vunpack.c.l.b16 %v4983
    %v5279 = vunpack.c.l.b16 %v4984
    %v5280 = vunpack.c.l.b16 %v4985
    %v5281 = vunpack.c.l.b16 %v4986
    %v5282 = vunpack.c.l.b16 %v4987
    %v5283 = vunpack.c.l.b16 %v4988
    %v5284 = vunpack.c.l.b16 %v4989
    %v5285 = vunpack.c.l.b16 %v4990
    %v5286 = vunpack.c.l.b16 %v4991
    %v5287 = vunpack.c.l.b16 %v4992
    %v5288 = vunpack.c.l.b16 %v4993
    %v5289 = vunpack.c.l.b16 %v4994
    %v5290 = vunpack.c.l.b16 %v4995
    %v5291 = vunpack.c.l.b16 %v4996
    %v5292 = vunpack.c.l.b16 %v4997
    %v5293 = vunpack.c.l.b16 %v4998
    %v5294 = vunpack.c.l.b16 %v4999
    %v5295 = vunpack.c.l.b16 %v5000
    %v5296 = vunpack.c.l.b16 %v5001
    %v5297 = vunpack.c.l.b16 %v5002
    %v5298 = vunpack.c.l.b16 %v5003
    %v5299 = vunpack.c.l.b16 %v5004
    %v5300 = vunpack.c.l.b16 %v5005
    %v5301 = vunpack.c.l.b16 %v5006
    %v5302 = vunpack.c.l.b16 %v5007
    %v5303 = vunpack.c.l.b16 %v5008
    %v5304 = vunpack.c.l.b16 %v5009
    %v5305 = vunpack.c.l.b16 %v5010
    %v5306 = vunpack.c.l.b16 %v5011
    %v5307 = vunpack.c.l.b16 %v5012
    %v5308 = vunpack.c.l.b16 %v5013
    %v5309 = vunpack.c.l.b16 %v5014
    %v5310 = vunpack.c.l.b16 %v5015
    %v5311 = vunpack.c.l.b16 %v5016
    %v5312 = vunpack.c.l.b16 %v5017
    %v5313 = vunpack.c.l.b16 %v5018
    %v5314 = vunpack.c.l.b16 %v5019
    %v5315 = vunpack.c.l.b16 %v5020
    %v5316 = vunpack.c.l.b16 %v5021
    %v5317 = vunpack.c.l.b16 %v5022
    %v5318 = vunpack.c.l.b16 %v5023
    %v5319 = vunpack.c.l.b16 %v5024
    %v5320 = vunpack.c.l.b16 %v5025
    %v5321 = vunpack.c.l.b16 %v5026
    %v5322 = vunpack.c.l.b16 %v5027
    %v5323 = vunpack.c.l.b16 %v5028
    %v5324 = vunpack.c.l.b16 %v5029
    %v5325 = vunpack.c.l.b16 %v5030
    %v5326 = vunpack.c.l.b16 %v5031
    %v5327 = vunpack.c.l.b16 %v5032
    %v5328 = vunpack.c.l.b16 %v5033
    %v5329 = vunpack.c.l.b16 %v5034
    %v5330 = vunpack.c.l.b16 %v5035
    %v5331 = vunpack.c.l.b16 %v5036
    %v5332 = vunpack.c.l.b16 %v5037
    %v5333 = vunpack.c.l.b16 %v5038
    %v5334 = vunpack.c.l.b16 %v5039
    %v5335 = vunpack.c.l.b16 %v5040
    %v5336 = vunpack.c.l.b16 %v5041
    %v5337 = vunpack.c.l.b16 %v5042
    %v5338 = vunpack.c.l.b16 %v5043
    %v5339 = vunpack.c.l.b16 %v5044
    %v5340 = vunpack.c.l.b16 %v5045
    %v5341 = vunpack.c.l.b16 %v5046
    %v5342 = vunpack.c.l.b16 %v5047
    %v5343 = vunpack.c.l.b16 %v5048
    %v5344 = vunpack.c.l.b16 %v5049
    %v5345 = vunpack.c.l.b16 %v5050
    %v5346 = vunpack.c.l.b16 %v5051
    %v5347 = vunpack.c.l.b16 %v5052
    %v5348 = vunpack.c.l.b16 %v5053
    %v5349 = vunpack.c.l.b16 %v5054
    %v5350 = vunpack.c.l.b16 %v5055
    %v5351 = vunpack.c.l.b16 %v5056
    %v5352 = vunpack.c.l.b16 %v5057
    %v5353 = vunpack.c.l.b16 %v5058
    %v5354 = vunpack.c.l.b16 %v5059
    %v5355 = vunpack.c.l.b16 %v5060
    %v5356 = vunpack.c.l.b16 %v5061
    %v5357 = vunpack.c.l.b16 %v5062
    %v5358 = vunpack.c.l.b16 %v5063
    %v5359 = vunpack.c.l.b16 %v5064
    %v5360 = vunpack.c.l.b16 %v5065
    %v5361 = vunpack.c.l.b16 %v5066
    %v5362 = vunpack.c.l.b16 %v5067
    %v5363 = vunpack.c.l.b16 %v5068
    %v5364 = vunpack.c.l.b16 %v5069
    %v5365 = vunpack.c.l.b16 %v5070
    %v5366 = vunpack.c.l.b16 %v5071
    %v5367 = vunpack.c.l.b16 %v5072
    %v5368 = vunpack.c.l.b16 %v5073
    %v5369 = vunpack.c.l.b16 %v5074
    %v5370 = vunpack.c.l.b16 %v5075
    %v5371 = vunpack.c.l.b16 %v5076
    %v5372 = vunpack.c.l.b16 %v5077
    %v5373 = vunpack.c.l.b16 %v5078
    %v5374 = vunpack.c.l.b16 %v5079
    %v5375 = vunpack.c.l.b16 %v5080
    %v5376 = vunpack.c.l.b16 %v5081
    %v5377 = vunpack.c.l.b16 %v5082
    %v5378 = vunpack.c.l.b16 %v5083
    %v5379 = vunpack.c.l.b16 %v5084
    %v5380 = vpack.c.b16 %v5237, %v5236
    %v5381 = vpack.c.b16 %v5239, %v5238
    %v5382 = vpack.c.b16 %v5241, %v5240
    %v5383 = vpack.c.b16 %v5243, %v5242
    %v5384 = vpack.c.b16 %v5245, %v5244
    %v5385 = vpack.c.b16 %v5247, %v5246
    %v5386 = vpack.c.b16 %v5249, %v5248
    %v5387 = vpack.c.b16 %v5251, %v5250
    %v5388 = vpack.c.b16 %v5253, %v5252
    %v5389 = vpack.c.b16 %v5255, %v5254
    %v5390 = vpack.c.b16 %v5257, %v5256
    %v5391 = vpack.c.b16 %v5259, %v5258
    %v5392 = vpack.c.b16 %v5261, %v5260
    %v5393 = vpack.c.b16 %v5263, %v5262
    %v5394 = vpack.c.b16 %v5265, %v5264
    %v5395 = vpack.c.b16 %v5267, %v5266
    %v5396 = vpack.c.b16 %v5269, %v5268
    %v5397 = vpack.c.b16 %v5271, %v5270
    %v5398 = vpack.c.b16 %v5273, %v5272
    %v5399 = vpack.c.b16 %v5275, %v5274
    %v5400 = vpack.c.b16 %v5277, %v5276
    %v5401 = vpack.c.b16 %v5279, %v5278
    %v5402 = vpack.c.b16 %v5281, %v5280
    %v5403 = vpack.c.b16 %v5283, %v5282
    %v5404 = vpack.c.b16 %v5285, %v5284
    %v5405 = vpack.c.b16 %v5287, %v5286
    %v5406 = vpack.c.b16 %v5289, %v5288
    %v5407 = vpack.c.b16 %v5291, %v5290
    %v5408 = vpack.c.b16 %v5293, %v5292
    %v5409 = vpack.c.b16 %v5295, %v5294
    %v5410 = vpack.c.b16 %v5297, %v5296
    %v5411 = vpack.c.b16 %v5299, %v5298
    %v5412 = vpack.c.b16 %v5301, %v5300
    %v5413 = vpack.c.b16 %v5303, %v5302
    %v5414 = vpack.c.b16 %v5305, %v5304
    %v5415 = vpack.c.b16 %v5307, %v5306
    %v5416 = vpack.c.b16 %v5309, %v5308
    %v5417 = vpack.c.b16 %v5311, %v5310
    %v5418 = vpack.c.b16 %v5313, %v5312
    %v5419 = vpack.c.b16 %v5315, %v5314
    %v5420 = vpack.c.b16 %v5317, %v5316
    %v5421 = vpack.c.b16 %v5319, %v5318
    %v5422 = vpack.c.b16 %v5321, %v5320
    %v5423 = vpack.c.b16 %v5323, %v5322
    %v5424 = vpack.c.b16 %v5325, %v5324
    %v5425 = vpack.c.b16 %v5327, %v5326
    %v5426 = vpack.c.b16 %v5329, %v5328
    %v5427 = vpack.c.b16 %v5331, %v5330
    %v5428 = vpack.c.b16 %v5333, %v5332
    %v5429 = vpack.c.b16 %v5335, %v5334
    %v5430 = vpack.c.b16 %v5337, %v5336
    %v5431 = vpack.c.b16 %v5339, %v5338
    %v5432 = vpack.c.b16 %v5341, %v5340
    %v5433 = vpack.c.b16 %v5343, %v5342
    %v5434 = vpack.c.b16 %v5345, %v5344
    %v5435 = vpack.c.b16 %v5347, %v5346
    %v5436 = vpack.c.b16 %v5349, %v5348
    %v5437 = vpack.c.b16 %v5351, %v5350
    %v5438 = vpack.c.b16 %v5353, %v5352
    %v5439 = vpack.c.b16 %v5355, %v5354
    %v5440 = vpack.c.b16 %v5357, %v5356
    %v5441 = vpack.c.b16 %v5359, %v5358
    %v5442 = vpack.c.b16 %v5361, %v5360
    %v5443 = vpack.c.b16 %v5363, %v5362
    %v5444 = vpack.c.b16 %v5365, %v5364
    %v5445 = vpack.c.b16 %v5367, %v5366
    %v5446 = vpack.c.b16 %v5369, %v5368
    %v5447 = vpack.c.b16 %v5371, %v5370
    %v5448 = vpack.c.b16 %v5373, %v5372
    %v5449 = vpack.c.b16 %v5375, %v5374
    %v5450 = vpack.c.b16 %v5377, %v5376
    %v5451 = vpack.c.b16 %v5379, %v5378
    %5524 = vmatprep.subr.bf16.mxu0 0
    %5525 = vmatpush1.bf16.msra.mxu0 %v5380
    %5526 = vmatprep.subr.bf16.mxu0 0
    %5527 = vmatpush1.bf16.msra.mxu0 %v5381
    %5528 = vmatprep.subr.bf16.mxu0 0
    %5529 = vmatpush1.bf16.msra.mxu0 %v5382
    %5530 = vmatprep.subr.bf16.mxu0 0
    %5531 = vmatpush1.bf16.msra.mxu0 %v5383
    %5532 = vmatprep.subr.bf16.mxu0 0
    %5533 = vmatpush1.bf16.msra.mxu0 %v5384
    %5534 = vmatprep.subr.bf16.mxu0 0
    %5535 = vmatpush1.bf16.msra.mxu0 %v5385
    %5536 = vmatprep.subr.bf16.mxu0 0
    %5537 = vmatpush1.bf16.msra.mxu0 %v5386
    %5538 = vmatprep.subr.bf16.mxu0 0
    %5539 = vmatpush1.bf16.msra.mxu0 %v5387
    %5540 = vmatprep.subr.bf16.mxu0 0
    %5541 = vmatpush1.bf16.msra.mxu0 %v5388
    %5542 = vmatprep.subr.bf16.mxu0 0
    %5543 = vmatpush1.bf16.msra.mxu0 %v5389
    %5544 = vmatprep.subr.bf16.mxu0 0
    %5545 = vmatpush1.bf16.msra.mxu0 %v5390
    %5546 = vmatprep.subr.bf16.mxu0 0
    %5547 = vmatpush1.bf16.msra.mxu0 %v5391
    %5548 = vmatprep.subr.bf16.mxu0 0
    %5549 = vmatpush1.bf16.msra.mxu0 %v5392
    %5550 = vmatprep.subr.bf16.mxu0 0
    %5551 = vmatpush1.bf16.msra.mxu0 %v5393
    %5552 = vmatprep.subr.bf16.mxu0 0
    %5553 = vmatpush1.bf16.msra.mxu0 %v5394
    %5554 = vmatprep.subr.bf16.mxu0 0
    %5555 = vmatpush1.bf16.msra.mxu0 %v5395
    %5556 = vmatprep.mubr.bf16.mxu0 %v4870
    %5557 = vmatmul.mubr.bf16.gmra.mrb[0].mxu0 %v4869
    %v5558 = vpop.f32.mrb[0].mxu0
    %v5559 = vadd.f32 %v5090, %v5558
    %v5560 = vpop.f32.mrb[0].mxu0
    %v5561 = vpop.f32.mrb[0].mxu0
    %v5562 = vadd.f32 %v5090, %v5561
    %v5563 = vpop.f32.mrb[0].mxu0
    %5564 = vmatprep.mubr.bf16.mxu0 %v4879
    %5565 = vmatmul.mubr.bf16.gmra.mrb[0].mxu0 %v4878
    %v5566 = vpop.f32.mrb[0].mxu0
    %v5567 = vadd.f32 %v5090, %v5566
    %v5568 = vpop.f32.mrb[0].mxu0
    %v5569 = vpop.f32.mrb[0].mxu0
    %v5570 = vadd.f32 %v5090, %v5569
    %v5571 = vpop.f32.mrb[0].mxu0
    %5572 = vmatprep.mubr.bf16.mxu0 %v4888
    %5573 = vmatmul.mubr.bf16.gmra.mrb[0].mxu0 %v4887
    %v5574 = vpop.f32.mrb[0].mxu0
    %v5575 = vadd.f32 %v5090, %v5574
    %v5576 = vpop.f32.mrb[0].mxu0
    %v5577 = vpop.f32.mrb[0].mxu0
    %v5578 = vadd.f32 %v5090, %v5577
    %v5579 = vpop.f32.mrb[0].mxu0
    %5580 = vmatprep.mubr.bf16.mxu0 %v4897
    %5581 = vmatmul.mubr.bf16.gmra.mrb[0].mxu0 %v4896
    %v5582 = vpop.f32.mrb[0].mxu0
    %v5583 = vadd.f32 %v5090, %v5582
    %v5584 = vpop.f32.mrb[0].mxu0
    %v5585 = vpop.f32.mrb[0].mxu0
    %v5586 = vadd.f32 %v5090, %v5585
    %v5587 = vpop.f32.mrb[0].mxu0
    %5588 = vmatprep.mubr.bf16.mxu0 %v4906
    %5589 = vmatmul.mubr.bf16.gmra.mrb[0].mxu0 %v4905
    %v5590 = vpop.f32.mrb[0].mxu0
    %v5591 = vadd.f32 %v5090, %v5590
    %v5592 = vpop.f32.mrb[0].mxu0
    %v5593 = vpop.f32.mrb[0].mxu0
    %v5594 = vadd.f32 %v5090, %v5593
    %v5595 = vpop.f32.mrb[0].mxu0
    %5596 = vmatprep.mubr.bf16.mxu0 %v4915
    %5597 = vmatmul.mubr.bf16.gmra.mrb[0].mxu0 %v4914
    %v5598 = vpop.f32.mrb[0].mxu0
    %v5599 = vadd.f32 %v5090, %v5598
    %v5600 = vpop.f32.mrb[0].mxu0
    %v5601 = vpop.f32.mrb[0].mxu0
    %v5602 = vadd.f32 %v5090, %v5601
    %v5603 = vpop.f32.mrb[0].mxu0
    %5604 = vmatprep.mubr.bf16.mxu0 %v4924
    %5605 = vmatmul.mubr.bf16.gmra.mrb[0].mxu0 %v4923
    %v5606 = vpop.f32.mrb[0].mxu0
    %v5607 = vadd.f32 %v5090, %v5606
    %v5608 = vpop.f32.mrb[0].mxu0
    %v5609 = vpop.f32.mrb[0].mxu0
    %v5610 = vadd.f32 %v5090, %v5609
    %v5611 = vpop.f32.mrb[0].mxu0
    %5612 = vmatprep.mubr.bf16.mxu0 %v4933
    %5613 = vmatmul.mubr.bf16.gmra.mrb[0].mxu0 %v4932
    %v5614 = vpop.f32.mrb[0].mxu0
    %v5615 = vadd.f32 %v5090, %v5614
    %v5616 = vpop.f32.mrb[0].mxu0
    %v5617 = vpop.f32.mrb[0].mxu0
    %v5618 = vadd.f32 %v5090, %v5617
    %v5619 = vpop.f32.mrb[0].mxu0
    %5620 = vdwg.mxu0
    %5621 = vmatprep.subr.bf16.mxu0 0
    %5622 = vmatpush1.bf16.msra.mxu0 %v5396
    %5623 = vmatprep.subr.bf16.mxu0 0
    %5624 = vmatpush1.bf16.msra.mxu0 %v5397
    %5625 = vmatprep.subr.bf16.mxu0 0
    %5626 = vmatpush1.bf16.msra.mxu0 %v5398
    %5627 = vmatprep.subr.bf16.mxu0 0
    %5628 = vmatpush1.bf16.msra.mxu0 %v5399
    %5629 = vmatprep.subr.bf16.mxu0 0
    %5630 = vmatpush1.bf16.msra.mxu0 %v5400
    %5631 = vmatprep.subr.bf16.mxu0 0
    %5632 = vmatpush1.bf16.msra.mxu0 %v5401
    %5633 = vmatprep.subr.bf16.mxu0 0
    %5634 = vmatpush1.bf16.msra.mxu0 %v5402
    %5635 = vmatprep.subr.bf16.mxu0 0
    %5636 = vmatpush1.bf16.msra.mxu0 %v5403
    %5637 = vmatprep.subr.bf16.mxu0 0
    %5638 = vmatpush1.bf16.msra.mxu0 %v5404
    %5639 = vmatprep.subr.bf16.mxu0 0
    %5640 = vmatpush1.bf16.msra.mxu0 %v5405
    %5641 = vmatprep.subr.bf16.mxu0 0
    %5642 = vmatpush1.bf16.msra.mxu0 %v5406
    %5643 = vmatprep.subr.bf16.mxu0 0
    %5644 = vmatpush1.bf16.msra.mxu0 %v5407
    %5645 = vmatprep.subr.bf16.mxu0 0
    %5646 = vmatpush1.bf16.msra.mxu0 %v5408
    %5647 = vmatprep.subr.bf16.mxu0 0
    %5648 = vmatpush1.bf16.msra.mxu0 %v5409
    %5649 = vmatprep.subr.bf16.mxu0 0
    %5650 = vmatpush1.bf16.msra.mxu0 %v5410
    %5651 = vmatprep.subr.bf16.mxu0 0
    %5652 = vmatpush1.bf16.msra.mxu0 %v5411
    %5653 = vmatprep.mubr.bf16.mxu0 %v4872
    %5654 = vmatmul.mubr.bf16.gmra.mrb[0].mxu0 %v4871
    %v5655 = vpop.f32.mrb[0].mxu0
    %v5656 = vadd.f32 %v5559, %v5655
    %v5657 = vpop.f32.mrb[0].mxu0
    %v5658 = vpop.f32.mrb[0].mxu0
    %v5659 = vadd.f32 %v5562, %v5658
    %v5660 = vpop.f32.mrb[0].mxu0
    %5661 = vmatprep.mubr.bf16.mxu0 %v4881
    %5662 = vmatmul.mubr.bf16.gmra.mrb[0].mxu0 %v4880
    %v5663 = vpop.f32.mrb[0].mxu0
    %v5664 = vadd.f32 %v5567, %v5663
    %v5665 = vpop.f32.mrb[0].mxu0
    %v5666 = vpop.f32.mrb[0].mxu0
    %v5667 = vadd.f32 %v5570, %v5666
    %v5668 = vpop.f32.mrb[0].mxu0
    %5669 = vmatprep.mubr.bf16.mxu0 %v4890
    %5670 = vmatmul.mubr.bf16.gmra.mrb[0].mxu0 %v4889
    %v5671 = vpop.f32.mrb[0].mxu0
    %v5672 = vadd.f32 %v5575, %v5671
    %v5673 = vpop.f32.mrb[0].mxu0
    %v5674 = vpop.f32.mrb[0].mxu0
    %v5675 = vadd.f32 %v5578, %v5674
    %v5676 = vpop.f32.mrb[0].mxu0
    %5677 = vmatprep.mubr.bf16.mxu0 %v4899
    %5678 = vmatmul.mubr.bf16.gmra.mrb[0].mxu0 %v4898
    %v5679 = vpop.f32.mrb[0].mxu0
    %v5680 = vadd.f32 %v5583, %v5679
    %v5681 = vpop.f32.mrb[0].mxu0
    %v5682 = vpop.f32.mrb[0].mxu0
    %v5683 = vadd.f32 %v5586, %v5682
    %v5684 = vpop.f32.mrb[0].mxu0
    %5685 = vmatprep.mubr.bf16.mxu0 %v4908
    %5686 = vmatmul.mubr.bf16.gmra.mrb[0].mxu0 %v4907
    %v5687 = vpop.f32.mrb[0].mxu0
    %v5688 = vadd.f32 %v5591, %v5687
    %v5689 = vpop.f32.mrb[0].mxu0
    %v5690 = vpop.f32.mrb[0].mxu0
    %v5691 = vadd.f32 %v5594, %v5690
    %v5692 = vpop.f32.mrb[0].mxu0
    %5693 = vmatprep.mubr.bf16.mxu0 %v4917
    %5694 = vmatmul.mubr.bf16.gmra.mrb[0].mxu0 %v4916
    %v5695 = vpop.f32.mrb[0].mxu0
    %v5696 = vadd.f32 %v5599, %v5695
    %v5697 = vpop.f32.mrb[0].mxu0
    %v5698 = vpop.f32.mrb[0].mxu0
    %v5699 = vadd.f32 %v5602, %v5698
    %v5700 = vpop.f32.mrb[0].mxu0
    %5701 = vmatprep.mubr.bf16.mxu0 %v4926
    %5702 = vmatmul.mubr.bf16.gmra.mrb[0].mxu0 %v4925
    %v5703 = vpop.f32.mrb[0].mxu0
    %v5704 = vadd.f32 %v5607, %v5703
    %v5705 = vpop.f32.mrb[0].mxu0
    %v5706 = vpop.f32.mrb[0].mxu0
    %v5707 = vadd.f32 %v5610, %v5706
    %v5708 = vpop.f32.mrb[0].mxu0
    %5709 = vmatprep.mubr.bf16.mxu0 %v4935
    %5710 = vmatmul.mubr.bf16.gmra.mrb[0].mxu0 %v4934
    %v5711 = vpop.f32.mrb[0].mxu0
    %v5712 = vadd.f32 %v5615, %v5711
    %v5713 = vpop.f32.mrb[0].mxu0
    %v5714 = vpop.f32.mrb[0].mxu0
    %v5715 = vadd.f32 %v5618, %v5714
    %v5716 = vpop.f32.mrb[0].mxu0
    %5717 = vdwg.mxu0
    %5718 = vmatprep.subr.bf16.mxu0 0
    %5719 = vmatpush1.bf16.msra.mxu0 %v5412
    %5720 = vmatprep.subr.bf16.mxu0 0
    %5721 = vmatpush1.bf16.msra.mxu0 %v5413
    %5722 = vmatprep.subr.bf16.mxu0 0
    %5723 = vmatpush1.bf16.msra.mxu0 %v5414
    %5724 = vmatprep.subr.bf16.mxu0 0
    %5725 = vmatpush1.bf16.msra.mxu0 %v5415
    %5726 = vmatprep.subr.bf16.mxu0 0
    %5727 = vmatpush1.bf16.msra.mxu0 %v5416
    %5728 = vmatprep.subr.bf16.mxu0 0
    %5729 = vmatpush1.bf16.msra.mxu0 %v5417
    %5730 = vmatprep.subr.bf16.mxu0 0
    %5731 = vmatpush1.bf16.msra.mxu0 %v5418
    %5732 = vmatprep.subr.bf16.mxu0 0
    %5733 = vmatpush1.bf16.msra.mxu0 %v5419
    %5734 = vmatprep.subr.bf16.mxu0 0
    %5735 = vmatpush1.bf16.msra.mxu0 %v5420
    %5736 = vmatprep.subr.bf16.mxu0 0
    %5737 = vmatpush1.bf16.msra.mxu0 %v5421
    %5738 = vmatprep.subr.bf16.mxu0 0
    %5739 = vmatpush1.bf16.msra.mxu0 %v5422
    %5740 = vmatprep.subr.bf16.mxu0 0
    %5741 = vmatpush1.bf16.msra.mxu0 %v5423
    %5742 = vmatprep.subr.bf16.mxu0 0
    %5743 = vmatpush1.bf16.msra.mxu0 %v5424
    %5744 = vmatprep.subr.bf16.mxu0 0
    %5745 = vmatpush1.bf16.msra.mxu0 %v5425
    %5746 = vmatprep.subr.bf16.mxu0 0
    %5747 = vmatpush1.bf16.msra.mxu0 %v5426
    %5748 = vmatprep.subr.bf16.mxu0 0
    %5749 = vmatpush1.bf16.msra.mxu0 %v5427
    %5750 = vmatprep.mubr.bf16.mxu0 %v4874
    %5751 = vmatmul.mubr.bf16.gmra.mrb[0].mxu0 %v4873
    %v5752 = vpop.f32.mrb[0].mxu0
    %v5753 = vadd.f32 %v5656, %v5752
    %v5754 = vpop.f32.mrb[0].mxu0
    %v5755 = vpop.f32.mrb[0].mxu0
    %v5756 = vadd.f32 %v5659, %v5755
    %v5757 = vpop.f32.mrb[0].mxu0
    %5758 = vmatprep.mubr.bf16.mxu0 %v4883
    %5759 = vmatmul.mubr.bf16.gmra.mrb[0].mxu0 %v4882
    %v5760 = vpop.f32.mrb[0].mxu0
    %v5761 = vadd.f32 %v5664, %v5760
    %v5762 = vpop.f32.mrb[0].mxu0
    %v5763 = vpop.f32.mrb[0].mxu0
    %v5764 = vadd.f32 %v5667, %v5763
    %v5765 = vpop.f32.mrb[0].mxu0
    %5766 = vmatprep.mubr.bf16.mxu0 %v4892
    %5767 = vmatmul.mubr.bf16.gmra.mrb[0].mxu0 %v4891
    %v5768 = vpop.f32.mrb[0].mxu0
    %v5769 = vadd.f32 %v5672, %v5768
    %v5770 = vpop.f32.mrb[0].mxu0
    %v5771 = vpop.f32.mrb[0].mxu0
    %v5772 = vadd.f32 %v5675, %v5771
    %v5773 = vpop.f32.mrb[0].mxu0
    %5774 = vmatprep.mubr.bf16.mxu0 %v4901
    %5775 = vmatmul.mubr.bf16.gmra.mrb[0].mxu0 %v4900
    %v5776 = vpop.f32.mrb[0].mxu0
    %v5777 = vadd.f32 %v5680, %v5776
    %v5778 = vpop.f32.mrb[0].mxu0
    %v5779 = vpop.f32.mrb[0].mxu0
    %v5780 = vadd.f32 %v5683, %v5779
    %v5781 = vpop.f32.mrb[0].mxu0
    %5782 = vmatprep.mubr.bf16.mxu0 %v4910
    %5783 = vmatmul.mubr.bf16.gmra.mrb[0].mxu0 %v4909
    %v5784 = vpop.f32.mrb[0].mxu0
    %v5785 = vadd.f32 %v5688, %v5784
    %v5786 = vpop.f32.mrb[0].mxu0
    %v5787 = vpop.f32.mrb[0].mxu0
    %v5788 = vadd.f32 %v5691, %v5787
    %v5789 = vpop.f32.mrb[0].mxu0
    %5790 = vmatprep.mubr.bf16.mxu0 %v4919
    %5791 = vmatmul.mubr.bf16.gmra.mrb[0].mxu0 %v4918
    %v5792 = vpop.f32.mrb[0].mxu0
    %v5793 = vadd.f32 %v5696, %v5792
    %v5794 = vpop.f32.mrb[0].mxu0
    %v5795 = vpop.f32.mrb[0].mxu0
    %v5796 = vadd.f32 %v5699, %v5795
    %v5797 = vpop.f32.mrb[0].mxu0
    %5798 = vmatprep.mubr.bf16.mxu0 %v4928
    %5799 = vmatmul.mubr.bf16.gmra.mrb[0].mxu0 %v4927
    %v5800 = vpop.f32.mrb[0].mxu0
    %v5801 = vadd.f32 %v5704, %v5800
    %v5802 = vpop.f32.mrb[0].mxu0
    %v5803 = vpop.f32.mrb[0].mxu0
    %v5804 = vadd.f32 %v5707, %v5803
    %v5805 = vpop.f32.mrb[0].mxu0
    %5806 = vmatprep.mubr.bf16.mxu0 %v4937
    %5807 = vmatmul.mubr.bf16.gmra.mrb[0].mxu0 %v4936
    %v5808 = vpop.f32.mrb[0].mxu0
    %v5809 = vadd.f32 %v5712, %v5808
    %v5810 = vpop.f32.mrb[0].mxu0
    %v5811 = vpop.f32.mrb[0].mxu0
    %v5812 = vadd.f32 %v5715, %v5811
    %v5813 = vpop.f32.mrb[0].mxu0
    %5814 = vdwg.mxu0
    %5815 = vmatprep.subr.bf16.mxu0 0
    %5816 = vmatpush1.bf16.msra.mxu0 %v5428
    %5817 = vmatprep.subr.bf16.mxu0 0
    %5818 = vmatpush1.bf16.msra.mxu0 %v5429
    %5819 = vmatprep.subr.bf16.mxu0 0
    %5820 = vmatpush1.bf16.msra.mxu0 %v5430
    %5821 = vmatprep.subr.bf16.mxu0 0
    %5822 = vmatpush1.bf16.msra.mxu0 %v5431
    %5823 = vmatprep.subr.bf16.mxu0 0
    %5824 = vmatpush1.bf16.msra.mxu0 %v5432
    %5825 = vmatprep.subr.bf16.mxu0 0
    %5826 = vmatpush1.bf16.msra.mxu0 %v5433
    %5827 = vmatprep.subr.bf16.mxu0 0
    %5828 = vmatpush1.bf16.msra.mxu0 %v5434
    %5829 = vmatprep.subr.bf16.mxu0 0
    %5830 = vmatpush1.bf16.msra.mxu0 %v5435
    %5831 = vmatprep.subr.bf16.mxu0 0
    %5832 = vmatpush1.bf16.msra.mxu0 %v5436
    %5833 = vmatprep.subr.bf16.mxu0 0
    %5834 = vmatpush1.bf16.msra.mxu0 %v5437
    %5835 = vmatprep.subr.bf16.mxu0 0
    %5836 = vmatpush1.bf16.msra.mxu0 %v5438
    %5837 = vmatprep.subr.bf16.mxu0 0
    %5838 = vmatpush1.bf16.msra.mxu0 %v5439
    %5839 = vmatprep.subr.bf16.mxu0 0
    %5840 = vmatpush1.bf16.msra.mxu0 %v5440
    %5841 = vmatprep.subr.bf16.mxu0 0
    %5842 = vmatpush1.bf16.msra.mxu0 %v5441
    %5843 = vmatprep.subr.bf16.mxu0 0
    %5844 = vmatpush1.bf16.msra.mxu0 %v5442
    %5845 = vmatprep.subr.bf16.mxu0 0
    %5846 = vmatpush1.bf16.msra.mxu0 %v5443
    %5847 = vmatprep.mubr.bf16.mxu0 %v4876
    %5848 = vmatmul.mubr.bf16.gmra.mrb[0].mxu0 %v4875
    %v5849 = vpop.f32.mrb[0].mxu0
    %v5850 = vadd.f32 %v5753, %v5849
    %v5851 = vpop.f32.mrb[0].mxu0
    %v5852 = vpop.f32.mrb[0].mxu0
    %v5853 = vadd.f32 %v5756, %v5852
    %v5854 = vpop.f32.mrb[0].mxu0
    %5855 = vmatprep.mubr.bf16.mxu0 %v4885
    %5856 = vmatmul.mubr.bf16.gmra.mrb[0].mxu0 %v4884
    %v5857 = vpop.f32.mrb[0].mxu0
    %v5858 = vadd.f32 %v5761, %v5857
    %v5859 = vpop.f32.mrb[0].mxu0
    %v5860 = vpop.f32.mrb[0].mxu0
    %v5861 = vadd.f32 %v5764, %v5860
    %v5862 = vpop.f32.mrb[0].mxu0
    %5863 = vmatprep.mubr.bf16.mxu0 %v4894
    %5864 = vmatmul.mubr.bf16.gmra.mrb[0].mxu0 %v4893
    %v5865 = vpop.f32.mrb[0].mxu0
    %v5866 = vadd.f32 %v5769, %v5865
    %v5867 = vpop.f32.mrb[0].mxu0
    %v5868 = vpop.f32.mrb[0].mxu0
    %v5869 = vadd.f32 %v5772, %v5868
    %v5870 = vpop.f32.mrb[0].mxu0
    %5871 = vmatprep.mubr.bf16.mxu0 %v4903
    %5872 = vmatmul.mubr.bf16.gmra.mrb[0].mxu0 %v4902
    %v5873 = vpop.f32.mrb[0].mxu0
    %v5874 = vadd.f32 %v5777, %v5873
    %v5875 = vpop.f32.mrb[0].mxu0
    %v5876 = vpop.f32.mrb[0].mxu0
    %v5877 = vadd.f32 %v5780, %v5876
    %v5878 = vpop.f32.mrb[0].mxu0
    %5879 = vmatprep.mubr.bf16.mxu0 %v4912
    %5880 = vmatmul.mubr.bf16.gmra.mrb[0].mxu0 %v4911
    %v5881 = vpop.f32.mrb[0].mxu0
    %v5882 = vadd.f32 %v5785, %v5881
    %v5883 = vpop.f32.mrb[0].mxu0
    %v5884 = vpop.f32.mrb[0].mxu0
    %v5885 = vadd.f32 %v5788, %v5884
    %v5886 = vpop.f32.mrb[0].mxu0
    %5887 = vmatprep.mubr.bf16.mxu0 %v4921
    %5888 = vmatmul.mubr.bf16.gmra.mrb[0].mxu0 %v4920
    %v5889 = vpop.f32.mrb[0].mxu0
    %v5890 = vadd.f32 %v5793, %v5889
    %v5891 = vpop.f32.mrb[0].mxu0
    %v5892 = vpop.f32.mrb[0].mxu0
    %v5893 = vadd.f32 %v5796, %v5892
    %v5894 = vpop.f32.mrb[0].mxu0
    %5895 = vmatprep.mubr.bf16.mxu0 %v4930
    %5896 = vmatmul.mubr.bf16.gmra.mrb[0].mxu0 %v4929
    %v5897 = vpop.f32.mrb[0].mxu0
    %v5898 = vadd.f32 %v5801, %v5897
    %v5899 = vpop.f32.mrb[0].mxu0
    %v5900 = vpop.f32.mrb[0].mxu0
    %v5901 = vadd.f32 %v5804, %v5900
    %v5902 = vpop.f32.mrb[0].mxu0
    %5903 = vmatprep.mubr.bf16.mxu0 %v4939
    %5904 = vmatmul.mubr.bf16.gmra.mrb[0].mxu0 %v4938
    %v5905 = vpop.f32.mrb[0].mxu0
    %v5906 = vadd.f32 %v5809, %v5905
    %v5907 = vpop.f32.mrb[0].mxu0
    %v5908 = vpop.f32.mrb[0].mxu0
    %v5909 = vadd.f32 %v5812, %v5908
    %v5910 = vpop.f32.mrb[0].mxu0
    %5911 = vdwg.mxu0
    %5912 = vmatprep.subr.bf16.mxu0 0
    %5913 = vmatpush1.bf16.msra.mxu0 %v5444
    %5914 = vmatprep.subr.bf16.mxu0 0
    %5915 = vmatpush1.bf16.msra.mxu0 %v5445
    %5916 = vmatprep.subr.bf16.mxu0 0
    %5917 = vmatpush1.bf16.msra.mxu0 %v5446
    %5918 = vmatprep.subr.bf16.mxu0 0
    %5919 = vmatpush1.bf16.msra.mxu0 %v5447
    %5920 = vmatprep.subr.bf16.mxu0 0
    %5921 = vmatpush1.bf16.msra.mxu0 %v5448
    %5922 = vmatprep.subr.bf16.mxu0 0
    %5923 = vmatpush1.bf16.msra.mxu0 %v5449
    %5924 = vmatprep.subr.bf16.mxu0 0
    %5925 = vmatpush1.bf16.msra.mxu0 %v5450
    %5926 = vmatprep.subr.bf16.mxu0 0
    %5927 = vmatpush1.bf16.msra.mxu0 %v5451
    %5928 = vmatprep.subr.bf16.mxu0 0
    %5929 = vmatpush1.bf16.msra.mxu0 0
    %5930 = vmatprep.subr.bf16.mxu0 0
    %5931 = vmatpush1.bf16.msra.mxu0 0
    %5932 = vmatprep.subr.bf16.mxu0 0
    %5933 = vmatpush1.bf16.msra.mxu0 0
    %5934 = vmatprep.subr.bf16.mxu0 0
    %5935 = vmatpush1.bf16.msra.mxu0 0
    %5936 = vmatprep.subr.bf16.mxu0 0
    %5937 = vmatpush1.bf16.msra.mxu0 0
    %5938 = vmatprep.subr.bf16.mxu0 0
    %5939 = vmatpush1.bf16.msra.mxu0 0
    %5940 = vmatprep.subr.bf16.mxu0 0
    %5941 = vmatpush1.bf16.msra.mxu0 0
    %5942 = vmatprep.subr.bf16.mxu0 0
    %5943 = vmatpush1.bf16.msra.mxu0 0
    %5944 = vmatprep.mubr.bf16.mxu0 0
    %5945 = vmatmul.mubr.bf16.gmra.mrb[0].mxu0 %v4877
    %v5946 = vpop.f32.mrb[0].mxu0
    %v5947 = vadd.f32 %v5850, %v5946
    %v5948 = vpop.f32.mrb[0].mxu0
    %v5949 = vpop.f32.mrb[0].mxu0
    %v5950 = vadd.f32 %v5853, %v5949
    %v5951 = vpop.f32.mrb[0].mxu0
    %5952 = vmatprep.mubr.bf16.mxu0 0
    %5953 = vmatmul.mubr.bf16.gmra.mrb[0].mxu0 %v4886
    %v5954 = vpop.f32.mrb[0].mxu0
    %v5955 = vadd.f32 %v5858, %v5954
    %v5956 = vpop.f32.mrb[0].mxu0
    %v5957 = vpop.f32.mrb[0].mxu0
    %v5958 = vadd.f32 %v5861, %v5957
    %v5959 = vpop.f32.mrb[0].mxu0
    %5960 = vmatprep.mubr.bf16.mxu0 0
    %5961 = vmatmul.mubr.bf16.gmra.mrb[0].mxu0 %v4895
    %v5962 = vpop.f32.mrb[0].mxu0
    %v5963 = vadd.f32 %v5866, %v5962
    %v5964 = vpop.f32.mrb[0].mxu0
    %v5965 = vpop.f32.mrb[0].mxu0
    %v5966 = vadd.f32 %v5869, %v5965
    %v5967 = vpop.f32.mrb[0].mxu0
    %5968 = vmatprep.mubr.bf16.mxu0 0
    %5969 = vmatmul.mubr.bf16.gmra.mrb[0].mxu0 %v4904
    %v5970 = vpop.f32.mrb[0].mxu0
    %v5971 = vadd.f32 %v5874, %v5970
    %v5972 = vpop.f32.mrb[0].mxu0
    %v5973 = vpop.f32.mrb[0].mxu0
    %v5974 = vadd.f32 %v5877, %v5973
    %v5975 = vpop.f32.mrb[0].mxu0
    %5976 = vmatprep.mubr.bf16.mxu0 0
    %5977 = vmatmul.mubr.bf16.gmra.mrb[0].mxu0 %v4913
    %v5978 = vpop.f32.mrb[0].mxu0
    %v5979 = vadd.f32 %v5882, %v5978
    %v5980 = vpop.f32.mrb[0].mxu0
    %v5981 = vpop.f32.mrb[0].mxu0
    %v5982 = vadd.f32 %v5885, %v5981
    %v5983 = vpop.f32.mrb[0].mxu0
    %5984 = vmatprep.mubr.bf16.mxu0 0
    %5985 = vmatmul.mubr.bf16.gmra.mrb[0].mxu0 %v4922
    %v5986 = vpop.f32.mrb[0].mxu0
    %v5987 = vadd.f32 %v5890, %v5986
    %v5988 = vpop.f32.mrb[0].mxu0
    %v5989 = vpop.f32.mrb[0].mxu0
    %v5990 = vadd.f32 %v5893, %v5989
    %v5991 = vpop.f32.mrb[0].mxu0
    %5992 = vmatprep.mubr.bf16.mxu0 0
    %5993 = vmatmul.mubr.bf16.gmra.mrb[0].mxu0 %v4931
    %v5994 = vpop.f32.mrb[0].mxu0
    %v5995 = vadd.f32 %v5898, %v5994
    %v5996 = vpop.f32.mrb[0].mxu0
    %v5997 = vpop.f32.mrb[0].mxu0
    %v5998 = vadd.f32 %v5901, %v5997
    %v5999 = vpop.f32.mrb[0].mxu0
    %6000 = vmatprep.mubr.bf16.mxu0 0
    %6001 = vmatmul.mubr.bf16.gmra.mrb[0].mxu0 %v4940
    %v6002 = vpop.f32.mrb[0].mxu0
    %v6003 = vadd.f32 %v5906, %v6002
    %v6004 = vpop.f32.mrb[0].mxu0
    %v6005 = vpop.f32.mrb[0].mxu0
    %v6006 = vadd.f32 %v5909, %v6005
    %v6007 = vpop.f32.mrb[0].mxu0
    %6008 = vdwg.mxu0
    %v6009 = vmax.f32 %v5947, 0.0
    %v6010 = vmax.f32 %v5950, 0.0
    %v6011 = vmax.f32 %v5955, 0.0
    %v6012 = vmax.f32 %v5958, 0.0
    %v6013 = vmax.f32 %v5963, 0.0
    %v6014 = vmax.f32 %v5966, 0.0
    %v6015 = vmax.f32 %v5971, 0.0
    %v6016 = vmax.f32 %v5974, 0.0
    %v6017 = vmax.f32 %v5979, 0.0
    %v6018 = vmax.f32 %v5982, 0.0
    %v6019 = vmax.f32 %v5987, 0.0
    %v6020 = vmax.f32 %v5990, 0.0
    %v6021 = vmax.f32 %v5995, 0.0
    %v6022 = vmax.f32 %v5998, 0.0
    %v6023 = vmax.f32 %v6003, 0.0
    %v6024 = vmax.f32 %v6006, 0.0
    %6025 = vst [vmem:[%s183 + $0x8] sm:$0xff] %v6009
    %6026 = vst [vmem:[%s183 + $0x20] sm:$0xff] %v6010
    %6027 = vst [vmem:[%s183 + $0x38] sm:$0xff] %v6011
    %6028 = vst [vmem:[%s183 + $0x50] sm:$0xff] %v6012
    %6029 = vst [vmem:[%s183 + $0x68] sm:$0xff] %v6013
    %6030 = vst [vmem:[%s183 + $0x80] sm:$0xff] %v6014
    %6031 = vst [vmem:[%s183 + $0x98] sm:$0xff] %v6015
    %6032 = vst [vmem:[%s183 + $0xb0] sm:$0xff] %v6016
    %6033 = vst [vmem:[%s183 + $0xf8] sm:$0xff] %v6017
    %6034 = vst [vmem:[%s183 + $0x110] sm:$0xff] %v6018
    %6035 = vst [vmem:[%s183 + $0x128] sm:$0xff] %v6019
    %6036 = vst [vmem:[%s183 + $0x140] sm:$0xff] %v6020
    %6037 = vst [vmem:[%s183 + $0x158] sm:$0xff] %v6021
    %6038 = vst [vmem:[%s183 + $0x170] sm:$0xff] %v6022
    %6039 = vst [vmem:[%s183 + $0x188] sm:$0xff] %v6023
    %6040 = vst [vmem:[%s183 + $0x1a0] sm:$0xff] %v6024
    %v6041 = vld [vmem:[#allocation2 + $0x7] sm:$0xff]
    %v6042 = vld [vmem:[#allocation2 + $0x1f] sm:$0xff]
    %v6043 = vld [vmem:[#allocation2 + $0x37] sm:$0xff]
    %v6044 = vld [vmem:[#allocation2 + $0x4f] sm:$0xff]
    %v6045 = vld [vmem:[#allocation2 + $0x67] sm:$0xff]
    %v6046 = vld [vmem:[#allocation2 + $0x7f] sm:$0xff]
    %v6047 = vld [vmem:[#allocation2 + $0x97] sm:$0xff]
    %v6048 = vld [vmem:[#allocation2 + $0xaf] sm:$0xff]
    %v6049 = vld [vmem:[#allocation2 + $0xf7] sm:$0xff]
    %v6050 = vld [vmem:[#allocation2 + $0x10f] sm:$0xff]
    %v6051 = vld [vmem:[#allocation2 + $0x127] sm:$0xff]
    %v6052 = vld [vmem:[#allocation2 + $0x13f] sm:$0xff]
    %v6053 = vld [vmem:[#allocation2 + $0x157] sm:$0xff]
    %v6054 = vld [vmem:[#allocation2 + $0x16f] sm:$0xff]
    %v6055 = vld [vmem:[#allocation2 + $0x187] sm:$0xff]
    %v6056 = vld [vmem:[#allocation2 + $0x19f] sm:$0xff]
    %v6057 = vpack.c.bf16 %v6042, %v6041
    %v6058 = vpack.c.bf16 %v6044, %v6043
    %v6059 = vpack.c.bf16 %v6046, %v6045
    %v6060 = vpack.c.bf16 %v6048, %v6047
    %v6061 = vpack.c.bf16 %v6050, %v6049
    %v6062 = vpack.c.bf16 %v6052, %v6051
    %v6063 = vpack.c.bf16 %v6054, %v6053
    %v6064 = vpack.c.bf16 %v6056, %v6055
    %6065 = vst [vmem:[#allocation3] sm:$0xff] %v6057
    %6066 = vst [vmem:[#allocation3 + $0x48] sm:$0xff] %v6058
    %6067 = vst [vmem:[#allocation3 + $0x90] sm:$0xff] %v6059
    %6068 = vst [vmem:[#allocation3 + $0xd8] sm:$0xff] %v6060
    %6069 = vst [vmem:[#allocation3 + $0x120] sm:$0xff] %v6061
    %6070 = vst [vmem:[#allocation3 + $0x168] sm:$0xff] %v6062
    %6071 = vst [vmem:[#allocation3 + $0x1b0] sm:$0xff] %v6063
    %6072 = vst [vmem:[#allocation3 + $0x1f8] sm:$0xff] %v6064
    %v6073 = vld [vmem:[#allocation2 + $0x8] sm:$0xff]
    %v6074 = vld [vmem:[#allocation2 + $0x20] sm:$0xff]
    %v6075 = vld [vmem:[#allocation2 + $0x38] sm:$0xff]
    %v6076 = vld [vmem:[#allocation2 + $0x50] sm:$0xff]
    %v6077 = vld [vmem:[#allocation2 + $0x68] sm:$0xff]
    %v6078 = vld [vmem:[#allocation2 + $0x80] sm:$0xff]
    %v6079 = vld [vmem:[#allocation2 + $0x98] sm:$0xff]
    %v6080 = vld [vmem:[#allocation2 + $0xb0] sm:$0xff]
    %v6081 = vld [vmem:[#allocation2 + $0xf8] sm:$0xff]
    %v6082 = vld [vmem:[#allocation2 + $0x110] sm:$0xff]
    %v6083 = vld [vmem:[#allocation2 + $0x128] sm:$0xff]
    %v6084 = vld [vmem:[#allocation2 + $0x140] sm:$0xff]
    %v6085 = vld [vmem:[#allocation2 + $0x158] sm:$0xff]
    %v6086 = vld [vmem:[#allocation2 + $0x170] sm:$0xff]
    %v6087 = vld [vmem:[#allocation2 + $0x188] sm:$0xff]
    %v6088 = vld [vmem:[#allocation2 + $0x1a0] sm:$0xff]
    %v6089 = vpack.c.bf16 %v6074, %v6073
    %v6090 = vpack.c.bf16 %v6076, %v6075
    %v6091 = vpack.c.bf16 %v6078, %v6077
    %v6092 = vpack.c.bf16 %v6080, %v6079
    %v6093 = vpack.c.bf16 %v6082, %v6081
    %v6094 = vpack.c.bf16 %v6084, %v6083
    %v6095 = vpack.c.bf16 %v6086, %v6085
    %v6096 = vpack.c.bf16 %v6088, %v6087
    %6097 = vst [vmem:[#allocation3 + $0x8] sm:$0xff] %v6089
    %6098 = vst [vmem:[#allocation3 + $0x50] sm:$0xff] %v6090
    %6099 = vst [vmem:[#allocation3 + $0x98] sm:$0xff] %v6091
    %6100 = vst [vmem:[#allocation3 + $0xe0] sm:$0xff] %v6092
    %6101 = vst [vmem:[#allocation3 + $0x128] sm:$0xff] %v6093
    %6102 = vst [vmem:[#allocation3 + $0x170] sm:$0xff] %v6094
    %6103 = vst [vmem:[#allocation3 + $0x1b8] sm:$0xff] %v6095
    %6104 = vst [vmem:[#allocation3 + $0x200] sm:$0xff] %v6096
    %v6105 = vld [vmem:[#allocation2 + $0x9] sm:$0xff]
    %v6106 = vld [vmem:[#allocation2 + $0x21] sm:$0xff]
    %v6107 = vld [vmem:[#allocation2 + $0x39] sm:$0xff]
    %v6108 = vld [vmem:[#allocation2 + $0x51] sm:$0xff]
    %v6109 = vld [vmem:[#allocation2 + $0x69] sm:$0xff]
    %v6110 = vld [vmem:[#allocation2 + $0x81] sm:$0xff]
    %v6111 = vld [vmem:[#allocation2 + $0x99] sm:$0xff]
    %v6112 = vld [vmem:[#allocation2 + $0xb1] sm:$0xff]
    %v6113 = vld [vmem:[#allocation2 + $0xf9] sm:$0xff]
    %v6114 = vld [vmem:[#allocation2 + $0x111] sm:$0xff]
    %v6115 = vld [vmem:[#allocation2 + $0x129] sm:$0xff]
    %v6116 = vld [vmem:[#allocation2 + $0x141] sm:$0xff]
    %v6117 = vld [vmem:[#allocation2 + $0x159] sm:$0xff]
    %v6118 = vld [vmem:[#allocation2 + $0x171] sm:$0xff]
    %v6119 = vld [vmem:[#allocation2 + $0x189] sm:$0xff]
    %v6120 = vld [vmem:[#allocation2 + $0x1a1] sm:$0xff]
    %v6121 = vpack.c.bf16 %v6106, %v6105
    %v6122 = vpack.c.bf16 %v6108, %v6107
    %v6123 = vpack.c.bf16 %v6110, %v6109
    %v6124 = vpack.c.bf16 %v6112, %v6111
    %v6125 = vpack.c.bf16 %v6114, %v6113
    %v6126 = vpack.c.bf16 %v6116, %v6115
    %v6127 = vpack.c.bf16 %v6118, %v6117
    %v6128 = vpack.c.bf16 %v6120, %v6119
    %6129 = vst [vmem:[#allocation3 + $0x10] sm:$0xff] %v6121
    %6130 = vst [vmem:[#allocation3 + $0x58] sm:$0xff] %v6122
    %6131 = vst [vmem:[#allocation3 + $0xa0] sm:$0xff] %v6123
    %6132 = vst [vmem:[#allocation3 + $0xe8] sm:$0xff] %v6124
    %6133 = vst [vmem:[#allocation3 + $0x130] sm:$0xff] %v6125
    %6134 = vst [vmem:[#allocation3 + $0x178] sm:$0xff] %v6126
    %6135 = vst [vmem:[#allocation3 + $0x1c0] sm:$0xff] %v6127
    %6136 = vst [vmem:[#allocation3 + $0x208] sm:$0xff] %v6128
    %v6137 = vld [vmem:[%s183 + $0x7] sm:$0xff]
    %v6138 = vld [vmem:[%s183 + $0x1f] sm:$0xff]
    %v6139 = vld [vmem:[%s183 + $0x37] sm:$0xff]
    %v6140 = vld [vmem:[%s183 + $0x4f] sm:$0xff]
    %v6141 = vld [vmem:[%s183 + $0x67] sm:$0xff]
    %v6142 = vld [vmem:[%s183 + $0x7f] sm:$0xff]
    %v6143 = vld [vmem:[%s183 + $0x97] sm:$0xff]
    %v6144 = vld [vmem:[%s183 + $0xaf] sm:$0xff]
    %v6145 = vld [vmem:[%s183 + $0xf7] sm:$0xff]
    %v6146 = vld [vmem:[%s183 + $0x10f] sm:$0xff]
    %v6147 = vld [vmem:[%s183 + $0x127] sm:$0xff]
    %v6148 = vld [vmem:[%s183 + $0x13f] sm:$0xff]
    %v6149 = vld [vmem:[%s183 + $0x157] sm:$0xff]
    %v6150 = vld [vmem:[%s183 + $0x16f] sm:$0xff]
    %v6151 = vld [vmem:[%s183 + $0x187] sm:$0xff]
    %v6152 = vld [vmem:[%s183 + $0x19f] sm:$0xff]
    %v6153 = vpack.c.bf16 %v6138, %v6137
    %v6154 = vpack.c.bf16 %v6140, %v6139
    %v6155 = vpack.c.bf16 %v6142, %v6141
    %v6156 = vpack.c.bf16 %v6144, %v6143
    %v6157 = vpack.c.bf16 %v6146, %v6145
    %v6158 = vpack.c.bf16 %v6148, %v6147
    %v6159 = vpack.c.bf16 %v6150, %v6149
    %v6160 = vpack.c.bf16 %v6152, %v6151
    %6161 = vst [vmem:[#allocation3 + $0x18] sm:$0xff] %v6153
    %6162 = vst [vmem:[#allocation3 + $0x60] sm:$0xff] %v6154
    %6163 = vst [vmem:[#allocation3 + $0xa8] sm:$0xff] %v6155
    %6164 = vst [vmem:[#allocation3 + $0xf0] sm:$0xff] %v6156
    %6165 = vst [vmem:[#allocation3 + $0x138] sm:$0xff] %v6157
    %6166 = vst [vmem:[#allocation3 + $0x180] sm:$0xff] %v6158
    %6167 = vst [vmem:[#allocation3 + $0x1c8] sm:$0xff] %v6159
    %6168 = vst [vmem:[#allocation3 + $0x210] sm:$0xff] %v6160
    %v6169 = vld [vmem:[%s183 + $0x8] sm:$0xff]
    %v6170 = vld [vmem:[%s183 + $0x20] sm:$0xff]
    %v6171 = vld [vmem:[%s183 + $0x38] sm:$0xff]
    %v6172 = vld [vmem:[%s183 + $0x50] sm:$0xff]
    %v6173 = vld [vmem:[%s183 + $0x68] sm:$0xff]
    %v6174 = vld [vmem:[%s183 + $0x80] sm:$0xff]
    %v6175 = vld [vmem:[%s183 + $0x98] sm:$0xff]
    %v6176 = vld [vmem:[%s183 + $0xb0] sm:$0xff]
    %v6177 = vld [vmem:[%s183 + $0xf8] sm:$0xff]
    %v6178 = vld [vmem:[%s183 + $0x110] sm:$0xff]
    %v6179 = vld [vmem:[%s183 + $0x128] sm:$0xff]
    %v6180 = vld [vmem:[%s183 + $0x140] sm:$0xff]
    %v6181 = vld [vmem:[%s183 + $0x158] sm:$0xff]
    %v6182 = vld [vmem:[%s183 + $0x170] sm:$0xff]
    %v6183 = vld [vmem:[%s183 + $0x188] sm:$0xff]
    %v6184 = vld [vmem:[%s183 + $0x1a0] sm:$0xff]
    %v6185 = vpack.c.bf16 %v6170, %v6169
    %v6186 = vpack.c.bf16 %v6172, %v6171
    %v6187 = vpack.c.bf16 %v6174, %v6173
    %v6188 = vpack.c.bf16 %v6176, %v6175
    %v6189 = vpack.c.bf16 %v6178, %v6177
    %v6190 = vpack.c.bf16 %v6180, %v6179
    %v6191 = vpack.c.bf16 %v6182, %v6181
    %v6192 = vpack.c.bf16 %v6184, %v6183
    %6193 = vst [vmem:[#allocation3 + $0x20] sm:$0xff] %v6185
    %6194 = vst [vmem:[#allocation3 + $0x68] sm:$0xff] %v6186
    %6195 = vst [vmem:[#allocation3 + $0xb0] sm:$0xff] %v6187
    %6196 = vst [vmem:[#allocation3 + $0xf8] sm:$0xff] %v6188
    %6197 = vst [vmem:[#allocation3 + $0x140] sm:$0xff] %v6189
    %6198 = vst [vmem:[#allocation3 + $0x188] sm:$0xff] %v6190
    %6199 = vst [vmem:[#allocation3 + $0x1d0] sm:$0xff] %v6191
    %6200 = vst [vmem:[#allocation3 + $0x218] sm:$0xff] %v6192
    %v6201 = vld [vmem:[%s183 + $0x9] sm:$0xff]
    %v6202 = vld [vmem:[%s183 + $0x21] sm:$0xff]
    %v6203 = vld [vmem:[%s183 + $0x39] sm:$0xff]
    %v6204 = vld [vmem:[%s183 + $0x51] sm:$0xff]
    %v6205 = vld [vmem:[%s183 + $0x69] sm:$0xff]
    %v6206 = vld [vmem:[%s183 + $0x81] sm:$0xff]
    %v6207 = vld [vmem:[%s183 + $0x99] sm:$0xff]
    %v6208 = vld [vmem:[%s183 + $0xb1] sm:$0xff]
    %v6209 = vld [vmem:[%s183 + $0xf9] sm:$0xff]
    %v6210 = vld [vmem:[%s183 + $0x111] sm:$0xff]
    %v6211 = vld [vmem:[%s183 + $0x129] sm:$0xff]
    %v6212 = vld [vmem:[%s183 + $0x141] sm:$0xff]
    %v6213 = vld [vmem:[%s183 + $0x159] sm:$0xff]
    %v6214 = vld [vmem:[%s183 + $0x171] sm:$0xff]
    %v6215 = vld [vmem:[%s183 + $0x189] sm:$0xff]
    %v6216 = vld [vmem:[%s183 + $0x1a1] sm:$0xff]
    %v6217 = vpack.c.bf16 %v6202, %v6201
    %v6218 = vpack.c.bf16 %v6204, %v6203
    %v6219 = vpack.c.bf16 %v6206, %v6205
    %v6220 = vpack.c.bf16 %v6208, %v6207
    %v6221 = vpack.c.bf16 %v6210, %v6209
    %v6222 = vpack.c.bf16 %v6212, %v6211
    %v6223 = vpack.c.bf16 %v6214, %v6213
    %v6224 = vpack.c.bf16 %v6216, %v6215
    %6225 = vst [vmem:[#allocation3 + $0x28] sm:$0xff] %v6217
    %6226 = vst [vmem:[#allocation3 + $0x70] sm:$0xff] %v6218
    %6227 = vst [vmem:[#allocation3 + $0xb8] sm:$0xff] %v6219
    %6228 = vst [vmem:[#allocation3 + $0x100] sm:$0xff] %v6220
    %6229 = vst [vmem:[#allocation3 + $0x148] sm:$0xff] %v6221
    %6230 = vst [vmem:[#allocation3 + $0x190] sm:$0xff] %v6222
    %6231 = vst [vmem:[#allocation3 + $0x1d8] sm:$0xff] %v6223
    %6232 = vst [vmem:[#allocation3 + $0x220] sm:$0xff] %v6224
    %v6233 = vld [vmem:[%s392 + $0x7] sm:$0xff]
    %v6234 = vld [vmem:[%s392 + $0x1f] sm:$0xff]
    %v6235 = vld [vmem:[%s392 + $0x37] sm:$0xff]
    %v6236 = vld [vmem:[%s392 + $0x4f] sm:$0xff]
    %v6237 = vld [vmem:[%s392 + $0x67] sm:$0xff]
    %v6238 = vld [vmem:[%s392 + $0x7f] sm:$0xff]
    %v6239 = vld [vmem:[%s392 + $0x97] sm:$0xff]
    %v6240 = vld [vmem:[%s392 + $0xaf] sm:$0xff]
    %v6241 = vld [vmem:[%s392 + $0xf7] sm:$0xff]
    %v6242 = vld [vmem:[%s392 + $0x10f] sm:$0xff]
    %v6243 = vld [vmem:[%s392 + $0x127] sm:$0xff]
    %v6244 = vld [vmem:[%s392 + $0x13f] sm:$0xff]
    %v6245 = vld [vmem:[%s392 + $0x157] sm:$0xff]
    %v6246 = vld [vmem:[%s392 + $0x16f] sm:$0xff]
    %v6247 = vld [vmem:[%s392 + $0x187] sm:$0xff]
    %v6248 = vld [vmem:[%s392 + $0x19f] sm:$0xff]
    %v6249 = vpack.c.bf16 %v6234, %v6233
    %v6250 = vpack.c.bf16 %v6236, %v6235
    %v6251 = vpack.c.bf16 %v6238, %v6237
    %v6252 = vpack.c.bf16 %v6240, %v6239
    %v6253 = vpack.c.bf16 %v6242, %v6241
    %v6254 = vpack.c.bf16 %v6244, %v6243
    %v6255 = vpack.c.bf16 %v6246, %v6245
    %v6256 = vpack.c.bf16 %v6248, %v6247
    %6257 = vst [vmem:[#allocation3 + $0x30] sm:$0xff] %v6249
    %6258 = vst [vmem:[#allocation3 + $0x78] sm:$0xff] %v6250
    %6259 = vst [vmem:[#allocation3 + $0xc0] sm:$0xff] %v6251
    %6260 = vst [vmem:[#allocation3 + $0x108] sm:$0xff] %v6252
    %6261 = vst [vmem:[#allocation3 + $0x150] sm:$0xff] %v6253
    %6262 = vst [vmem:[#allocation3 + $0x198] sm:$0xff] %v6254
    %6263 = vst [vmem:[#allocation3 + $0x1e0] sm:$0xff] %v6255
    %6264 = vst [vmem:[#allocation3 + $0x228] sm:$0xff] %v6256
    %v6265 = vld [vmem:[%s392 + $0x8] sm:$0xff]
    %v6266 = vld [vmem:[%s392 + $0x20] sm:$0xff]
    %v6267 = vld [vmem:[%s392 + $0x38] sm:$0xff]
    %v6268 = vld [vmem:[%s392 + $0x50] sm:$0xff]
    %v6269 = vld [vmem:[%s392 + $0x68] sm:$0xff]
    %v6270 = vld [vmem:[%s392 + $0x80] sm:$0xff]
    %v6271 = vld [vmem:[%s392 + $0x98] sm:$0xff]
    %v6272 = vld [vmem:[%s392 + $0xb0] sm:$0xff]
    %v6273 = vld [vmem:[%s392 + $0xf8] sm:$0xff]
    %v6274 = vld [vmem:[%s392 + $0x110] sm:$0xff]
    %v6275 = vld [vmem:[%s392 + $0x128] sm:$0xff]
    %v6276 = vld [vmem:[%s392 + $0x140] sm:$0xff]
    %v6277 = vld [vmem:[%s392 + $0x158] sm:$0xff]
    %v6278 = vld [vmem:[%s392 + $0x170] sm:$0xff]
    %v6279 = vld [vmem:[%s392 + $0x188] sm:$0xff]
    %v6280 = vld [vmem:[%s392 + $0x1a0] sm:$0xff]
    %v6281 = vpack.c.bf16 %v6266, %v6265
    %v6282 = vpack.c.bf16 %v6268, %v6267
    %v6283 = vpack.c.bf16 %v6270, %v6269
    %v6284 = vpack.c.bf16 %v6272, %v6271
    %v6285 = vpack.c.bf16 %v6274, %v6273
    %v6286 = vpack.c.bf16 %v6276, %v6275
    %v6287 = vpack.c.bf16 %v6278, %v6277
    %v6288 = vpack.c.bf16 %v6280, %v6279
    %6289 = vst [vmem:[#allocation3 + $0x38] sm:$0xff] %v6281
    %6290 = vst [vmem:[#allocation3 + $0x80] sm:$0xff] %v6282
    %6291 = vst [vmem:[#allocation3 + $0xc8] sm:$0xff] %v6283
    %6292 = vst [vmem:[#allocation3 + $0x110] sm:$0xff] %v6284
    %6293 = vst [vmem:[#allocation3 + $0x158] sm:$0xff] %v6285
    %6294 = vst [vmem:[#allocation3 + $0x1a0] sm:$0xff] %v6286
    %6295 = vst [vmem:[#allocation3 + $0x1e8] sm:$0xff] %v6287
    %6296 = vst [vmem:[#allocation3 + $0x230] sm:$0xff] %v6288
    %v6297 = vld [vmem:[%s392 + $0x9] sm:$0xff]
    %v6298 = vld [vmem:[%s392 + $0x21] sm:$0xff]
    %v6299 = vld [vmem:[%s392 + $0x39] sm:$0xff]
    %v6300 = vld [vmem:[%s392 + $0x51] sm:$0xff]
    %v6301 = vld [vmem:[%s392 + $0x69] sm:$0xff]
    %v6302 = vld [vmem:[%s392 + $0x81] sm:$0xff]
    %v6303 = vld [vmem:[%s392 + $0x99] sm:$0xff]
    %v6304 = vld [vmem:[%s392 + $0xb1] sm:$0xff]
    %v6305 = vld [vmem:[%s392 + $0xf9] sm:$0xff]
    %v6306 = vld [vmem:[%s392 + $0x111] sm:$0xff]
    %v6307 = vld [vmem:[%s392 + $0x129] sm:$0xff]
    %v6308 = vld [vmem:[%s392 + $0x141] sm:$0xff]
    %v6309 = vld [vmem:[%s392 + $0x159] sm:$0xff]
    %v6310 = vld [vmem:[%s392 + $0x171] sm:$0xff]
    %v6311 = vld [vmem:[%s392 + $0x189] sm:$0xff]
    %v6312 = vld [vmem:[%s392 + $0x1a1] sm:$0xff]
    %v6313 = vpack.c.bf16 %v6298, %v6297
    %v6314 = vpack.c.bf16 %v6300, %v6299
    %v6315 = vpack.c.bf16 %v6302, %v6301
    %v6316 = vpack.c.bf16 %v6304, %v6303
    %v6317 = vpack.c.bf16 %v6306, %v6305
    %v6318 = vpack.c.bf16 %v6308, %v6307
    %v6319 = vpack.c.bf16 %v6310, %v6309
    %v6320 = vpack.c.bf16 %v6312, %v6311
    %6321 = vst [vmem:[#allocation3 + $0x40] sm:$0xff] %v6313
    %6322 = vst [vmem:[#allocation3 + $0x88] sm:$0xff] %v6314
    %6323 = vst [vmem:[#allocation3 + $0xd0] sm:$0xff] %v6315
    %6324 = vst [vmem:[#allocation3 + $0x118] sm:$0xff] %v6316
    %6325 = vst [vmem:[#allocation3 + $0x160] sm:$0xff] %v6317
    %6326 = vst [vmem:[#allocation3 + $0x1a8] sm:$0xff] %v6318
    %6327 = vst [vmem:[#allocation3 + $0x1f0] sm:$0xff] %v6319
    %6328 = vst [vmem:[#allocation3 + $0x238] sm:$0xff] %v6320
    %v6329 = vld [vmem:[#allocation3] sm:$0xff]
    %v6330 = vld [vmem:[#allocation3 + $0x8] sm:$0xff]
    %v6331 = vld [vmem:[#allocation3 + $0x10] sm:$0xff]
    %v6332 = vld [vmem:[#allocation3 + $0x18] sm:$0xff]
    %v6333 = vld [vmem:[#allocation3 + $0x20] sm:$0xff]
    %v6334 = vld [vmem:[#allocation3 + $0x28] sm:$0xff]
    %v6335 = vld [vmem:[#allocation3 + $0x30] sm:$0xff]
    %v6336 = vld [vmem:[#allocation3 + $0x38] sm:$0xff]
    %v6337 = vld [vmem:[#allocation3 + $0x40] sm:$0xff]
    %v6338 = vld [vmem:[#allocation3 + $0x48] sm:$0xff]
    %v6339 = vld [vmem:[#allocation3 + $0x50] sm:$0xff]
    %v6340 = vld [vmem:[#allocation3 + $0x58] sm:$0xff]
    %v6341 = vld [vmem:[#allocation3 + $0x60] sm:$0xff]
    %v6342 = vld [vmem:[#allocation3 + $0x68] sm:$0xff]
    %v6343 = vld [vmem:[#allocation3 + $0x70] sm:$0xff]
    %v6344 = vld [vmem:[#allocation3 + $0x78] sm:$0xff]
    %v6345 = vld [vmem:[#allocation3 + $0x80] sm:$0xff]
    %v6346 = vld [vmem:[#allocation3 + $0x88] sm:$0xff]
    %v6347 = vld [vmem:[#allocation3 + $0x90] sm:$0xff]
    %v6348 = vld [vmem:[#allocation3 + $0x98] sm:$0xff]
    %v6349 = vld [vmem:[#allocation3 + $0xa0] sm:$0xff]
    %v6350 = vld [vmem:[#allocation3 + $0xa8] sm:$0xff]
    %v6351 = vld [vmem:[#allocation3 + $0xb0] sm:$0xff]
    %v6352 = vld [vmem:[#allocation3 + $0xb8] sm:$0xff]
    %v6353 = vld [vmem:[#allocation3 + $0xc0] sm:$0xff]
    %v6354 = vld [vmem:[#allocation3 + $0xc8] sm:$0xff]
    %v6355 = vld [vmem:[#allocation3 + $0xd0] sm:$0xff]
    %v6356 = vld [vmem:[#allocation3 + $0xd8] sm:$0xff]
    %v6357 = vld [vmem:[#allocation3 + $0xe0] sm:$0xff]
    %v6358 = vld [vmem:[#allocation3 + $0xe8] sm:$0xff]
    %v6359 = vld [vmem:[#allocation3 + $0xf0] sm:$0xff]
    %v6360 = vld [vmem:[#allocation3 + $0xf8] sm:$0xff]
    %v6361 = vld [vmem:[#allocation3 + $0x100] sm:$0xff]
    %v6362 = vld [vmem:[#allocation3 + $0x108] sm:$0xff]
    %v6363 = vld [vmem:[#allocation3 + $0x110] sm:$0xff]
    %v6364 = vld [vmem:[#allocation3 + $0x118] sm:$0xff]
    %v6365 = vld [vmem:[#allocation3 + $0x120] sm:$0xff]
    %v6366 = vld [vmem:[#allocation3 + $0x128] sm:$0xff]
    %v6367 = vld [vmem:[#allocation3 + $0x130] sm:$0xff]
    %v6368 = vld [vmem:[#allocation3 + $0x138] sm:$0xff]
    %v6369 = vld [vmem:[#allocation3 + $0x140] sm:$0xff]
    %v6370 = vld [vmem:[#allocation3 + $0x148] sm:$0xff]
    %v6371 = vld [vmem:[#allocation3 + $0x150] sm:$0xff]
    %v6372 = vld [vmem:[#allocation3 + $0x158] sm:$0xff]
    %v6373 = vld [vmem:[#allocation3 + $0x160] sm:$0xff]
    %v6374 = vld [vmem:[#allocation3 + $0x168] sm:$0xff]
    %v6375 = vld [vmem:[#allocation3 + $0x170] sm:$0xff]
    %v6376 = vld [vmem:[#allocation3 + $0x178] sm:$0xff]
    %v6377 = vld [vmem:[#allocation3 + $0x180] sm:$0xff]
    %v6378 = vld [vmem:[#allocation3 + $0x188] sm:$0xff]
    %v6379 = vld [vmem:[#allocation3 + $0x190] sm:$0xff]
    %v6380 = vld [vmem:[#allocation3 + $0x198] sm:$0xff]
    %v6381 = vld [vmem:[#allocation3 + $0x1a0] sm:$0xff]
    %v6382 = vld [vmem:[#allocation3 + $0x1a8] sm:$0xff]
    %v6383 = vld [vmem:[#allocation3 + $0x1b0] sm:$0xff]
    %v6384 = vld [vmem:[#allocation3 + $0x1b8] sm:$0xff]
    %v6385 = vld [vmem:[#allocation3 + $0x1c0] sm:$0xff]
    %v6386 = vld [vmem:[#allocation3 + $0x1c8] sm:$0xff]
    %v6387 = vld [vmem:[#allocation3 + $0x1d0] sm:$0xff]
    %v6388 = vld [vmem:[#allocation3 + $0x1d8] sm:$0xff]
    %v6389 = vld [vmem:[#allocation3 + $0x1e0] sm:$0xff]
    %v6390 = vld [vmem:[#allocation3 + $0x1e8] sm:$0xff]
    %v6391 = vld [vmem:[#allocation3 + $0x1f0] sm:$0xff]
    %v6392 = vld [vmem:[#allocation3 + $0x1f8] sm:$0xff]
    %v6393 = vld [vmem:[#allocation3 + $0x200] sm:$0xff]
    %v6394 = vld [vmem:[#allocation3 + $0x208] sm:$0xff]
    %v6395 = vld [vmem:[#allocation3 + $0x210] sm:$0xff]
    %v6396 = vld [vmem:[#allocation3 + $0x218] sm:$0xff]
    %v6397 = vld [vmem:[#allocation3 + $0x220] sm:$0xff]
    %v6398 = vld [vmem:[#allocation3 + $0x228] sm:$0xff]
    %v6399 = vld [vmem:[#allocation3 + $0x230] sm:$0xff]
    %v6400 = vld [vmem:[#allocation3 + $0x238] sm:$0xff]
    %v6401 = vld [vmem:[#allocation11] sm:$0xff]
    %v6402 = vld [vmem:[#allocation11 + $0x8] sm:$0xff]
    %v6403 = vld [vmem:[#allocation11 + $0x10] sm:$0xff]
    %v6404 = vld [vmem:[#allocation11 + $0x18] sm:$0xff]
    %v6405 = vld [vmem:[#allocation11 + $0x20] sm:$0xff]
    %v6406 = vld [vmem:[#allocation11 + $0x28] sm:$0xff]
    %v6407 = vld [vmem:[#allocation11 + $0x30] sm:$0xff]
    %v6408 = vld [vmem:[#allocation11 + $0x38] sm:$0xff]
    %v6409 = vld [vmem:[#allocation11 + $0x40] sm:$0xff]
    %v6410 = vld [vmem:[#allocation11 + $0x48] sm:$0xff]
    %v6411 = vld [vmem:[#allocation11 + $0x50] sm:$0xff]
    %v6412 = vld [vmem:[#allocation11 + $0x58] sm:$0xff]
    %v6413 = vld [vmem:[#allocation11 + $0x60] sm:$0xff]
    %v6414 = vld [vmem:[#allocation11 + $0x68] sm:$0xff]
    %v6415 = vld [vmem:[#allocation11 + $0x70] sm:$0xff]
    %v6416 = vld [vmem:[#allocation11 + $0x78] sm:$0xff]
    %v6417 = vld [vmem:[#allocation11 + $0x80] sm:$0xff]
    %v6418 = vld [vmem:[#allocation11 + $0x88] sm:$0xff]
    %v6419 = vld [vmem:[#allocation11 + $0x90] sm:$0xff]
    %v6420 = vld [vmem:[#allocation11 + $0x98] sm:$0xff]
    %v6421 = vld [vmem:[#allocation11 + $0xa0] sm:$0xff]
    %v6422 = vld [vmem:[#allocation11 + $0xa8] sm:$0xff]
    %v6423 = vld [vmem:[#allocation11 + $0xb0] sm:$0xff]
    %v6424 = vld [vmem:[#allocation11 + $0xb8] sm:$0xff]
    %v6425 = vld [vmem:[#allocation11 + $0xc0] sm:$0xff]
    %v6426 = vld [vmem:[#allocation11 + $0xc8] sm:$0xff]
    %v6427 = vld [vmem:[#allocation11 + $0xd0] sm:$0xff]
    %v6428 = vld [vmem:[#allocation11 + $0xd8] sm:$0xff]
    %v6429 = vld [vmem:[#allocation11 + $0xe0] sm:$0xff]
    %v6430 = vld [vmem:[#allocation11 + $0xe8] sm:$0xff]
    %v6431 = vld [vmem:[#allocation11 + $0xf0] sm:$0xff]
    %v6432 = vld [vmem:[#allocation11 + $0xf8] sm:$0xff]
    %v6433 = vld [vmem:[#allocation11 + $0x100] sm:$0xff]
    %v6434 = vld [vmem:[#allocation11 + $0x108] sm:$0xff]
    %v6435 = vld [vmem:[#allocation11 + $0x110] sm:$0xff]
    %v6436 = vld [vmem:[#allocation11 + $0x118] sm:$0xff]
    %v6437 = vld [vmem:[#allocation11 + $0x120] sm:$0xff]
    %v6438 = vld [vmem:[#allocation11 + $0x128] sm:$0xff]
    %v6439 = vld [vmem:[#allocation11 + $0x130] sm:$0xff]
    %v6440 = vld [vmem:[#allocation11 + $0x138] sm:$0xff]
    %v6441 = vld [vmem:[#allocation11 + $0x140] sm:$0xff]
    %v6442 = vld [vmem:[#allocation11 + $0x148] sm:$0xff]
    %v6443 = vld [vmem:[#allocation11 + $0x150] sm:$0xff]
    %v6444 = vld [vmem:[#allocation11 + $0x158] sm:$0xff]
    %v6445 = vld [vmem:[#allocation11 + $0x160] sm:$0xff]
    %v6446 = vld [vmem:[#allocation11 + $0x168] sm:$0xff]
    %v6447 = vld [vmem:[#allocation11 + $0x170] sm:$0xff]
    %v6448 = vld [vmem:[#allocation11 + $0x178] sm:$0xff]
    %v6449 = vld [vmem:[#allocation11 + $0x180] sm:$0xff]
    %v6450 = vld [vmem:[#allocation11 + $0x188] sm:$0xff]
    %v6451 = vld [vmem:[#allocation11 + $0x190] sm:$0xff]
    %v6452 = vld [vmem:[#allocation11 + $0x198] sm:$0xff]
    %v6453 = vld [vmem:[#allocation11 + $0x1a0] sm:$0xff]
    %v6454 = vld [vmem:[#allocation11 + $0x1a8] sm:$0xff]
    %v6455 = vld [vmem:[#allocation11 + $0x1b0] sm:$0xff]
    %v6456 = vld [vmem:[#allocation11 + $0x1b8] sm:$0xff]
    %v6457 = vld [vmem:[#allocation11 + $0x1c0] sm:$0xff]
    %v6458 = vld [vmem:[#allocation11 + $0x1c8] sm:$0xff]
    %v6459 = vld [vmem:[#allocation11 + $0x1d0] sm:$0xff]
    %v6460 = vld [vmem:[#allocation11 + $0x1d8] sm:$0xff]
    %v6461 = vld [vmem:[#allocation11 + $0x1e0] sm:$0xff]
    %v6462 = vld [vmem:[#allocation11 + $0x1e8] sm:$0xff]
    %v6463 = vld [vmem:[#allocation11 + $0x1f0] sm:$0xff]
    %v6464 = vld [vmem:[#allocation11 + $0x1f8] sm:$0xff]
    %v6465 = vld [vmem:[#allocation11 + $0x200] sm:$0xff]
    %v6466 = vld [vmem:[#allocation11 + $0x208] sm:$0xff]
    %v6467 = vld [vmem:[#allocation11 + $0x210] sm:$0xff]
    %v6468 = vld [vmem:[#allocation11 + $0x218] sm:$0xff]
    %v6469 = vld [vmem:[#allocation11 + $0x220] sm:$0xff]
    %v6470 = vld [vmem:[#allocation11 + $0x228] sm:$0xff]
    %v6471 = vld [vmem:[#allocation11 + $0x230] sm:$0xff]
    %v6472 = vld [vmem:[#allocation11 + $0x238] sm:$0xff]
    %v6473 = vld [vmem:[#allocation11 + $0x240] sm:$0xff]
    %v6474 = vld [vmem:[#allocation11 + $0x248] sm:$0xff]
    %v6475 = vld [vmem:[#allocation11 + $0x250] sm:$0xff]
    %v6476 = vld [vmem:[#allocation11 + $0x258] sm:$0xff]
    %v6477 = vld [vmem:[#allocation11 + $0x260] sm:$0xff]
    %v6478 = vld [vmem:[#allocation11 + $0x268] sm:$0xff]
    %v6479 = vld [vmem:[#allocation11 + $0x270] sm:$0xff]
    %v6480 = vld [vmem:[#allocation11 + $0x278] sm:$0xff]
    %v6481 = vld [vmem:[#allocation11 + $0x280] sm:$0xff]
    %v6482 = vld [vmem:[#allocation11 + $0x288] sm:$0xff]
    %v6483 = vld [vmem:[#allocation11 + $0x290] sm:$0xff]
    %v6484 = vld [vmem:[#allocation11 + $0x298] sm:$0xff]
    %v6485 = vld [vmem:[#allocation11 + $0x2a0] sm:$0xff]
    %v6486 = vld [vmem:[#allocation11 + $0x2a8] sm:$0xff]
    %v6487 = vld [vmem:[#allocation11 + $0x2b0] sm:$0xff]
    %v6488 = vld [vmem:[#allocation11 + $0x2b8] sm:$0xff]
    %v6489 = vld [vmem:[#allocation11 + $0x2c0] sm:$0xff]
    %v6490 = vld [vmem:[#allocation11 + $0x2c8] sm:$0xff]
    %v6491 = vld [vmem:[#allocation11 + $0x2d0] sm:$0xff]
    %v6492 = vld [vmem:[#allocation11 + $0x2d8] sm:$0xff]
    %v6493 = vld [vmem:[#allocation11 + $0x2e0] sm:$0xff]
    %v6494 = vld [vmem:[#allocation11 + $0x2e8] sm:$0xff]
    %v6495 = vld [vmem:[#allocation11 + $0x2f0] sm:$0xff]
    %v6496 = vld [vmem:[#allocation11 + $0x2f8] sm:$0xff]
    %v6497 = vld [vmem:[#allocation11 + $0x300] sm:$0xff]
    %v6498 = vld [vmem:[#allocation11 + $0x308] sm:$0xff]
    %v6499 = vld [vmem:[#allocation11 + $0x310] sm:$0xff]
    %v6500 = vld [vmem:[#allocation11 + $0x318] sm:$0xff]
    %v6501 = vld [vmem:[#allocation11 + $0x320] sm:$0xff]
    %v6502 = vld [vmem:[#allocation11 + $0x328] sm:$0xff]
    %v6503 = vld [vmem:[#allocation11 + $0x330] sm:$0xff]
    %v6504 = vld [vmem:[#allocation11 + $0x338] sm:$0xff]
    %v6505 = vld [vmem:[#allocation11 + $0x340] sm:$0xff]
    %v6506 = vld [vmem:[#allocation11 + $0x348] sm:$0xff]
    %v6507 = vld [vmem:[#allocation11 + $0x350] sm:$0xff]
    %v6508 = vld [vmem:[#allocation11 + $0x358] sm:$0xff]
    %v6509 = vld [vmem:[#allocation11 + $0x360] sm:$0xff]
    %v6510 = vld [vmem:[#allocation11 + $0x368] sm:$0xff]
    %v6511 = vld [vmem:[#allocation11 + $0x370] sm:$0xff]
    %v6512 = vld [vmem:[#allocation11 + $0x378] sm:$0xff]
    %v6513 = vld [vmem:[#allocation11 + $0x380] sm:$0xff]
    %v6514 = vld [vmem:[#allocation11 + $0x388] sm:$0xff]
    %v6515 = vld [vmem:[#allocation11 + $0x390] sm:$0xff]
    %v6516 = vld [vmem:[#allocation11 + $0x398] sm:$0xff]
    %v6517 = vld [vmem:[#allocation11 + $0x3a0] sm:$0xff]
    %v6518 = vld [vmem:[#allocation11 + $0x3a8] sm:$0xff]
    %v6519 = vld [vmem:[#allocation11 + $0x3b0] sm:$0xff]
    %v6520 = vld [vmem:[#allocation11 + $0x3b8] sm:$0xff]
    %v6521 = vld [vmem:[#allocation11 + $0x3c0] sm:$0xff]
    %v6522 = vld [vmem:[#allocation11 + $0x3c8] sm:$0xff]
    %v6523 = vld [vmem:[#allocation11 + $0x3d0] sm:$0xff]
    %v6524 = vld [vmem:[#allocation11 + $0x3d8] sm:$0xff]
    %v6525 = vld [vmem:[#allocation11 + $0x3e0] sm:$0xff]
    %v6526 = vld [vmem:[#allocation11 + $0x3e8] sm:$0xff]
    %v6527 = vld [vmem:[#allocation11 + $0x3f0] sm:$0xff]
    %v6528 = vld [vmem:[#allocation11 + $0x3f8] sm:$0xff]
    %v6529 = vld [vmem:[#allocation11 + $0x400] sm:$0xff]
    %v6530 = vld [vmem:[#allocation11 + $0x408] sm:$0xff]
    %v6531 = vld [vmem:[#allocation11 + $0x410] sm:$0xff]
    %v6532 = vld [vmem:[#allocation11 + $0x418] sm:$0xff]
    %v6533 = vld [vmem:[#allocation11 + $0x420] sm:$0xff]
    %v6534 = vld [vmem:[#allocation11 + $0x428] sm:$0xff]
    %v6535 = vld [vmem:[#allocation11 + $0x430] sm:$0xff]
    %v6536 = vld [vmem:[#allocation11 + $0x438] sm:$0xff]
    %v6537 = vld [vmem:[#allocation11 + $0x440] sm:$0xff]
    %v6538 = vld [vmem:[#allocation11 + $0x448] sm:$0xff]
    %v6539 = vld [vmem:[#allocation11 + $0x450] sm:$0xff]
    %v6540 = vld [vmem:[#allocation11 + $0x458] sm:$0xff]
    %v6541 = vld [vmem:[#allocation11 + $0x460] sm:$0xff]
    %v6542 = vld [vmem:[#allocation11 + $0x468] sm:$0xff]
    %v6543 = vld [vmem:[#allocation11 + $0x470] sm:$0xff]
    %v6544 = vld [vmem:[#allocation11 + $0x478] sm:$0xff]
    %v6545 = vld [vmem:[%s10] sm:$0x3]
    %v6547 = vlaneseq
    %v6548 = vshrl.u32 %v6547, 7
    %v6549 = vsub.s32 0, %v6548
    %v6550 = vrot.slane %v6545, %v6549
    %v6551 = vlaneseq
    %v6552 = vshrl.u32 %v6551, 7
    %v6553 = vsub.s32 1, %v6552
    %v6554 = vrot.slane %v6545, %v6553
    %v6701 = vunpack.c.l.b16 %v6401
    %v6702 = vunpack.c.h.b16 %v6401
    %v6703 = vunpack.c.l.b16 %v6402
    %v6704 = vunpack.c.h.b16 %v6402
    %v6705 = vunpack.c.l.b16 %v6403
    %v6706 = vunpack.c.h.b16 %v6403
    %v6707 = vunpack.c.l.b16 %v6404
    %v6708 = vunpack.c.h.b16 %v6404
    %v6709 = vunpack.c.l.b16 %v6405
    %v6710 = vunpack.c.h.b16 %v6405
    %v6711 = vunpack.c.l.b16 %v6406
    %v6712 = vunpack.c.h.b16 %v6406
    %v6713 = vunpack.c.l.b16 %v6407
    %v6714 = vunpack.c.h.b16 %v6407
    %v6715 = vunpack.c.l.b16 %v6408
    %v6716 = vunpack.c.h.b16 %v6408
    %v6717 = vunpack.c.l.b16 %v6409
    %v6718 = vunpack.c.h.b16 %v6409
    %v6719 = vunpack.c.l.b16 %v6410
    %v6720 = vunpack.c.h.b16 %v6410
    %v6721 = vunpack.c.l.b16 %v6411
    %v6722 = vunpack.c.h.b16 %v6411
    %v6723 = vunpack.c.l.b16 %v6412
    %v6724 = vunpack.c.h.b16 %v6412
    %v6725 = vunpack.c.l.b16 %v6413
    %v6726 = vunpack.c.h.b16 %v6413
    %v6727 = vunpack.c.l.b16 %v6414
    %v6728 = vunpack.c.h.b16 %v6414
    %v6729 = vunpack.c.l.b16 %v6415
    %v6730 = vunpack.c.h.b16 %v6415
    %v6731 = vunpack.c.l.b16 %v6416
    %v6732 = vunpack.c.h.b16 %v6416
    %v6733 = vunpack.c.l.b16 %v6417
    %v6734 = vunpack.c.h.b16 %v6417
    %v6735 = vunpack.c.l.b16 %v6418
    %v6736 = vunpack.c.h.b16 %v6418
    %v6737 = vunpack.c.l.b16 %v6419
    %v6738 = vunpack.c.h.b16 %v6419
    %v6739 = vunpack.c.l.b16 %v6420
    %v6740 = vunpack.c.h.b16 %v6420
    %v6741 = vunpack.c.l.b16 %v6421
    %v6742 = vunpack.c.h.b16 %v6421
    %v6743 = vunpack.c.l.b16 %v6422
    %v6744 = vunpack.c.h.b16 %v6422
    %v6745 = vunpack.c.l.b16 %v6423
    %v6746 = vunpack.c.h.b16 %v6423
    %v6747 = vunpack.c.l.b16 %v6424
    %v6748 = vunpack.c.h.b16 %v6424
    %v6749 = vunpack.c.l.b16 %v6425
    %v6750 = vunpack.c.h.b16 %v6425
    %v6751 = vunpack.c.l.b16 %v6426
    %v6752 = vunpack.c.h.b16 %v6426
    %v6753 = vunpack.c.l.b16 %v6427
    %v6754 = vunpack.c.h.b16 %v6427
    %v6755 = vunpack.c.l.b16 %v6428
    %v6756 = vunpack.c.h.b16 %v6428
    %v6757 = vunpack.c.l.b16 %v6429
    %v6758 = vunpack.c.h.b16 %v6429
    %v6759 = vunpack.c.l.b16 %v6430
    %v6760 = vunpack.c.h.b16 %v6430
    %v6761 = vunpack.c.l.b16 %v6431
    %v6762 = vunpack.c.h.b16 %v6431
    %v6763 = vunpack.c.l.b16 %v6432
    %v6764 = vunpack.c.h.b16 %v6432
    %v6765 = vunpack.c.l.b16 %v6433
    %v6766 = vunpack.c.h.b16 %v6433
    %v6767 = vunpack.c.l.b16 %v6434
    %v6768 = vunpack.c.h.b16 %v6434
    %v6769 = vunpack.c.l.b16 %v6435
    %v6770 = vunpack.c.h.b16 %v6435
    %v6771 = vunpack.c.l.b16 %v6436
    %v6772 = vunpack.c.h.b16 %v6436
    %v6773 = vunpack.c.l.b16 %v6437
    %v6774 = vunpack.c.h.b16 %v6437
    %v6775 = vunpack.c.l.b16 %v6438
    %v6776 = vunpack.c.h.b16 %v6438
    %v6777 = vunpack.c.l.b16 %v6439
    %v6778 = vunpack.c.h.b16 %v6439
    %v6779 = vunpack.c.l.b16 %v6440
    %v6780 = vunpack.c.h.b16 %v6440
    %v6781 = vunpack.c.l.b16 %v6441
    %v6782 = vunpack.c.h.b16 %v6441
    %v6783 = vunpack.c.l.b16 %v6442
    %v6784 = vunpack.c.h.b16 %v6442
    %v6785 = vunpack.c.l.b16 %v6443
    %v6786 = vunpack.c.h.b16 %v6443
    %v6787 = vunpack.c.l.b16 %v6444
    %v6788 = vunpack.c.h.b16 %v6444
    %v6789 = vunpack.c.l.b16 %v6445
    %v6790 = vunpack.c.h.b16 %v6445
    %v6791 = vunpack.c.l.b16 %v6446
    %v6792 = vunpack.c.h.b16 %v6446
    %v6793 = vunpack.c.l.b16 %v6447
    %v6794 = vunpack.c.h.b16 %v6447
    %v6795 = vunpack.c.l.b16 %v6448
    %v6796 = vunpack.c.h.b16 %v6448
    %v6797 = vunpack.c.l.b16 %v6449
    %v6798 = vunpack.c.h.b16 %v6449
    %v6799 = vunpack.c.l.b16 %v6450
    %v6800 = vunpack.c.h.b16 %v6450
    %v6801 = vunpack.c.l.b16 %v6451
    %v6802 = vunpack.c.h.b16 %v6451
    %v6803 = vunpack.c.l.b16 %v6452
    %v6804 = vunpack.c.h.b16 %v6452
    %v6805 = vunpack.c.l.b16 %v6453
    %v6806 = vunpack.c.h.b16 %v6453
    %v6807 = vunpack.c.l.b16 %v6454
    %v6808 = vunpack.c.h.b16 %v6454
    %v6809 = vunpack.c.l.b16 %v6455
    %v6810 = vunpack.c.h.b16 %v6455
    %v6811 = vunpack.c.l.b16 %v6456
    %v6812 = vunpack.c.h.b16 %v6456
    %v6813 = vunpack.c.l.b16 %v6457
    %v6814 = vunpack.c.h.b16 %v6457
    %v6815 = vunpack.c.l.b16 %v6458
    %v6816 = vunpack.c.h.b16 %v6458
    %v6817 = vunpack.c.l.b16 %v6459
    %v6818 = vunpack.c.h.b16 %v6459
    %v6819 = vunpack.c.l.b16 %v6460
    %v6820 = vunpack.c.h.b16 %v6460
    %v6821 = vunpack.c.l.b16 %v6461
    %v6822 = vunpack.c.h.b16 %v6461
    %v6823 = vunpack.c.l.b16 %v6462
    %v6824 = vunpack.c.h.b16 %v6462
    %v6825 = vunpack.c.l.b16 %v6463
    %v6826 = vunpack.c.h.b16 %v6463
    %v6827 = vunpack.c.l.b16 %v6464
    %v6828 = vunpack.c.h.b16 %v6464
    %v6829 = vunpack.c.l.b16 %v6465
    %v6830 = vunpack.c.h.b16 %v6465
    %v6831 = vunpack.c.l.b16 %v6466
    %v6832 = vunpack.c.h.b16 %v6466
    %v6833 = vunpack.c.l.b16 %v6467
    %v6834 = vunpack.c.h.b16 %v6467
    %v6835 = vunpack.c.l.b16 %v6468
    %v6836 = vunpack.c.h.b16 %v6468
    %v6837 = vunpack.c.l.b16 %v6469
    %v6838 = vunpack.c.h.b16 %v6469
    %v6839 = vunpack.c.l.b16 %v6470
    %v6840 = vunpack.c.h.b16 %v6470
    %v6841 = vunpack.c.l.b16 %v6471
    %v6842 = vunpack.c.h.b16 %v6471
    %v6843 = vunpack.c.l.b16 %v6472
    %v6844 = vunpack.c.h.b16 %v6472
    %v6845 = vunpack.c.l.b16 %v6473
    %v6846 = vunpack.c.h.b16 %v6473
    %v6847 = vunpack.c.l.b16 %v6474
    %v6848 = vunpack.c.h.b16 %v6474
    %v6849 = vunpack.c.l.b16 %v6475
    %v6850 = vunpack.c.h.b16 %v6475
    %v6851 = vunpack.c.l.b16 %v6476
    %v6852 = vunpack.c.h.b16 %v6476
    %v6853 = vunpack.c.l.b16 %v6477
    %v6854 = vunpack.c.h.b16 %v6477
    %v6855 = vunpack.c.l.b16 %v6478
    %v6856 = vunpack.c.h.b16 %v6478
    %v6857 = vunpack.c.l.b16 %v6479
    %v6858 = vunpack.c.h.b16 %v6479
    %v6859 = vunpack.c.l.b16 %v6480
    %v6860 = vunpack.c.h.b16 %v6480
    %v6861 = vunpack.c.l.b16 %v6481
    %v6862 = vunpack.c.h.b16 %v6481
    %v6863 = vunpack.c.l.b16 %v6482
    %v6864 = vunpack.c.h.b16 %v6482
    %v6865 = vunpack.c.l.b16 %v6483
    %v6866 = vunpack.c.h.b16 %v6483
    %v6867 = vunpack.c.l.b16 %v6484
    %v6868 = vunpack.c.h.b16 %v6484
    %v6869 = vunpack.c.l.b16 %v6485
    %v6870 = vunpack.c.h.b16 %v6485
    %v6871 = vunpack.c.l.b16 %v6486
    %v6872 = vunpack.c.h.b16 %v6486
    %v6873 = vunpack.c.l.b16 %v6487
    %v6874 = vunpack.c.h.b16 %v6487
    %v6875 = vunpack.c.l.b16 %v6488
    %v6876 = vunpack.c.h.b16 %v6488
    %v6877 = vunpack.c.l.b16 %v6489
    %v6878 = vunpack.c.h.b16 %v6489
    %v6879 = vunpack.c.l.b16 %v6490
    %v6880 = vunpack.c.h.b16 %v6490
    %v6881 = vunpack.c.l.b16 %v6491
    %v6882 = vunpack.c.h.b16 %v6491
    %v6883 = vunpack.c.l.b16 %v6492
    %v6884 = vunpack.c.h.b16 %v6492
    %v6885 = vunpack.c.l.b16 %v6493
    %v6886 = vunpack.c.h.b16 %v6493
    %v6887 = vunpack.c.l.b16 %v6494
    %v6888 = vunpack.c.h.b16 %v6494
    %v6889 = vunpack.c.l.b16 %v6495
    %v6890 = vunpack.c.h.b16 %v6495
    %v6891 = vunpack.c.l.b16 %v6496
    %v6892 = vunpack.c.h.b16 %v6496
    %v6893 = vunpack.c.l.b16 %v6497
    %v6894 = vunpack.c.h.b16 %v6497
    %v6895 = vunpack.c.l.b16 %v6498
    %v6896 = vunpack.c.h.b16 %v6498
    %v6897 = vunpack.c.l.b16 %v6499
    %v6898 = vunpack.c.h.b16 %v6499
    %v6899 = vunpack.c.l.b16 %v6500
    %v6900 = vunpack.c.h.b16 %v6500
    %v6901 = vunpack.c.l.b16 %v6501
    %v6902 = vunpack.c.h.b16 %v6501
    %v6903 = vunpack.c.l.b16 %v6502
    %v6904 = vunpack.c.h.b16 %v6502
    %v6905 = vunpack.c.l.b16 %v6503
    %v6906 = vunpack.c.h.b16 %v6503
    %v6907 = vunpack.c.l.b16 %v6504
    %v6908 = vunpack.c.h.b16 %v6504
    %v6909 = vunpack.c.l.b16 %v6505
    %v6910 = vunpack.c.h.b16 %v6505
    %v6911 = vunpack.c.l.b16 %v6506
    %v6912 = vunpack.c.h.b16 %v6506
    %v6913 = vunpack.c.l.b16 %v6507
    %v6914 = vunpack.c.h.b16 %v6507
    %v6915 = vunpack.c.l.b16 %v6508
    %v6916 = vunpack.c.h.b16 %v6508
    %v6917 = vunpack.c.l.b16 %v6509
    %v6918 = vunpack.c.h.b16 %v6509
    %v6919 = vunpack.c.l.b16 %v6510
    %v6920 = vunpack.c.h.b16 %v6510
    %v6921 = vunpack.c.l.b16 %v6511
    %v6922 = vunpack.c.h.b16 %v6511
    %v6923 = vunpack.c.l.b16 %v6512
    %v6924 = vunpack.c.h.b16 %v6512
    %v6925 = vunpack.c.l.b16 %v6513
    %v6926 = vunpack.c.h.b16 %v6513
    %v6927 = vunpack.c.l.b16 %v6514
    %v6928 = vunpack.c.h.b16 %v6514
    %v6929 = vunpack.c.l.b16 %v6515
    %v6930 = vunpack.c.h.b16 %v6515
    %v6931 = vunpack.c.l.b16 %v6516
    %v6932 = vunpack.c.h.b16 %v6516
    %v6933 = vunpack.c.l.b16 %v6517
    %v6934 = vunpack.c.h.b16 %v6517
    %v6935 = vunpack.c.l.b16 %v6518
    %v6936 = vunpack.c.h.b16 %v6518
    %v6937 = vunpack.c.l.b16 %v6519
    %v6938 = vunpack.c.h.b16 %v6519
    %v6939 = vunpack.c.l.b16 %v6520
    %v6940 = vunpack.c.h.b16 %v6520
    %v6941 = vunpack.c.l.b16 %v6521
    %v6942 = vunpack.c.h.b16 %v6521
    %v6943 = vunpack.c.l.b16 %v6522
    %v6944 = vunpack.c.h.b16 %v6522
    %v6945 = vunpack.c.l.b16 %v6523
    %v6946 = vunpack.c.h.b16 %v6523
    %v6947 = vunpack.c.l.b16 %v6524
    %v6948 = vunpack.c.h.b16 %v6524
    %v6949 = vunpack.c.l.b16 %v6525
    %v6950 = vunpack.c.h.b16 %v6525
    %v6951 = vunpack.c.l.b16 %v6526
    %v6952 = vunpack.c.h.b16 %v6526
    %v6953 = vunpack.c.l.b16 %v6527
    %v6954 = vunpack.c.h.b16 %v6527
    %v6955 = vunpack.c.l.b16 %v6528
    %v6956 = vunpack.c.h.b16 %v6528
    %v6957 = vunpack.c.l.b16 %v6529
    %v6958 = vunpack.c.h.b16 %v6529
    %v6959 = vunpack.c.l.b16 %v6530
    %v6960 = vunpack.c.h.b16 %v6530
    %v6961 = vunpack.c.l.b16 %v6531
    %v6962 = vunpack.c.h.b16 %v6531
    %v6963 = vunpack.c.l.b16 %v6532
    %v6964 = vunpack.c.h.b16 %v6532
    %v6965 = vunpack.c.l.b16 %v6533
    %v6966 = vunpack.c.h.b16 %v6533
    %v6967 = vunpack.c.l.b16 %v6534
    %v6968 = vunpack.c.h.b16 %v6534
    %v6969 = vunpack.c.l.b16 %v6535
    %v6970 = vunpack.c.h.b16 %v6535
    %v6971 = vunpack.c.l.b16 %v6536
    %v6972 = vunpack.c.h.b16 %v6536
    %v6973 = vunpack.c.l.b16 %v6537
    %v6974 = vunpack.c.h.b16 %v6537
    %v6975 = vunpack.c.l.b16 %v6538
    %v6976 = vunpack.c.h.b16 %v6538
    %v6977 = vunpack.c.l.b16 %v6539
    %v6978 = vunpack.c.h.b16 %v6539
    %v6979 = vunpack.c.l.b16 %v6540
    %v6980 = vunpack.c.h.b16 %v6540
    %v6981 = vunpack.c.l.b16 %v6541
    %v6982 = vunpack.c.h.b16 %v6541
    %v6983 = vunpack.c.l.b16 %v6542
    %v6984 = vunpack.c.h.b16 %v6542
    %v6985 = vunpack.c.l.b16 %v6543
    %v6986 = vunpack.c.h.b16 %v6543
    %v6987 = vunpack.c.l.b16 %v6544
    %v6988 = vunpack.c.h.b16 %v6544
    %v6989 = vpack.c.b16 %v6703, %v6701
    %v6990 = vpack.c.b16 %v6704, %v6702
    %v6991 = vpack.c.b16 %v6707, %v6705
    %v6992 = vpack.c.b16 %v6708, %v6706
    %v6993 = vpack.c.b16 %v6711, %v6709
    %v6994 = vpack.c.b16 %v6712, %v6710
    %v6995 = vpack.c.b16 %v6715, %v6713
    %v6996 = vpack.c.b16 %v6716, %v6714
    %v6997 = vpack.c.b16 %v6719, %v6717
    %v6998 = vpack.c.b16 %v6720, %v6718
    %v6999 = vpack.c.b16 %v6723, %v6721
    %v7000 = vpack.c.b16 %v6724, %v6722
    %v7001 = vpack.c.b16 %v6727, %v6725
    %v7002 = vpack.c.b16 %v6728, %v6726
    %v7003 = vpack.c.b16 %v6731, %v6729
    %v7004 = vpack.c.b16 %v6732, %v6730
    %v7005 = vpack.c.b16 %v6735, %v6733
    %v7006 = vpack.c.b16 %v6736, %v6734
    %v7007 = vpack.c.b16 %v6739, %v6737
    %v7008 = vpack.c.b16 %v6740, %v6738
    %v7009 = vpack.c.b16 %v6743, %v6741
    %v7010 = vpack.c.b16 %v6744, %v6742
    %v7011 = vpack.c.b16 %v6747, %v6745
    %v7012 = vpack.c.b16 %v6748, %v6746
    %v7013 = vpack.c.b16 %v6751, %v6749
    %v7014 = vpack.c.b16 %v6752, %v6750
    %v7015 = vpack.c.b16 %v6755, %v6753
    %v7016 = vpack.c.b16 %v6756, %v6754
    %v7017 = vpack.c.b16 %v6759, %v6757
    %v7018 = vpack.c.b16 %v6760, %v6758
    %v7019 = vpack.c.b16 %v6763, %v6761
    %v7020 = vpack.c.b16 %v6764, %v6762
    %v7021 = vpack.c.b16 %v6767, %v6765
    %v7022 = vpack.c.b16 %v6768, %v6766
    %v7023 = vpack.c.b16 %v6771, %v6769
    %v7024 = vpack.c.b16 %v6772, %v6770
    %v7025 = vpack.c.b16 %v6775, %v6773
    %v7026 = vpack.c.b16 %v6776, %v6774
    %v7027 = vpack.c.b16 %v6779, %v6777
    %v7028 = vpack.c.b16 %v6780, %v6778
    %v7029 = vpack.c.b16 %v6783, %v6781
    %v7030 = vpack.c.b16 %v6784, %v6782
    %v7031 = vpack.c.b16 %v6787, %v6785
    %v7032 = vpack.c.b16 %v6788, %v6786
    %v7033 = vpack.c.b16 %v6791, %v6789
    %v7034 = vpack.c.b16 %v6792, %v6790
    %v7035 = vpack.c.b16 %v6795, %v6793
    %v7036 = vpack.c.b16 %v6796, %v6794
    %v7037 = vpack.c.b16 %v6799, %v6797
    %v7038 = vpack.c.b16 %v6800, %v6798
    %v7039 = vpack.c.b16 %v6803, %v6801
    %v7040 = vpack.c.b16 %v6804, %v6802
    %v7041 = vpack.c.b16 %v6807, %v6805
    %v7042 = vpack.c.b16 %v6808, %v6806
    %v7043 = vpack.c.b16 %v6811, %v6809
    %v7044 = vpack.c.b16 %v6812, %v6810
    %v7045 = vpack.c.b16 %v6815, %v6813
    %v7046 = vpack.c.b16 %v6816, %v6814
    %v7047 = vpack.c.b16 %v6819, %v6817
    %v7048 = vpack.c.b16 %v6820, %v6818
    %v7049 = vpack.c.b16 %v6823, %v6821
    %v7050 = vpack.c.b16 %v6824, %v6822
    %v7051 = vpack.c.b16 %v6827, %v6825
    %v7052 = vpack.c.b16 %v6828, %v6826
    %v7053 = vpack.c.b16 %v6831, %v6829
    %v7054 = vpack.c.b16 %v6832, %v6830
    %v7055 = vpack.c.b16 %v6835, %v6833
    %v7056 = vpack.c.b16 %v6836, %v6834
    %v7057 = vpack.c.b16 %v6839, %v6837
    %v7058 = vpack.c.b16 %v6840, %v6838
    %v7059 = vpack.c.b16 %v6843, %v6841
    %v7060 = vpack.c.b16 %v6844, %v6842
    %v7061 = vpack.c.b16 %v6847, %v6845
    %v7062 = vpack.c.b16 %v6848, %v6846
    %v7063 = vpack.c.b16 %v6851, %v6849
    %v7064 = vpack.c.b16 %v6852, %v6850
    %v7065 = vpack.c.b16 %v6855, %v6853
    %v7066 = vpack.c.b16 %v6856, %v6854
    %v7067 = vpack.c.b16 %v6859, %v6857
    %v7068 = vpack.c.b16 %v6860, %v6858
    %v7069 = vpack.c.b16 %v6863, %v6861
    %v7070 = vpack.c.b16 %v6864, %v6862
    %v7071 = vpack.c.b16 %v6867, %v6865
    %v7072 = vpack.c.b16 %v6868, %v6866
    %v7073 = vpack.c.b16 %v6871, %v6869
    %v7074 = vpack.c.b16 %v6872, %v6870
    %v7075 = vpack.c.b16 %v6875, %v6873
    %v7076 = vpack.c.b16 %v6876, %v6874
    %v7077 = vpack.c.b16 %v6879, %v6877
    %v7078 = vpack.c.b16 %v6880, %v6878
    %v7079 = vpack.c.b16 %v6883, %v6881
    %v7080 = vpack.c.b16 %v6884, %v6882
    %v7081 = vpack.c.b16 %v6887, %v6885
    %v7082 = vpack.c.b16 %v6888, %v6886
    %v7083 = vpack.c.b16 %v6891, %v6889
    %v7084 = vpack.c.b16 %v6892, %v6890
    %v7085 = vpack.c.b16 %v6895, %v6893
    %v7086 = vpack.c.b16 %v6896, %v6894
    %v7087 = vpack.c.b16 %v6899, %v6897
    %v7088 = vpack.c.b16 %v6900, %v6898
    %v7089 = vpack.c.b16 %v6903, %v6901
    %v7090 = vpack.c.b16 %v6904, %v6902
    %v7091 = vpack.c.b16 %v6907, %v6905
    %v7092 = vpack.c.b16 %v6908, %v6906
    %v7093 = vpack.c.b16 %v6911, %v6909
    %v7094 = vpack.c.b16 %v6912, %v6910
    %v7095 = vpack.c.b16 %v6915, %v6913
    %v7096 = vpack.c.b16 %v6916, %v6914
    %v7097 = vpack.c.b16 %v6919, %v6917
    %v7098 = vpack.c.b16 %v6920, %v6918
    %v7099 = vpack.c.b16 %v6923, %v6921
    %v7100 = vpack.c.b16 %v6924, %v6922
    %v7101 = vpack.c.b16 %v6927, %v6925
    %v7102 = vpack.c.b16 %v6928, %v6926
    %v7103 = vpack.c.b16 %v6931, %v6929
    %v7104 = vpack.c.b16 %v6932, %v6930
    %v7105 = vpack.c.b16 %v6935, %v6933
    %v7106 = vpack.c.b16 %v6936, %v6934
    %v7107 = vpack.c.b16 %v6939, %v6937
    %v7108 = vpack.c.b16 %v6940, %v6938
    %v7109 = vpack.c.b16 %v6943, %v6941
    %v7110 = vpack.c.b16 %v6944, %v6942
    %v7111 = vpack.c.b16 %v6947, %v6945
    %v7112 = vpack.c.b16 %v6948, %v6946
    %v7113 = vpack.c.b16 %v6951, %v6949
    %v7114 = vpack.c.b16 %v6952, %v6950
    %v7115 = vpack.c.b16 %v6955, %v6953
    %v7116 = vpack.c.b16 %v6956, %v6954
    %v7117 = vpack.c.b16 %v6959, %v6957
    %v7118 = vpack.c.b16 %v6960, %v6958
    %v7119 = vpack.c.b16 %v6963, %v6961
    %v7120 = vpack.c.b16 %v6964, %v6962
    %v7121 = vpack.c.b16 %v6967, %v6965
    %v7122 = vpack.c.b16 %v6968, %v6966
    %v7123 = vpack.c.b16 %v6971, %v6969
    %v7124 = vpack.c.b16 %v6972, %v6970
    %v7125 = vpack.c.b16 %v6975, %v6973
    %v7126 = vpack.c.b16 %v6976, %v6974
    %v7127 = vpack.c.b16 %v6979, %v6977
    %v7128 = vpack.c.b16 %v6980, %v6978
    %v7129 = vpack.c.b16 %v6983, %v6981
    %v7130 = vpack.c.b16 %v6984, %v6982
    %v7131 = vpack.c.b16 %v6987, %v6985
    %v7132 = vpack.c.b16 %v6988, %v6986
    %7277 = vmatprep.subr.bf16.mxu0 %v6990
    %7278 = vmatpush1.bf16.msra.mxu0 %v6989
    %7279 = vmatprep.subr.bf16.mxu0 %v6992
    %7280 = vmatpush1.bf16.msra.mxu0 %v6991
    %7281 = vmatprep.subr.bf16.mxu0 %v6994
    %7282 = vmatpush1.bf16.msra.mxu0 %v6993
    %7283 = vmatprep.subr.bf16.mxu0 %v6996
    %7284 = vmatpush1.bf16.msra.mxu0 %v6995
    %7285 = vmatprep.subr.bf16.mxu0 %v6998
    %7286 = vmatpush1.bf16.msra.mxu0 %v6997
    %7287 = vmatprep.subr.bf16.mxu0 %v7000
    %7288 = vmatpush1.bf16.msra.mxu0 %v6999
    %7289 = vmatprep.subr.bf16.mxu0 %v7002
    %7290 = vmatpush1.bf16.msra.mxu0 %v7001
    %7291 = vmatprep.subr.bf16.mxu0 %v7004
    %7292 = vmatpush1.bf16.msra.mxu0 %v7003
    %7293 = vmatprep.subr.bf16.mxu0 %v7006
    %7294 = vmatpush1.bf16.msra.mxu0 %v7005
    %7295 = vmatprep.subr.bf16.mxu0 %v7008
    %7296 = vmatpush1.bf16.msra.mxu0 %v7007
    %7297 = vmatprep.subr.bf16.mxu0 %v7010
    %7298 = vmatpush1.bf16.msra.mxu0 %v7009
    %7299 = vmatprep.subr.bf16.mxu0 %v7012
    %7300 = vmatpush1.bf16.msra.mxu0 %v7011
    %7301 = vmatprep.subr.bf16.mxu0 %v7014
    %7302 = vmatpush1.bf16.msra.mxu0 %v7013
    %7303 = vmatprep.subr.bf16.mxu0 %v7016
    %7304 = vmatpush1.bf16.msra.mxu0 %v7015
    %7305 = vmatprep.subr.bf16.mxu0 %v7018
    %7306 = vmatpush1.bf16.msra.mxu0 %v7017
    %7307 = vmatprep.subr.bf16.mxu0 %v7020
    %7308 = vmatpush1.bf16.msra.mxu0 %v7019
    %7309 = vmatprep.mubr.bf16.mxu0 %v6330
    %7310 = vmatmul.mubr.bf16.gmra.mrb[0].mxu0 %v6329
    %v7311 = vpop.f32.mrb[0].mxu0
    %v7312 = vadd.f32 %v6550, %v7311
    %v7313 = vpop.f32.mrb[0].mxu0
    %v7314 = vadd.f32 %v6554, %v7313
    %v7315 = vpop.f32.mrb[0].mxu0
    %v7316 = vadd.f32 %v6550, %v7315
    %v7317 = vpop.f32.mrb[0].mxu0
    %v7318 = vadd.f32 %v6554, %v7317
    %7319 = vmatprep.mubr.bf16.mxu0 %v6339
    %7320 = vmatmul.mubr.bf16.gmra.mrb[0].mxu0 %v6338
    %v7321 = vpop.f32.mrb[0].mxu0
    %v7322 = vadd.f32 %v6550, %v7321
    %v7323 = vpop.f32.mrb[0].mxu0
    %v7324 = vadd.f32 %v6554, %v7323
    %v7325 = vpop.f32.mrb[0].mxu0
    %v7326 = vadd.f32 %v6550, %v7325
    %v7327 = vpop.f32.mrb[0].mxu0
    %v7328 = vadd.f32 %v6554, %v7327
    %7329 = vmatprep.mubr.bf16.mxu0 %v6348
    %7330 = vmatmul.mubr.bf16.gmra.mrb[0].mxu0 %v6347
    %v7331 = vpop.f32.mrb[0].mxu0
    %v7332 = vadd.f32 %v6550, %v7331
    %v7333 = vpop.f32.mrb[0].mxu0
    %v7334 = vadd.f32 %v6554, %v7333
    %v7335 = vpop.f32.mrb[0].mxu0
    %v7336 = vadd.f32 %v6550, %v7335
    %v7337 = vpop.f32.mrb[0].mxu0
    %v7338 = vadd.f32 %v6554, %v7337
    %7339 = vmatprep.mubr.bf16.mxu0 %v6357
    %7340 = vmatmul.mubr.bf16.gmra.mrb[0].mxu0 %v6356
    %v7341 = vpop.f32.mrb[0].mxu0
    %v7342 = vadd.f32 %v6550, %v7341
    %v7343 = vpop.f32.mrb[0].mxu0
    %v7344 = vadd.f32 %v6554, %v7343
    %v7345 = vpop.f32.mrb[0].mxu0
    %v7346 = vadd.f32 %v6550, %v7345
    %v7347 = vpop.f32.mrb[0].mxu0
    %v7348 = vadd.f32 %v6554, %v7347
    %7349 = vmatprep.mubr.bf16.mxu0 %v6366
    %7350 = vmatmul.mubr.bf16.gmra.mrb[0].mxu0 %v6365
    %v7351 = vpop.f32.mrb[0].mxu0
    %v7352 = vadd.f32 %v6550, %v7351
    %v7353 = vpop.f32.mrb[0].mxu0
    %v7354 = vadd.f32 %v6554, %v7353
    %v7355 = vpop.f32.mrb[0].mxu0
    %v7356 = vadd.f32 %v6550, %v7355
    %v7357 = vpop.f32.mrb[0].mxu0
    %v7358 = vadd.f32 %v6554, %v7357
    %7359 = vmatprep.mubr.bf16.mxu0 %v6375
    %7360 = vmatmul.mubr.bf16.gmra.mrb[0].mxu0 %v6374
    %v7361 = vpop.f32.mrb[0].mxu0
    %v7362 = vadd.f32 %v6550, %v7361
    %v7363 = vpop.f32.mrb[0].mxu0
    %v7364 = vadd.f32 %v6554, %v7363
    %v7365 = vpop.f32.mrb[0].mxu0
    %v7366 = vadd.f32 %v6550, %v7365
    %v7367 = vpop.f32.mrb[0].mxu0
    %v7368 = vadd.f32 %v6554, %v7367
    %7369 = vmatprep.mubr.bf16.mxu0 %v6384
    %7370 = vmatmul.mubr.bf16.gmra.mrb[0].mxu0 %v6383
    %v7371 = vpop.f32.mrb[0].mxu0
    %v7372 = vadd.f32 %v6550, %v7371
    %v7373 = vpop.f32.mrb[0].mxu0
    %v7374 = vadd.f32 %v6554, %v7373
    %v7375 = vpop.f32.mrb[0].mxu0
    %v7376 = vadd.f32 %v6550, %v7375
    %v7377 = vpop.f32.mrb[0].mxu0
    %v7378 = vadd.f32 %v6554, %v7377
    %7379 = vmatprep.mubr.bf16.mxu0 %v6393
    %7380 = vmatmul.mubr.bf16.gmra.mrb[0].mxu0 %v6392
    %v7381 = vpop.f32.mrb[0].mxu0
    %v7382 = vadd.f32 %v6550, %v7381
    %v7383 = vpop.f32.mrb[0].mxu0
    %v7384 = vadd.f32 %v6554, %v7383
    %v7385 = vpop.f32.mrb[0].mxu0
    %v7386 = vadd.f32 %v6550, %v7385
    %v7387 = vpop.f32.mrb[0].mxu0
    %v7388 = vadd.f32 %v6554, %v7387
    %7389 = vdwg.mxu0
    %7390 = vmatprep.subr.bf16.mxu0 %v7022
    %7391 = vmatpush1.bf16.msra.mxu0 %v7021
    %7392 = vmatprep.subr.bf16.mxu0 %v7024
    %7393 = vmatpush1.bf16.msra.mxu0 %v7023
    %7394 = vmatprep.subr.bf16.mxu0 %v7026
    %7395 = vmatpush1.bf16.msra.mxu0 %v7025
    %7396 = vmatprep.subr.bf16.mxu0 %v7028
    %7397 = vmatpush1.bf16.msra.mxu0 %v7027
    %7398 = vmatprep.subr.bf16.mxu0 %v7030
    %7399 = vmatpush1.bf16.msra.mxu0 %v7029
    %7400 = vmatprep.subr.bf16.mxu0 %v7032
    %7401 = vmatpush1.bf16.msra.mxu0 %v7031
    %7402 = vmatprep.subr.bf16.mxu0 %v7034
    %7403 = vmatpush1.bf16.msra.mxu0 %v7033
    %7404 = vmatprep.subr.bf16.mxu0 %v7036
    %7405 = vmatpush1.bf16.msra.mxu0 %v7035
    %7406 = vmatprep.subr.bf16.mxu0 %v7038
    %7407 = vmatpush1.bf16.msra.mxu0 %v7037
    %7408 = vmatprep.subr.bf16.mxu0 %v7040
    %7409 = vmatpush1.bf16.msra.mxu0 %v7039
    %7410 = vmatprep.subr.bf16.mxu0 %v7042
    %7411 = vmatpush1.bf16.msra.mxu0 %v7041
    %7412 = vmatprep.subr.bf16.mxu0 %v7044
    %7413 = vmatpush1.bf16.msra.mxu0 %v7043
    %7414 = vmatprep.subr.bf16.mxu0 %v7046
    %7415 = vmatpush1.bf16.msra.mxu0 %v7045
    %7416 = vmatprep.subr.bf16.mxu0 %v7048
    %7417 = vmatpush1.bf16.msra.mxu0 %v7047
    %7418 = vmatprep.subr.bf16.mxu0 %v7050
    %7419 = vmatpush1.bf16.msra.mxu0 %v7049
    %7420 = vmatprep.subr.bf16.mxu0 %v7052
    %7421 = vmatpush1.bf16.msra.mxu0 %v7051
    %7422 = vmatprep.mubr.bf16.mxu0 %v6332
    %7423 = vmatmul.mubr.bf16.gmra.mrb[0].mxu0 %v6331
    %v7424 = vpop.f32.mrb[0].mxu0
    %v7425 = vadd.f32 %v7312, %v7424
    %v7426 = vpop.f32.mrb[0].mxu0
    %v7427 = vadd.f32 %v7314, %v7426
    %v7428 = vpop.f32.mrb[0].mxu0
    %v7429 = vadd.f32 %v7316, %v7428
    %v7430 = vpop.f32.mrb[0].mxu0
    %v7431 = vadd.f32 %v7318, %v7430
    %7432 = vmatprep.mubr.bf16.mxu0 %v6341
    %7433 = vmatmul.mubr.bf16.gmra.mrb[0].mxu0 %v6340
    %v7434 = vpop.f32.mrb[0].mxu0
    %v7435 = vadd.f32 %v7322, %v7434
    %v7436 = vpop.f32.mrb[0].mxu0
    %v7437 = vadd.f32 %v7324, %v7436
    %v7438 = vpop.f32.mrb[0].mxu0
    %v7439 = vadd.f32 %v7326, %v7438
    %v7440 = vpop.f32.mrb[0].mxu0
    %v7441 = vadd.f32 %v7328, %v7440
    %7442 = vmatprep.mubr.bf16.mxu0 %v6350
    %7443 = vmatmul.mubr.bf16.gmra.mrb[0].mxu0 %v6349
    %v7444 = vpop.f32.mrb[0].mxu0
    %v7445 = vadd.f32 %v7332, %v7444
    %v7446 = vpop.f32.mrb[0].mxu0
    %v7447 = vadd.f32 %v7334, %v7446
    %v7448 = vpop.f32.mrb[0].mxu0
    %v7449 = vadd.f32 %v7336, %v7448
    %v7450 = vpop.f32.mrb[0].mxu0
    %v7451 = vadd.f32 %v7338, %v7450
    %7452 = vmatprep.mubr.bf16.mxu0 %v6359
    %7453 = vmatmul.mubr.bf16.gmra.mrb[0].mxu0 %v6358
    %v7454 = vpop.f32.mrb[0].mxu0
    %v7455 = vadd.f32 %v7342, %v7454
    %v7456 = vpop.f32.mrb[0].mxu0
    %v7457 = vadd.f32 %v7344, %v7456
    %v7458 = vpop.f32.mrb[0].mxu0
    %v7459 = vadd.f32 %v7346, %v7458
    %v7460 = vpop.f32.mrb[0].mxu0
    %v7461 = vadd.f32 %v7348, %v7460
    %7462 = vmatprep.mubr.bf16.mxu0 %v6368
    %7463 = vmatmul.mubr.bf16.gmra.mrb[0].mxu0 %v6367
    %v7464 = vpop.f32.mrb[0].mxu0
    %v7465 = vadd.f32 %v7352, %v7464
    %v7466 = vpop.f32.mrb[0].mxu0
    %v7467 = vadd.f32 %v7354, %v7466
    %v7468 = vpop.f32.mrb[0].mxu0
    %v7469 = vadd.f32 %v7356, %v7468
    %v7470 = vpop.f32.mrb[0].mxu0
    %v7471 = vadd.f32 %v7358, %v7470
    %7472 = vmatprep.mubr.bf16.mxu0 %v6377
    %7473 = vmatmul.mubr.bf16.gmra.mrb[0].mxu0 %v6376
    %v7474 = vpop.f32.mrb[0].mxu0
    %v7475 = vadd.f32 %v7362, %v7474
    %v7476 = vpop.f32.mrb[0].mxu0
    %v7477 = vadd.f32 %v7364, %v7476
    %v7478 = vpop.f32.mrb[0].mxu0
    %v7479 = vadd.f32 %v7366, %v7478
    %v7480 = vpop.f32.mrb[0].mxu0
    %v7481 = vadd.f32 %v7368, %v7480
    %7482 = vmatprep.mubr.bf16.mxu0 %v6386
    %7483 = vmatmul.mubr.bf16.gmra.mrb[0].mxu0 %v6385
    %v7484 = vpop.f32.mrb[0].mxu0
    %v7485 = vadd.f32 %v7372, %v7484
    %v7486 = vpop.f32.mrb[0].mxu0
    %v7487 = vadd.f32 %v7374, %v7486
    %v7488 = vpop.f32.mrb[0].mxu0
    %v7489 = vadd.f32 %v7376, %v7488
    %v7490 = vpop.f32.mrb[0].mxu0
    %v7491 = vadd.f32 %v7378, %v7490
    %7492 = vmatprep.mubr.bf16.mxu0 %v6395
    %7493 = vmatmul.mubr.bf16.gmra.mrb[0].mxu0 %v6394
    %v7494 = vpop.f32.mrb[0].mxu0
    %v7495 = vadd.f32 %v7382, %v7494
    %v7496 = vpop.f32.mrb[0].mxu0
    %v7497 = vadd.f32 %v7384, %v7496
    %v7498 = vpop.f32.mrb[0].mxu0
    %v7499 = vadd.f32 %v7386, %v7498
    %v7500 = vpop.f32.mrb[0].mxu0
    %v7501 = vadd.f32 %v7388, %v7500
    %7502 = vdwg.mxu0
    %7503 = vmatprep.subr.bf16.mxu0 %v7054
    %7504 = vmatpush1.bf16.msra.mxu0 %v7053
    %7505 = vmatprep.subr.bf16.mxu0 %v7056
    %7506 = vmatpush1.bf16.msra.mxu0 %v7055
    %7507 = vmatprep.subr.bf16.mxu0 %v7058
    %7508 = vmatpush1.bf16.msra.mxu0 %v7057
    %7509 = vmatprep.subr.bf16.mxu0 %v7060
    %7510 = vmatpush1.bf16.msra.mxu0 %v7059
    %7511 = vmatprep.subr.bf16.mxu0 %v7062
    %7512 = vmatpush1.bf16.msra.mxu0 %v7061
    %7513 = vmatprep.subr.bf16.mxu0 %v7064
    %7514 = vmatpush1.bf16.msra.mxu0 %v7063
    %7515 = vmatprep.subr.bf16.mxu0 %v7066
    %7516 = vmatpush1.bf16.msra.mxu0 %v7065
    %7517 = vmatprep.subr.bf16.mxu0 %v7068
    %7518 = vmatpush1.bf16.msra.mxu0 %v7067
    %7519 = vmatprep.subr.bf16.mxu0 %v7070
    %7520 = vmatpush1.bf16.msra.mxu0 %v7069
    %7521 = vmatprep.subr.bf16.mxu0 %v7072
    %7522 = vmatpush1.bf16.msra.mxu0 %v7071
    %7523 = vmatprep.subr.bf16.mxu0 %v7074
    %7524 = vmatpush1.bf16.msra.mxu0 %v7073
    %7525 = vmatprep.subr.bf16.mxu0 %v7076
    %7526 = vmatpush1.bf16.msra.mxu0 %v7075
    %7527 = vmatprep.subr.bf16.mxu0 %v7078
    %7528 = vmatpush1.bf16.msra.mxu0 %v7077
    %7529 = vmatprep.subr.bf16.mxu0 %v7080
    %7530 = vmatpush1.bf16.msra.mxu0 %v7079
    %7531 = vmatprep.subr.bf16.mxu0 %v7082
    %7532 = vmatpush1.bf16.msra.mxu0 %v7081
    %7533 = vmatprep.subr.bf16.mxu0 %v7084
    %7534 = vmatpush1.bf16.msra.mxu0 %v7083
    %7535 = vmatprep.mubr.bf16.mxu0 %v6334
    %7536 = vmatmul.mubr.bf16.gmra.mrb[0].mxu0 %v6333
    %v7537 = vpop.f32.mrb[0].mxu0
    %v7538 = vadd.f32 %v7425, %v7537
    %v7539 = vpop.f32.mrb[0].mxu0
    %v7540 = vadd.f32 %v7427, %v7539
    %v7541 = vpop.f32.mrb[0].mxu0
    %v7542 = vadd.f32 %v7429, %v7541
    %v7543 = vpop.f32.mrb[0].mxu0
    %v7544 = vadd.f32 %v7431, %v7543
    %7545 = vmatprep.mubr.bf16.mxu0 %v6343
    %7546 = vmatmul.mubr.bf16.gmra.mrb[0].mxu0 %v6342
    %v7547 = vpop.f32.mrb[0].mxu0
    %v7548 = vadd.f32 %v7435, %v7547
    %v7549 = vpop.f32.mrb[0].mxu0
    %v7550 = vadd.f32 %v7437, %v7549
    %v7551 = vpop.f32.mrb[0].mxu0
    %v7552 = vadd.f32 %v7439, %v7551
    %v7553 = vpop.f32.mrb[0].mxu0
    %v7554 = vadd.f32 %v7441, %v7553
    %7555 = vmatprep.mubr.bf16.mxu0 %v6352
    %7556 = vmatmul.mubr.bf16.gmra.mrb[0].mxu0 %v6351
    %v7557 = vpop.f32.mrb[0].mxu0
    %v7558 = vadd.f32 %v7445, %v7557
    %v7559 = vpop.f32.mrb[0].mxu0
    %v7560 = vadd.f32 %v7447, %v7559
    %v7561 = vpop.f32.mrb[0].mxu0
    %v7562 = vadd.f32 %v7449, %v7561
    %v7563 = vpop.f32.mrb[0].mxu0
    %v7564 = vadd.f32 %v7451, %v7563
    %7565 = vmatprep.mubr.bf16.mxu0 %v6361
    %7566 = vmatmul.mubr.bf16.gmra.mrb[0].mxu0 %v6360
    %v7567 = vpop.f32.mrb[0].mxu0
    %v7568 = vadd.f32 %v7455, %v7567
    %v7569 = vpop.f32.mrb[0].mxu0
    %v7570 = vadd.f32 %v7457, %v7569
    %v7571 = vpop.f32.mrb[0].mxu0
    %v7572 = vadd.f32 %v7459, %v7571
    %v7573 = vpop.f32.mrb[0].mxu0
    %v7574 = vadd.f32 %v7461, %v7573
    %7575 = vmatprep.mubr.bf16.mxu0 %v6370
    %7576 = vmatmul.mubr.bf16.gmra.mrb[0].mxu0 %v6369
    %v7577 = vpop.f32.mrb[0].mxu0
    %v7578 = vadd.f32 %v7465, %v7577
    %v7579 = vpop.f32.mrb[0].mxu0
    %v7580 = vadd.f32 %v7467, %v7579
    %v7581 = vpop.f32.mrb[0].mxu0
    %v7582 = vadd.f32 %v7469, %v7581
    %v7583 = vpop.f32.mrb[0].mxu0
    %v7584 = vadd.f32 %v7471, %v7583
    %7585 = vmatprep.mubr.bf16.mxu0 %v6379
    %7586 = vmatmul.mubr.bf16.gmra.mrb[0].mxu0 %v6378
    %v7587 = vpop.f32.mrb[0].mxu0
    %v7588 = vadd.f32 %v7475, %v7587
    %v7589 = vpop.f32.mrb[0].mxu0
    %v7590 = vadd.f32 %v7477, %v7589
    %v7591 = vpop.f32.mrb[0].mxu0
    %v7592 = vadd.f32 %v7479, %v7591
    %v7593 = vpop.f32.mrb[0].mxu0
    %v7594 = vadd.f32 %v7481, %v7593
    %7595 = vmatprep.mubr.bf16.mxu0 %v6388
    %7596 = vmatmul.mubr.bf16.gmra.mrb[0].mxu0 %v6387
    %v7597 = vpop.f32.mrb[0].mxu0
    %v7598 = vadd.f32 %v7485, %v7597
    %v7599 = vpop.f32.mrb[0].mxu0
    %v7600 = vadd.f32 %v7487, %v7599
    %v7601 = vpop.f32.mrb[0].mxu0
    %v7602 = vadd.f32 %v7489, %v7601
    %v7603 = vpop.f32.mrb[0].mxu0
    %v7604 = vadd.f32 %v7491, %v7603
    %7605 = vmatprep.mubr.bf16.mxu0 %v6397
    %7606 = vmatmul.mubr.bf16.gmra.mrb[0].mxu0 %v6396
    %v7607 = vpop.f32.mrb[0].mxu0
    %v7608 = vadd.f32 %v7495, %v7607
    %v7609 = vpop.f32.mrb[0].mxu0
    %v7610 = vadd.f32 %v7497, %v7609
    %v7611 = vpop.f32.mrb[0].mxu0
    %v7612 = vadd.f32 %v7499, %v7611
    %v7613 = vpop.f32.mrb[0].mxu0
    %v7614 = vadd.f32 %v7501, %v7613
    %7615 = vdwg.mxu0
    %7616 = vmatprep.subr.bf16.mxu0 %v7086
    %7617 = vmatpush1.bf16.msra.mxu0 %v7085
    %7618 = vmatprep.subr.bf16.mxu0 %v7088
    %7619 = vmatpush1.bf16.msra.mxu0 %v7087
    %7620 = vmatprep.subr.bf16.mxu0 %v7090
    %7621 = vmatpush1.bf16.msra.mxu0 %v7089
    %7622 = vmatprep.subr.bf16.mxu0 %v7092
    %7623 = vmatpush1.bf16.msra.mxu0 %v7091
    %7624 = vmatprep.subr.bf16.mxu0 %v7094
    %7625 = vmatpush1.bf16.msra.mxu0 %v7093
    %7626 = vmatprep.subr.bf16.mxu0 %v7096
    %7627 = vmatpush1.bf16.msra.mxu0 %v7095
    %7628 = vmatprep.subr.bf16.mxu0 %v7098
    %7629 = vmatpush1.bf16.msra.mxu0 %v7097
    %7630 = vmatprep.subr.bf16.mxu0 %v7100
    %7631 = vmatpush1.bf16.msra.mxu0 %v7099
    %7632 = vmatprep.subr.bf16.mxu0 %v7102
    %7633 = vmatpush1.bf16.msra.mxu0 %v7101
    %7634 = vmatprep.subr.bf16.mxu0 %v7104
    %7635 = vmatpush1.bf16.msra.mxu0 %v7103
    %7636 = vmatprep.subr.bf16.mxu0 %v7106
    %7637 = vmatpush1.bf16.msra.mxu0 %v7105
    %7638 = vmatprep.subr.bf16.mxu0 %v7108
    %7639 = vmatpush1.bf16.msra.mxu0 %v7107
    %7640 = vmatprep.subr.bf16.mxu0 %v7110
    %7641 = vmatpush1.bf16.msra.mxu0 %v7109
    %7642 = vmatprep.subr.bf16.mxu0 %v7112
    %7643 = vmatpush1.bf16.msra.mxu0 %v7111
    %7644 = vmatprep.subr.bf16.mxu0 %v7114
    %7645 = vmatpush1.bf16.msra.mxu0 %v7113
    %7646 = vmatprep.subr.bf16.mxu0 %v7116
    %7647 = vmatpush1.bf16.msra.mxu0 %v7115
    %7648 = vmatprep.mubr.bf16.mxu0 %v6336
    %7649 = vmatmul.mubr.bf16.gmra.mrb[0].mxu0 %v6335
    %v7650 = vpop.f32.mrb[0].mxu0
    %v7651 = vadd.f32 %v7538, %v7650
    %v7652 = vpop.f32.mrb[0].mxu0
    %v7653 = vadd.f32 %v7540, %v7652
    %v7654 = vpop.f32.mrb[0].mxu0
    %v7655 = vadd.f32 %v7542, %v7654
    %v7656 = vpop.f32.mrb[0].mxu0
    %v7657 = vadd.f32 %v7544, %v7656
    %7658 = vmatprep.mubr.bf16.mxu0 %v6345
    %7659 = vmatmul.mubr.bf16.gmra.mrb[0].mxu0 %v6344
    %v7660 = vpop.f32.mrb[0].mxu0
    %v7661 = vadd.f32 %v7548, %v7660
    %v7662 = vpop.f32.mrb[0].mxu0
    %v7663 = vadd.f32 %v7550, %v7662
    %v7664 = vpop.f32.mrb[0].mxu0
    %v7665 = vadd.f32 %v7552, %v7664
    %v7666 = vpop.f32.mrb[0].mxu0
    %v7667 = vadd.f32 %v7554, %v7666
    %7668 = vmatprep.mubr.bf16.mxu0 %v6354
    %7669 = vmatmul.mubr.bf16.gmra.mrb[0].mxu0 %v6353
    %v7670 = vpop.f32.mrb[0].mxu0
    %v7671 = vadd.f32 %v7558, %v7670
    %v7672 = vpop.f32.mrb[0].mxu0
    %v7673 = vadd.f32 %v7560, %v7672
    %v7674 = vpop.f32.mrb[0].mxu0
    %v7675 = vadd.f32 %v7562, %v7674
    %v7676 = vpop.f32.mrb[0].mxu0
    %v7677 = vadd.f32 %v7564, %v7676
    %7678 = vmatprep.mubr.bf16.mxu0 %v6363
    %7679 = vmatmul.mubr.bf16.gmra.mrb[0].mxu0 %v6362
    %v7680 = vpop.f32.mrb[0].mxu0
    %v7681 = vadd.f32 %v7568, %v7680
    %v7682 = vpop.f32.mrb[0].mxu0
    %v7683 = vadd.f32 %v7570, %v7682
    %v7684 = vpop.f32.mrb[0].mxu0
    %v7685 = vadd.f32 %v7572, %v7684
    %v7686 = vpop.f32.mrb[0].mxu0
    %v7687 = vadd.f32 %v7574, %v7686
    %7688 = vmatprep.mubr.bf16.mxu0 %v6372
    %7689 = vmatmul.mubr.bf16.gmra.mrb[0].mxu0 %v6371
    %v7690 = vpop.f32.mrb[0].mxu0
    %v7691 = vadd.f32 %v7578, %v7690
    %v7692 = vpop.f32.mrb[0].mxu0
    %v7693 = vadd.f32 %v7580, %v7692
    %v7694 = vpop.f32.mrb[0].mxu0
    %v7695 = vadd.f32 %v7582, %v7694
    %v7696 = vpop.f32.mrb[0].mxu0
    %v7697 = vadd.f32 %v7584, %v7696
    %7698 = vmatprep.mubr.bf16.mxu0 %v6381
    %7699 = vmatmul.mubr.bf16.gmra.mrb[0].mxu0 %v6380
    %v7700 = vpop.f32.mrb[0].mxu0
    %v7701 = vadd.f32 %v7588, %v7700
    %v7702 = vpop.f32.mrb[0].mxu0
    %v7703 = vadd.f32 %v7590, %v7702
    %v7704 = vpop.f32.mrb[0].mxu0
    %v7705 = vadd.f32 %v7592, %v7704
    %v7706 = vpop.f32.mrb[0].mxu0
    %v7707 = vadd.f32 %v7594, %v7706
    %7708 = vmatprep.mubr.bf16.mxu0 %v6390
    %7709 = vmatmul.mubr.bf16.gmra.mrb[0].mxu0 %v6389
    %v7710 = vpop.f32.mrb[0].mxu0
    %v7711 = vadd.f32 %v7598, %v7710
    %v7712 = vpop.f32.mrb[0].mxu0
    %v7713 = vadd.f32 %v7600, %v7712
    %v7714 = vpop.f32.mrb[0].mxu0
    %v7715 = vadd.f32 %v7602, %v7714
    %v7716 = vpop.f32.mrb[0].mxu0
    %v7717 = vadd.f32 %v7604, %v7716
    %7718 = vmatprep.mubr.bf16.mxu0 %v6399
    %7719 = vmatmul.mubr.bf16.gmra.mrb[0].mxu0 %v6398
    %v7720 = vpop.f32.mrb[0].mxu0
    %v7721 = vadd.f32 %v7608, %v7720
    %v7722 = vpop.f32.mrb[0].mxu0
    %v7723 = vadd.f32 %v7610, %v7722
    %v7724 = vpop.f32.mrb[0].mxu0
    %v7725 = vadd.f32 %v7612, %v7724
    %v7726 = vpop.f32.mrb[0].mxu0
    %v7727 = vadd.f32 %v7614, %v7726
    %7728 = vdwg.mxu0
    %7729 = vmatprep.subr.bf16.mxu0 %v7118
    %7730 = vmatpush1.bf16.msra.mxu0 %v7117
    %7731 = vmatprep.subr.bf16.mxu0 %v7120
    %7732 = vmatpush1.bf16.msra.mxu0 %v7119
    %7733 = vmatprep.subr.bf16.mxu0 %v7122
    %7734 = vmatpush1.bf16.msra.mxu0 %v7121
    %7735 = vmatprep.subr.bf16.mxu0 %v7124
    %7736 = vmatpush1.bf16.msra.mxu0 %v7123
    %7737 = vmatprep.subr.bf16.mxu0 %v7126
    %7738 = vmatpush1.bf16.msra.mxu0 %v7125
    %7739 = vmatprep.subr.bf16.mxu0 %v7128
    %7740 = vmatpush1.bf16.msra.mxu0 %v7127
    %7741 = vmatprep.subr.bf16.mxu0 %v7130
    %7742 = vmatpush1.bf16.msra.mxu0 %v7129
    %7743 = vmatprep.subr.bf16.mxu0 %v7132
    %7744 = vmatpush1.bf16.msra.mxu0 %v7131
    %7745 = vmatprep.subr.bf16.mxu0 0
    %7746 = vmatpush1.bf16.msra.mxu0 0
    %7747 = vmatprep.subr.bf16.mxu0 0
    %7748 = vmatpush1.bf16.msra.mxu0 0
    %7749 = vmatprep.subr.bf16.mxu0 0
    %7750 = vmatpush1.bf16.msra.mxu0 0
    %7751 = vmatprep.subr.bf16.mxu0 0
    %7752 = vmatpush1.bf16.msra.mxu0 0
    %7753 = vmatprep.subr.bf16.mxu0 0
    %7754 = vmatpush1.bf16.msra.mxu0 0
    %7755 = vmatprep.subr.bf16.mxu0 0
    %7756 = vmatpush1.bf16.msra.mxu0 0
    %7757 = vmatprep.subr.bf16.mxu0 0
    %7758 = vmatpush1.bf16.msra.mxu0 0
    %7759 = vmatprep.subr.bf16.mxu0 0
    %7760 = vmatpush1.bf16.msra.mxu0 0
    %7761 = vmatprep.mubr.bf16.mxu0 0
    %7762 = vmatmul.mubr.bf16.gmra.mrb[0].mxu0 %v6337
    %v7763 = vpop.f32.mrb[0].mxu0
    %v7764 = vadd.f32 %v7651, %v7763
    %v7765 = vpop.f32.mrb[0].mxu0
    %v7766 = vadd.f32 %v7653, %v7765
    %v7767 = vpop.f32.mrb[0].mxu0
    %v7768 = vadd.f32 %v7655, %v7767
    %v7769 = vpop.f32.mrb[0].mxu0
    %v7770 = vadd.f32 %v7657, %v7769
    %7771 = vmatprep.mubr.bf16.mxu0 0
    %7772 = vmatmul.mubr.bf16.gmra.mrb[0].mxu0 %v6346
    %v7773 = vpop.f32.mrb[0].mxu0
    %v7774 = vadd.f32 %v7661, %v7773
    %v7775 = vpop.f32.mrb[0].mxu0
    %v7776 = vadd.f32 %v7663, %v7775
    %v7777 = vpop.f32.mrb[0].mxu0
    %v7778 = vadd.f32 %v7665, %v7777
    %v7779 = vpop.f32.mrb[0].mxu0
    %v7780 = vadd.f32 %v7667, %v7779
    %7781 = vmatprep.mubr.bf16.mxu0 0
    %7782 = vmatmul.mubr.bf16.gmra.mrb[0].mxu0 %v6355
    %v7783 = vpop.f32.mrb[0].mxu0
    %v7784 = vadd.f32 %v7671, %v7783
    %v7785 = vpop.f32.mrb[0].mxu0
    %v7786 = vadd.f32 %v7673, %v7785
    %v7787 = vpop.f32.mrb[0].mxu0
    %v7788 = vadd.f32 %v7675, %v7787
    %v7789 = vpop.f32.mrb[0].mxu0
    %v7790 = vadd.f32 %v7677, %v7789
    %7791 = vmatprep.mubr.bf16.mxu0 0
    %7792 = vmatmul.mubr.bf16.gmra.mrb[0].mxu0 %v6364
    %v7793 = vpop.f32.mrb[0].mxu0
    %v7794 = vadd.f32 %v7681, %v7793
    %v7795 = vpop.f32.mrb[0].mxu0
    %v7796 = vadd.f32 %v7683, %v7795
    %v7797 = vpop.f32.mrb[0].mxu0
    %v7798 = vadd.f32 %v7685, %v7797
    %v7799 = vpop.f32.mrb[0].mxu0
    %v7800 = vadd.f32 %v7687, %v7799
    %7801 = vmatprep.mubr.bf16.mxu0 0
    %7802 = vmatmul.mubr.bf16.gmra.mrb[0].mxu0 %v6373
    %v7803 = vpop.f32.mrb[0].mxu0
    %v7804 = vadd.f32 %v7691, %v7803
    %v7805 = vpop.f32.mrb[0].mxu0
    %v7806 = vadd.f32 %v7693, %v7805
    %v7807 = vpop.f32.mrb[0].mxu0
    %v7808 = vadd.f32 %v7695, %v7807
    %v7809 = vpop.f32.mrb[0].mxu0
    %v7810 = vadd.f32 %v7697, %v7809
    %7811 = vmatprep.mubr.bf16.mxu0 0
    %7812 = vmatmul.mubr.bf16.gmra.mrb[0].mxu0 %v6382
    %v7813 = vpop.f32.mrb[0].mxu0
    %v7814 = vadd.f32 %v7701, %v7813
    %v7815 = vpop.f32.mrb[0].mxu0
    %v7816 = vadd.f32 %v7703, %v7815
    %v7817 = vpop.f32.mrb[0].mxu0
    %v7818 = vadd.f32 %v7705, %v7817
    %v7819 = vpop.f32.mrb[0].mxu0
    %v7820 = vadd.f32 %v7707, %v7819
    %7821 = vmatprep.mubr.bf16.mxu0 0
    %7822 = vmatmul.mubr.bf16.gmra.mrb[0].mxu0 %v6391
    %v7823 = vpop.f32.mrb[0].mxu0
    %v7824 = vadd.f32 %v7711, %v7823
    %v7825 = vpop.f32.mrb[0].mxu0
    %v7826 = vadd.f32 %v7713, %v7825
    %v7827 = vpop.f32.mrb[0].mxu0
    %v7828 = vadd.f32 %v7715, %v7827
    %v7829 = vpop.f32.mrb[0].mxu0
    %v7830 = vadd.f32 %v7717, %v7829
    %7831 = vmatprep.mubr.bf16.mxu0 0
    %7832 = vmatmul.mubr.bf16.gmra.mrb[0].mxu0 %v6400
    %v7833 = vpop.f32.mrb[0].mxu0
    %v7834 = vadd.f32 %v7721, %v7833
    %v7835 = vpop.f32.mrb[0].mxu0
    %v7836 = vadd.f32 %v7723, %v7835
    %v7837 = vpop.f32.mrb[0].mxu0
    %v7838 = vadd.f32 %v7725, %v7837
    %v7839 = vpop.f32.mrb[0].mxu0
    %v7840 = vadd.f32 %v7727, %v7839
    %7841 = vdwg.mxu0
    %7842 = vst [vmem:[%s11] sm:$0xff] %v7764
    %7843 = vst [vmem:[%s11 + $0x8] sm:$0xff] %v7766
    %7844 = vst [vmem:[%s11 + $0x10] sm:$0xff] %v7768
    %7845 = vst [vmem:[%s11 + $0x18] sm:$0xff] %v7770
    %7846 = vst [vmem:[%s11 + $0x20] sm:$0xff] %v7774
    %7847 = vst [vmem:[%s11 + $0x28] sm:$0xff] %v7776
    %7848 = vst [vmem:[%s11 + $0x30] sm:$0xff] %v7778
    %7849 = vst [vmem:[%s11 + $0x38] sm:$0xff] %v7780
    %7850 = vst [vmem:[%s11 + $0x40] sm:$0xff] %v7784
    %7851 = vst [vmem:[%s11 + $0x48] sm:$0xff] %v7786
    %7852 = vst [vmem:[%s11 + $0x50] sm:$0xff] %v7788
    %7853 = vst [vmem:[%s11 + $0x58] sm:$0xff] %v7790
    %7854 = vst [vmem:[%s11 + $0x60] sm:$0xff] %v7794
    %7855 = vst [vmem:[%s11 + $0x68] sm:$0xff] %v7796
    %7856 = vst [vmem:[%s11 + $0x70] sm:$0xff] %v7798
    %7857 = vst [vmem:[%s11 + $0x78] sm:$0xff] %v7800
    %7858 = vst [vmem:[%s11 + $0x80] sm:$0xff] %v7804
    %7859 = vst [vmem:[%s11 + $0x88] sm:$0xff] %v7806
    %7860 = vst [vmem:[%s11 + $0x90] sm:$0xff] %v7808
    %7861 = vst [vmem:[%s11 + $0x98] sm:$0xff] %v7810
    %7862 = vst [vmem:[%s11 + $0xa0] sm:$0xff] %v7814
    %7863 = vst [vmem:[%s11 + $0xa8] sm:$0xff] %v7816
    %7864 = vst [vmem:[%s11 + $0xb0] sm:$0xff] %v7818
    %7865 = vst [vmem:[%s11 + $0xb8] sm:$0xff] %v7820
    %7866 = vst [vmem:[%s11 + $0xc0] sm:$0xff] %v7824
    %7867 = vst [vmem:[%s11 + $0xc8] sm:$0xff] %v7826
    %7868 = vst [vmem:[%s11 + $0xd0] sm:$0xff] %v7828
    %7869 = vst [vmem:[%s11 + $0xd8] sm:$0xff] %v7830
    %7870 = vst [vmem:[%s11 + $0xe0] sm:$0xff] %v7834
    %7871 = vst [vmem:[%s11 + $0xe8] sm:$0xff] %v7836
    %7872 = vst [vmem:[%s11 + $0xf0] sm:$0xff] %v7838
    %7873 = vst [vmem:[%s11 + $0xf8] sm:$0xff] %v7840
    // Predicated region
    $region66: #{koundinya2d_forward.1} parent=1 // pred_check
      _
    $region67: #{koundinya2d_forward.1} parent=1 // pred_check_branch
      %7875 = sbr.rel (0) target = $region69
    $region68: #{koundinya2d_forward.1} parent=1 // pred_region
      _
    $region69: #{koundinya2d_forward.1} parent=1 // pred_fallthru
      _
    // Predicated region
    $region70: #{koundinya2d_forward.1} parent=1 // pred_check
      _
    $region71: #{koundinya2d_forward.1} parent=1 // pred_check_branch
      %7877 = sbr.rel (0) target = $region73
    $region72: #{koundinya2d_forward.1} parent=1 // pred_region
      _
    $region73: #{koundinya2d_forward.1} parent=1 // pred_fallthru
      _
    %7878 = vsyncpa [#allocation5], 1
    %7879 = vsyncpa [#allocation7], 1
    %7880 = vsyncpa [#allocation10], 1

</llo_original>
